<compile_context>
chip_gen: v7x
topology: tpu7x:2x2x1
jax: 0.10.0
libtpu: 0.0.40
codegen_flags: <defaults>
</compile_context>

<pallas_src>
import functools

import jax
import jax.numpy as jnp
from jax.experimental import pallas as pl
from jax.experimental.pallas import tpu as pltpu

EPS = 1e-5  # nn.BatchNorm1d default eps


def _round_up(x, m):
    return ((x + m - 1) // m) * m


def _choose_row_tile(M, Dp):
    """Row tile for the projection: divides M exactly (no pad / no slice afterwards)."""
    cap = 512 if Dp <= 384 else 256            # keep f32 accs + bf16 tiles inside scoped VMEM
    if M <= cap:
        return M                               # block dim == full dim is always legal
    t = cap - (cap % 8)
    while t >= 8:
        if M % t == 0:
            return t
        t -= 8
    return M                                   # M not a multiple of 8: one full-height block


def _choose_time_tile(T, B, cap=32):
    """Timesteps per scan grid step: divides T, and TT*B rows satisfy the 8-sublane rule."""
    for tt in range(min(T, cap), 0, -1):
        if T % tt == 0 and (tt * B) % 8 == 0:
            return tt
    return T                                   # fallback: whole sequence in one block


# ----------------------------------------------------------------------------------------
# Kernel 1: fused input projection for all four GRUs
#   a : (2, M, D)    bf16   group 0 = real input rows, group 1 = imag input rows (time-major)
#   w : (2, D, 6Dp)  bf16   [W_ih_rr^T | W_ih_ri^T] and [W_ih_ir^T | W_ih_ii^T]
#   b : (2, 1, 6Dp)  f32
#   out: (2, M, 6Dp) bf16
# ----------------------------------------------------------------------------------------
def _proj_kernel(a_ref, w_ref, b_ref, o_ref):
    acc = jnp.dot(a_ref[0], w_ref[0], preferred_element_type=jnp.float32)
    o_ref[0] = (acc + b_ref[0]).astype(o_ref.dtype)


def _input_projection(a, w, b, tm):
    G, M, K = a.shape
    _, _, N = w.shape
    return pl.pallas_call(
        _proj_kernel,
        out_shape=jax.ShapeDtypeStruct((G, M, N), jnp.bfloat16),
        grid_spec=pltpu.PrefetchScalarGridSpec(
            num_scalar_prefetch=0,
            grid=(G, M // tm),
            in_specs=[
                pl.BlockSpec((1, tm, K), lambda g, i: (g, i, 0)),
                pl.BlockSpec((1, K, N), lambda g, i: (g, 0, 0)),   # weight resident per group
                pl.BlockSpec((1, 1, N), lambda g, i: (g, 0, 0)),
            ],
            out_specs=pl.BlockSpec((1, tm, N), lambda g, i: (g, i, 0)),
        ),
        compiler_params=pltpu.CompilerParams(
            dimension_semantics=("parallel", "parallel")),
    )(a, w, b)


# ----------------------------------------------------------------------------------------
# Kernel 2: sequential GRU scan (TT timesteps per grid step) + complex combine
#           + fused eval-mode BatchNorm1d + PReLU
#   gx (passed twice with different BlockSpecs): (2, M, 6Dp) bf16
#       gx[0] lanes = [rr gates | ri gates], gx[1] lanes = [ir gates | ii gates]
#   w_hh : (2, 2, Dp, 3Dp) bf16   [group][sub]: group 0 = (rr, ii), group 1 = (ri, ir)
#   b_hh : (2, 2, 1, 3Dp)  f32
#   post : (2, 4, 1, Dp)   f32    rows = [scale, shift, alpha, combine-sign] per group
#   out  : (2, M, D)       f32    out[0] = re rows, out[1] = im rows (time-major)
# ----------------------------------------------------------------------------------------
def _gru_scan_kernel(gxa_ref, gxb_ref, whh_ref, bhh_ref, post_ref,
                     out_ref, h_ref, *, tt, batch, dim):
    tb = pl.program_id(1)
    Dp = h_ref.shape[-1]

    @pl.when(tb == 0)
    def _():
        h_ref[...] = jnp.zeros_like(h_ref)      # PyTorch default h_0 = 0 (per group)

    # Hoisted per-block loads / broadcasts (broadcast_in_dim is not CSE'd by JAX).
    bhh_a = jnp.broadcast_to(bhh_ref[0, 0], (batch, 3 * Dp))
    bhh_b = jnp.broadcast_to(bhh_ref[0, 1], (batch, 3 * Dp))
    scale = jnp.broadcast_to(post_ref[0, 0], (batch, Dp))
    shift = jnp.broadcast_to(post_ref[0, 1], (batch, Dp))
    alpha = jnp.broadcast_to(post_ref[0, 2], (batch, Dp))
    sign = jnp.broadcast_to(post_ref[0, 3], (batch, Dp))   # -1 for re group, +1 for im group

    def sig(v):  # sigmoid via tanh identity: exact, runs on the EUP (no VALU divide)
        return 0.5 * jnp.tanh(0.5 * v) + 0.5

    h_a = h_ref[0]                               # (B, Dp) f32
    h_b = h_ref[1]
    for s in range(tt):                          # unrolled; tt is small (<= 32)
        r0 = s * batch
        gx_a = gxa_ref[0, r0:r0 + batch, :].astype(jnp.float32)   # (B, 3Dp)
        gx_b = gxb_ref[0, r0:r0 + batch, :].astype(jnp.float32)

        # Weights read per step (keeping them as hoisted values would pin ~48 vregs).
        gh_a = jnp.dot(h_a.astype(jnp.bfloat16), whh_ref[0, 0],
                       preferred_element_type=jnp.float32) + bhh_a
        gh_b = jnp.dot(h_b.astype(jnp.bfloat16), whh_ref[0, 1],
                       preferred_element_type=jnp.float32) + bhh_b

        r_a = sig(gx_a[:, :Dp] + gh_a[:, :Dp])
        z_a = sig(gx_a[:, Dp:2 * Dp] + gh_a[:, Dp:2 * Dp])
        n_a = jnp.tanh(gx_a[:, 2 * Dp:] + r_a * gh_a[:, 2 * Dp:])
        h_a = (1.0 - z_a) * n_a + z_a * h_a

        r_b = sig(gx_b[:, :Dp] + gh_b[:, :Dp])
        z_b = sig(gx_b[:, Dp:2 * Dp] + gh_b[:, Dp:2 * Dp])
        n_b = jnp.tanh(gx_b[:, 2 * Dp:] + r_b * gh_b[:, 2 * Dp:])
        h_b = (1.0 - z_b) * n_b + z_b * h_b

        y = h_a + sign * h_b                      # re = rr - ii   /   im = ri + ir
        y = y * scale + shift                     # eval-mode BatchNorm1d
        y = jnp.where(y >= 0.0, y, alpha * y)     # PReLU
        out_ref[0, r0:r0 + batch, :] = y[:, :dim].astype(out_ref.dtype)

    h_ref[0] = h_a
    h_ref[1] = h_b


def _gru_scan(gx, w_hh, b_hh, post, *, T, B, D, tt):
    M = T * B
    Dp = w_hh.shape[2]
    kernel = functools.partial(_gru_scan_kernel, tt=tt, batch=B, dim=D)
    return pl.pallas_call(
        kernel,
        out_shape=jax.ShapeDtypeStruct((2, M, D), jnp.float32),
        grid_spec=pltpu.PrefetchScalarGridSpec(
            num_scalar_prefetch=0,
            grid=(2, T // tt),
            in_specs=[
                # "a" recurrence gates (rr for re, ri for im): gx[0], lane-chunk g
                pl.BlockSpec((1, tt * B, 3 * Dp), lambda g, t: (0, t, g)),
                # "b" recurrence gates (ii for re, ir for im): gx[1], lane-chunk 1-g
                pl.BlockSpec((1, tt * B, 3 * Dp), lambda g, t: (1, t, 1 - g)),
                pl.BlockSpec((1, 2, Dp, 3 * Dp), lambda g, t: (g, 0, 0, 0)),   # resident
                pl.BlockSpec((1, 2, 1, 3 * Dp), lambda g, t: (g, 0, 0, 0)),
                pl.BlockSpec((1, 4, 1, Dp), lambda g, t: (g, 0, 0, 0)),
            ],
            out_specs=pl.BlockSpec((1, tt * B, D), lambda g, t: (g, t, 0)),
            scratch_shapes=[pltpu.VMEM((2, B, Dp), jnp.float32)],              # hidden states
        ),
        compiler_params=pltpu.CompilerParams(
            # group axis is truly independent (splits across TCs on v7x megacore);
            # the time axis carries the recurrence and must stay sequential.
            dimension_semantics=("parallel", "arbitrary")),
    )(gx, gx, w_hh, b_hh, post)


# ----------------------------------------------------------------------------------------
# Deterministic parameter construction (PyTorch layouts kept in `raw` for the reference,
# padded / packed kernel layouts built once here, off the hot path).
# ----------------------------------------------------------------------------------------
class ParamGen:
    def __init__(self, seed=0):
        self.key = jax.random.PRNGKey(seed)

    def normal(self, shape, scale=1.0):
        self.key, k = jax.random.split(self.key)
        return scale * jax.random.normal(k, shape, dtype=jnp.float32)


def _pack_gate_w(w, D, Dp, k_rows):
    """PyTorch (3D, D) gate-stacked weight -> (k_rows, 3Dp), r|z|n chunks at Dp offsets."""
    out = jnp.zeros((k_rows, 3 * Dp), jnp.float32)
    wt = w.T
    for g in range(3):
        out = out.at[:D, g * Dp:g * Dp + D].set(wt[:, g * D:(g + 1) * D])
    return out


def _pack_gate_b(b, D, Dp):
    out = jnp.zeros((3 * Dp,), jnp.float32)
    for g in range(3):
        out = out.at[g * Dp:g * Dp + D].set(b[g * D:(g + 1) * D])
    return out


def init_params(C, F, seed=0):
    gen = ParamGen(seed)
    D = C * F
    Dp = _round_up(max(D, 128), 128)
    s = D ** -0.5

    raw = {"gru": {}, "bn": {}}
    pw_ih, pb_ih, pw_hh, pb_hh = {}, {}, {}, {}
    for name in ("rr", "ri", "ir", "ii"):
        w_ih = gen.normal((3 * D, D), s)        # PyTorch layout, gate order [r, z, n]
        w_hh = gen.normal((3 * D, D), s)
        b_ih = gen.normal((3 * D,), s)
        b_hh = gen.normal((3 * D,), s)
        raw["gru"][name] = (w_ih, w_hh, b_ih, b_hh)
        pw_ih[name] = _pack_gate_w(w_ih, D, Dp, D)      # K unpadded for the projection
        pw_hh[name] = _pack_gate_w(w_hh, D, Dp, Dp)     # K = Dp (hidden carried at Dp width)
        pb_ih[name] = _pack_gate_b(b_ih, D, Dp)
        pb_hh[name] = _pack_gate_b(b_hh, D, Dp)

    # Input projection: group 0 (real input) -> [rr | ri], group 1 (imag input) -> [ir | ii].
    w_ih = jnp.stack(
        [jnp.concatenate([pw_ih["rr"], pw_ih["ri"]], axis=1),
         jnp.concatenate([pw_ih["ir"], pw_ih["ii"]], axis=1)], axis=0
    ).astype(jnp.bfloat16)                                          # (2, D, 6Dp)
    b_ih = jnp.stack([jnp.concatenate([pb_ih["rr"], pb_ih["ri"]]),
                      jnp.concatenate([pb_ih["ir"], pb_ih["ii"]])],
                     axis=0)[:, None, :]                            # (2, 1, 6Dp)

    # Recurrent weights by scan group: group 0 = (rr, ii) -> re, group 1 = (ri, ir) -> im.
    w_hh = jnp.stack(
        [jnp.stack([pw_hh["rr"], pw_hh["ii"]], axis=0),
         jnp.stack([pw_hh["ri"], pw_hh["ir"]], axis=0)], axis=0
    ).astype(jnp.bfloat16)                                          # (2, 2, Dp, 3Dp)
    b_hh = jnp.stack(
        [jnp.stack([pb_hh["rr"], pb_hh["ii"]], axis=0),
         jnp.stack([pb_hh["ri"], pb_hh["ir"]], axis=0)], axis=0
    )[:, :, None, :]                                                # (2, 2, 1, 3Dp)

    # Fused eval-mode BN + PReLU + combine-sign parameters.
    post = jnp.zeros((2, 4, 1, Dp), jnp.float32)
    signs = (-1.0, 1.0)                                             # re = rr - ii, im = ri + ir
    for gidx, part in enumerate(("re", "im")):
        gamma = 1.0 + gen.normal((D,), 0.1)
        beta = gen.normal((D,), 0.1)
        mean = gen.normal((D,), 0.1)
        var = 1.0 + jnp.abs(gen.normal((D,), 0.1))
        alpha = jnp.float32(0.25)                                   # nn.PReLU() default init
        scale = gamma / jnp.sqrt(var + EPS)
        shift = beta - mean * scale
        raw["bn"][part] = (scale, shift, alpha)
        post = post.at[gidx, 0, 0, :D].set(scale)
        post = post.at[gidx, 1, 0, :D].set(shift)
        post = post.at[gidx, 2, 0, :D].set(jnp.full((D,), alpha))
        post = post.at[gidx, 3, 0, :].set(signs[gidx])

    kernel_params = {"w_ih": w_ih, "b_ih": b_ih, "w_hh": w_hh, "b_hh": b_hh, "post": post}
    return kernel_params, raw


# ----------------------------------------------------------------------------------------
# cRNN forward (Pallas)
# ----------------------------------------------------------------------------------------
def crnn_forward(params, x):
    B, C, F, T, _ = x.shape
    D = C * F
    Dp = params["w_hh"].shape[2]
    M = T * B

    # (B, C, F, T, 2) -> (2, T*B, D) bf16, time-major rows; no zero-pad (K dim unpadded).
    xs = jnp.transpose(x, (4, 3, 0, 1, 2)).reshape(2, M, D).astype(jnp.bfloat16)

    tm = _choose_row_tile(M, Dp)
    gx = _input_projection(xs, params["w_ih"], params["b_ih"], tm)      # (2, M, 6Dp) bf16

    tt = _choose_time_tile(T, B)
    out = _gru_scan(gx, params["w_hh"], params["b_hh"], params["post"],
                    T=T, B=B, D=D, tt=tt)                               # (2, M, D) f32

    # Replicate the PyTorch tail exactly:
    #   stack -> (B, dim, T, 2) -> permute (1,3,2,0) -> (dim, 2, T, B) -> reshape.
    y = jnp.transpose(out.reshape(2, T, B, D), (3, 0, 1, 2))            # (D, 2, T, B)
    return y.reshape(B, C, F, T, 2)


# ----------------------------------------------------------------------------------------
# Pure-JAX reference (same bf16 matmul / bf16 gx numerics) for validation
# ----------------------------------------------------------------------------------------
def _gru_ref(x_seq, w_ih, w_hh, b_ih, b_hh):
    Bb, T, D = x_seq.shape
    wi = w_ih.T.astype(jnp.bfloat16)
    wh = w_hh.T.astype(jnp.bfloat16)
    h = jnp.zeros((Bb, D), jnp.float32)
    outs = []
    for t in range(T):
        gx = jnp.dot(x_seq[:, t].astype(jnp.bfloat16), wi,
                     preferred_element_type=jnp.float32) + b_ih
        gx = gx.astype(jnp.bfloat16).astype(jnp.float32)   # kernel stores gx in bf16
        gh = jnp.dot(h.astype(jnp.bfloat16), wh,
                     preferred_element_type=jnp.float32) + b_hh
        r = jax.nn.sigmoid(gx[:, :D] + gh[:, :D])
        z = jax.nn.sigmoid(gx[:, D:2 * D] + gh[:, D:2 * D])
        n = jnp.tanh(gx[:, 2 * D:] + r * gh[:, 2 * D:])
        h = (1.0 - z) * n + z * h
        outs.append(h)
    return jnp.stack(outs, axis=1)                                      # (B, T, D)


def crnn_reference(raw, x):
    B, C, F, T, _ = x.shape
    D = C * F
    xs = jnp.transpose(x, (4, 0, 3, 1, 2)).reshape(2, B, T, D)
    rr = _gru_ref(xs[0], *raw["gru"]["rr"])
    ri = _gru_ref(xs[0], *raw["gru"]["ri"])
    ir = _gru_ref(xs[1], *raw["gru"]["ir"])
    ii = _gru_ref(xs[1], *raw["gru"]["ii"])
    re = jnp.transpose(rr - ii, (0, 2, 1))                              # (B, D, T)
    im = jnp.transpose(ri + ir, (0, 2, 1))
    sc_re, sh_re, a_re = raw["bn"]["re"]
    sc_im, sh_im, a_im = raw["bn"]["im"]
    re = re * sc_re[None, :, None] + sh_re[None, :, None]
    im = im * sc_im[None, :, None] + sh_im[None, :, None]
    re = jnp.where(re >= 0.0, re, a_re * re)
    im = jnp.where(im >= 0.0, im, a_im * im)
    s = jnp.stack([re, im], axis=-1)                                    # (B, D, T, 2)
    y = jnp.transpose(s, (1, 3, 2, 0))                                  # (D, 2, T, B)
    return y.reshape(B, C, F, T, 2)


# ----------------------------------------------------------------------------------------
if __name__ == "__main__":
    B, C, F, T = 2, 4, 16, 8                      # dim = C*F = 64
    kernel_params, raw_params = init_params(C, F, seed=0)
    x = jax.random.normal(jax.random.PRNGKey(0), (B, C, F, T, 2), dtype=jnp.float32)

    fwd = jax.jit(crnn_forward)
    y = fwd(kernel_params, x)
    jax.block_until_ready(y)

    assert y.shape == (B, C, F, T, 2)
    assert bool(jnp.all(jnp.isfinite(y)))

    y_ref = crnn_reference(raw_params, x)
    err = float(jnp.max(jnp.abs(y - y_ref)))
    assert err < 5e-2, f"mismatch vs reference: {err}"
    print("KERNEL_OK")
</pallas_src>

<mosaic_0001>
module attributes {stable_mosaic.version = 11 : i64} {
  func.func @_proj_kernel(%arg0: i32, %arg1: i32, %arg2: memref<1x16x64xbf16, #tpu.memory_space<vmem>>, %arg3: memref<1x64x768xbf16, #tpu.memory_space<vmem>>, %arg4: memref<1x1x768xf32, #tpu.memory_space<vmem>>, %arg5: memref<1x16x768xbf16, #tpu.memory_space<vmem>>) attributes {dimension_semantics = [#tpu.dimension_semantics<parallel>, #tpu.dimension_semantics<parallel>], iteration_bounds = array<i64: 2, 1>, scalar_prefetch = 0 : i64, scratch_operands = 0 : i64, tpu.core_type = #tpu.core_type<tc>, window_params = [{transform_indices = @transform_0, window_bounds = array<i64: 1, 16, 64>}, {transform_indices = @transform_1, window_bounds = array<i64: 1, 64, 768>}, {transform_indices = @transform_2, window_bounds = array<i64: 1, 1, 768>}, {transform_indices = @transform_3, window_bounds = array<i64: 1, 16, 768>}]} {
    %c0 = arith.constant 0 : index
    %c0_0 = arith.constant 0 : index
    %c0_1 = arith.constant 0 : index
    %0 = vector.load %arg2[%c0, %c0_0, %c0_1] : memref<1x16x64xbf16, #tpu.memory_space<vmem>>, vector<1x16x64xbf16>
    %1 = vector.shape_cast %0 : vector<1x16x64xbf16> to vector<16x64xbf16>
    %c0_2 = arith.constant 0 : index
    %c0_3 = arith.constant 0 : index
    %c0_4 = arith.constant 0 : index
    %2 = vector.load %arg3[%c0_2, %c0_3, %c0_4] : memref<1x64x768xbf16, #tpu.memory_space<vmem>>, vector<1x64x768xbf16>
    %3 = vector.shape_cast %2 : vector<1x64x768xbf16> to vector<64x768xbf16>
    %cst = arith.constant dense<0.000000e+00> : vector<16x768xf32>
    %4 = tpu.matmul %1, %3, %cst {dimension_numbers = #tpu.dot_dimension_numbers<[1], [0], [0], [1], [0, 0, 1, 1], [], []>} : vector<16x64xbf16>, vector<64x768xbf16>, vector<16x768xf32> -> vector<16x768xf32>
    %c0_5 = arith.constant 0 : index
    %c0_6 = arith.constant 0 : index
    %c0_7 = arith.constant 0 : index
    %5 = vector.load %arg4[%c0_5, %c0_6, %c0_7] : memref<1x1x768xf32, #tpu.memory_space<vmem>>, vector<1x1x768xf32>
    %6 = vector.shape_cast %5 : vector<1x1x768xf32> to vector<1x768xf32>
    %7 = vector.broadcast %6 : vector<1x768xf32> to vector<16x768xf32>
    %8 = arith.addf %4, %7 : vector<16x768xf32>
    %9 = arith.truncf %8 : vector<16x768xf32> to vector<16x768xbf16>
    %c0_8 = arith.constant 0 : index
    %c0_9 = arith.constant 0 : index
    %c0_10 = arith.constant 0 : index
    %10 = vector.load %arg5[%c0_8, %c0_9, %c0_10] : memref<1x16x768xbf16, #tpu.memory_space<vmem>>, vector<1x16x768xbf16>
    %11 = vector.shape_cast %10 : vector<1x16x768xbf16> to vector<16x768xbf16>
    %12 = vector.shape_cast %9 : vector<16x768xbf16> to vector<1x16x768xbf16>
    tpu.vector_store %arg5[%c0_8, %c0_9, %c0_10], %12 {strides = array<i32>} : memref<1x16x768xbf16, #tpu.memory_space<vmem>>, vector<1x16x768xbf16>,
    return
  }
  func.func @transform_0(%arg0: i32, %arg1: i32) -> (i32, i32, i32) {
    %c0_i32 = arith.constant 0 : i32
    %c0_i32_0 = arith.constant 0 : i32
    return %arg0, %arg1, %c0_i32 : i32, i32, i32
  }
  func.func @transform_1(%arg0: i32, %arg1: i32) -> (i32, i32, i32) {
    %c0_i32 = arith.constant 0 : i32
    %c0_i32_0 = arith.constant 0 : i32
    %c0_i32_1 = arith.constant 0 : i32
    return %arg0, %c0_i32, %c0_i32_0 : i32, i32, i32
  }
  func.func @transform_2(%arg0: i32, %arg1: i32) -> (i32, i32, i32) {
    %c0_i32 = arith.constant 0 : i32
    %c0_i32_0 = arith.constant 0 : i32
    %c0_i32_1 = arith.constant 0 : i32
    return %arg0, %c0_i32, %c0_i32_0 : i32, i32, i32
  }
  func.func @transform_3(%arg0: i32, %arg1: i32) -> (i32, i32, i32) {
    %c0_i32 = arith.constant 0 : i32
    %c0_i32_0 = arith.constant 0 : i32
    return %arg0, %arg1, %c0_i32 : i32, i32, i32
  }
}

module attributes {stable_mosaic.version = 11 : i64} {
  func.func @_gru_scan_kernel(%arg0: i32, %arg1: i32, %arg2: memref<1x16x384xbf16, #tpu.memory_space<vmem>>, %arg3: memref<1x16x384xbf16, #tpu.memory_space<vmem>>, %arg4: memref<1x2x128x384xbf16, #tpu.memory_space<vmem>>, %arg5: memref<1x2x1x384xf32, #tpu.memory_space<vmem>>, %arg6: memref<1x4x1x128xf32, #tpu.memory_space<vmem>>, %arg7: memref<1x16x64xf32, #tpu.memory_space<vmem>>, %arg8: memref<2x2x128xf32, #tpu.memory_space<vmem>>) attributes {dimension_semantics = [#tpu.dimension_semantics<parallel>, #tpu.dimension_semantics<arbitrary>], iteration_bounds = array<i64: 2, 1>, scalar_prefetch = 0 : i64, scratch_operands = 1 : i64, tpu.core_type = #tpu.core_type<tc>, window_params = [{transform_indices = @transform_0, window_bounds = array<i64: 1, 16, 384>}, {transform_indices = @transform_1, window_bounds = array<i64: 1, 16, 384>}, {transform_indices = @transform_2, window_bounds = array<i64: 1, 2, 128, 384>}, {transform_indices = @transform_3, window_bounds = array<i64: 1, 2, 1, 384>}, {transform_indices = @transform_4, window_bounds = array<i64: 1, 4, 1, 128>}, {transform_indices = @transform_5, window_bounds = array<i64: 1, 16, 64>}]} {
    %c0_i32 = arith.constant 0 : i32
    %0 = arith.cmpi eq, %arg1, %c0_i32 : i32
    %1 = arith.extui %0 : i1 to i32
    %c0_i32_0 = arith.constant 0 : i32
    %2 = arith.cmpi ne, %1, %c0_i32_0 : i32
    scf.if %2 {
      %cst_298 = arith.constant 0.000000e+00 : f32
      %741 = vector.broadcast %cst_298 : f32 to vector<2x2x128xf32>
      %c0_299 = arith.constant 0 : index
      %c0_300 = arith.constant 0 : index
      %c0_301 = arith.constant 0 : index
      %742 = vector.load %arg8[%c0_299, %c0_300, %c0_301] : memref<2x2x128xf32, #tpu.memory_space<vmem>>, vector<2x2x128xf32>
      tpu.vector_store %arg8[%c0_299, %c0_300, %c0_301], %741 {strides = array<i32>} : memref<2x2x128xf32, #tpu.memory_space<vmem>>, vector<2x2x128xf32>,
    } else {
    }
    %c0 = arith.constant 0 : index
    %c0_1 = arith.constant 0 : index
    %c0_2 = arith.constant 0 : index
    %c0_3 = arith.constant 0 : index
    %3 = vector.load %arg5[%c0, %c0_1, %c0_2, %c0_3] : memref<1x2x1x384xf32, #tpu.memory_space<vmem>>, vector<1x1x1x384xf32>
    %4 = vector.shape_cast %3 : vector<1x1x1x384xf32> to vector<1x384xf32>
    %5 = vector.shape_cast %4 : vector<1x384xf32> to vector<1x384xf32>
    %6 = vector.broadcast %5 : vector<1x384xf32> to vector<2x384xf32>
    %c0_4 = arith.constant 0 : index
    %c1 = arith.constant 1 : index
    %c0_5 = arith.constant 0 : index
    %c0_6 = arith.constant 0 : index
    %7 = vector.load %arg5[%c0_4, %c1, %c0_5, %c0_6] : memref<1x2x1x384xf32, #tpu.memory_space<vmem>>, vector<1x1x1x384xf32>
    %8 = vector.shape_cast %7 : vector<1x1x1x384xf32> to vector<1x384xf32>
    %9 = vector.shape_cast %8 : vector<1x384xf32> to vector<1x384xf32>
    %10 = vector.broadcast %9 : vector<1x384xf32> to vector<2x384xf32>
    %c0_7 = arith.constant 0 : index
    %c0_8 = arith.constant 0 : index
    %c0_9 = arith.constant 0 : index
    %c0_10 = arith.constant 0 : index
    %11 = vector.load %arg6[%c0_7, %c0_8, %c0_9, %c0_10] : memref<1x4x1x128xf32, #tpu.memory_space<vmem>>, vector<1x1x1x128xf32>
    %12 = vector.shape_cast %11 : vector<1x1x1x128xf32> to vector<1x128xf32>
    %13 = vector.shape_cast %12 : vector<1x128xf32> to vector<1x128xf32>
    %14 = vector.broadcast %13 : vector<1x128xf32> to vector<2x128xf32>
    %c0_11 = arith.constant 0 : index
    %c1_12 = arith.constant 1 : index
    %c0_13 = arith.constant 0 : index
    %c0_14 = arith.constant 0 : index
    %15 = vector.load %arg6[%c0_11, %c1_12, %c0_13, %c0_14] : memref<1x4x1x128xf32, #tpu.memory_space<vmem>>, vector<1x1x1x128xf32>
    %16 = vector.shape_cast %15 : vector<1x1x1x128xf32> to vector<1x128xf32>
    %17 = vector.shape_cast %16 : vector<1x128xf32> to vector<1x128xf32>
    %18 = vector.broadcast %17 : vector<1x128xf32> to vector<2x128xf32>
    %c0_15 = arith.constant 0 : index
    %c2 = arith.constant 2 : index
    %c0_16 = arith.constant 0 : index
    %c0_17 = arith.constant 0 : index
    %19 = vector.load %arg6[%c0_15, %c2, %c0_16, %c0_17] : memref<1x4x1x128xf32, #tpu.memory_space<vmem>>, vector<1x1x1x128xf32>
    %20 = vector.shape_cast %19 : vector<1x1x1x128xf32> to vector<1x128xf32>
    %21 = vector.shape_cast %20 : vector<1x128xf32> to vector<1x128xf32>
    %22 = vector.broadcast %21 : vector<1x128xf32> to vector<2x128xf32>
    %c0_18 = arith.constant 0 : index
    %c3 = arith.constant 3 : index
    %c0_19 = arith.constant 0 : index
    %c0_20 = arith.constant 0 : index
    %23 = vector.load %arg6[%c0_18, %c3, %c0_19, %c0_20] : memref<1x4x1x128xf32, #tpu.memory_space<vmem>>, vector<1x1x1x128xf32>
    %24 = vector.shape_cast %23 : vector<1x1x1x128xf32> to vector<1x128xf32>
    %25 = vector.shape_cast %24 : vector<1x128xf32> to vector<1x128xf32>
    %26 = vector.broadcast %25 : vector<1x128xf32> to vector<2x128xf32>
    %c0_21 = arith.constant 0 : index
    %c0_22 = arith.constant 0 : index
    %c0_23 = arith.constant 0 : index
    %27 = vector.load %arg8[%c0_21, %c0_22, %c0_23] : memref<2x2x128xf32, #tpu.memory_space<vmem>>, vector<1x2x128xf32>
    %28 = vector.shape_cast %27 : vector<1x2x128xf32> to vector<2x128xf32>
    %c1_24 = arith.constant 1 : index
    %c0_25 = arith.constant 0 : index
    %c0_26 = arith.constant 0 : index
    %29 = vector.load %arg8[%c1_24, %c0_25, %c0_26] : memref<2x2x128xf32, #tpu.memory_space<vmem>>, vector<1x2x128xf32>
    %30 = vector.shape_cast %29 : vector<1x2x128xf32> to vector<2x128xf32>
    %c0_27 = arith.constant 0 : index
    %c0_28 = arith.constant 0 : index
    %c0_29 = arith.constant 0 : index
    %31 = vector.load %arg2[%c0_27, %c0_28, %c0_29] : memref<1x16x384xbf16, #tpu.memory_space<vmem>>, vector<1x2x384xbf16>
    %32 = vector.shape_cast %31 : vector<1x2x384xbf16> to vector<2x384xbf16>
    %33 = arith.extf %32 : vector<2x384xbf16> to vector<2x384xf32>
    %c0_30 = arith.constant 0 : index
    %c0_31 = arith.constant 0 : index
    %c0_32 = arith.constant 0 : index
    %34 = vector.load %arg3[%c0_30, %c0_31, %c0_32] : memref<1x16x384xbf16, #tpu.memory_space<vmem>>, vector<1x2x384xbf16>
    %35 = vector.shape_cast %34 : vector<1x2x384xbf16> to vector<2x384xbf16>
    %36 = arith.extf %35 : vector<2x384xbf16> to vector<2x384xf32>
    %37 = arith.truncf %28 : vector<2x128xf32> to vector<2x128xbf16>
    %c0_33 = arith.constant 0 : index
    %c0_34 = arith.constant 0 : index
    %c0_35 = arith.constant 0 : index
    %c0_36 = arith.constant 0 : index
    %38 = vector.load %arg4[%c0_33, %c0_34, %c0_35, %c0_36] : memref<1x2x128x384xbf16, #tpu.memory_space<vmem>>, vector<1x1x128x384xbf16>
    %39 = vector.shape_cast %38 : vector<1x1x128x384xbf16> to vector<128x384xbf16>
    %cst = arith.constant dense<0.000000e+00> : vector<2x384xf32>
    %40 = tpu.matmul %37, %39, %cst {dimension_numbers = #tpu.dot_dimension_numbers<[1], [0], [0], [1], [0, 0, 1, 1], [], []>} : vector<2x128xbf16>, vector<128x384xbf16>, vector<2x384xf32> -> vector<2x384xf32>
    %41 = arith.addf %40, %6 : vector<2x384xf32>
    %42 = arith.truncf %30 : vector<2x128xf32> to vector<2x128xbf16>
    %c0_37 = arith.constant 0 : index
    %c1_38 = arith.constant 1 : index
    %c0_39 = arith.constant 0 : index
    %c0_40 = arith.constant 0 : index
    %43 = vector.load %arg4[%c0_37, %c1_38, %c0_39, %c0_40] : memref<1x2x128x384xbf16, #tpu.memory_space<vmem>>, vector<1x1x128x384xbf16>
    %44 = vector.shape_cast %43 : vector<1x1x128x384xbf16> to vector<128x384xbf16>
    %cst_41 = arith.constant dense<0.000000e+00> : vector<2x384xf32>
    %45 = tpu.matmul %42, %44, %cst_41 {dimension_numbers = #tpu.dot_dimension_numbers<[1], [0], [0], [1], [0, 0, 1, 1], [], []>} : vector<2x128xbf16>, vector<128x384xbf16>, vector<2x384xf32> -> vector<2x384xf32>
    %46 = arith.addf %45, %10 : vector<2x384xf32>
    %47 = vector.extract_strided_slice %33 {offsets = [0, 0], sizes = [2, 128], strides = [1, 1]} : vector<2x384xf32> to vector<2x128xf32>
    %48 = vector.extract_strided_slice %41 {offsets = [0, 0], sizes = [2, 128], strides = [1, 1]} : vector<2x384xf32> to vector<2x128xf32>
    %49 = arith.addf %47, %48 : vector<2x128xf32>
    %cst_42 = arith.constant 5.000000e-01 : f32
    %50 = vector.broadcast %cst_42 : f32 to vector<2x128xf32>
    %51 = arith.mulf %50, %49 : vector<2x128xf32>
    %52 = math.tanh %51 : vector<2x128xf32>
    %cst_43 = arith.constant 5.000000e-01 : f32
    %53 = vector.broadcast %cst_43 : f32 to vector<2x128xf32>
    %54 = arith.mulf %53, %52 : vector<2x128xf32>
    %cst_44 = arith.constant 5.000000e-01 : f32
    %55 = vector.broadcast %cst_44 : f32 to vector<2x128xf32>
    %56 = arith.addf %54, %55 : vector<2x128xf32>
    %57 = vector.extract_strided_slice %33 {offsets = [0, 128], sizes = [2, 128], strides = [1, 1]} : vector<2x384xf32> to vector<2x128xf32>
    %58 = vector.extract_strided_slice %41 {offsets = [0, 128], sizes = [2, 128], strides = [1, 1]} : vector<2x384xf32> to vector<2x128xf32>
    %59 = arith.addf %57, %58 : vector<2x128xf32>
    %cst_45 = arith.constant 5.000000e-01 : f32
    %60 = vector.broadcast %cst_45 : f32 to vector<2x128xf32>
    %61 = arith.mulf %60, %59 : vector<2x128xf32>
    %62 = math.tanh %61 : vector<2x128xf32>
    %cst_46 = arith.constant 5.000000e-01 : f32
    %63 = vector.broadcast %cst_46 : f32 to vector<2x128xf32>
    %64 = arith.mulf %63, %62 : vector<2x128xf32>
    %cst_47 = arith.constant 5.000000e-01 : f32
    %65 = vector.broadcast %cst_47 : f32 to vector<2x128xf32>
    %66 = arith.addf %64, %65 : vector<2x128xf32>
    %67 = vector.extract_strided_slice %33 {offsets = [0, 256], sizes = [2, 128], strides = [1, 1]} : vector<2x384xf32> to vector<2x128xf32>
    %68 = vector.extract_strided_slice %41 {offsets = [0, 256], sizes = [2, 128], strides = [1, 1]} : vector<2x384xf32> to vector<2x128xf32>
    %69 = arith.mulf %56, %68 : vector<2x128xf32>
    %70 = arith.addf %67, %69 : vector<2x128xf32>
    %71 = math.tanh %70 : vector<2x128xf32>
    %cst_48 = arith.constant 1.000000e+00 : f32
    %72 = vector.broadcast %cst_48 : f32 to vector<2x128xf32>
    %73 = arith.subf %72, %66 : vector<2x128xf32>
    %74 = arith.mulf %73, %71 : vector<2x128xf32>
    %75 = arith.mulf %66, %28 : vector<2x128xf32>
    %76 = arith.addf %74, %75 : vector<2x128xf32>
    %77 = vector.extract_strided_slice %36 {offsets = [0, 0], sizes = [2, 128], strides = [1, 1]} : vector<2x384xf32> to vector<2x128xf32>
    %78 = vector.extract_strided_slice %46 {offsets = [0, 0], sizes = [2, 128], strides = [1, 1]} : vector<2x384xf32> to vector<2x128xf32>
    %79 = arith.addf %77, %78 : vector<2x128xf32>
    %cst_49 = arith.constant 5.000000e-01 : f32
    %80 = vector.broadcast %cst_49 : f32 to vector<2x128xf32>
    %81 = arith.mulf %80, %79 : vector<2x128xf32>
    %82 = math.tanh %81 : vector<2x128xf32>
    %cst_50 = arith.constant 5.000000e-01 : f32
    %83 = vector.broadcast %cst_50 : f32 to vector<2x128xf32>
    %84 = arith.mulf %83, %82 : vector<2x128xf32>
    %cst_51 = arith.constant 5.000000e-01 : f32
    %85 = vector.broadcast %cst_51 : f32 to vector<2x128xf32>
    %86 = arith.addf %84, %85 : vector<2x128xf32>
    %87 = vector.extract_strided_slice %36 {offsets = [0, 128], sizes = [2, 128], strides = [1, 1]} : vector<2x384xf32> to vector<2x128xf32>
    %88 = vector.extract_strided_slice %46 {offsets = [0, 128], sizes = [2, 128], strides = [1, 1]} : vector<2x384xf32> to vector<2x128xf32>
    %89 = arith.addf %87, %88 : vector<2x128xf32>
    %cst_52 = arith.constant 5.000000e-01 : f32
    %90 = vector.broadcast %cst_52 : f32 to vector<2x128xf32>
    %91 = arith.mulf %90, %89 : vector<2x128xf32>
    %92 = math.tanh %91 : vector<2x128xf32>
    %cst_53 = arith.constant 5.000000e-01 : f32
    %93 = vector.broadcast %cst_53 : f32 to vector<2x128xf32>
    %94 = arith.mulf %93, %92 : vector<2x128xf32>
    %cst_54 = arith.constant 5.000000e-01 : f32
    %95 = vector.broadcast %cst_54 : f32 to vector<2x128xf32>
    %96 = arith.addf %94, %95 : vector<2x128xf32>
    %97 = vector.extract_strided_slice %36 {offsets = [0, 256], sizes = [2, 128], strides = [1, 1]} : vector<2x384xf32> to vector<2x128xf32>
    %98 = vector.extract_strided_slice %46 {offsets = [0, 256], sizes = [2, 128], strides = [1, 1]} : vector<2x384xf32> to vector<2x128xf32>
    %99 = arith.mulf %86, %98 : vector<2x128xf32>
    %100 = arith.addf %97, %99 : vector<2x128xf32>
    %101 = math.tanh %100 : vector<2x128xf32>
    %cst_55 = arith.constant 1.000000e+00 : f32
    %102 = vector.broadcast %cst_55 : f32 to vector<2x128xf32>
    %103 = arith.subf %102, %96 : vector<2x128xf32>
    %104 = arith.mulf %103, %101 : vector<2x128xf32>
    %105 = arith.mulf %96, %30 : vector<2x128xf32>
    %106 = arith.addf %104, %105 : vector<2x128xf32>
    %107 = arith.mulf %26, %106 : vector<2x128xf32>
    %108 = arith.addf %76, %107 : vector<2x128xf32>
    %109 = arith.mulf %108, %14 : vector<2x128xf32>
    %110 = arith.addf %109, %18 : vector<2x128xf32>
    %cst_56 = arith.constant 0.000000e+00 : f32
    %111 = vector.broadcast %cst_56 : f32 to vector<2x128xf32>
    %112 = arith.cmpf oge, %110, %111 : vector<2x128xf32>
    %113 = arith.mulf %22, %110 : vector<2x128xf32>
    %114 = arith.select %112, %110, %113 : vector<2x128xi1>, vector<2x128xf32>
    %115 = vector.extract_strided_slice %114 {offsets = [0, 0], sizes = [2, 64], strides = [1, 1]} : vector<2x128xf32> to vector<2x64xf32>
    %c0_57 = arith.constant 0 : index
    %c0_58 = arith.constant 0 : index
    %c0_59 = arith.constant 0 : index
    %116 = vector.load %arg7[%c0_57, %c0_58, %c0_59] : memref<1x16x64xf32, #tpu.memory_space<vmem>>, vector<1x2x64xf32>
    %117 = vector.shape_cast %116 : vector<1x2x64xf32> to vector<2x64xf32>
    %118 = vector.shape_cast %115 : vector<2x64xf32> to vector<1x2x64xf32>
    tpu.vector_store %arg7[%c0_57, %c0_58, %c0_59], %118 {strides = array<i32>} : memref<1x16x64xf32, #tpu.memory_space<vmem>>, vector<1x2x64xf32>,
    %c0_60 = arith.constant 0 : index
    %c2_61 = arith.constant 2 : index
    %c0_62 = arith.constant 0 : index
    %119 = vector.load %arg2[%c0_60, %c2_61, %c0_62] : memref<1x16x384xbf16, #tpu.memory_space<vmem>>, vector<1x2x384xbf16>
    %120 = vector.shape_cast %119 : vector<1x2x384xbf16> to vector<2x384xbf16>
    %121 = arith.extf %120 : vector<2x384xbf16> to vector<2x384xf32>
    %c0_63 = arith.constant 0 : index
    %c2_64 = arith.constant 2 : index
    %c0_65 = arith.constant 0 : index
    %122 = vector.load %arg3[%c0_63, %c2_64, %c0_65] : memref<1x16x384xbf16, #tpu.memory_space<vmem>>, vector<1x2x384xbf16>
    %123 = vector.shape_cast %122 : vector<1x2x384xbf16> to vector<2x384xbf16>
    %124 = arith.extf %123 : vector<2x384xbf16> to vector<2x384xf32>
    %125 = arith.truncf %76 : vector<2x128xf32> to vector<2x128xbf16>
    %c0_66 = arith.constant 0 : index
    %c0_67 = arith.constant 0 : index
    %c0_68 = arith.constant 0 : index
    %c0_69 = arith.constant 0 : index
    %126 = vector.load %arg4[%c0_66, %c0_67, %c0_68, %c0_69] : memref<1x2x128x384xbf16, #tpu.memory_space<vmem>>, vector<1x1x128x384xbf16>
    %127 = vector.shape_cast %126 : vector<1x1x128x384xbf16> to vector<128x384xbf16>
    %cst_70 = arith.constant dense<0.000000e+00> : vector<2x384xf32>
    %128 = tpu.matmul %125, %127, %cst_70 {dimension_numbers = #tpu.dot_dimension_numbers<[1], [0], [0], [1], [0, 0, 1, 1], [], []>} : vector<2x128xbf16>, vector<128x384xbf16>, vector<2x384xf32> -> vector<2x384xf32>
    %129 = arith.addf %128, %6 : vector<2x384xf32>
    %130 = arith.truncf %106 : vector<2x128xf32> to vector<2x128xbf16>
    %c0_71 = arith.constant 0 : index
    %c1_72 = arith.constant 1 : index
    %c0_73 = arith.constant 0 : index
    %c0_74 = arith.constant 0 : index
    %131 = vector.load %arg4[%c0_71, %c1_72, %c0_73, %c0_74] : memref<1x2x128x384xbf16, #tpu.memory_space<vmem>>, vector<1x1x128x384xbf16>
    %132 = vector.shape_cast %131 : vector<1x1x128x384xbf16> to vector<128x384xbf16>
    %cst_75 = arith.constant dense<0.000000e+00> : vector<2x384xf32>
    %133 = tpu.matmul %130, %132, %cst_75 {dimension_numbers = #tpu.dot_dimension_numbers<[1], [0], [0], [1], [0, 0, 1, 1], [], []>} : vector<2x128xbf16>, vector<128x384xbf16>, vector<2x384xf32> -> vector<2x384xf32>
    %134 = arith.addf %133, %10 : vector<2x384xf32>
    %135 = vector.extract_strided_slice %121 {offsets = [0, 0], sizes = [2, 128], strides = [1, 1]} : vector<2x384xf32> to vector<2x128xf32>
    %136 = vector.extract_strided_slice %129 {offsets = [0, 0], sizes = [2, 128], strides = [1, 1]} : vector<2x384xf32> to vector<2x128xf32>
    %137 = arith.addf %135, %136 : vector<2x128xf32>
    %cst_76 = arith.constant 5.000000e-01 : f32
    %138 = vector.broadcast %cst_76 : f32 to vector<2x128xf32>
    %139 = arith.mulf %138, %137 : vector<2x128xf32>
    %140 = math.tanh %139 : vector<2x128xf32>
    %cst_77 = arith.constant 5.000000e-01 : f32
    %141 = vector.broadcast %cst_77 : f32 to vector<2x128xf32>
    %142 = arith.mulf %141, %140 : vector<2x128xf32>
    %cst_78 = arith.constant 5.000000e-01 : f32
    %143 = vector.broadcast %cst_78 : f32 to vector<2x128xf32>
    %144 = arith.addf %142, %143 : vector<2x128xf32>
    %145 = vector.extract_strided_slice %121 {offsets = [0, 128], sizes = [2, 128], strides = [1, 1]} : vector<2x384xf32> to vector<2x128xf32>
    %146 = vector.extract_strided_slice %129 {offsets = [0, 128], sizes = [2, 128], strides = [1, 1]} : vector<2x384xf32> to vector<2x128xf32>
    %147 = arith.addf %145, %146 : vector<2x128xf32>
    %cst_79 = arith.constant 5.000000e-01 : f32
    %148 = vector.broadcast %cst_79 : f32 to vector<2x128xf32>
    %149 = arith.mulf %148, %147 : vector<2x128xf32>
    %150 = math.tanh %149 : vector<2x128xf32>
    %cst_80 = arith.constant 5.000000e-01 : f32
    %151 = vector.broadcast %cst_80 : f32 to vector<2x128xf32>
    %152 = arith.mulf %151, %150 : vector<2x128xf32>
    %cst_81 = arith.constant 5.000000e-01 : f32
    %153 = vector.broadcast %cst_81 : f32 to vector<2x128xf32>
    %154 = arith.addf %152, %153 : vector<2x128xf32>
    %155 = vector.extract_strided_slice %121 {offsets = [0, 256], sizes = [2, 128], strides = [1, 1]} : vector<2x384xf32> to vector<2x128xf32>
    %156 = vector.extract_strided_slice %129 {offsets = [0, 256], sizes = [2, 128], strides = [1, 1]} : vector<2x384xf32> to vector<2x128xf32>
    %157 = arith.mulf %144, %156 : vector<2x128xf32>
    %158 = arith.addf %155, %157 : vector<2x128xf32>
    %159 = math.tanh %158 : vector<2x128xf32>
    %cst_82 = arith.constant 1.000000e+00 : f32
    %160 = vector.broadcast %cst_82 : f32 to vector<2x128xf32>
    %161 = arith.subf %160, %154 : vector<2x128xf32>
    %162 = arith.mulf %161, %159 : vector<2x128xf32>
    %163 = arith.mulf %154, %76 : vector<2x128xf32>
    %164 = arith.addf %162, %163 : vector<2x128xf32>
    %165 = vector.extract_strided_slice %124 {offsets = [0, 0], sizes = [2, 128], strides = [1, 1]} : vector<2x384xf32> to vector<2x128xf32>
    %166 = vector.extract_strided_slice %134 {offsets = [0, 0], sizes = [2, 128], strides = [1, 1]} : vector<2x384xf32> to vector<2x128xf32>
    %167 = arith.addf %165, %166 : vector<2x128xf32>
    %cst_83 = arith.constant 5.000000e-01 : f32
    %168 = vector.broadcast %cst_83 : f32 to vector<2x128xf32>
    %169 = arith.mulf %168, %167 : vector<2x128xf32>
    %170 = math.tanh %169 : vector<2x128xf32>
    %cst_84 = arith.constant 5.000000e-01 : f32
    %171 = vector.broadcast %cst_84 : f32 to vector<2x128xf32>
    %172 = arith.mulf %171, %170 : vector<2x128xf32>
    %cst_85 = arith.constant 5.000000e-01 : f32
    %173 = vector.broadcast %cst_85 : f32 to vector<2x128xf32>
    %174 = arith.addf %172, %173 : vector<2x128xf32>
    %175 = vector.extract_strided_slice %124 {offsets = [0, 128], sizes = [2, 128], strides = [1, 1]} : vector<2x384xf32> to vector<2x128xf32>
    %176 = vector.extract_strided_slice %134 {offsets = [0, 128], sizes = [2, 128], strides = [1, 1]} : vector<2x384xf32> to vector<2x128xf32>
    %177 = arith.addf %175, %176 : vector<2x128xf32>
    %cst_86 = arith.constant 5.000000e-01 : f32
    %178 = vector.broadcast %cst_86 : f32 to vector<2x128xf32>
    %179 = arith.mulf %178, %177 : vector<2x128xf32>
    %180 = math.tanh %179 : vector<2x128xf32>
    %cst_87 = arith.constant 5.000000e-01 : f32
    %181 = vector.broadcast %cst_87 : f32 to vector<2x128xf32>
    %182 = arith.mulf %181, %180 : vector<2x128xf32>
    %cst_88 = arith.constant 5.000000e-01 : f32
    %183 = vector.broadcast %cst_88 : f32 to vector<2x128xf32>
    %184 = arith.addf %182, %183 : vector<2x128xf32>
    %185 = vector.extract_strided_slice %124 {offsets = [0, 256], sizes = [2, 128], strides = [1, 1]} : vector<2x384xf32> to vector<2x128xf32>
    %186 = vector.extract_strided_slice %134 {offsets = [0, 256], sizes = [2, 128], strides = [1, 1]} : vector<2x384xf32> to vector<2x128xf32>
    %187 = arith.mulf %174, %186 : vector<2x128xf32>
    %188 = arith.addf %185, %187 : vector<2x128xf32>
    %189 = math.tanh %188 : vector<2x128xf32>
    %cst_89 = arith.constant 1.000000e+00 : f32
    %190 = vector.broadcast %cst_89 : f32 to vector<2x128xf32>
    %191 = arith.subf %190, %184 : vector<2x128xf32>
    %192 = arith.mulf %191, %189 : vector<2x128xf32>
    %193 = arith.mulf %184, %106 : vector<2x128xf32>
    %194 = arith.addf %192, %193 : vector<2x128xf32>
    %195 = arith.mulf %26, %194 : vector<2x128xf32>
    %196 = arith.addf %164, %195 : vector<2x128xf32>
    %197 = arith.mulf %196, %14 : vector<2x128xf32>
    %198 = arith.addf %197, %18 : vector<2x128xf32>
    %cst_90 = arith.constant 0.000000e+00 : f32
    %199 = vector.broadcast %cst_90 : f32 to vector<2x128xf32>
    %200 = arith.cmpf oge, %198, %199 : vector<2x128xf32>
    %201 = arith.mulf %22, %198 : vector<2x128xf32>
    %202 = arith.select %200, %198, %201 : vector<2x128xi1>, vector<2x128xf32>
    %203 = vector.extract_strided_slice %202 {offsets = [0, 0], sizes = [2, 64], strides = [1, 1]} : vector<2x128xf32> to vector<2x64xf32>
    %c0_91 = arith.constant 0 : index
    %c2_92 = arith.constant 2 : index
    %c0_93 = arith.constant 0 : index
    %204 = vector.load %arg7[%c0_91, %c2_92, %c0_93] : memref<1x16x64xf32, #tpu.memory_space<vmem>>, vector<1x2x64xf32>
    %205 = vector.shape_cast %204 : vector<1x2x64xf32> to vector<2x64xf32>
    %206 = vector.shape_cast %203 : vector<2x64xf32> to vector<1x2x64xf32>
    tpu.vector_store %arg7[%c0_91, %c2_92, %c0_93], %206 {strides = array<i32>} : memref<1x16x64xf32, #tpu.memory_space<vmem>>, vector<1x2x64xf32>,
    %c0_94 = arith.constant 0 : index
    %c4 = arith.constant 4 : index
    %c0_95 = arith.constant 0 : index
    %207 = vector.load %arg2[%c0_94, %c4, %c0_95] : memref<1x16x384xbf16, #tpu.memory_space<vmem>>, vector<1x2x384xbf16>
    %208 = vector.shape_cast %207 : vector<1x2x384xbf16> to vector<2x384xbf16>
    %209 = arith.extf %208 : vector<2x384xbf16> to vector<2x384xf32>
    %c0_96 = arith.constant 0 : index
    %c4_97 = arith.constant 4 : index
    %c0_98 = arith.constant 0 : index
    %210 = vector.load %arg3[%c0_96, %c4_97, %c0_98] : memref<1x16x384xbf16, #tpu.memory_space<vmem>>, vector<1x2x384xbf16>
    %211 = vector.shape_cast %210 : vector<1x2x384xbf16> to vector<2x384xbf16>
    %212 = arith.extf %211 : vector<2x384xbf16> to vector<2x384xf32>
    %213 = arith.truncf %164 : vector<2x128xf32> to vector<2x128xbf16>
    %c0_99 = arith.constant 0 : index
    %c0_100 = arith.constant 0 : index
    %c0_101 = arith.constant 0 : index
    %c0_102 = arith.constant 0 : index
    %214 = vector.load %arg4[%c0_99, %c0_100, %c0_101, %c0_102] : memref<1x2x128x384xbf16, #tpu.memory_space<vmem>>, vector<1x1x128x384xbf16>
    %215 = vector.shape_cast %214 : vector<1x1x128x384xbf16> to vector<128x384xbf16>
    %cst_103 = arith.constant dense<0.000000e+00> : vector<2x384xf32>
    %216 = tpu.matmul %213, %215, %cst_103 {dimension_numbers = #tpu.dot_dimension_numbers<[1], [0], [0], [1], [0, 0, 1, 1], [], []>} : vector<2x128xbf16>, vector<128x384xbf16>, vector<2x384xf32> -> vector<2x384xf32>
    %217 = arith.addf %216, %6 : vector<2x384xf32>
    %218 = arith.truncf %194 : vector<2x128xf32> to vector<2x128xbf16>
    %c0_104 = arith.constant 0 : index
    %c1_105 = arith.constant 1 : index
    %c0_106 = arith.constant 0 : index
    %c0_107 = arith.constant 0 : index
    %219 = vector.load %arg4[%c0_104, %c1_105, %c0_106, %c0_107] : memref<1x2x128x384xbf16, #tpu.memory_space<vmem>>, vector<1x1x128x384xbf16>
    %220 = vector.shape_cast %219 : vector<1x1x128x384xbf16> to vector<128x384xbf16>
    %cst_108 = arith.constant dense<0.000000e+00> : vector<2x384xf32>
    %221 = tpu.matmul %218, %220, %cst_108 {dimension_numbers = #tpu.dot_dimension_numbers<[1], [0], [0], [1], [0, 0, 1, 1], [], []>} : vector<2x128xbf16>, vector<128x384xbf16>, vector<2x384xf32> -> vector<2x384xf32>
    %222 = arith.addf %221, %10 : vector<2x384xf32>
    %223 = vector.extract_strided_slice %209 {offsets = [0, 0], sizes = [2, 128], strides = [1, 1]} : vector<2x384xf32> to vector<2x128xf32>
    %224 = vector.extract_strided_slice %217 {offsets = [0, 0], sizes = [2, 128], strides = [1, 1]} : vector<2x384xf32> to vector<2x128xf32>
    %225 = arith.addf %223, %224 : vector<2x128xf32>
    %cst_109 = arith.constant 5.000000e-01 : f32
    %226 = vector.broadcast %cst_109 : f32 to vector<2x128xf32>
    %227 = arith.mulf %226, %225 : vector<2x128xf32>
    %228 = math.tanh %227 : vector<2x128xf32>
    %cst_110 = arith.constant 5.000000e-01 : f32
    %229 = vector.broadcast %cst_110 : f32 to vector<2x128xf32>
    %230 = arith.mulf %229, %228 : vector<2x128xf32>
    %cst_111 = arith.constant 5.000000e-01 : f32
    %231 = vector.broadcast %cst_111 : f32 to vector<2x128xf32>
    %232 = arith.addf %230, %231 : vector<2x128xf32>
    %233 = vector.extract_strided_slice %209 {offsets = [0, 128], sizes = [2, 128], strides = [1, 1]} : vector<2x384xf32> to vector<2x128xf32>
    %234 = vector.extract_strided_slice %217 {offsets = [0, 128], sizes = [2, 128], strides = [1, 1]} : vector<2x384xf32> to vector<2x128xf32>
    %235 = arith.addf %233, %234 : vector<2x128xf32>
    %cst_112 = arith.constant 5.000000e-01 : f32
    %236 = vector.broadcast %cst_112 : f32 to vector<2x128xf32>
    %237 = arith.mulf %236, %235 : vector<2x128xf32>
    %238 = math.tanh %237 : vector<2x128xf32>
    %cst_113 = arith.constant 5.000000e-01 : f32
    %239 = vector.broadcast %cst_113 : f32 to vector<2x128xf32>
    %240 = arith.mulf %239, %238 : vector<2x128xf32>
    %cst_114 = arith.constant 5.000000e-01 : f32
    %241 = vector.broadcast %cst_114 : f32 to vector<2x128xf32>
    %242 = arith.addf %240, %241 : vector<2x128xf32>
    %243 = vector.extract_strided_slice %209 {offsets = [0, 256], sizes = [2, 128], strides = [1, 1]} : vector<2x384xf32> to vector<2x128xf32>
    %244 = vector.extract_strided_slice %217 {offsets = [0, 256], sizes = [2, 128], strides = [1, 1]} : vector<2x384xf32> to vector<2x128xf32>
    %245 = arith.mulf %232, %244 : vector<2x128xf32>
    %246 = arith.addf %243, %245 : vector<2x128xf32>
    %247 = math.tanh %246 : vector<2x128xf32>
    %cst_115 = arith.constant 1.000000e+00 : f32
    %248 = vector.broadcast %cst_115 : f32 to vector<2x128xf32>
    %249 = arith.subf %248, %242 : vector<2x128xf32>
    %250 = arith.mulf %249, %247 : vector<2x128xf32>
    %251 = arith.mulf %242, %164 : vector<2x128xf32>
    %252 = arith.addf %250, %251 : vector<2x128xf32>
    %253 = vector.extract_strided_slice %212 {offsets = [0, 0], sizes = [2, 128], strides = [1, 1]} : vector<2x384xf32> to vector<2x128xf32>
    %254 = vector.extract_strided_slice %222 {offsets = [0, 0], sizes = [2, 128], strides = [1, 1]} : vector<2x384xf32> to vector<2x128xf32>
    %255 = arith.addf %253, %254 : vector<2x128xf32>
    %cst_116 = arith.constant 5.000000e-01 : f32
    %256 = vector.broadcast %cst_116 : f32 to vector<2x128xf32>
    %257 = arith.mulf %256, %255 : vector<2x128xf32>
    %258 = math.tanh %257 : vector<2x128xf32>
    %cst_117 = arith.constant 5.000000e-01 : f32
    %259 = vector.broadcast %cst_117 : f32 to vector<2x128xf32>
    %260 = arith.mulf %259, %258 : vector<2x128xf32>
    %cst_118 = arith.constant 5.000000e-01 : f32
    %261 = vector.broadcast %cst_118 : f32 to vector<2x128xf32>
    %262 = arith.addf %260, %261 : vector<2x128xf32>
    %263 = vector.extract_strided_slice %212 {offsets = [0, 128], sizes = [2, 128], strides = [1, 1]} : vector<2x384xf32> to vector<2x128xf32>
    %264 = vector.extract_strided_slice %222 {offsets = [0, 128], sizes = [2, 128], strides = [1, 1]} : vector<2x384xf32> to vector<2x128xf32>
    %265 = arith.addf %263, %264 : vector<2x128xf32>
    %cst_119 = arith.constant 5.000000e-01 : f32
    %266 = vector.broadcast %cst_119 : f32 to vector<2x128xf32>
    %267 = arith.mulf %266, %265 : vector<2x128xf32>
    %268 = math.tanh %267 : vector<2x128xf32>
    %cst_120 = arith.constant 5.000000e-01 : f32
    %269 = vector.broadcast %cst_120 : f32 to vector<2x128xf32>
    %270 = arith.mulf %269, %268 : vector<2x128xf32>
    %cst_121 = arith.constant 5.000000e-01 : f32
    %271 = vector.broadcast %cst_121 : f32 to vector<2x128xf32>
    %272 = arith.addf %270, %271 : vector<2x128xf32>
    %273 = vector.extract_strided_slice %212 {offsets = [0, 256], sizes = [2, 128], strides = [1, 1]} : vector<2x384xf32> to vector<2x128xf32>
    %274 = vector.extract_strided_slice %222 {offsets = [0, 256], sizes = [2, 128], strides = [1, 1]} : vector<2x384xf32> to vector<2x128xf32>
    %275 = arith.mulf %262, %274 : vector<2x128xf32>
    %276 = arith.addf %273, %275 : vector<2x128xf32>
    %277 = math.tanh %276 : vector<2x128xf32>
    %cst_122 = arith.constant 1.000000e+00 : f32
    %278 = vector.broadcast %cst_122 : f32 to vector<2x128xf32>
    %279 = arith.subf %278, %272 : vector<2x128xf32>
    %280 = arith.mulf %279, %277 : vector<2x128xf32>
    %281 = arith.mulf %272, %194 : vector<2x128xf32>
    %282 = arith.addf %280, %281 : vector<2x128xf32>
    %283 = arith.mulf %26, %282 : vector<2x128xf32>
    %284 = arith.addf %252, %283 : vector<2x128xf32>
    %285 = arith.mulf %284, %14 : vector<2x128xf32>
    %286 = arith.addf %285, %18 : vector<2x128xf32>
    %cst_123 = arith.constant 0.000000e+00 : f32
    %287 = vector.broadcast %cst_123 : f32 to vector<2x128xf32>
    %288 = arith.cmpf oge, %286, %287 : vector<2x128xf32>
    %289 = arith.mulf %22, %286 : vector<2x128xf32>
    %290 = arith.select %288, %286, %289 : vector<2x128xi1>, vector<2x128xf32>
    %291 = vector.extract_strided_slice %290 {offsets = [0, 0], sizes = [2, 64], strides = [1, 1]} : vector<2x128xf32> to vector<2x64xf32>
    %c0_124 = arith.constant 0 : index
    %c4_125 = arith.constant 4 : index
    %c0_126 = arith.constant 0 : index
    %292 = vector.load %arg7[%c0_124, %c4_125, %c0_126] : memref<1x16x64xf32, #tpu.memory_space<vmem>>, vector<1x2x64xf32>
    %293 = vector.shape_cast %292 : vector<1x2x64xf32> to vector<2x64xf32>
    %294 = vector.shape_cast %291 : vector<2x64xf32> to vector<1x2x64xf32>
    tpu.vector_store %arg7[%c0_124, %c4_125, %c0_126], %294 {strides = array<i32>} : memref<1x16x64xf32, #tpu.memory_space<vmem>>, vector<1x2x64xf32>,
    %c0_127 = arith.constant 0 : index
    %c6 = arith.constant 6 : index
    %c0_128 = arith.constant 0 : index
    %295 = vector.load %arg2[%c0_127, %c6, %c0_128] : memref<1x16x384xbf16, #tpu.memory_space<vmem>>, vector<1x2x384xbf16>
    %296 = vector.shape_cast %295 : vector<1x2x384xbf16> to vector<2x384xbf16>
    %297 = arith.extf %296 : vector<2x384xbf16> to vector<2x384xf32>
    %c0_129 = arith.constant 0 : index
    %c6_130 = arith.constant 6 : index
    %c0_131 = arith.constant 0 : index
    %298 = vector.load %arg3[%c0_129, %c6_130, %c0_131] : memref<1x16x384xbf16, #tpu.memory_space<vmem>>, vector<1x2x384xbf16>
    %299 = vector.shape_cast %298 : vector<1x2x384xbf16> to vector<2x384xbf16>
    %300 = arith.extf %299 : vector<2x384xbf16> to vector<2x384xf32>
    %301 = arith.truncf %252 : vector<2x128xf32> to vector<2x128xbf16>
    %c0_132 = arith.constant 0 : index
    %c0_133 = arith.constant 0 : index
    %c0_134 = arith.constant 0 : index
    %c0_135 = arith.constant 0 : index
    %302 = vector.load %arg4[%c0_132, %c0_133, %c0_134, %c0_135] : memref<1x2x128x384xbf16, #tpu.memory_space<vmem>>, vector<1x1x128x384xbf16>
    %303 = vector.shape_cast %302 : vector<1x1x128x384xbf16> to vector<128x384xbf16>
    %cst_136 = arith.constant dense<0.000000e+00> : vector<2x384xf32>
    %304 = tpu.matmul %301, %303, %cst_136 {dimension_numbers = #tpu.dot_dimension_numbers<[1], [0], [0], [1], [0, 0, 1, 1], [], []>} : vector<2x128xbf16>, vector<128x384xbf16>, vector<2x384xf32> -> vector<2x384xf32>
    %305 = arith.addf %304, %6 : vector<2x384xf32>
    %306 = arith.truncf %282 : vector<2x128xf32> to vector<2x128xbf16>
    %c0_137 = arith.constant 0 : index
    %c1_138 = arith.constant 1 : index
    %c0_139 = arith.constant 0 : index
    %c0_140 = arith.constant 0 : index
    %307 = vector.load %arg4[%c0_137, %c1_138, %c0_139, %c0_140] : memref<1x2x128x384xbf16, #tpu.memory_space<vmem>>, vector<1x1x128x384xbf16>
    %308 = vector.shape_cast %307 : vector<1x1x128x384xbf16> to vector<128x384xbf16>
    %cst_141 = arith.constant dense<0.000000e+00> : vector<2x384xf32>
    %309 = tpu.matmul %306, %308, %cst_141 {dimension_numbers = #tpu.dot_dimension_numbers<[1], [0], [0], [1], [0, 0, 1, 1], [], []>} : vector<2x128xbf16>, vector<128x384xbf16>, vector<2x384xf32> -> vector<2x384xf32>
    %310 = arith.addf %309, %10 : vector<2x384xf32>
    %311 = vector.extract_strided_slice %297 {offsets = [0, 0], sizes = [2, 128], strides = [1, 1]} : vector<2x384xf32> to vector<2x128xf32>
    %312 = vector.extract_strided_slice %305 {offsets = [0, 0], sizes = [2, 128], strides = [1, 1]} : vector<2x384xf32> to vector<2x128xf32>
    %313 = arith.addf %311, %312 : vector<2x128xf32>
    %cst_142 = arith.constant 5.000000e-01 : f32
    %314 = vector.broadcast %cst_142 : f32 to vector<2x128xf32>
    %315 = arith.mulf %314, %313 : vector<2x128xf32>
    %316 = math.tanh %315 : vector<2x128xf32>
    %cst_143 = arith.constant 5.000000e-01 : f32
    %317 = vector.broadcast %cst_143 : f32 to vector<2x128xf32>
    %318 = arith.mulf %317, %316 : vector<2x128xf32>
    %cst_144 = arith.constant 5.000000e-01 : f32
    %319 = vector.broadcast %cst_144 : f32 to vector<2x128xf32>
    %320 = arith.addf %318, %319 : vector<2x128xf32>
    %321 = vector.extract_strided_slice %297 {offsets = [0, 128], sizes = [2, 128], strides = [1, 1]} : vector<2x384xf32> to vector<2x128xf32>
    %322 = vector.extract_strided_slice %305 {offsets = [0, 128], sizes = [2, 128], strides = [1, 1]} : vector<2x384xf32> to vector<2x128xf32>
    %323 = arith.addf %321, %322 : vector<2x128xf32>
    %cst_145 = arith.constant 5.000000e-01 : f32
    %324 = vector.broadcast %cst_145 : f32 to vector<2x128xf32>
    %325 = arith.mulf %324, %323 : vector<2x128xf32>
    %326 = math.tanh %325 : vector<2x128xf32>
    %cst_146 = arith.constant 5.000000e-01 : f32
    %327 = vector.broadcast %cst_146 : f32 to vector<2x128xf32>
    %328 = arith.mulf %327, %326 : vector<2x128xf32>
    %cst_147 = arith.constant 5.000000e-01 : f32
    %329 = vector.broadcast %cst_147 : f32 to vector<2x128xf32>
    %330 = arith.addf %328, %329 : vector<2x128xf32>
    %331 = vector.extract_strided_slice %297 {offsets = [0, 256], sizes = [2, 128], strides = [1, 1]} : vector<2x384xf32> to vector<2x128xf32>
    %332 = vector.extract_strided_slice %305 {offsets = [0, 256], sizes = [2, 128], strides = [1, 1]} : vector<2x384xf32> to vector<2x128xf32>
    %333 = arith.mulf %320, %332 : vector<2x128xf32>
    %334 = arith.addf %331, %333 : vector<2x128xf32>
    %335 = math.tanh %334 : vector<2x128xf32>
    %cst_148 = arith.constant 1.000000e+00 : f32
    %336 = vector.broadcast %cst_148 : f32 to vector<2x128xf32>
    %337 = arith.subf %336, %330 : vector<2x128xf32>
    %338 = arith.mulf %337, %335 : vector<2x128xf32>
    %339 = arith.mulf %330, %252 : vector<2x128xf32>
    %340 = arith.addf %338, %339 : vector<2x128xf32>
    %341 = vector.extract_strided_slice %300 {offsets = [0, 0], sizes = [2, 128], strides = [1, 1]} : vector<2x384xf32> to vector<2x128xf32>
    %342 = vector.extract_strided_slice %310 {offsets = [0, 0], sizes = [2, 128], strides = [1, 1]} : vector<2x384xf32> to vector<2x128xf32>
    %343 = arith.addf %341, %342 : vector<2x128xf32>
    %cst_149 = arith.constant 5.000000e-01 : f32
    %344 = vector.broadcast %cst_149 : f32 to vector<2x128xf32>
    %345 = arith.mulf %344, %343 : vector<2x128xf32>
    %346 = math.tanh %345 : vector<2x128xf32>
    %cst_150 = arith.constant 5.000000e-01 : f32
    %347 = vector.broadcast %cst_150 : f32 to vector<2x128xf32>
    %348 = arith.mulf %347, %346 : vector<2x128xf32>
    %cst_151 = arith.constant 5.000000e-01 : f32
    %349 = vector.broadcast %cst_151 : f32 to vector<2x128xf32>
    %350 = arith.addf %348, %349 : vector<2x128xf32>
    %351 = vector.extract_strided_slice %300 {offsets = [0, 128], sizes = [2, 128], strides = [1, 1]} : vector<2x384xf32> to vector<2x128xf32>
    %352 = vector.extract_strided_slice %310 {offsets = [0, 128], sizes = [2, 128], strides = [1, 1]} : vector<2x384xf32> to vector<2x128xf32>
    %353 = arith.addf %351, %352 : vector<2x128xf32>
    %cst_152 = arith.constant 5.000000e-01 : f32
    %354 = vector.broadcast %cst_152 : f32 to vector<2x128xf32>
    %355 = arith.mulf %354, %353 : vector<2x128xf32>
    %356 = math.tanh %355 : vector<2x128xf32>
    %cst_153 = arith.constant 5.000000e-01 : f32
    %357 = vector.broadcast %cst_153 : f32 to vector<2x128xf32>
    %358 = arith.mulf %357, %356 : vector<2x128xf32>
    %cst_154 = arith.constant 5.000000e-01 : f32
    %359 = vector.broadcast %cst_154 : f32 to vector<2x128xf32>
    %360 = arith.addf %358, %359 : vector<2x128xf32>
    %361 = vector.extract_strided_slice %300 {offsets = [0, 256], sizes = [2, 128], strides = [1, 1]} : vector<2x384xf32> to vector<2x128xf32>
    %362 = vector.extract_strided_slice %310 {offsets = [0, 256], sizes = [2, 128], strides = [1, 1]} : vector<2x384xf32> to vector<2x128xf32>
    %363 = arith.mulf %350, %362 : vector<2x128xf32>
    %364 = arith.addf %361, %363 : vector<2x128xf32>
    %365 = math.tanh %364 : vector<2x128xf32>
    %cst_155 = arith.constant 1.000000e+00 : f32
    %366 = vector.broadcast %cst_155 : f32 to vector<2x128xf32>
    %367 = arith.subf %366, %360 : vector<2x128xf32>
    %368 = arith.mulf %367, %365 : vector<2x128xf32>
    %369 = arith.mulf %360, %282 : vector<2x128xf32>
    %370 = arith.addf %368, %369 : vector<2x128xf32>
    %371 = arith.mulf %26, %370 : vector<2x128xf32>
    %372 = arith.addf %340, %371 : vector<2x128xf32>
    %373 = arith.mulf %372, %14 : vector<2x128xf32>
    %374 = arith.addf %373, %18 : vector<2x128xf32>
    %cst_156 = arith.constant 0.000000e+00 : f32
    %375 = vector.broadcast %cst_156 : f32 to vector<2x128xf32>
    %376 = arith.cmpf oge, %374, %375 : vector<2x128xf32>
    %377 = arith.mulf %22, %374 : vector<2x128xf32>
    %378 = arith.select %376, %374, %377 : vector<2x128xi1>, vector<2x128xf32>
    %379 = vector.extract_strided_slice %378 {offsets = [0, 0], sizes = [2, 64], strides = [1, 1]} : vector<2x128xf32> to vector<2x64xf32>
    %c0_157 = arith.constant 0 : index
    %c6_158 = arith.constant 6 : index
    %c0_159 = arith.constant 0 : index
    %380 = vector.load %arg7[%c0_157, %c6_158, %c0_159] : memref<1x16x64xf32, #tpu.memory_space<vmem>>, vector<1x2x64xf32>
    %381 = vector.shape_cast %380 : vector<1x2x64xf32> to vector<2x64xf32>
    %382 = vector.shape_cast %379 : vector<2x64xf32> to vector<1x2x64xf32>
    tpu.vector_store %arg7[%c0_157, %c6_158, %c0_159], %382 {strides = array<i32>} : memref<1x16x64xf32, #tpu.memory_space<vmem>>, vector<1x2x64xf32>,
    %c0_160 = arith.constant 0 : index
    %c8 = arith.constant 8 : index
    %c0_161 = arith.constant 0 : index
    %383 = vector.load %arg2[%c0_160, %c8, %c0_161] : memref<1x16x384xbf16, #tpu.memory_space<vmem>>, vector<1x2x384xbf16>
    %384 = vector.shape_cast %383 : vector<1x2x384xbf16> to vector<2x384xbf16>
    %385 = arith.extf %384 : vector<2x384xbf16> to vector<2x384xf32>
    %c0_162 = arith.constant 0 : index
    %c8_163 = arith.constant 8 : index
    %c0_164 = arith.constant 0 : index
    %386 = vector.load %arg3[%c0_162, %c8_163, %c0_164] : memref<1x16x384xbf16, #tpu.memory_space<vmem>>, vector<1x2x384xbf16>
    %387 = vector.shape_cast %386 : vector<1x2x384xbf16> to vector<2x384xbf16>
    %388 = arith.extf %387 : vector<2x384xbf16> to vector<2x384xf32>
    %389 = arith.truncf %340 : vector<2x128xf32> to vector<2x128xbf16>
    %c0_165 = arith.constant 0 : index
    %c0_166 = arith.constant 0 : index
    %c0_167 = arith.constant 0 : index
    %c0_168 = arith.constant 0 : index
    %390 = vector.load %arg4[%c0_165, %c0_166, %c0_167, %c0_168] : memref<1x2x128x384xbf16, #tpu.memory_space<vmem>>, vector<1x1x128x384xbf16>
    %391 = vector.shape_cast %390 : vector<1x1x128x384xbf16> to vector<128x384xbf16>
    %cst_169 = arith.constant dense<0.000000e+00> : vector<2x384xf32>
    %392 = tpu.matmul %389, %391, %cst_169 {dimension_numbers = #tpu.dot_dimension_numbers<[1], [0], [0], [1], [0, 0, 1, 1], [], []>} : vector<2x128xbf16>, vector<128x384xbf16>, vector<2x384xf32> -> vector<2x384xf32>
    %393 = arith.addf %392, %6 : vector<2x384xf32>
    %394 = arith.truncf %370 : vector<2x128xf32> to vector<2x128xbf16>
    %c0_170 = arith.constant 0 : index
    %c1_171 = arith.constant 1 : index
    %c0_172 = arith.constant 0 : index
    %c0_173 = arith.constant 0 : index
    %395 = vector.load %arg4[%c0_170, %c1_171, %c0_172, %c0_173] : memref<1x2x128x384xbf16, #tpu.memory_space<vmem>>, vector<1x1x128x384xbf16>
    %396 = vector.shape_cast %395 : vector<1x1x128x384xbf16> to vector<128x384xbf16>
    %cst_174 = arith.constant dense<0.000000e+00> : vector<2x384xf32>
    %397 = tpu.matmul %394, %396, %cst_174 {dimension_numbers = #tpu.dot_dimension_numbers<[1], [0], [0], [1], [0, 0, 1, 1], [], []>} : vector<2x128xbf16>, vector<128x384xbf16>, vector<2x384xf32> -> vector<2x384xf32>
    %398 = arith.addf %397, %10 : vector<2x384xf32>
    %399 = vector.extract_strided_slice %385 {offsets = [0, 0], sizes = [2, 128], strides = [1, 1]} : vector<2x384xf32> to vector<2x128xf32>
    %400 = vector.extract_strided_slice %393 {offsets = [0, 0], sizes = [2, 128], strides = [1, 1]} : vector<2x384xf32> to vector<2x128xf32>
    %401 = arith.addf %399, %400 : vector<2x128xf32>
    %cst_175 = arith.constant 5.000000e-01 : f32
    %402 = vector.broadcast %cst_175 : f32 to vector<2x128xf32>
    %403 = arith.mulf %402, %401 : vector<2x128xf32>
    %404 = math.tanh %403 : vector<2x128xf32>
    %cst_176 = arith.constant 5.000000e-01 : f32
    %405 = vector.broadcast %cst_176 : f32 to vector<2x128xf32>
    %406 = arith.mulf %405, %404 : vector<2x128xf32>
    %cst_177 = arith.constant 5.000000e-01 : f32
    %407 = vector.broadcast %cst_177 : f32 to vector<2x128xf32>
    %408 = arith.addf %406, %407 : vector<2x128xf32>
    %409 = vector.extract_strided_slice %385 {offsets = [0, 128], sizes = [2, 128], strides = [1, 1]} : vector<2x384xf32> to vector<2x128xf32>
    %410 = vector.extract_strided_slice %393 {offsets = [0, 128], sizes = [2, 128], strides = [1, 1]} : vector<2x384xf32> to vector<2x128xf32>
    %411 = arith.addf %409, %410 : vector<2x128xf32>
    %cst_178 = arith.constant 5.000000e-01 : f32
    %412 = vector.broadcast %cst_178 : f32 to vector<2x128xf32>
    %413 = arith.mulf %412, %411 : vector<2x128xf32>
    %414 = math.tanh %413 : vector<2x128xf32>
    %cst_179 = arith.constant 5.000000e-01 : f32
    %415 = vector.broadcast %cst_179 : f32 to vector<2x128xf32>
    %416 = arith.mulf %415, %414 : vector<2x128xf32>
    %cst_180 = arith.constant 5.000000e-01 : f32
    %417 = vector.broadcast %cst_180 : f32 to vector<2x128xf32>
    %418 = arith.addf %416, %417 : vector<2x128xf32>
    %419 = vector.extract_strided_slice %385 {offsets = [0, 256], sizes = [2, 128], strides = [1, 1]} : vector<2x384xf32> to vector<2x128xf32>
    %420 = vector.extract_strided_slice %393 {offsets = [0, 256], sizes = [2, 128], strides = [1, 1]} : vector<2x384xf32> to vector<2x128xf32>
    %421 = arith.mulf %408, %420 : vector<2x128xf32>
    %422 = arith.addf %419, %421 : vector<2x128xf32>
    %423 = math.tanh %422 : vector<2x128xf32>
    %cst_181 = arith.constant 1.000000e+00 : f32
    %424 = vector.broadcast %cst_181 : f32 to vector<2x128xf32>
    %425 = arith.subf %424, %418 : vector<2x128xf32>
    %426 = arith.mulf %425, %423 : vector<2x128xf32>
    %427 = arith.mulf %418, %340 : vector<2x128xf32>
    %428 = arith.addf %426, %427 : vector<2x128xf32>
    %429 = vector.extract_strided_slice %388 {offsets = [0, 0], sizes = [2, 128], strides = [1, 1]} : vector<2x384xf32> to vector<2x128xf32>
    %430 = vector.extract_strided_slice %398 {offsets = [0, 0], sizes = [2, 128], strides = [1, 1]} : vector<2x384xf32> to vector<2x128xf32>
    %431 = arith.addf %429, %430 : vector<2x128xf32>
    %cst_182 = arith.constant 5.000000e-01 : f32
    %432 = vector.broadcast %cst_182 : f32 to vector<2x128xf32>
    %433 = arith.mulf %432, %431 : vector<2x128xf32>
    %434 = math.tanh %433 : vector<2x128xf32>
    %cst_183 = arith.constant 5.000000e-01 : f32
    %435 = vector.broadcast %cst_183 : f32 to vector<2x128xf32>
    %436 = arith.mulf %435, %434 : vector<2x128xf32>
    %cst_184 = arith.constant 5.000000e-01 : f32
    %437 = vector.broadcast %cst_184 : f32 to vector<2x128xf32>
    %438 = arith.addf %436, %437 : vector<2x128xf32>
    %439 = vector.extract_strided_slice %388 {offsets = [0, 128], sizes = [2, 128], strides = [1, 1]} : vector<2x384xf32> to vector<2x128xf32>
    %440 = vector.extract_strided_slice %398 {offsets = [0, 128], sizes = [2, 128], strides = [1, 1]} : vector<2x384xf32> to vector<2x128xf32>
    %441 = arith.addf %439, %440 : vector<2x128xf32>
    %cst_185 = arith.constant 5.000000e-01 : f32
    %442 = vector.broadcast %cst_185 : f32 to vector<2x128xf32>
    %443 = arith.mulf %442, %441 : vector<2x128xf32>
    %444 = math.tanh %443 : vector<2x128xf32>
    %cst_186 = arith.constant 5.000000e-01 : f32
    %445 = vector.broadcast %cst_186 : f32 to vector<2x128xf32>
    %446 = arith.mulf %445, %444 : vector<2x128xf32>
    %cst_187 = arith.constant 5.000000e-01 : f32
    %447 = vector.broadcast %cst_187 : f32 to vector<2x128xf32>
    %448 = arith.addf %446, %447 : vector<2x128xf32>
    %449 = vector.extract_strided_slice %388 {offsets = [0, 256], sizes = [2, 128], strides = [1, 1]} : vector<2x384xf32> to vector<2x128xf32>
    %450 = vector.extract_strided_slice %398 {offsets = [0, 256], sizes = [2, 128], strides = [1, 1]} : vector<2x384xf32> to vector<2x128xf32>
    %451 = arith.mulf %438, %450 : vector<2x128xf32>
    %452 = arith.addf %449, %451 : vector<2x128xf32>
    %453 = math.tanh %452 : vector<2x128xf32>
    %cst_188 = arith.constant 1.000000e+00 : f32
    %454 = vector.broadcast %cst_188 : f32 to vector<2x128xf32>
    %455 = arith.subf %454, %448 : vector<2x128xf32>
    %456 = arith.mulf %455, %453 : vector<2x128xf32>
    %457 = arith.mulf %448, %370 : vector<2x128xf32>
    %458 = arith.addf %456, %457 : vector<2x128xf32>
    %459 = arith.mulf %26, %458 : vector<2x128xf32>
    %460 = arith.addf %428, %459 : vector<2x128xf32>
    %461 = arith.mulf %460, %14 : vector<2x128xf32>
    %462 = arith.addf %461, %18 : vector<2x128xf32>
    %cst_189 = arith.constant 0.000000e+00 : f32
    %463 = vector.broadcast %cst_189 : f32 to vector<2x128xf32>
    %464 = arith.cmpf oge, %462, %463 : vector<2x128xf32>
    %465 = arith.mulf %22, %462 : vector<2x128xf32>
    %466 = arith.select %464, %462, %465 : vector<2x128xi1>, vector<2x128xf32>
    %467 = vector.extract_strided_slice %466 {offsets = [0, 0], sizes = [2, 64], strides = [1, 1]} : vector<2x128xf32> to vector<2x64xf32>
    %c0_190 = arith.constant 0 : index
    %c8_191 = arith.constant 8 : index
    %c0_192 = arith.constant 0 : index
    %468 = vector.load %arg7[%c0_190, %c8_191, %c0_192] : memref<1x16x64xf32, #tpu.memory_space<vmem>>, vector<1x2x64xf32>
    %469 = vector.shape_cast %468 : vector<1x2x64xf32> to vector<2x64xf32>
    %470 = vector.shape_cast %467 : vector<2x64xf32> to vector<1x2x64xf32>
    tpu.vector_store %arg7[%c0_190, %c8_191, %c0_192], %470 {strides = array<i32>} : memref<1x16x64xf32, #tpu.memory_space<vmem>>, vector<1x2x64xf32>,
    %c0_193 = arith.constant 0 : index
    %c10 = arith.constant 10 : index
    %c0_194 = arith.constant 0 : index
    %471 = vector.load %arg2[%c0_193, %c10, %c0_194] : memref<1x16x384xbf16, #tpu.memory_space<vmem>>, vector<1x2x384xbf16>
    %472 = vector.shape_cast %471 : vector<1x2x384xbf16> to vector<2x384xbf16>
    %473 = arith.extf %472 : vector<2x384xbf16> to vector<2x384xf32>
    %c0_195 = arith.constant 0 : index
    %c10_196 = arith.constant 10 : index
    %c0_197 = arith.constant 0 : index
    %474 = vector.load %arg3[%c0_195, %c10_196, %c0_197] : memref<1x16x384xbf16, #tpu.memory_space<vmem>>, vector<1x2x384xbf16>
    %475 = vector.shape_cast %474 : vector<1x2x384xbf16> to vector<2x384xbf16>
    %476 = arith.extf %475 : vector<2x384xbf16> to vector<2x384xf32>
    %477 = arith.truncf %428 : vector<2x128xf32> to vector<2x128xbf16>
    %c0_198 = arith.constant 0 : index
    %c0_199 = arith.constant 0 : index
    %c0_200 = arith.constant 0 : index
    %c0_201 = arith.constant 0 : index
    %478 = vector.load %arg4[%c0_198, %c0_199, %c0_200, %c0_201] : memref<1x2x128x384xbf16, #tpu.memory_space<vmem>>, vector<1x1x128x384xbf16>
    %479 = vector.shape_cast %478 : vector<1x1x128x384xbf16> to vector<128x384xbf16>
    %cst_202 = arith.constant dense<0.000000e+00> : vector<2x384xf32>
    %480 = tpu.matmul %477, %479, %cst_202 {dimension_numbers = #tpu.dot_dimension_numbers<[1], [0], [0], [1], [0, 0, 1, 1], [], []>} : vector<2x128xbf16>, vector<128x384xbf16>, vector<2x384xf32> -> vector<2x384xf32>
    %481 = arith.addf %480, %6 : vector<2x384xf32>
    %482 = arith.truncf %458 : vector<2x128xf32> to vector<2x128xbf16>
    %c0_203 = arith.constant 0 : index
    %c1_204 = arith.constant 1 : index
    %c0_205 = arith.constant 0 : index
    %c0_206 = arith.constant 0 : index
    %483 = vector.load %arg4[%c0_203, %c1_204, %c0_205, %c0_206] : memref<1x2x128x384xbf16, #tpu.memory_space<vmem>>, vector<1x1x128x384xbf16>
    %484 = vector.shape_cast %483 : vector<1x1x128x384xbf16> to vector<128x384xbf16>
    %cst_207 = arith.constant dense<0.000000e+00> : vector<2x384xf32>
    %485 = tpu.matmul %482, %484, %cst_207 {dimension_numbers = #tpu.dot_dimension_numbers<[1], [0], [0], [1], [0, 0, 1, 1], [], []>} : vector<2x128xbf16>, vector<128x384xbf16>, vector<2x384xf32> -> vector<2x384xf32>
    %486 = arith.addf %485, %10 : vector<2x384xf32>
    %487 = vector.extract_strided_slice %473 {offsets = [0, 0], sizes = [2, 128], strides = [1, 1]} : vector<2x384xf32> to vector<2x128xf32>
    %488 = vector.extract_strided_slice %481 {offsets = [0, 0], sizes = [2, 128], strides = [1, 1]} : vector<2x384xf32> to vector<2x128xf32>
    %489 = arith.addf %487, %488 : vector<2x128xf32>
    %cst_208 = arith.constant 5.000000e-01 : f32
    %490 = vector.broadcast %cst_208 : f32 to vector<2x128xf32>
    %491 = arith.mulf %490, %489 : vector<2x128xf32>
    %492 = math.tanh %491 : vector<2x128xf32>
    %cst_209 = arith.constant 5.000000e-01 : f32
    %493 = vector.broadcast %cst_209 : f32 to vector<2x128xf32>
    %494 = arith.mulf %493, %492 : vector<2x128xf32>
    %cst_210 = arith.constant 5.000000e-01 : f32
    %495 = vector.broadcast %cst_210 : f32 to vector<2x128xf32>
    %496 = arith.addf %494, %495 : vector<2x128xf32>
    %497 = vector.extract_strided_slice %473 {offsets = [0, 128], sizes = [2, 128], strides = [1, 1]} : vector<2x384xf32> to vector<2x128xf32>
    %498 = vector.extract_strided_slice %481 {offsets = [0, 128], sizes = [2, 128], strides = [1, 1]} : vector<2x384xf32> to vector<2x128xf32>
    %499 = arith.addf %497, %498 : vector<2x128xf32>
    %cst_211 = arith.constant 5.000000e-01 : f32
    %500 = vector.broadcast %cst_211 : f32 to vector<2x128xf32>
    %501 = arith.mulf %500, %499 : vector<2x128xf32>
    %502 = math.tanh %501 : vector<2x128xf32>
    %cst_212 = arith.constant 5.000000e-01 : f32
    %503 = vector.broadcast %cst_212 : f32 to vector<2x128xf32>
    %504 = arith.mulf %503, %502 : vector<2x128xf32>
    %cst_213 = arith.constant 5.000000e-01 : f32
    %505 = vector.broadcast %cst_213 : f32 to vector<2x128xf32>
    %506 = arith.addf %504, %505 : vector<2x128xf32>
    %507 = vector.extract_strided_slice %473 {offsets = [0, 256], sizes = [2, 128], strides = [1, 1]} : vector<2x384xf32> to vector<2x128xf32>
    %508 = vector.extract_strided_slice %481 {offsets = [0, 256], sizes = [2, 128], strides = [1, 1]} : vector<2x384xf32> to vector<2x128xf32>
    %509 = arith.mulf %496, %508 : vector<2x128xf32>
    %510 = arith.addf %507, %509 : vector<2x128xf32>
    %511 = math.tanh %510 : vector<2x128xf32>
    %cst_214 = arith.constant 1.000000e+00 : f32
    %512 = vector.broadcast %cst_214 : f32 to vector<2x128xf32>
    %513 = arith.subf %512, %506 : vector<2x128xf32>
    %514 = arith.mulf %513, %511 : vector<2x128xf32>
    %515 = arith.mulf %506, %428 : vector<2x128xf32>
    %516 = arith.addf %514, %515 : vector<2x128xf32>
    %517 = vector.extract_strided_slice %476 {offsets = [0, 0], sizes = [2, 128], strides = [1, 1]} : vector<2x384xf32> to vector<2x128xf32>
    %518 = vector.extract_strided_slice %486 {offsets = [0, 0], sizes = [2, 128], strides = [1, 1]} : vector<2x384xf32> to vector<2x128xf32>
    %519 = arith.addf %517, %518 : vector<2x128xf32>
    %cst_215 = arith.constant 5.000000e-01 : f32
    %520 = vector.broadcast %cst_215 : f32 to vector<2x128xf32>
    %521 = arith.mulf %520, %519 : vector<2x128xf32>
    %522 = math.tanh %521 : vector<2x128xf32>
    %cst_216 = arith.constant 5.000000e-01 : f32
    %523 = vector.broadcast %cst_216 : f32 to vector<2x128xf32>
    %524 = arith.mulf %523, %522 : vector<2x128xf32>
    %cst_217 = arith.constant 5.000000e-01 : f32
    %525 = vector.broadcast %cst_217 : f32 to vector<2x128xf32>
    %526 = arith.addf %524, %525 : vector<2x128xf32>
    %527 = vector.extract_strided_slice %476 {offsets = [0, 128], sizes = [2, 128], strides = [1, 1]} : vector<2x384xf32> to vector<2x128xf32>
    %528 = vector.extract_strided_slice %486 {offsets = [0, 128], sizes = [2, 128], strides = [1, 1]} : vector<2x384xf32> to vector<2x128xf32>
    %529 = arith.addf %527, %528 : vector<2x128xf32>
    %cst_218 = arith.constant 5.000000e-01 : f32
    %530 = vector.broadcast %cst_218 : f32 to vector<2x128xf32>
    %531 = arith.mulf %530, %529 : vector<2x128xf32>
    %532 = math.tanh %531 : vector<2x128xf32>
    %cst_219 = arith.constant 5.000000e-01 : f32
    %533 = vector.broadcast %cst_219 : f32 to vector<2x128xf32>
    %534 = arith.mulf %533, %532 : vector<2x128xf32>
    %cst_220 = arith.constant 5.000000e-01 : f32
    %535 = vector.broadcast %cst_220 : f32 to vector<2x128xf32>
    %536 = arith.addf %534, %535 : vector<2x128xf32>
    %537 = vector.extract_strided_slice %476 {offsets = [0, 256], sizes = [2, 128], strides = [1, 1]} : vector<2x384xf32> to vector<2x128xf32>
    %538 = vector.extract_strided_slice %486 {offsets = [0, 256], sizes = [2, 128], strides = [1, 1]} : vector<2x384xf32> to vector<2x128xf32>
    %539 = arith.mulf %526, %538 : vector<2x128xf32>
    %540 = arith.addf %537, %539 : vector<2x128xf32>
    %541 = math.tanh %540 : vector<2x128xf32>
    %cst_221 = arith.constant 1.000000e+00 : f32
    %542 = vector.broadcast %cst_221 : f32 to vector<2x128xf32>
    %543 = arith.subf %542, %536 : vector<2x128xf32>
    %544 = arith.mulf %543, %541 : vector<2x128xf32>
    %545 = arith.mulf %536, %458 : vector<2x128xf32>
    %546 = arith.addf %544, %545 : vector<2x128xf32>
    %547 = arith.mulf %26, %546 : vector<2x128xf32>
    %548 = arith.addf %516, %547 : vector<2x128xf32>
    %549 = arith.mulf %548, %14 : vector<2x128xf32>
    %550 = arith.addf %549, %18 : vector<2x128xf32>
    %cst_222 = arith.constant 0.000000e+00 : f32
    %551 = vector.broadcast %cst_222 : f32 to vector<2x128xf32>
    %552 = arith.cmpf oge, %550, %551 : vector<2x128xf32>
    %553 = arith.mulf %22, %550 : vector<2x128xf32>
    %554 = arith.select %552, %550, %553 : vector<2x128xi1>, vector<2x128xf32>
    %555 = vector.extract_strided_slice %554 {offsets = [0, 0], sizes = [2, 64], strides = [1, 1]} : vector<2x128xf32> to vector<2x64xf32>
    %c0_223 = arith.constant 0 : index
    %c10_224 = arith.constant 10 : index
    %c0_225 = arith.constant 0 : index
    %556 = vector.load %arg7[%c0_223, %c10_224, %c0_225] : memref<1x16x64xf32, #tpu.memory_space<vmem>>, vector<1x2x64xf32>
    %557 = vector.shape_cast %556 : vector<1x2x64xf32> to vector<2x64xf32>
    %558 = vector.shape_cast %555 : vector<2x64xf32> to vector<1x2x64xf32>
    tpu.vector_store %arg7[%c0_223, %c10_224, %c0_225], %558 {strides = array<i32>} : memref<1x16x64xf32, #tpu.memory_space<vmem>>, vector<1x2x64xf32>,
    %c0_226 = arith.constant 0 : index
    %c12 = arith.constant 12 : index
    %c0_227 = arith.constant 0 : index
    %559 = vector.load %arg2[%c0_226, %c12, %c0_227] : memref<1x16x384xbf16, #tpu.memory_space<vmem>>, vector<1x2x384xbf16>
    %560 = vector.shape_cast %559 : vector<1x2x384xbf16> to vector<2x384xbf16>
    %561 = arith.extf %560 : vector<2x384xbf16> to vector<2x384xf32>
    %c0_228 = arith.constant 0 : index
    %c12_229 = arith.constant 12 : index
    %c0_230 = arith.constant 0 : index
    %562 = vector.load %arg3[%c0_228, %c12_229, %c0_230] : memref<1x16x384xbf16, #tpu.memory_space<vmem>>, vector<1x2x384xbf16>
    %563 = vector.shape_cast %562 : vector<1x2x384xbf16> to vector<2x384xbf16>
    %564 = arith.extf %563 : vector<2x384xbf16> to vector<2x384xf32>
    %565 = arith.truncf %516 : vector<2x128xf32> to vector<2x128xbf16>
    %c0_231 = arith.constant 0 : index
    %c0_232 = arith.constant 0 : index
    %c0_233 = arith.constant 0 : index
    %c0_234 = arith.constant 0 : index
    %566 = vector.load %arg4[%c0_231, %c0_232, %c0_233, %c0_234] : memref<1x2x128x384xbf16, #tpu.memory_space<vmem>>, vector<1x1x128x384xbf16>
    %567 = vector.shape_cast %566 : vector<1x1x128x384xbf16> to vector<128x384xbf16>
    %cst_235 = arith.constant dense<0.000000e+00> : vector<2x384xf32>
    %568 = tpu.matmul %565, %567, %cst_235 {dimension_numbers = #tpu.dot_dimension_numbers<[1], [0], [0], [1], [0, 0, 1, 1], [], []>} : vector<2x128xbf16>, vector<128x384xbf16>, vector<2x384xf32> -> vector<2x384xf32>
    %569 = arith.addf %568, %6 : vector<2x384xf32>
    %570 = arith.truncf %546 : vector<2x128xf32> to vector<2x128xbf16>
    %c0_236 = arith.constant 0 : index
    %c1_237 = arith.constant 1 : index
    %c0_238 = arith.constant 0 : index
    %c0_239 = arith.constant 0 : index
    %571 = vector.load %arg4[%c0_236, %c1_237, %c0_238, %c0_239] : memref<1x2x128x384xbf16, #tpu.memory_space<vmem>>, vector<1x1x128x384xbf16>
    %572 = vector.shape_cast %571 : vector<1x1x128x384xbf16> to vector<128x384xbf16>
    %cst_240 = arith.constant dense<0.000000e+00> : vector<2x384xf32>
    %573 = tpu.matmul %570, %572, %cst_240 {dimension_numbers = #tpu.dot_dimension_numbers<[1], [0], [0], [1], [0, 0, 1, 1], [], []>} : vector<2x128xbf16>, vector<128x384xbf16>, vector<2x384xf32> -> vector<2x384xf32>
    %574 = arith.addf %573, %10 : vector<2x384xf32>
    %575 = vector.extract_strided_slice %561 {offsets = [0, 0], sizes = [2, 128], strides = [1, 1]} : vector<2x384xf32> to vector<2x128xf32>
    %576 = vector.extract_strided_slice %569 {offsets = [0, 0], sizes = [2, 128], strides = [1, 1]} : vector<2x384xf32> to vector<2x128xf32>
    %577 = arith.addf %575, %576 : vector<2x128xf32>
    %cst_241 = arith.constant 5.000000e-01 : f32
    %578 = vector.broadcast %cst_241 : f32 to vector<2x128xf32>
    %579 = arith.mulf %578, %577 : vector<2x128xf32>
    %580 = math.tanh %579 : vector<2x128xf32>
    %cst_242 = arith.constant 5.000000e-01 : f32
    %581 = vector.broadcast %cst_242 : f32 to vector<2x128xf32>
    %582 = arith.mulf %581, %580 : vector<2x128xf32>
    %cst_243 = arith.constant 5.000000e-01 : f32
    %583 = vector.broadcast %cst_243 : f32 to vector<2x128xf32>
    %584 = arith.addf %582, %583 : vector<2x128xf32>
    %585 = vector.extract_strided_slice %561 {offsets = [0, 128], sizes = [2, 128], strides = [1, 1]} : vector<2x384xf32> to vector<2x128xf32>
    %586 = vector.extract_strided_slice %569 {offsets = [0, 128], sizes = [2, 128], strides = [1, 1]} : vector<2x384xf32> to vector<2x128xf32>
    %587 = arith.addf %585, %586 : vector<2x128xf32>
    %cst_244 = arith.constant 5.000000e-01 : f32
    %588 = vector.broadcast %cst_244 : f32 to vector<2x128xf32>
    %589 = arith.mulf %588, %587 : vector<2x128xf32>
    %590 = math.tanh %589 : vector<2x128xf32>
    %cst_245 = arith.constant 5.000000e-01 : f32
    %591 = vector.broadcast %cst_245 : f32 to vector<2x128xf32>
    %592 = arith.mulf %591, %590 : vector<2x128xf32>
    %cst_246 = arith.constant 5.000000e-01 : f32
    %593 = vector.broadcast %cst_246 : f32 to vector<2x128xf32>
    %594 = arith.addf %592, %593 : vector<2x128xf32>
    %595 = vector.extract_strided_slice %561 {offsets = [0, 256], sizes = [2, 128], strides = [1, 1]} : vector<2x384xf32> to vector<2x128xf32>
    %596 = vector.extract_strided_slice %569 {offsets = [0, 256], sizes = [2, 128], strides = [1, 1]} : vector<2x384xf32> to vector<2x128xf32>
    %597 = arith.mulf %584, %596 : vector<2x128xf32>
    %598 = arith.addf %595, %597 : vector<2x128xf32>
    %599 = math.tanh %598 : vector<2x128xf32>
    %cst_247 = arith.constant 1.000000e+00 : f32
    %600 = vector.broadcast %cst_247 : f32 to vector<2x128xf32>
    %601 = arith.subf %600, %594 : vector<2x128xf32>
    %602 = arith.mulf %601, %599 : vector<2x128xf32>
    %603 = arith.mulf %594, %516 : vector<2x128xf32>
    %604 = arith.addf %602, %603 : vector<2x128xf32>
    %605 = vector.extract_strided_slice %564 {offsets = [0, 0], sizes = [2, 128], strides = [1, 1]} : vector<2x384xf32> to vector<2x128xf32>
    %606 = vector.extract_strided_slice %574 {offsets = [0, 0], sizes = [2, 128], strides = [1, 1]} : vector<2x384xf32> to vector<2x128xf32>
    %607 = arith.addf %605, %606 : vector<2x128xf32>
    %cst_248 = arith.constant 5.000000e-01 : f32
    %608 = vector.broadcast %cst_248 : f32 to vector<2x128xf32>
    %609 = arith.mulf %608, %607 : vector<2x128xf32>
    %610 = math.tanh %609 : vector<2x128xf32>
    %cst_249 = arith.constant 5.000000e-01 : f32
    %611 = vector.broadcast %cst_249 : f32 to vector<2x128xf32>
    %612 = arith.mulf %611, %610 : vector<2x128xf32>
    %cst_250 = arith.constant 5.000000e-01 : f32
    %613 = vector.broadcast %cst_250 : f32 to vector<2x128xf32>
    %614 = arith.addf %612, %613 : vector<2x128xf32>
    %615 = vector.extract_strided_slice %564 {offsets = [0, 128], sizes = [2, 128], strides = [1, 1]} : vector<2x384xf32> to vector<2x128xf32>
    %616 = vector.extract_strided_slice %574 {offsets = [0, 128], sizes = [2, 128], strides = [1, 1]} : vector<2x384xf32> to vector<2x128xf32>
    %617 = arith.addf %615, %616 : vector<2x128xf32>
    %cst_251 = arith.constant 5.000000e-01 : f32
    %618 = vector.broadcast %cst_251 : f32 to vector<2x128xf32>
    %619 = arith.mulf %618, %617 : vector<2x128xf32>
    %620 = math.tanh %619 : vector<2x128xf32>
    %cst_252 = arith.constant 5.000000e-01 : f32
    %621 = vector.broadcast %cst_252 : f32 to vector<2x128xf32>
    %622 = arith.mulf %621, %620 : vector<2x128xf32>
    %cst_253 = arith.constant 5.000000e-01 : f32
    %623 = vector.broadcast %cst_253 : f32 to vector<2x128xf32>
    %624 = arith.addf %622, %623 : vector<2x128xf32>
    %625 = vector.extract_strided_slice %564 {offsets = [0, 256], sizes = [2, 128], strides = [1, 1]} : vector<2x384xf32> to vector<2x128xf32>
    %626 = vector.extract_strided_slice %574 {offsets = [0, 256], sizes = [2, 128], strides = [1, 1]} : vector<2x384xf32> to vector<2x128xf32>
    %627 = arith.mulf %614, %626 : vector<2x128xf32>
    %628 = arith.addf %625, %627 : vector<2x128xf32>
    %629 = math.tanh %628 : vector<2x128xf32>
    %cst_254 = arith.constant 1.000000e+00 : f32
    %630 = vector.broadcast %cst_254 : f32 to vector<2x128xf32>
    %631 = arith.subf %630, %624 : vector<2x128xf32>
    %632 = arith.mulf %631, %629 : vector<2x128xf32>
    %633 = arith.mulf %624, %546 : vector<2x128xf32>
    %634 = arith.addf %632, %633 : vector<2x128xf32>
    %635 = arith.mulf %26, %634 : vector<2x128xf32>
    %636 = arith.addf %604, %635 : vector<2x128xf32>
    %637 = arith.mulf %636, %14 : vector<2x128xf32>
    %638 = arith.addf %637, %18 : vector<2x128xf32>
    %cst_255 = arith.constant 0.000000e+00 : f32
    %639 = vector.broadcast %cst_255 : f32 to vector<2x128xf32>
    %640 = arith.cmpf oge, %638, %639 : vector<2x128xf32>
    %641 = arith.mulf %22, %638 : vector<2x128xf32>
    %642 = arith.select %640, %638, %641 : vector<2x128xi1>, vector<2x128xf32>
    %643 = vector.extract_strided_slice %642 {offsets = [0, 0], sizes = [2, 64], strides = [1, 1]} : vector<2x128xf32> to vector<2x64xf32>
    %c0_256 = arith.constant 0 : index
    %c12_257 = arith.constant 12 : index
    %c0_258 = arith.constant 0 : index
    %644 = vector.load %arg7[%c0_256, %c12_257, %c0_258] : memref<1x16x64xf32, #tpu.memory_space<vmem>>, vector<1x2x64xf32>
    %645 = vector.shape_cast %644 : vector<1x2x64xf32> to vector<2x64xf32>
    %646 = vector.shape_cast %643 : vector<2x64xf32> to vector<1x2x64xf32>
    tpu.vector_store %arg7[%c0_256, %c12_257, %c0_258], %646 {strides = array<i32>} : memref<1x16x64xf32, #tpu.memory_space<vmem>>, vector<1x2x64xf32>,
    %c0_259 = arith.constant 0 : index
    %c14 = arith.constant 14 : index
    %c0_260 = arith.constant 0 : index
    %647 = vector.load %arg2[%c0_259, %c14, %c0_260] : memref<1x16x384xbf16, #tpu.memory_space<vmem>>, vector<1x2x384xbf16>
    %648 = vector.shape_cast %647 : vector<1x2x384xbf16> to vector<2x384xbf16>
    %649 = arith.extf %648 : vector<2x384xbf16> to vector<2x384xf32>
    %c0_261 = arith.constant 0 : index
    %c14_262 = arith.constant 14 : index
    %c0_263 = arith.constant 0 : index
    %650 = vector.load %arg3[%c0_261, %c14_262, %c0_263] : memref<1x16x384xbf16, #tpu.memory_space<vmem>>, vector<1x2x384xbf16>
    %651 = vector.shape_cast %650 : vector<1x2x384xbf16> to vector<2x384xbf16>
    %652 = arith.extf %651 : vector<2x384xbf16> to vector<2x384xf32>
    %653 = arith.truncf %604 : vector<2x128xf32> to vector<2x128xbf16>
    %c0_264 = arith.constant 0 : index
    %c0_265 = arith.constant 0 : index
    %c0_266 = arith.constant 0 : index
    %c0_267 = arith.constant 0 : index
    %654 = vector.load %arg4[%c0_264, %c0_265, %c0_266, %c0_267] : memref<1x2x128x384xbf16, #tpu.memory_space<vmem>>, vector<1x1x128x384xbf16>
    %655 = vector.shape_cast %654 : vector<1x1x128x384xbf16> to vector<128x384xbf16>
    %cst_268 = arith.constant dense<0.000000e+00> : vector<2x384xf32>
    %656 = tpu.matmul %653, %655, %cst_268 {dimension_numbers = #tpu.dot_dimension_numbers<[1], [0], [0], [1], [0, 0, 1, 1], [], []>} : vector<2x128xbf16>, vector<128x384xbf16>, vector<2x384xf32> -> vector<2x384xf32>
    %657 = arith.addf %656, %6 : vector<2x384xf32>
    %658 = arith.truncf %634 : vector<2x128xf32> to vector<2x128xbf16>
    %c0_269 = arith.constant 0 : index
    %c1_270 = arith.constant 1 : index
    %c0_271 = arith.constant 0 : index
    %c0_272 = arith.constant 0 : index
    %659 = vector.load %arg4[%c0_269, %c1_270, %c0_271, %c0_272] : memref<1x2x128x384xbf16, #tpu.memory_space<vmem>>, vector<1x1x128x384xbf16>
    %660 = vector.shape_cast %659 : vector<1x1x128x384xbf16> to vector<128x384xbf16>
    %cst_273 = arith.constant dense<0.000000e+00> : vector<2x384xf32>
    %661 = tpu.matmul %658, %660, %cst_273 {dimension_numbers = #tpu.dot_dimension_numbers<[1], [0], [0], [1], [0, 0, 1, 1], [], []>} : vector<2x128xbf16>, vector<128x384xbf16>, vector<2x384xf32> -> vector<2x384xf32>
    %662 = arith.addf %661, %10 : vector<2x384xf32>
    %663 = vector.extract_strided_slice %649 {offsets = [0, 0], sizes = [2, 128], strides = [1, 1]} : vector<2x384xf32> to vector<2x128xf32>
    %664 = vector.extract_strided_slice %657 {offsets = [0, 0], sizes = [2, 128], strides = [1, 1]} : vector<2x384xf32> to vector<2x128xf32>
    %665 = arith.addf %663, %664 : vector<2x128xf32>
    %cst_274 = arith.constant 5.000000e-01 : f32
    %666 = vector.broadcast %cst_274 : f32 to vector<2x128xf32>
    %667 = arith.mulf %666, %665 : vector<2x128xf32>
    %668 = math.tanh %667 : vector<2x128xf32>
    %cst_275 = arith.constant 5.000000e-01 : f32
    %669 = vector.broadcast %cst_275 : f32 to vector<2x128xf32>
    %670 = arith.mulf %669, %668 : vector<2x128xf32>
    %cst_276 = arith.constant 5.000000e-01 : f32
    %671 = vector.broadcast %cst_276 : f32 to vector<2x128xf32>
    %672 = arith.addf %670, %671 : vector<2x128xf32>
    %673 = vector.extract_strided_slice %649 {offsets = [0, 128], sizes = [2, 128], strides = [1, 1]} : vector<2x384xf32> to vector<2x128xf32>
    %674 = vector.extract_strided_slice %657 {offsets = [0, 128], sizes = [2, 128], strides = [1, 1]} : vector<2x384xf32> to vector<2x128xf32>
    %675 = arith.addf %673, %674 : vector<2x128xf32>
    %cst_277 = arith.constant 5.000000e-01 : f32
    %676 = vector.broadcast %cst_277 : f32 to vector<2x128xf32>
    %677 = arith.mulf %676, %675 : vector<2x128xf32>
    %678 = math.tanh %677 : vector<2x128xf32>
    %cst_278 = arith.constant 5.000000e-01 : f32
    %679 = vector.broadcast %cst_278 : f32 to vector<2x128xf32>
    %680 = arith.mulf %679, %678 : vector<2x128xf32>
    %cst_279 = arith.constant 5.000000e-01 : f32
    %681 = vector.broadcast %cst_279 : f32 to vector<2x128xf32>
    %682 = arith.addf %680, %681 : vector<2x128xf32>
    %683 = vector.extract_strided_slice %649 {offsets = [0, 256], sizes = [2, 128], strides = [1, 1]} : vector<2x384xf32> to vector<2x128xf32>
    %684 = vector.extract_strided_slice %657 {offsets = [0, 256], sizes = [2, 128], strides = [1, 1]} : vector<2x384xf32> to vector<2x128xf32>
    %685 = arith.mulf %672, %684 : vector<2x128xf32>
    %686 = arith.addf %683, %685 : vector<2x128xf32>
    %687 = math.tanh %686 : vector<2x128xf32>
    %cst_280 = arith.constant 1.000000e+00 : f32
    %688 = vector.broadcast %cst_280 : f32 to vector<2x128xf32>
    %689 = arith.subf %688, %682 : vector<2x128xf32>
    %690 = arith.mulf %689, %687 : vector<2x128xf32>
    %691 = arith.mulf %682, %604 : vector<2x128xf32>
    %692 = arith.addf %690, %691 : vector<2x128xf32>
    %693 = vector.extract_strided_slice %652 {offsets = [0, 0], sizes = [2, 128], strides = [1, 1]} : vector<2x384xf32> to vector<2x128xf32>
    %694 = vector.extract_strided_slice %662 {offsets = [0, 0], sizes = [2, 128], strides = [1, 1]} : vector<2x384xf32> to vector<2x128xf32>
    %695 = arith.addf %693, %694 : vector<2x128xf32>
    %cst_281 = arith.constant 5.000000e-01 : f32
    %696 = vector.broadcast %cst_281 : f32 to vector<2x128xf32>
    %697 = arith.mulf %696, %695 : vector<2x128xf32>
    %698 = math.tanh %697 : vector<2x128xf32>
    %cst_282 = arith.constant 5.000000e-01 : f32
    %699 = vector.broadcast %cst_282 : f32 to vector<2x128xf32>
    %700 = arith.mulf %699, %698 : vector<2x128xf32>
    %cst_283 = arith.constant 5.000000e-01 : f32
    %701 = vector.broadcast %cst_283 : f32 to vector<2x128xf32>
    %702 = arith.addf %700, %701 : vector<2x128xf32>
    %703 = vector.extract_strided_slice %652 {offsets = [0, 128], sizes = [2, 128], strides = [1, 1]} : vector<2x384xf32> to vector<2x128xf32>
    %704 = vector.extract_strided_slice %662 {offsets = [0, 128], sizes = [2, 128], strides = [1, 1]} : vector<2x384xf32> to vector<2x128xf32>
    %705 = arith.addf %703, %704 : vector<2x128xf32>
    %cst_284 = arith.constant 5.000000e-01 : f32
    %706 = vector.broadcast %cst_284 : f32 to vector<2x128xf32>
    %707 = arith.mulf %706, %705 : vector<2x128xf32>
    %708 = math.tanh %707 : vector<2x128xf32>
    %cst_285 = arith.constant 5.000000e-01 : f32
    %709 = vector.broadcast %cst_285 : f32 to vector<2x128xf32>
    %710 = arith.mulf %709, %708 : vector<2x128xf32>
    %cst_286 = arith.constant 5.000000e-01 : f32
    %711 = vector.broadcast %cst_286 : f32 to vector<2x128xf32>
    %712 = arith.addf %710, %711 : vector<2x128xf32>
    %713 = vector.extract_strided_slice %652 {offsets = [0, 256], sizes = [2, 128], strides = [1, 1]} : vector<2x384xf32> to vector<2x128xf32>
    %714 = vector.extract_strided_slice %662 {offsets = [0, 256], sizes = [2, 128], strides = [1, 1]} : vector<2x384xf32> to vector<2x128xf32>
    %715 = arith.mulf %702, %714 : vector<2x128xf32>
    %716 = arith.addf %713, %715 : vector<2x128xf32>
    %717 = math.tanh %716 : vector<2x128xf32>
    %cst_287 = arith.constant 1.000000e+00 : f32
    %718 = vector.broadcast %cst_287 : f32 to vector<2x128xf32>
    %719 = arith.subf %718, %712 : vector<2x128xf32>
    %720 = arith.mulf %719, %717 : vector<2x128xf32>
    %721 = arith.mulf %712, %634 : vector<2x128xf32>
    %722 = arith.addf %720, %721 : vector<2x128xf32>
    %723 = arith.mulf %26, %722 : vector<2x128xf32>
    %724 = arith.addf %692, %723 : vector<2x128xf32>
    %725 = arith.mulf %724, %14 : vector<2x128xf32>
    %726 = arith.addf %725, %18 : vector<2x128xf32>
    %cst_288 = arith.constant 0.000000e+00 : f32
    %727 = vector.broadcast %cst_288 : f32 to vector<2x128xf32>
    %728 = arith.cmpf oge, %726, %727 : vector<2x128xf32>
    %729 = arith.mulf %22, %726 : vector<2x128xf32>
    %730 = arith.select %728, %726, %729 : vector<2x128xi1>, vector<2x128xf32>
    %731 = vector.extract_strided_slice %730 {offsets = [0, 0], sizes = [2, 64], strides = [1, 1]} : vector<2x128xf32> to vector<2x64xf32>
    %c0_289 = arith.constant 0 : index
    %c14_290 = arith.constant 14 : index
    %c0_291 = arith.constant 0 : index
    %732 = vector.load %arg7[%c0_289, %c14_290, %c0_291] : memref<1x16x64xf32, #tpu.memory_space<vmem>>, vector<1x2x64xf32>
    %733 = vector.shape_cast %732 : vector<1x2x64xf32> to vector<2x64xf32>
    %734 = vector.shape_cast %731 : vector<2x64xf32> to vector<1x2x64xf32>
    tpu.vector_store %arg7[%c0_289, %c14_290, %c0_291], %734 {strides = array<i32>} : memref<1x16x64xf32, #tpu.memory_space<vmem>>, vector<1x2x64xf32>,
    %c0_292 = arith.constant 0 : index
    %c0_293 = arith.constant 0 : index
    %c0_294 = arith.constant 0 : index
    %735 = vector.load %arg8[%c0_292, %c0_293, %c0_294] : memref<2x2x128xf32, #tpu.memory_space<vmem>>, vector<1x2x128xf32>
    %736 = vector.shape_cast %735 : vector<1x2x128xf32> to vector<2x128xf32>
    %737 = vector.shape_cast %692 : vector<2x128xf32> to vector<1x2x128xf32>
    tpu.vector_store %arg8[%c0_292, %c0_293, %c0_294], %737 {strides = array<i32>} : memref<2x2x128xf32, #tpu.memory_space<vmem>>, vector<1x2x128xf32>,
    %c1_295 = arith.constant 1 : index
    %c0_296 = arith.constant 0 : index
    %c0_297 = arith.constant 0 : index
    %738 = vector.load %arg8[%c1_295, %c0_296, %c0_297] : memref<2x2x128xf32, #tpu.memory_space<vmem>>, vector<1x2x128xf32>
    %739 = vector.shape_cast %738 : vector<1x2x128xf32> to vector<2x128xf32>
    %740 = vector.shape_cast %722 : vector<2x128xf32> to vector<1x2x128xf32>
    tpu.vector_store %arg8[%c1_295, %c0_296, %c0_297], %740 {strides = array<i32>} : memref<2x2x128xf32, #tpu.memory_space<vmem>>, vector<1x2x128xf32>,
    return
  }
  func.func @transform_0(%arg0: i32, %arg1: i32) -> (i32, i32, i32) {
    %c0_i32 = arith.constant 0 : i32
    %c0_i32_0 = arith.constant 0 : i32
    return %c0_i32, %arg1, %arg0 : i32, i32, i32
  }
  func.func @transform_1(%arg0: i32, %arg1: i32) -> (i32, i32, i32) {
    %c1_i32 = arith.constant 1 : i32
    %0 = arith.subi %c1_i32, %arg0 : i32
    %c1_i32_0 = arith.constant 1 : i32
    %c0_i32 = arith.constant 0 : i32
    return %c1_i32_0, %arg1, %0 : i32, i32, i32
  }
  func.func @transform_2(%arg0: i32, %arg1: i32) -> (i32, i32, i32, i32) {
    %c0_i32 = arith.constant 0 : i32
    %c0_i32_0 = arith.constant 0 : i32
    %c0_i32_1 = arith.constant 0 : i32
    %c0_i32_2 = arith.constant 0 : i32
    return %arg0, %c0_i32, %c0_i32_0, %c0_i32_1 : i32, i32, i32, i32
  }
  func.func @transform_3(%arg0: i32, %arg1: i32) -> (i32, i32, i32, i32) {
    %c0_i32 = arith.constant 0 : i32
    %c0_i32_0 = arith.constant 0 : i32
    %c0_i32_1 = arith.constant 0 : i32
    %c0_i32_2 = arith.constant 0 : i32
    return %arg0, %c0_i32, %c0_i32_0, %c0_i32_1 : i32, i32, i32, i32
  }
  func.func @transform_4(%arg0: i32, %arg1: i32) -> (i32, i32, i32, i32) {
    %c0_i32 = arith.constant 0 : i32
    %c0_i32_0 = arith.constant 0 : i32
    %c0_i32_1 = arith.constant 0 : i32
    %c0_i32_2 = arith.constant 0 : i32
    return %arg0, %c0_i32, %c0_i32_0, %c0_i32_1 : i32, i32, i32, i32
  }
  func.func @transform_5(%arg0: i32, %arg1: i32) -> (i32, i32, i32) {
    %c0_i32 = arith.constant 0 : i32
    %c0_i32_0 = arith.constant 0 : i32
    return %arg0, %arg1, %c0_i32 : i32, i32, i32
  }
}

</mosaic_0001>

<llo_original>
// kernel: crnn_forward.2
$region0: #{crnn_forward.2}
  #allocation0 [shape = 'u32[]', space=smem, size = 0x4, offset = 0x4, fixed_abs, tag = 'smem constant byte address 0x4 - core index']
  #allocation1 [shape = 'u32[144,128]{1,0:T(1,128)}', space=vmem, size = 0x12000, scoped, tag = 'internal scratch']
  %s0 = inlined_call_operand.vmem [shape: bf16[2,16,64], index: 0, kind: input, shape index: {}]
  %s1 = inlined_call_operand.hbm [shape: bf16[2,64,768], index: 1, kind: input, shape index: {}]
  %s2 = inlined_call_operand.hbm [shape: f32[2,1,768], index: 2, kind: input, shape index: {}]
  %s3 = inlined_call_operand.vmem [shape: bf16[2,16,768], index: 3, kind: output, shape index: {}]
  %s4 = sld [smem:[#allocation0]]
  $region53: #{crnn_forward.2} parent=0
    _
  %s6 = ssub.s32 1, %s4
  %s7 = scalar_select 0, %s6, %s4
  $region1: #{crnn_forward.2} parent=0
    #allocation2 [shape = 'u8[196608]{0}', space=vmem, size = 0x30000, scoped, tag = 'input window, operand 1']
    #allocation3 [shape = 's32[2]{0}', space=sflag, size = 0x8, scoped, tag = 'scoped memory for crnn_forward.2']
    #allocation4 [shape = 'u8[6144]{0}', space=vmem, size = 0x1800, scoped, tag = 'input window, operand 2']
    #allocation5 [shape = 's32[2]{0}', space=sflag, size = 0x8, scoped, tag = 'scoped memory for crnn_forward.2']
    %8 = vsyncpa [#allocation3], 0
    %s9 = scalar_lea.sflag [#allocation3], 1
    %10 = vsyncpa %s9, 0
    %11 = vsyncpa [#allocation5], 0
    %s12 = scalar_lea.sflag [#allocation5], 1
    %13 = vsyncpa %s12, 0
    loop: start=0, step=1, limit=4
    $region2: #{crnn_forward.2} parent=1 // loop_pre_header
      _
    $region3: #{crnn_forward.2} parent=1 // loop_header
      %s15 = sphi 0, %s19
      %p16 = scmp.ge.s32.totalorder %s15, 4
      %s22 = sphi 0, %s34
      %s23 = sphi 0, %s30
      %s24 = sphi 0, %s22
      %s25 = sphi 0, %s23
      %s26 = sphi 0, %s24
      %s27 = sphi 0, %s25
      %s39 = sphi 0, %s41
      %s42 = sphi 0, %s39
      %s43 = sphi 0, %s42
      %s59 = sphi 0, %s43
      %s65 = sphi 0, %s67
      %s68 = sphi 0, %s65
      %s69 = sphi 0, %s68
      %s85 = sphi 0, %s69
      %s91 = sphi 0, %s93
      %s94 = sphi 0, %s91
      %s95 = sphi 0, %s94
      %s111 = sphi 0, %s95
      %s119 = sphi 0, %s121
      %s122 = sphi 0, %s119
      %s123 = sphi 0, %s122
      %s139 = sphi 0, %s123
    $region4: #{crnn_forward.2} parent=1 // loop_header_branch
      %18 = sbr.rel (%p16) target = $region8
    $region5: #{crnn_forward.2} parent=1 // loop_body
      %s20 = ssub.s32 %s15, 1
      %s21 = ssub.s32 %s15, 2
      %s28 = sadd.s32 1, %s23
      %p29 = scmp.ge.s32.totalorder %s28, 1
      %s30 = scalar_select %p29, 0, %s28
      %s31 = sadd.s32 1, %s22
      %s32 = scalar_select %p29, %s31, %s22
      %p33 = scmp.ge.s32.totalorder %s32, 2
      %s34 = scalar_select %p33, 0, %s32
      %s35 = ssub.s32 %s22, %s34
      %s36 = ssub.s32 %s23, %s30
      %s37 = sor.u32 %s35, %s36
      %p38 = scmp.eq.s32.totalorder %s37, 0
      %s40 = sadd.s32 %s39, 1
      %s41 = scalar_select %p38, %s39, %s40
      %p44 = pneg %p38
      %p45 = scmp.eq.s32.totalorder %s15, 1
      %p46 = por %p44, %p45
      %p47 = scmp.ne.s32.totalorder %s39, %s42
      %p48 = scmp.eq.s32.totalorder %s15, 0
      %p49 = por %p47, %p48
      %p50 = scmp.ne.s32.totalorder %s39, %s42
      %p51 = scmp.eq.s32.totalorder %s20, 1
      %p52 = por %p50, %p51
      %p53 = scmp.ne.s32.totalorder %s42, %s43
      %p54 = scmp.eq.s32.totalorder %s20, 0
      %p55 = por %p53, %p54
      %p56 = scmp.ne.s32.totalorder %s42, %s43
      %p57 = scmp.eq.s32.totalorder %s21, 1
      %p58 = por %p56, %p57
      %p60 = scmp.ne.s32.totalorder %s43, %s59
      %p61 = scmp.eq.s32.totalorder %s21, 0
      %p62 = por %p60, %p61
      %s63 = ssub.s32 %s22, %s34
      %p64 = scmp.eq.s32.totalorder %s63, 0
      %s66 = sadd.s32 %s65, 1
      %s67 = scalar_select %p64, %s65, %s66
      %p70 = pneg %p64
      %p71 = scmp.eq.s32.totalorder %s15, 1
      %p72 = por %p70, %p71
      %p73 = scmp.ne.s32.totalorder %s65, %s68
      %p74 = scmp.eq.s32.totalorder %s15, 0
      %p75 = por %p73, %p74
      %p76 = scmp.ne.s32.totalorder %s65, %s68
      %p77 = scmp.eq.s32.totalorder %s20, 1
      %p78 = por %p76, %p77
      %p79 = scmp.ne.s32.totalorder %s68, %s69
      %p80 = scmp.eq.s32.totalorder %s20, 0
      %p81 = por %p79, %p80
      %p82 = scmp.ne.s32.totalorder %s68, %s69
      %p83 = scmp.eq.s32.totalorder %s21, 1
      %p84 = por %p82, %p83
      %p86 = scmp.ne.s32.totalorder %s69, %s85
      %p87 = scmp.eq.s32.totalorder %s21, 0
      %p88 = por %p86, %p87
      %s89 = ssub.s32 %s22, %s34
      %p90 = scmp.eq.s32.totalorder %s89, 0
      %s92 = sadd.s32 %s91, 1
      %s93 = scalar_select %p90, %s91, %s92
      %p96 = pneg %p90
      %p97 = scmp.eq.s32.totalorder %s15, 1
      %p98 = por %p96, %p97
      %p99 = scmp.ne.s32.totalorder %s91, %s94
      %p100 = scmp.eq.s32.totalorder %s15, 0
      %p101 = por %p99, %p100
      %p102 = scmp.ne.s32.totalorder %s91, %s94
      %p103 = scmp.eq.s32.totalorder %s20, 1
      %p104 = por %p102, %p103
      %p105 = scmp.ne.s32.totalorder %s94, %s95
      %p106 = scmp.eq.s32.totalorder %s20, 0
      %p107 = por %p105, %p106
      %p108 = scmp.ne.s32.totalorder %s94, %s95
      %p109 = scmp.eq.s32.totalorder %s21, 1
      %p110 = por %p108, %p109
      %p112 = scmp.ne.s32.totalorder %s95, %s111
      %p113 = scmp.eq.s32.totalorder %s21, 0
      %p114 = por %p112, %p113
      %s115 = ssub.s32 %s22, %s34
      %s116 = ssub.s32 %s23, %s30
      %s117 = sor.u32 %s115, %s116
      %p118 = scmp.eq.s32.totalorder %s117, 0
      %s120 = sadd.s32 %s119, 1
      %s121 = scalar_select %p118, %s119, %s120
      %p124 = pneg %p118
      %p125 = scmp.eq.s32.totalorder %s15, 1
      %p126 = por %p124, %p125
      %p127 = scmp.ne.s32.totalorder %s119, %s122
      %p128 = scmp.eq.s32.totalorder %s15, 0
      %p129 = por %p127, %p128
      %p130 = scmp.ne.s32.totalorder %s119, %s122
      %p131 = scmp.eq.s32.totalorder %s20, 1
      %p132 = por %p130, %p131
      %p133 = scmp.ne.s32.totalorder %s122, %s123
      %p134 = scmp.eq.s32.totalorder %s20, 0
      %p135 = por %p133, %p134
      %p136 = scmp.ne.s32.totalorder %s122, %s123
      %p137 = scmp.eq.s32.totalorder %s21, 1
      %p138 = por %p136, %p137
      %p140 = scmp.ne.s32.totalorder %s123, %s139
      %p141 = scmp.eq.s32.totalorder %s21, 0
      %p142 = por %p140, %p141
      %p143 = scmp.le.s32.totalorder 1, %s15
      %p144 = scmp.lt.s32.totalorder %s15, 3
      %p145 = pnand %p143, %p144
      %p146 = pneg %p145
      // Predicated region
      $region9: #{crnn_forward.2} parent=5 // pred_check
        _
      $region10: #{crnn_forward.2} parent=5 // pred_check_branch
        %148 = sbr.rel (%p145) target = $region12
      $region11: #{crnn_forward.2} parent=5 // pred_region
        %s149 = ssub.s32 %s15, 1
      $region12: #{crnn_forward.2} parent=5 // pred_fallthru
        _
      %p150 = scmp.lt.s32.totalorder %s15, 2
      // Predicated region
      $region13: #{crnn_forward.2} parent=5 // pred_check
        %p151 = pneg %p150
      $region14: #{crnn_forward.2} parent=5 // pred_check_branch
        %153 = sbr.rel (%p151) target = $region16
      $region15: #{crnn_forward.2} parent=5 // pred_region
        // Predicated region
        $region17: #{crnn_forward.2} parent=15 // pred_check
          %p154 = pneg %p49
        $region18: #{crnn_forward.2} parent=15 // pred_check_branch
          %156 = sbr.rel (%p154) target = $region20
        $region19: #{crnn_forward.2} parent=15 // pred_region
          %s157 = smul.u32 2, %s23
          %p158 = scmp.lt.s32.totalorder %s22, 1
          %s159 = scalar_select %p158, %s22, 1
          %p160 = scmp.lt.s32.totalorder %s157, 1
          %s161 = scalar_select %p160, %s157, 1
          %s162 = smul.addr %s159, 2
          %s163 = sadd.s32 %s161, %s162
          %s164 = smul.addr %s163, 4
          %s165 = scalar_lea.vmem %s0, %s164
          %s166 = smul.u32 2, %s23
        $region20: #{crnn_forward.2} parent=15 // pred_fallthru
          _
        // Predicated region
        $region21: #{crnn_forward.2} parent=15 // pred_check
          %p167 = pneg %p75
        $region22: #{crnn_forward.2} parent=15 // pred_check_branch
          %169 = sbr.rel (%p167) target = $region24
        $region23: #{crnn_forward.2} parent=15 // pred_region
          %s170 = sand.u32 %s65, 1
          %s171 = scalar_lea.sflag [#allocation3], %s170
          %s172 = sand.u32 %s65, 1
          %s173 = smul.addr %s172, 192
          %s174 = scalar_lea.vmem [#allocation2], %s173
          %s176 = ssub.s32 3072, 3072
          %177 = vsyncadd %s171, %s176
          %s178 = smul.addr %s22, 48
          %s179 = smul.addr %s178, 64
          %s180 = scalar_lea.hbm %s1, %s179
          %s181 = sshll.u32 %s174, 4
          %s182 = int_to_ptr.vmem [resolvable:$true] %s181
          %187 = dma.hbm_to_vmem [thread:$0]  %s180, 3072, %s182, %s171, 384, 384, 24
        $region24: #{crnn_forward.2} parent=15 // pred_fallthru
          _
        // Predicated region
        $region25: #{crnn_forward.2} parent=15 // pred_check
          %p188 = pneg %p101
        $region26: #{crnn_forward.2} parent=15 // pred_check_branch
          %190 = sbr.rel (%p188) target = $region28
        $region27: #{crnn_forward.2} parent=15 // pred_region
          %s191 = sand.u32 %s91, 1
          %s192 = scalar_lea.sflag [#allocation5], %s191
          %s193 = sand.u32 %s91, 1
          %s194 = smul.addr %s193, 6
          %s195 = scalar_lea.vmem [#allocation4], %s194
          %s197 = ssub.s32 96, 96
          %198 = vsyncadd %s192, %s197
          %s199 = smul.addr %s22, 6
          %s200 = smul.addr %s199, 16
          %s201 = scalar_lea.hbm %s2, %s200
          %s203 = sshll.u32 %s195, 4
          %s204 = int_to_ptr.vmem [resolvable:$true] %s203
          %206 = dma.hbm_to_vmem [thread:$0]  %s201, 96, %s204, %s192
        $region28: #{crnn_forward.2} parent=15 // pred_fallthru
          _
      $region16: #{crnn_forward.2} parent=5 // pred_fallthru
        _
      %p207 = scmp.le.s32.totalorder 1, %s15
      %p208 = scmp.lt.s32.totalorder %s15, 3
      %p209 = pnand %p207, %p208
      %p210 = pneg %p209
      // Predicated region
      $region29: #{crnn_forward.2} parent=5 // pred_check
        _
      $region30: #{crnn_forward.2} parent=5 // pred_check_branch
        %212 = sbr.rel (%p209) target = $region32
      $region31: #{crnn_forward.2} parent=5 // pred_region
        %s213 = ssub.s32 %s15, 1
        %s214 = sand.u32 %s68, 1
        %s215 = scalar_lea.sflag [#allocation3], %s214
        %s216 = sand.u32 %s68, 1
        %s217 = smul.addr %s216, 192
        %s218 = scalar_lea.vmem [#allocation2], %s217
        // Predicated region
        $region33: #{crnn_forward.2} parent=31 // pred_check
          %p219 = pneg %p81
        $region34: #{crnn_forward.2} parent=31 // pred_check_branch
          %221 = sbr.rel (%p219) target = $region36
        $region35: #{crnn_forward.2} parent=31 // pred_region
          %222 = dma.done %s215, 3072
        $region36: #{crnn_forward.2} parent=31 // pred_fallthru
          _
        %s223 = sand.u32 %s94, 1
        %s224 = scalar_lea.sflag [#allocation5], %s223
        %s225 = sand.u32 %s94, 1
        %s226 = smul.addr %s225, 6
        %s227 = scalar_lea.vmem [#allocation4], %s226
        // Predicated region
        $region37: #{crnn_forward.2} parent=31 // pred_check
          %p228 = pneg %p107
        $region38: #{crnn_forward.2} parent=31 // pred_check_branch
          %230 = sbr.rel (%p228) target = $region40
        $region39: #{crnn_forward.2} parent=31 // pred_region
          %231 = dma.done %s224, 96
        $region40: #{crnn_forward.2} parent=31 // pred_fallthru
          _
        %s232 = smul.u32 2, %s25
        %p233 = scmp.lt.s32.totalorder %s24, 1
        %s234 = scalar_select %p233, %s24, 1
        %p235 = scmp.lt.s32.totalorder %s232, 1
        %s236 = scalar_select %p235, %s232, 1
        %s237 = smul.addr %s234, 2
        %s238 = sadd.s32 %s236, %s237
        %s239 = smul.addr %s238, 4
        %s240 = scalar_lea.vmem %s0, %s239
        %p241 = pneg %p55
        %p242 = pneg %p52
        %s243 = sand.u32 %s68, 1
        %s244 = scalar_lea.sflag [#allocation3], %s243
        %s245 = sand.u32 %s68, 1
        %s246 = smul.addr %s245, 192
        %s247 = scalar_lea.vmem [#allocation2], %s246
        %p248 = pneg %p81
        %p249 = pneg %p78
        %s250 = sand.u32 %s94, 1
        %s251 = scalar_lea.sflag [#allocation5], %s250
        %s252 = sand.u32 %s94, 1
        %s253 = smul.addr %s252, 6
        %s254 = scalar_lea.vmem [#allocation4], %s253
        %p255 = pneg %p107
        %p256 = pneg %p104
        %p257 = pneg %p135
        %p258 = pneg %p132
        %s259 = smul.u32 2, %s25
        %p260 = scmp.lt.s32.totalorder %s24, 1
        %s261 = scalar_select %p260, %s24, 1
        %p262 = scmp.lt.s32.totalorder %s259, 1
        %s263 = scalar_select %p262, %s259, 1
        %s264 = smul.addr %s263, 6
        %s265 = smul.addr %s261, 12
        %s266 = sadd.s32 %s264, %s265
        %s267 = smul.addr %s266, 4
        %s268 = scalar_lea.vmem %s3, %s267
        %s269 = smul.u32 2, %s25
        %p270 = scmp.lt.s32.totalorder %s24, 1
        %s271 = scalar_select %p270, %s24, 1
        %p272 = scmp.lt.s32.totalorder %s269, 1
        %s273 = scalar_select %p272, %s269, 1
        %s274 = smul.addr %s271, 2
        %s275 = sadd.s32 %s273, %s274
        %s276 = smul.addr %s275, 4
        %s277 = scalar_lea.vmem %s0, %s276
        %s278 = smul.u32 2, %s25
        %s279 = smul.u32 2, %s25
        %p280 = scmp.lt.s32.totalorder %s24, 1
        %s281 = scalar_select %p280, %s24, 1
        %p282 = scmp.lt.s32.totalorder %s279, 1
        %s283 = scalar_select %p282, %s279, 1
        %s284 = smul.addr %s283, 6
        %s285 = smul.addr %s281, 12
        %s286 = sadd.s32 %s284, %s285
        %s287 = smul.addr %s286, 4
        %s288 = scalar_lea.vmem %s3, %s287
        %s289 = smul.u32 2, %s25
        %v291 = vld [vmem:[%s277] sm:$0xf]
        %v292 = vld [vmem:[%s277 + $0x4] sm:$0xf]
        %v293 = vld [vmem:[%s218] sm:$0xff]
        %v294 = vld [vmem:[%s218 + $0x8] sm:$0xff]
        %v295 = vld [vmem:[%s218 + $0x10] sm:$0xff]
        %v296 = vld [vmem:[%s218 + $0x18] sm:$0xff]
        %v297 = vld [vmem:[%s218 + $0x20] sm:$0xff]
        %v298 = vld [vmem:[%s218 + $0x28] sm:$0xff]
        %v299 = vld [vmem:[%s218 + $0x30] sm:$0xff]
        %v300 = vld [vmem:[%s218 + $0x38] sm:$0xff]
        %v301 = vld [vmem:[%s218 + $0x40] sm:$0xff]
        %v302 = vld [vmem:[%s218 + $0x48] sm:$0xff]
        %v303 = vld [vmem:[%s218 + $0x50] sm:$0xff]
        %v304 = vld [vmem:[%s218 + $0x58] sm:$0xff]
        %v305 = vld [vmem:[%s218 + $0x60] sm:$0xff]
        %v306 = vld [vmem:[%s218 + $0x68] sm:$0xff]
        %v307 = vld [vmem:[%s218 + $0x70] sm:$0xff]
        %v308 = vld [vmem:[%s218 + $0x78] sm:$0xff]
        %v309 = vld [vmem:[%s218 + $0x80] sm:$0xff]
        %v310 = vld [vmem:[%s218 + $0x88] sm:$0xff]
        %v311 = vld [vmem:[%s218 + $0x90] sm:$0xff]
        %v312 = vld [vmem:[%s218 + $0x98] sm:$0xff]
        %v313 = vld [vmem:[%s218 + $0xa0] sm:$0xff]
        %v314 = vld [vmem:[%s218 + $0xa8] sm:$0xff]
        %v315 = vld [vmem:[%s218 + $0xb0] sm:$0xff]
        %v316 = vld [vmem:[%s218 + $0xb8] sm:$0xff]
        %v317 = vld [vmem:[%s227] sm:$0x3f]
        %v319 = vlaneseq
        %v320 = vshrl.u32 %v319, 7
        %v321 = vsub.s32 0, %v320
        %v322 = vrot.slane %v317, %v321
        %v323 = vlaneseq
        %v324 = vshrl.u32 %v323, 7
        %v325 = vsub.s32 1, %v324
        %v326 = vrot.slane %v317, %v325
        %v327 = vlaneseq
        %v328 = vshrl.u32 %v327, 7
        %v329 = vsub.s32 2, %v328
        %v330 = vrot.slane %v317, %v329
        %v331 = vlaneseq
        %v332 = vshrl.u32 %v331, 7
        %v333 = vsub.s32 3, %v332
        %v334 = vrot.slane %v317, %v333
        %v335 = vlaneseq
        %v336 = vshrl.u32 %v335, 7
        %v337 = vsub.s32 4, %v336
        %v338 = vrot.slane %v317, %v337
        %v339 = vlaneseq
        %v340 = vshrl.u32 %v339, 7
        %v341 = vsub.s32 5, %v340
        %v342 = vrot.slane %v317, %v341
        %v351 = vunpack.c.l.b16 %v291
        %v352 = vunpack.c.l.b16 %v292
        %v353 = vpack.c.b16 %v352, %v351
        %v378 = vunpack.c.l.b16 %v293
        %v379 = vunpack.c.h.b16 %v293
        %v380 = vunpack.c.l.b16 %v294
        %v381 = vunpack.c.h.b16 %v294
        %v382 = vunpack.c.l.b16 %v295
        %v383 = vunpack.c.h.b16 %v295
        %v384 = vunpack.c.l.b16 %v296
        %v385 = vunpack.c.h.b16 %v296
        %v386 = vunpack.c.l.b16 %v297
        %v387 = vunpack.c.h.b16 %v297
        %v388 = vunpack.c.l.b16 %v298
        %v389 = vunpack.c.h.b16 %v298
        %v390 = vunpack.c.l.b16 %v299
        %v391 = vunpack.c.h.b16 %v299
        %v392 = vunpack.c.l.b16 %v300
        %v393 = vunpack.c.h.b16 %v300
        %v394 = vunpack.c.l.b16 %v301
        %v395 = vunpack.c.h.b16 %v301
        %v396 = vunpack.c.l.b16 %v302
        %v397 = vunpack.c.h.b16 %v302
        %v398 = vunpack.c.l.b16 %v303
        %v399 = vunpack.c.h.b16 %v303
        %v400 = vunpack.c.l.b16 %v304
        %v401 = vunpack.c.h.b16 %v304
        %v402 = vunpack.c.l.b16 %v305
        %v403 = vunpack.c.h.b16 %v305
        %v404 = vunpack.c.l.b16 %v306
        %v405 = vunpack.c.h.b16 %v306
        %v406 = vunpack.c.l.b16 %v307
        %v407 = vunpack.c.h.b16 %v307
        %v408 = vunpack.c.l.b16 %v308
        %v409 = vunpack.c.h.b16 %v308
        %v410 = vunpack.c.l.b16 %v309
        %v411 = vunpack.c.h.b16 %v309
        %v412 = vunpack.c.l.b16 %v310
        %v413 = vunpack.c.h.b16 %v310
        %v414 = vunpack.c.l.b16 %v311
        %v415 = vunpack.c.h.b16 %v311
        %v416 = vunpack.c.l.b16 %v312
        %v417 = vunpack.c.h.b16 %v312
        %v418 = vunpack.c.l.b16 %v313
        %v419 = vunpack.c.h.b16 %v313
        %v420 = vunpack.c.l.b16 %v314
        %v421 = vunpack.c.h.b16 %v314
        %v422 = vunpack.c.l.b16 %v315
        %v423 = vunpack.c.h.b16 %v315
        %v424 = vunpack.c.l.b16 %v316
        %v425 = vunpack.c.h.b16 %v316
        %v426 = vpack.c.b16 %v384, %v378
        %v427 = vpack.c.b16 %v385, %v379
        %v428 = vpack.c.b16 %v386, %v380
        %v429 = vpack.c.b16 %v387, %v381
        %v430 = vpack.c.b16 %v388, %v382
        %v431 = vpack.c.b16 %v389, %v383
        %v432 = vpack.c.b16 %v396, %v390
        %v433 = vpack.c.b16 %v397, %v391
        %v434 = vpack.c.b16 %v398, %v392
        %v435 = vpack.c.b16 %v399, %v393
        %v436 = vpack.c.b16 %v400, %v394
        %v437 = vpack.c.b16 %v401, %v395
        %v438 = vpack.c.b16 %v408, %v402
        %v439 = vpack.c.b16 %v409, %v403
        %v440 = vpack.c.b16 %v410, %v404
        %v441 = vpack.c.b16 %v411, %v405
        %v442 = vpack.c.b16 %v412, %v406
        %v443 = vpack.c.b16 %v413, %v407
        %v444 = vpack.c.b16 %v420, %v414
        %v445 = vpack.c.b16 %v421, %v415
        %v446 = vpack.c.b16 %v422, %v416
        %v447 = vpack.c.b16 %v423, %v417
        %v448 = vpack.c.b16 %v424, %v418
        %v449 = vpack.c.b16 %v425, %v419
        %vm474 = vcmask 523264
        %v476 = vsel %vm474, %v353, 0
        %478 = vmatprep.subr.bf16.mxu0 %v427
        %479 = vmatpush1.bf16.msra.mxu0 %v426
        %480 = vmatprep.subr.bf16.mxu0 %v433
        %481 = vmatpush1.bf16.msra.mxu0 %v432
        %482 = vmatprep.subr.bf16.mxu0 %v439
        %483 = vmatpush1.bf16.msra.mxu0 %v438
        %484 = vmatprep.subr.bf16.mxu0 %v445
        %485 = vmatpush1.bf16.msra.mxu0 %v444
        %486 = vmatprep.subr.bf16.mxu0 0
        %487 = vmatpush1.bf16.msra.mxu0 0
        %488 = vmatprep.subr.bf16.mxu0 0
        %489 = vmatpush1.bf16.msra.mxu0 0
        %490 = vmatprep.subr.bf16.mxu0 0
        %491 = vmatpush1.bf16.msra.mxu0 0
        %492 = vmatprep.subr.bf16.mxu0 0
        %493 = vmatpush1.bf16.msra.mxu0 0
        %494 = vmatprep.subr.bf16.mxu0 0
        %495 = vmatpush1.bf16.msra.mxu0 0
        %496 = vmatprep.subr.bf16.mxu0 0
        %497 = vmatpush1.bf16.msra.mxu0 0
        %498 = vmatprep.subr.bf16.mxu0 0
        %499 = vmatpush1.bf16.msra.mxu0 0
        %500 = vmatprep.subr.bf16.mxu0 0
        %501 = vmatpush1.bf16.msra.mxu0 0
        %502 = vmatprep.subr.bf16.mxu0 0
        %503 = vmatpush1.bf16.msra.mxu0 0
        %504 = vmatprep.subr.bf16.mxu0 0
        %505 = vmatpush1.bf16.msra.mxu0 0
        %506 = vmatprep.subr.bf16.mxu0 0
        %507 = vmatpush1.bf16.msra.mxu0 0
        %508 = vmatprep.subr.bf16.mxu0 0
        %509 = vmatpush1.bf16.msra.mxu0 0
        %510 = vmatprep.mubr.bf16.mxu0 0
        %511 = vmatmul.mubr.bf16.gmra.mrb[0].mxu0 %v476
        %v512 = vpop.f32.mrb[0].mxu0
        %v513 = vadd.f32 %v322, %v512
        %v514 = vpop.f32.mrb[0].mxu0
        %v515 = vadd.f32 %v326, %v514
        %v516 = vpop.f32.mrb[0].mxu0
        %v517 = vadd.f32 %v322, %v516
        %v518 = vpop.f32.mrb[0].mxu0
        %v519 = vadd.f32 %v326, %v518
        %520 = vdwg.mxu0
        %521 = vmatprep.subr.bf16.mxu0 %v429
        %522 = vmatpush1.bf16.msra.mxu0 %v428
        %523 = vmatprep.subr.bf16.mxu0 %v435
        %524 = vmatpush1.bf16.msra.mxu0 %v434
        %525 = vmatprep.subr.bf16.mxu0 %v441
        %526 = vmatpush1.bf16.msra.mxu0 %v440
        %527 = vmatprep.subr.bf16.mxu0 %v447
        %528 = vmatpush1.bf16.msra.mxu0 %v446
        %529 = vmatprep.subr.bf16.mxu0 0
        %530 = vmatpush1.bf16.msra.mxu0 0
        %531 = vmatprep.subr.bf16.mxu0 0
        %532 = vmatpush1.bf16.msra.mxu0 0
        %533 = vmatprep.subr.bf16.mxu0 0
        %534 = vmatpush1.bf16.msra.mxu0 0
        %535 = vmatprep.subr.bf16.mxu0 0
        %536 = vmatpush1.bf16.msra.mxu0 0
        %537 = vmatprep.subr.bf16.mxu0 0
        %538 = vmatpush1.bf16.msra.mxu0 0
        %539 = vmatprep.subr.bf16.mxu0 0
        %540 = vmatpush1.bf16.msra.mxu0 0
        %541 = vmatprep.subr.bf16.mxu0 0
        %542 = vmatpush1.bf16.msra.mxu0 0
        %543 = vmatprep.subr.bf16.mxu0 0
        %544 = vmatpush1.bf16.msra.mxu0 0
        %545 = vmatprep.subr.bf16.mxu0 0
        %546 = vmatpush1.bf16.msra.mxu0 0
        %547 = vmatprep.subr.bf16.mxu0 0
        %548 = vmatpush1.bf16.msra.mxu0 0
        %549 = vmatprep.subr.bf16.mxu0 0
        %550 = vmatpush1.bf16.msra.mxu0 0
        %551 = vmatprep.subr.bf16.mxu0 0
        %552 = vmatpush1.bf16.msra.mxu0 0
        %553 = vmatprep.mubr.bf16.mxu0 0
        %554 = vmatmul.mubr.bf16.gmra.mrb[0].mxu0 %v476
        %v555 = vpop.f32.mrb[0].mxu0
        %v556 = vadd.f32 %v330, %v555
        %v557 = vpop.f32.mrb[0].mxu0
        %v558 = vadd.f32 %v334, %v557
        %v559 = vpop.f32.mrb[0].mxu0
        %v560 = vadd.f32 %v330, %v559
        %v561 = vpop.f32.mrb[0].mxu0
        %v562 = vadd.f32 %v334, %v561
        %563 = vdwg.mxu0
        %564 = vmatprep.subr.bf16.mxu0 %v431
        %565 = vmatpush1.bf16.msra.mxu0 %v430
        %566 = vmatprep.subr.bf16.mxu0 %v437
        %567 = vmatpush1.bf16.msra.mxu0 %v436
        %568 = vmatprep.subr.bf16.mxu0 %v443
        %569 = vmatpush1.bf16.msra.mxu0 %v442
        %570 = vmatprep.subr.bf16.mxu0 %v449
        %571 = vmatpush1.bf16.msra.mxu0 %v448
        %572 = vmatprep.subr.bf16.mxu0 0
        %573 = vmatpush1.bf16.msra.mxu0 0
        %574 = vmatprep.subr.bf16.mxu0 0
        %575 = vmatpush1.bf16.msra.mxu0 0
        %576 = vmatprep.subr.bf16.mxu0 0
        %577 = vmatpush1.bf16.msra.mxu0 0
        %578 = vmatprep.subr.bf16.mxu0 0
        %579 = vmatpush1.bf16.msra.mxu0 0
        %580 = vmatprep.subr.bf16.mxu0 0
        %581 = vmatpush1.bf16.msra.mxu0 0
        %582 = vmatprep.subr.bf16.mxu0 0
        %583 = vmatpush1.bf16.msra.mxu0 0
        %584 = vmatprep.subr.bf16.mxu0 0
        %585 = vmatpush1.bf16.msra.mxu0 0
        %586 = vmatprep.subr.bf16.mxu0 0
        %587 = vmatpush1.bf16.msra.mxu0 0
        %588 = vmatprep.subr.bf16.mxu0 0
        %589 = vmatpush1.bf16.msra.mxu0 0
        %590 = vmatprep.subr.bf16.mxu0 0
        %591 = vmatpush1.bf16.msra.mxu0 0
        %592 = vmatprep.subr.bf16.mxu0 0
        %593 = vmatpush1.bf16.msra.mxu0 0
        %594 = vmatprep.subr.bf16.mxu0 0
        %595 = vmatpush1.bf16.msra.mxu0 0
        %596 = vmatprep.mubr.bf16.mxu0 0
        %597 = vmatmul.mubr.bf16.gmra.mrb[0].mxu0 %v476
        %v598 = vpop.f32.mrb[0].mxu0
        %v599 = vadd.f32 %v338, %v598
        %v600 = vpop.f32.mrb[0].mxu0
        %v601 = vadd.f32 %v342, %v600
        %v602 = vpop.f32.mrb[0].mxu0
        %v603 = vadd.f32 %v338, %v602
        %v604 = vpop.f32.mrb[0].mxu0
        %v605 = vadd.f32 %v342, %v604
        %606 = vdwg.mxu0
        %v607 = vpack.c.bf16 %v517, %v513
        %v608 = vpack.c.bf16 %v519, %v515
        %v609 = vpack.c.bf16 %v560, %v556
        %v610 = vpack.c.bf16 %v562, %v558
        %v611 = vpack.c.bf16 %v603, %v599
        %v612 = vpack.c.bf16 %v605, %v601
        %v619 = vunpack.c.l.b16 %v607
        %v620 = vunpack.c.l.b16 %v608
        %v621 = vunpack.c.l.b16 %v609
        %v622 = vunpack.c.l.b16 %v610
        %v623 = vunpack.c.l.b16 %v611
        %v624 = vunpack.c.l.b16 %v612
        %v625 = vunpack.c.h.b16 %v607
        %v626 = vunpack.c.h.b16 %v608
        %v627 = vunpack.c.h.b16 %v609
        %v628 = vunpack.c.h.b16 %v610
        %v629 = vunpack.c.h.b16 %v611
        %v630 = vunpack.c.h.b16 %v612
        %v631 = vpack.c.b16 %v620, %v619
        %v632 = vpack.c.b16 %v622, %v621
        %v633 = vpack.c.b16 %v624, %v623
        %v634 = vpack.c.b16 %v626, %v625
        %v635 = vpack.c.b16 %v628, %v627
        %v636 = vpack.c.b16 %v630, %v629
        %643 = vst [vmem:[%s288] sm:$0xff] %v631
        %644 = vst [vmem:[%s288 + $0x8] sm:$0xff] %v632
        %645 = vst [vmem:[%s288 + $0x10] sm:$0xff] %v633
        %646 = vst [vmem:[%s288 + $0x18] sm:$0xff] %v634
        %647 = vst [vmem:[%s288 + $0x20] sm:$0xff] %v635
        %648 = vst [vmem:[%s288 + $0x28] sm:$0xff] %v636
        %s649 = smul.u32 2, %s25
        %p650 = scmp.lt.s32.totalorder %s24, 1
        %s651 = scalar_select %p650, %s24, 1
        %p652 = scmp.lt.s32.totalorder %s649, 1
        %s653 = scalar_select %p652, %s649, 1
        %s654 = smul.addr %s653, 6
        %s655 = smul.addr %s651, 12
        %s656 = sadd.s32 %s654, %s655
        %s657 = smul.addr %s656, 4
        %s658 = scalar_lea.vmem %s3, %s657
        // Predicated region
        $region41: #{crnn_forward.2} parent=31 // pred_check
          %p659 = pneg %p132
        $region42: #{crnn_forward.2} parent=31 // pred_check_branch
          %661 = sbr.rel (%p659) target = $region44
        $region43: #{crnn_forward.2} parent=31 // pred_region
          %s662 = smul.u32 2, %s25
        $region44: #{crnn_forward.2} parent=31 // pred_fallthru
          _
      $region32: #{crnn_forward.2} parent=5 // pred_fallthru
        _
      %p663 = scmp.le.s32.totalorder 2, %s15
      // Predicated region
      $region45: #{crnn_forward.2} parent=5 // pred_check
        %p664 = pneg %p663
      $region46: #{crnn_forward.2} parent=5 // pred_check_branch
        %666 = sbr.rel (%p664) target = $region48
      $region47: #{crnn_forward.2} parent=5 // pred_region
        %s667 = ssub.s32 %s15, 2
        // Predicated region
        $region49: #{crnn_forward.2} parent=47 // pred_check
          %p668 = pneg %p138
        $region50: #{crnn_forward.2} parent=47 // pred_check_branch
          %670 = sbr.rel (%p668) target = $region52
        $region51: #{crnn_forward.2} parent=47 // pred_region
          %s671 = smul.u32 2, %s27
          %p672 = scmp.lt.s32.totalorder %s26, 1
          %s673 = scalar_select %p672, %s26, 1
          %p674 = scmp.lt.s32.totalorder %s671, 1
          %s675 = scalar_select %p674, %s671, 1
          %s676 = smul.addr %s675, 6
          %s677 = smul.addr %s673, 12
          %s678 = sadd.s32 %s676, %s677
          %s679 = smul.addr %s678, 4
          %s680 = scalar_lea.vmem %s3, %s679
        $region52: #{crnn_forward.2} parent=47 // pred_fallthru
          _
      $region48: #{crnn_forward.2} parent=5 // pred_fallthru
        _
    $region6: #{crnn_forward.2} parent=1 // loop_footer
      %s19 = sadd.s32 1, %s15
    $region7: #{crnn_forward.2} parent=1 // loop_footer_branch
      %14 = sbr.rel target = $region3
    $region8: #{crnn_forward.2} parent=1 // loop_exit
      _
    %681 = vsyncpa [#allocation3], 1
    %s682 = scalar_lea.sflag [#allocation3], 1
    %683 = vsyncpa %s682, 1
    %684 = vsyncpa [#allocation5], 1
    %s685 = scalar_lea.sflag [#allocation5], 1
    %686 = vsyncpa %s685, 1

// kernel: crnn_forward.3
$region0: #{crnn_forward.3}
  #allocation0 [shape = 'u32[]', space=smem, size = 0x4, offset = 0x4, fixed_abs, tag = 'smem constant byte address 0x4 - core index']
  #allocation1 [shape = 'u32[144,128]{1,0:T(1,128)}', space=vmem, size = 0x12000, scoped, tag = 'internal scratch']
  #allocation2 [shape = 'f32[2,2,128]{2,1,0:T(2,128)}', space=vmem, size = 0x800, scoped, tag = 'scratch operand']
  %s0 = inlined_call_operand.vmem [shape: bf16[2,16,768], index: 0, kind: input, shape index: {}, may-alias: {0,1}]
  %s1 = inlined_call_operand.vmem [shape: bf16[2,16,768], index: 1, kind: input, shape index: {}, may-alias: {0,1}]
  %s2 = inlined_call_operand.vmem [shape: bf16[2,2,128,384], index: 2, kind: input, shape index: {}]
  %s3 = inlined_call_operand.vmem [shape: f32[2,2,1,384], index: 3, kind: input, shape index: {}]
  %s4 = inlined_call_operand.vmem [shape: f32[2,4,1,128], index: 4, kind: input, shape index: {}]
  %s5 = inlined_call_operand.vmem [shape: f32[2,16,64], index: 5, kind: output, shape index: {}]
  %s6 = sld [smem:[#allocation0]]
  $region109: #{crnn_forward.3} parent=0
    _
  %s8 = ssub.s32 1, %s6
  %s9 = scalar_select 0, %s8, %s6
  $region1: #{crnn_forward.3} parent=0
    #allocation3 [shape = 'u8[24576]{0}', space=vmem, size = 0x6000, scoped, tag = 'input window, operand 0']
    #allocation4 [shape = 'u8[24576]{0}', space=vmem, size = 0x6000, scoped, tag = 'input window, operand 1']
    loop: start=0, step=1, limit=4
    $region2: #{crnn_forward.3} parent=1 // loop_pre_header
      _
    $region3: #{crnn_forward.3} parent=1 // loop_header
      %s11 = sphi 0, %s15
      %p12 = scmp.ge.s32.totalorder %s11, 4
      %s18 = sphi 0, %s30
      %s19 = sphi 0, %s26
      %s20 = sphi 0, %s18
      %s21 = sphi 0, %s19
      %s22 = sphi 0, %s20
      %s23 = sphi 0, %s21
      %s35 = sphi 0, %s37
      %s38 = sphi 0, %s35
      %s39 = sphi 0, %s38
      %s55 = sphi 0, %s39
      %s65 = sphi 0, %s67
      %s68 = sphi 0, %s65
      %s69 = sphi 0, %s68
      %s85 = sphi 0, %s69
      %s91 = sphi 0, %s93
      %s94 = sphi 0, %s91
      %s95 = sphi 0, %s94
      %s111 = sphi 0, %s95
      %s117 = sphi 0, %s119
      %s120 = sphi 0, %s117
      %s121 = sphi 0, %s120
      %s137 = sphi 0, %s121
      %s143 = sphi 0, %s145
      %s146 = sphi 0, %s143
      %s147 = sphi 0, %s146
      %s163 = sphi 0, %s147
      %s171 = sphi 0, %s173
      %s174 = sphi 0, %s171
      %s175 = sphi 0, %s174
      %s191 = sphi 0, %s175
    $region4: #{crnn_forward.3} parent=1 // loop_header_branch
      %14 = sbr.rel (%p12) target = $region8
    $region5: #{crnn_forward.3} parent=1 // loop_body
      %s16 = ssub.s32 %s11, 1
      %s17 = ssub.s32 %s11, 2
      %s24 = sadd.s32 1, %s19
      %p25 = scmp.ge.s32.totalorder %s24, 1
      %s26 = scalar_select %p25, 0, %s24
      %s27 = sadd.s32 1, %s18
      %s28 = scalar_select %p25, %s27, %s18
      %p29 = scmp.ge.s32.totalorder %s28, 2
      %s30 = scalar_select %p29, 0, %s28
      %s31 = ssub.s32 %s19, %s26
      %s32 = ssub.s32 %s18, %s30
      %s33 = sor.u32 %s31, %s32
      %p34 = scmp.eq.s32.totalorder %s33, 0
      %s36 = sadd.s32 %s35, 1
      %s37 = scalar_select %p34, %s35, %s36
      %p40 = pneg %p34
      %p41 = scmp.eq.s32.totalorder %s11, 1
      %p42 = por %p40, %p41
      %p43 = scmp.ne.s32.totalorder %s35, %s38
      %p44 = scmp.eq.s32.totalorder %s11, 0
      %p45 = por %p43, %p44
      %p46 = scmp.ne.s32.totalorder %s35, %s38
      %p47 = scmp.eq.s32.totalorder %s16, 1
      %p48 = por %p46, %p47
      %p49 = scmp.ne.s32.totalorder %s38, %s39
      %p50 = scmp.eq.s32.totalorder %s16, 0
      %p51 = por %p49, %p50
      %p52 = scmp.ne.s32.totalorder %s38, %s39
      %p53 = scmp.eq.s32.totalorder %s17, 1
      %p54 = por %p52, %p53
      %p56 = scmp.ne.s32.totalorder %s39, %s55
      %p57 = scmp.eq.s32.totalorder %s17, 0
      %p58 = por %p56, %p57
      %s59 = ssub.s32 1, %s18
      %s60 = ssub.s32 1, %s30
      %s61 = ssub.s32 %s19, %s26
      %s62 = ssub.s32 %s59, %s60
      %s63 = sor.u32 %s61, %s62
      %p64 = scmp.eq.s32.totalorder %s63, 0
      %s66 = sadd.s32 %s65, 1
      %s67 = scalar_select %p64, %s65, %s66
      %p70 = pneg %p64
      %p71 = scmp.eq.s32.totalorder %s11, 1
      %p72 = por %p70, %p71
      %p73 = scmp.ne.s32.totalorder %s65, %s68
      %p74 = scmp.eq.s32.totalorder %s11, 0
      %p75 = por %p73, %p74
      %p76 = scmp.ne.s32.totalorder %s65, %s68
      %p77 = scmp.eq.s32.totalorder %s16, 1
      %p78 = por %p76, %p77
      %p79 = scmp.ne.s32.totalorder %s68, %s69
      %p80 = scmp.eq.s32.totalorder %s16, 0
      %p81 = por %p79, %p80
      %p82 = scmp.ne.s32.totalorder %s68, %s69
      %p83 = scmp.eq.s32.totalorder %s17, 1
      %p84 = por %p82, %p83
      %p86 = scmp.ne.s32.totalorder %s69, %s85
      %p87 = scmp.eq.s32.totalorder %s17, 0
      %p88 = por %p86, %p87
      %s89 = ssub.s32 %s18, %s30
      %p90 = scmp.eq.s32.totalorder %s89, 0
      %s92 = sadd.s32 %s91, 1
      %s93 = scalar_select %p90, %s91, %s92
      %p96 = pneg %p90
      %p97 = scmp.eq.s32.totalorder %s11, 1
      %p98 = por %p96, %p97
      %p99 = scmp.ne.s32.totalorder %s91, %s94
      %p100 = scmp.eq.s32.totalorder %s11, 0
      %p101 = por %p99, %p100
      %p102 = scmp.ne.s32.totalorder %s91, %s94
      %p103 = scmp.eq.s32.totalorder %s16, 1
      %p104 = por %p102, %p103
      %p105 = scmp.ne.s32.totalorder %s94, %s95
      %p106 = scmp.eq.s32.totalorder %s16, 0
      %p107 = por %p105, %p106
      %p108 = scmp.ne.s32.totalorder %s94, %s95
      %p109 = scmp.eq.s32.totalorder %s17, 1
      %p110 = por %p108, %p109
      %p112 = scmp.ne.s32.totalorder %s95, %s111
      %p113 = scmp.eq.s32.totalorder %s17, 0
      %p114 = por %p112, %p113
      %s115 = ssub.s32 %s18, %s30
      %p116 = scmp.eq.s32.totalorder %s115, 0
      %s118 = sadd.s32 %s117, 1
      %s119 = scalar_select %p116, %s117, %s118
      %p122 = pneg %p116
      %p123 = scmp.eq.s32.totalorder %s11, 1
      %p124 = por %p122, %p123
      %p125 = scmp.ne.s32.totalorder %s117, %s120
      %p126 = scmp.eq.s32.totalorder %s11, 0
      %p127 = por %p125, %p126
      %p128 = scmp.ne.s32.totalorder %s117, %s120
      %p129 = scmp.eq.s32.totalorder %s16, 1
      %p130 = por %p128, %p129
      %p131 = scmp.ne.s32.totalorder %s120, %s121
      %p132 = scmp.eq.s32.totalorder %s16, 0
      %p133 = por %p131, %p132
      %p134 = scmp.ne.s32.totalorder %s120, %s121
      %p135 = scmp.eq.s32.totalorder %s17, 1
      %p136 = por %p134, %p135
      %p138 = scmp.ne.s32.totalorder %s121, %s137
      %p139 = scmp.eq.s32.totalorder %s17, 0
      %p140 = por %p138, %p139
      %s141 = ssub.s32 %s18, %s30
      %p142 = scmp.eq.s32.totalorder %s141, 0
      %s144 = sadd.s32 %s143, 1
      %s145 = scalar_select %p142, %s143, %s144
      %p148 = pneg %p142
      %p149 = scmp.eq.s32.totalorder %s11, 1
      %p150 = por %p148, %p149
      %p151 = scmp.ne.s32.totalorder %s143, %s146
      %p152 = scmp.eq.s32.totalorder %s11, 0
      %p153 = por %p151, %p152
      %p154 = scmp.ne.s32.totalorder %s143, %s146
      %p155 = scmp.eq.s32.totalorder %s16, 1
      %p156 = por %p154, %p155
      %p157 = scmp.ne.s32.totalorder %s146, %s147
      %p158 = scmp.eq.s32.totalorder %s16, 0
      %p159 = por %p157, %p158
      %p160 = scmp.ne.s32.totalorder %s146, %s147
      %p161 = scmp.eq.s32.totalorder %s17, 1
      %p162 = por %p160, %p161
      %p164 = scmp.ne.s32.totalorder %s147, %s163
      %p165 = scmp.eq.s32.totalorder %s17, 0
      %p166 = por %p164, %p165
      %s167 = ssub.s32 %s18, %s30
      %s168 = ssub.s32 %s19, %s26
      %s169 = sor.u32 %s167, %s168
      %p170 = scmp.eq.s32.totalorder %s169, 0
      %s172 = sadd.s32 %s171, 1
      %s173 = scalar_select %p170, %s171, %s172
      %p176 = pneg %p170
      %p177 = scmp.eq.s32.totalorder %s11, 1
      %p178 = por %p176, %p177
      %p179 = scmp.ne.s32.totalorder %s171, %s174
      %p180 = scmp.eq.s32.totalorder %s11, 0
      %p181 = por %p179, %p180
      %p182 = scmp.ne.s32.totalorder %s171, %s174
      %p183 = scmp.eq.s32.totalorder %s16, 1
      %p184 = por %p182, %p183
      %p185 = scmp.ne.s32.totalorder %s174, %s175
      %p186 = scmp.eq.s32.totalorder %s16, 0
      %p187 = por %p185, %p186
      %p188 = scmp.ne.s32.totalorder %s174, %s175
      %p189 = scmp.eq.s32.totalorder %s17, 1
      %p190 = por %p188, %p189
      %p192 = scmp.ne.s32.totalorder %s175, %s191
      %p193 = scmp.eq.s32.totalorder %s17, 0
      %p194 = por %p192, %p193
      %p195 = scmp.le.s32.totalorder 1, %s11
      %p196 = scmp.lt.s32.totalorder %s11, 3
      %p197 = pnand %p195, %p196
      %p198 = pneg %p197
      // Predicated region
      $region9: #{crnn_forward.3} parent=5 // pred_check
        _
      $region10: #{crnn_forward.3} parent=5 // pred_check_branch
        %200 = sbr.rel (%p197) target = $region12
      $region11: #{crnn_forward.3} parent=5 // pred_region
        %s201 = ssub.s32 %s11, 1
      $region12: #{crnn_forward.3} parent=5 // pred_fallthru
        _
      %p202 = scmp.lt.s32.totalorder %s11, 2
      // Predicated region
      $region13: #{crnn_forward.3} parent=5 // pred_check
        %p203 = pneg %p202
      $region14: #{crnn_forward.3} parent=5 // pred_check_branch
        %205 = sbr.rel (%p203) target = $region16
      $region15: #{crnn_forward.3} parent=5 // pred_region
        // Predicated region
        $region17: #{crnn_forward.3} parent=15 // pred_check
          %p206 = pneg %p45
        $region18: #{crnn_forward.3} parent=15 // pred_check_branch
          %208 = sbr.rel (%p206) target = $region20
        $region19: #{crnn_forward.3} parent=15 // pred_region
          %s209 = sand.u32 %s35, 1
          %s210 = sand.u32 %s35, 1
          %s211 = smul.addr %s210, 24
          %s212 = scalar_lea.vmem [#allocation3], %s211
          %s213 = smul.u32 2, %s19
          %s214 = smul.u32 3, %s18
          %s215 = smul.addr %s213, 6
          %s216 = sadd.s32 %s214, %s215
          %s217 = smul.addr %s216, 4
          %s218 = scalar_lea.vmem %s0, %s217
          // Predicated region
          $region21: #{crnn_forward.3} parent=19 // pred_check
            _
          $region22: #{crnn_forward.3} parent=19 // pred_check_branch
            %220 = sbr.rel (0) target = $region24
          $region23: #{crnn_forward.3} parent=19 // pred_region
            // Predicated region
            $region25: #{crnn_forward.3} parent=23 // pred_check
              _
            $region26: #{crnn_forward.3} parent=23 // pred_check_branch
              %222 = sbr.rel (0) target = $region28
            $region27: #{crnn_forward.3} parent=23 // pred_region
              %s223 = scalar_lea.vmem %s218, 8
              %s224 = scalar_lea.vmem %s212, 8 [#allocation3]
              loop: start=0, step=1, limit=1
              $region29: #{crnn_forward.3} parent=27 // loop_pre_header
                _
              $region30: #{crnn_forward.3} parent=27 // loop_header
                %s226 = sphi 0, %s230
                %p227 = scmp.ge.s32.totalorder %s226, 1
                %s231 = sphi %s218, %s218
                %s232 = sphi %s212, %s212
              $region31: #{crnn_forward.3} parent=27 // loop_header_branch
                %229 = sbr.rel (%p227) target = $region35
              $region32: #{crnn_forward.3} parent=27 // loop_body
                %v233 = vld [vmem:[%s231] sm:$0xff]
                %234 = vst [vmem:[%s232] sm:$0xff] %v233
                %v235 = vld [vmem:[%s231 + $0x18] sm:$0xff]
                %236 = vst [vmem:[%s232 + $0xc] sm:$0xff] %v235
              $region33: #{crnn_forward.3} parent=27 // loop_footer
                %s230 = sadd.s32 1, %s226
              $region34: #{crnn_forward.3} parent=27 // loop_footer_branch
                %225 = sbr.rel target = $region30
              $region35: #{crnn_forward.3} parent=27 // loop_exit
                _
              loop: start=0, step=1, limit=1
              $region36: #{crnn_forward.3} parent=27 // loop_pre_header
                _
              $region37: #{crnn_forward.3} parent=27 // loop_header
                %s239 = sphi 0, %s243
                %p240 = scmp.ge.s32.totalorder %s239, 1
                %s244 = sphi %s223, %s223
                %s245 = sphi %s224, %s224
              $region38: #{crnn_forward.3} parent=27 // loop_header_branch
                %242 = sbr.rel (%p240) target = $region42
              $region39: #{crnn_forward.3} parent=27 // loop_body
                %v246 = vld [vmem:[%s244] sm:$0xf]
                %247 = vst [vmem:[%s245] sm:$0xf] %v246
                %v248 = vld [vmem:[%s244 + $0x18] sm:$0xf]
                %249 = vst [vmem:[%s245 + $0xc] sm:$0xf] %v248
              $region40: #{crnn_forward.3} parent=27 // loop_footer
                %s243 = sadd.s32 1, %s239
              $region41: #{crnn_forward.3} parent=27 // loop_footer_branch
                %238 = sbr.rel target = $region37
              $region42: #{crnn_forward.3} parent=27 // loop_exit
                _
            $region28: #{crnn_forward.3} parent=23 // pred_fallthru
              _
          $region24: #{crnn_forward.3} parent=19 // pred_fallthru
            _
          %250 = vnop
        $region20: #{crnn_forward.3} parent=15 // pred_fallthru
          _
        // Predicated region
        $region43: #{crnn_forward.3} parent=15 // pred_check
          %p251 = pneg %p75
        $region44: #{crnn_forward.3} parent=15 // pred_check_branch
          %253 = sbr.rel (%p251) target = $region46
        $region45: #{crnn_forward.3} parent=15 // pred_region
          %s254 = sand.u32 %s65, 1
          %s255 = sand.u32 %s65, 1
          %s256 = smul.addr %s255, 24
          %s257 = scalar_lea.vmem [#allocation4], %s256
          %s258 = ssub.s32 1, %s18
          %s259 = smul.u32 2, %s19
          %s260 = smul.u32 3, %s258
          %s261 = smul.addr %s259, 6
          %s262 = sadd.s32 %s260, %s261
          %s263 = sadd.s32 %s262, 12
          %s264 = smul.addr %s263, 4
          %s265 = scalar_lea.vmem %s1, %s264
          // Predicated region
          $region47: #{crnn_forward.3} parent=45 // pred_check
            _
          $region48: #{crnn_forward.3} parent=45 // pred_check_branch
            %267 = sbr.rel (0) target = $region50
          $region49: #{crnn_forward.3} parent=45 // pred_region
            // Predicated region
            $region51: #{crnn_forward.3} parent=49 // pred_check
              _
            $region52: #{crnn_forward.3} parent=49 // pred_check_branch
              %269 = sbr.rel (0) target = $region54
            $region53: #{crnn_forward.3} parent=49 // pred_region
              %s270 = scalar_lea.vmem %s265, 8
              %s271 = scalar_lea.vmem %s257, 8 [#allocation4]
              loop: start=0, step=1, limit=1
              $region55: #{crnn_forward.3} parent=53 // loop_pre_header
                _
              $region56: #{crnn_forward.3} parent=53 // loop_header
                %s273 = sphi 0, %s277
                %p274 = scmp.ge.s32.totalorder %s273, 1
                %s278 = sphi %s265, %s265
                %s279 = sphi %s257, %s257
              $region57: #{crnn_forward.3} parent=53 // loop_header_branch
                %276 = sbr.rel (%p274) target = $region61
              $region58: #{crnn_forward.3} parent=53 // loop_body
                %v280 = vld [vmem:[%s278] sm:$0xff]
                %281 = vst [vmem:[%s279] sm:$0xff] %v280
                %v282 = vld [vmem:[%s278 + $0x18] sm:$0xff]
                %283 = vst [vmem:[%s279 + $0xc] sm:$0xff] %v282
              $region59: #{crnn_forward.3} parent=53 // loop_footer
                %s277 = sadd.s32 1, %s273
              $region60: #{crnn_forward.3} parent=53 // loop_footer_branch
                %272 = sbr.rel target = $region56
              $region61: #{crnn_forward.3} parent=53 // loop_exit
                _
              loop: start=0, step=1, limit=1
              $region62: #{crnn_forward.3} parent=53 // loop_pre_header
                _
              $region63: #{crnn_forward.3} parent=53 // loop_header
                %s286 = sphi 0, %s290
                %p287 = scmp.ge.s32.totalorder %s286, 1
                %s291 = sphi %s270, %s270
                %s292 = sphi %s271, %s271
              $region64: #{crnn_forward.3} parent=53 // loop_header_branch
                %289 = sbr.rel (%p287) target = $region68
              $region65: #{crnn_forward.3} parent=53 // loop_body
                %v293 = vld [vmem:[%s291] sm:$0xf]
                %294 = vst [vmem:[%s292] sm:$0xf] %v293
                %v295 = vld [vmem:[%s291 + $0x18] sm:$0xf]
                %296 = vst [vmem:[%s292 + $0xc] sm:$0xf] %v295
              $region66: #{crnn_forward.3} parent=53 // loop_footer
                %s290 = sadd.s32 1, %s286
              $region67: #{crnn_forward.3} parent=53 // loop_footer_branch
                %285 = sbr.rel target = $region63
              $region68: #{crnn_forward.3} parent=53 // loop_exit
                _
            $region54: #{crnn_forward.3} parent=49 // pred_fallthru
              _
          $region50: #{crnn_forward.3} parent=45 // pred_fallthru
            _
          %297 = vnop
        $region46: #{crnn_forward.3} parent=15 // pred_fallthru
          _
        // Predicated region
        $region69: #{crnn_forward.3} parent=15 // pred_check
          %p298 = pneg %p101
        $region70: #{crnn_forward.3} parent=15 // pred_check_branch
          %300 = sbr.rel (%p298) target = $region72
        $region71: #{crnn_forward.3} parent=15 // pred_region
          %p301 = scmp.lt.s32.totalorder %s18, 1
          %s302 = scalar_select %p301, %s18, 1
          %s303 = smul.addr %s302, 96
          %s304 = smul.addr %s303, 4
          %s305 = scalar_lea.vmem %s2, %s304
        $region72: #{crnn_forward.3} parent=15 // pred_fallthru
          _
        // Predicated region
        $region73: #{crnn_forward.3} parent=15 // pred_check
          %p306 = pneg %p127
        $region74: #{crnn_forward.3} parent=15 // pred_check_branch
          %308 = sbr.rel (%p306) target = $region76
        $region75: #{crnn_forward.3} parent=15 // pred_region
          %p309 = scmp.lt.s32.totalorder %s18, 1
          %s310 = scalar_select %p309, %s18, 1
          %s311 = smul.addr %s310, 6
          %s312 = scalar_lea.vmem %s3, %s311
        $region76: #{crnn_forward.3} parent=15 // pred_fallthru
          _
        // Predicated region
        $region77: #{crnn_forward.3} parent=15 // pred_check
          %p313 = pneg %p153
        $region78: #{crnn_forward.3} parent=15 // pred_check_branch
          %315 = sbr.rel (%p313) target = $region80
        $region79: #{crnn_forward.3} parent=15 // pred_region
          %p316 = scmp.lt.s32.totalorder %s18, 1
          %s317 = scalar_select %p316, %s18, 1
          %s318 = smul.addr %s317, 4
          %s319 = scalar_lea.vmem %s4, %s318
        $region80: #{crnn_forward.3} parent=15 // pred_fallthru
          _
      $region16: #{crnn_forward.3} parent=5 // pred_fallthru
        _
      %p320 = scmp.le.s32.totalorder 1, %s11
      %p321 = scmp.lt.s32.totalorder %s11, 3
      %p322 = pnand %p320, %p321
      %p323 = pneg %p322
      // Predicated region
      $region81: #{crnn_forward.3} parent=5 // pred_check
        _
      $region82: #{crnn_forward.3} parent=5 // pred_check_branch
        %325 = sbr.rel (%p322) target = $region84
      $region83: #{crnn_forward.3} parent=5 // pred_region
        %s326 = ssub.s32 %s11, 1
        %s327 = sand.u32 %s38, 1
        %s328 = sand.u32 %s38, 1
        %s329 = smul.addr %s328, 24
        %s330 = scalar_lea.vmem [#allocation3], %s329
        // Predicated region
        $region85: #{crnn_forward.3} parent=83 // pred_check
          %p331 = pneg %p51
        $region86: #{crnn_forward.3} parent=83 // pred_check_branch
          %333 = sbr.rel (%p331) target = $region88
        $region87: #{crnn_forward.3} parent=83 // pred_region
          _
        $region88: #{crnn_forward.3} parent=83 // pred_fallthru
          _
        %s334 = sand.u32 %s68, 1
        %s335 = sand.u32 %s68, 1
        %s336 = smul.addr %s335, 24
        %s337 = scalar_lea.vmem [#allocation4], %s336
        // Predicated region
        $region89: #{crnn_forward.3} parent=83 // pred_check
          %p338 = pneg %p81
        $region90: #{crnn_forward.3} parent=83 // pred_check_branch
          %340 = sbr.rel (%p338) target = $region92
        $region91: #{crnn_forward.3} parent=83 // pred_region
          _
        $region92: #{crnn_forward.3} parent=83 // pred_fallthru
          _
        %s341 = sand.u32 %s38, 1
        %s342 = sand.u32 %s38, 1
        %s343 = smul.addr %s342, 24
        %s344 = scalar_lea.vmem [#allocation3], %s343
        %p345 = pneg %p51
        %p346 = pneg %p48
        %s347 = sand.u32 %s68, 1
        %s348 = sand.u32 %s68, 1
        %s349 = smul.addr %s348, 24
        %s350 = scalar_lea.vmem [#allocation4], %s349
        %p351 = pneg %p81
        %p352 = pneg %p78
        %p353 = scmp.lt.s32.totalorder %s20, 1
        %s354 = scalar_select %p353, %s20, 1
        %s355 = smul.addr %s354, 96
        %s356 = smul.addr %s355, 4
        %s357 = scalar_lea.vmem %s2, %s356
        %p358 = pneg %p107
        %p359 = pneg %p104
        %p360 = scmp.lt.s32.totalorder %s20, 1
        %s361 = scalar_select %p360, %s20, 1
        %s362 = smul.addr %s361, 6
        %s363 = scalar_lea.vmem %s3, %s362
        %p364 = pneg %p133
        %p365 = pneg %p130
        %p366 = scmp.lt.s32.totalorder %s20, 1
        %s367 = scalar_select %p366, %s20, 1
        %s368 = smul.addr %s367, 4
        %s369 = scalar_lea.vmem %s4, %s368
        %p370 = pneg %p159
        %p371 = pneg %p156
        %p372 = pneg %p187
        %p373 = pneg %p184
        %s374 = smul.u32 2, %s21
        %p375 = scmp.lt.s32.totalorder %s20, 1
        %s376 = scalar_select %p375, %s20, 1
        %p377 = scmp.lt.s32.totalorder %s374, 1
        %s378 = scalar_select %p377, %s374, 1
        %s379 = smul.addr %s376, 2
        %s380 = sadd.s32 %s378, %s379
        %s381 = smul.addr %s380, 8
        %s382 = scalar_lea.vmem %s5, %s381
        %s383 = smul.u32 2, %s21
        %s384 = smul.u32 3, %s20
        %s385 = ssub.s32 1, %s20
        %s386 = smul.u32 2, %s21
        %s387 = smul.u32 3, %s385
        %p388 = scmp.lt.s32.totalorder %s20, 1
        %s389 = scalar_select %p388, %s20, 1
        %s390 = smul.addr %s389, 96
        %s391 = smul.addr %s390, 4
        %s392 = scalar_lea.vmem %s2, %s391
        %p393 = scmp.lt.s32.totalorder %s20, 1
        %s394 = scalar_select %p393, %s20, 1
        %s395 = smul.addr %s394, 6
        %s396 = scalar_lea.vmem %s3, %s395
        %p397 = scmp.lt.s32.totalorder %s20, 1
        %s398 = scalar_select %p397, %s20, 1
        %s399 = smul.addr %s398, 4
        %s400 = scalar_lea.vmem %s4, %s399
        %s401 = smul.u32 2, %s21
        %p402 = scmp.lt.s32.totalorder %s20, 1
        %s403 = scalar_select %p402, %s20, 1
        %p404 = scmp.lt.s32.totalorder %s401, 1
        %s405 = scalar_select %p404, %s401, 1
        %s406 = smul.addr %s403, 2
        %s407 = sadd.s32 %s405, %s406
        %s408 = smul.addr %s407, 8
        %s409 = scalar_lea.vmem %s5, %s408
        %s410 = smul.u32 2, %s21
        %p412 = scmp.eq.s32.totalorder %s21, 0
        // Predicated region
        $region93: #{crnn_forward.3} parent=83 // pred_check
          %p413 = pneg %p412
        $region94: #{crnn_forward.3} parent=83 // pred_check_branch
          %415 = sbr.rel (%p413) target = $region96
        $region95: #{crnn_forward.3} parent=83 // pred_region
          %416 = vst [vmem:[#allocation2] sm:$0x3] 0.0
          %417 = vst [vmem:[#allocation2 + $0x2] sm:$0x3] 0.0
        $region96: #{crnn_forward.3} parent=83 // pred_fallthru
          _
        %v418 = vld [vmem:[%s396] sm:$0x7]
        %v420 = vlaneseq
        %v421 = vshrl.u32 %v420, 7
        %v422 = vsub.s32 0, %v421
        %v423 = vrot.slane %v418, %v422
        %v424 = vlaneseq
        %v425 = vshrl.u32 %v424, 7
        %v426 = vsub.s32 1, %v425
        %v427 = vrot.slane %v418, %v426
        %v428 = vlaneseq
        %v429 = vshrl.u32 %v428, 7
        %v430 = vsub.s32 2, %v429
        %v431 = vrot.slane %v418, %v430
        %s435 = scalar_lea.vmem %s396, 3
        %v436 = vld [vmem:[%s435] sm:$0x7]
        %v438 = vlaneseq
        %v439 = vshrl.u32 %v438, 7
        %v440 = vsub.s32 0, %v439
        %v441 = vrot.slane %v436, %v440
        %v442 = vlaneseq
        %v443 = vshrl.u32 %v442, 7
        %v444 = vsub.s32 1, %v443
        %v445 = vrot.slane %v436, %v444
        %v446 = vlaneseq
        %v447 = vshrl.u32 %v446, 7
        %v448 = vsub.s32 2, %v447
        %v449 = vrot.slane %v436, %v448
        %v453 = vld [vmem:[%s400] sm:$0x1]
        %v455 = vlaneseq
        %v456 = vshrl.u32 %v455, 7
        %v457 = vsub.s32 0, %v456
        %v458 = vrot.slane %v453, %v457
        %s460 = scalar_lea.vmem %s400, 1
        %v461 = vld [vmem:[%s460] sm:$0x1]
        %v463 = vlaneseq
        %v464 = vshrl.u32 %v463, 7
        %v465 = vsub.s32 0, %v464
        %v466 = vrot.slane %v461, %v465
        %s468 = scalar_lea.vmem %s400, 2
        %v469 = vld [vmem:[%s468] sm:$0x1]
        %v471 = vlaneseq
        %v472 = vshrl.u32 %v471, 7
        %v473 = vsub.s32 0, %v472
        %v474 = vrot.slane %v469, %v473
        %s476 = scalar_lea.vmem %s400, 3
        %v477 = vld [vmem:[%s476] sm:$0x1]
        %v479 = vlaneseq
        %v480 = vshrl.u32 %v479, 7
        %v481 = vsub.s32 0, %v480
        %v482 = vrot.slane %v477, %v481
        %v484 = vld [vmem:[#allocation2] sm:$0x3]
        %s485 = scalar_lea.vmem [#allocation2], 2
        %v486 = vld [vmem:[%s485] sm:$0x3]
        %v487 = vld [vmem:[%s330] sm:$0x11]
        %v488 = vld [vmem:[%s330 + $0x8] sm:$0x1]
        %v489 = vunpack.c.l.bf16 %v487
        %v490 = vunpack.c.h.bf16 %v487
        %v491 = vunpack.c.l.bf16 %v488
        %v492 = vld [vmem:[%s337] sm:$0x11]
        %v493 = vld [vmem:[%s337 + $0x8] sm:$0x1]
        %v494 = vunpack.c.l.bf16 %v492
        %v495 = vunpack.c.h.bf16 %v492
        %v496 = vunpack.c.l.bf16 %v493
        %v497 = vpack.c.bf16 %v484, %v484
        %v498 = vld [vmem:[%s392] sm:$0xff]
        %v499 = vld [vmem:[%s392 + $0x8] sm:$0xf]
        %v500 = vld [vmem:[%s392 + $0xc] sm:$0xff]
        %v501 = vld [vmem:[%s392 + $0x14] sm:$0xf]
        %v502 = vld [vmem:[%s392 + $0x18] sm:$0xff]
        %v503 = vld [vmem:[%s392 + $0x20] sm:$0xf]
        %v504 = vld [vmem:[%s392 + $0x24] sm:$0xff]
        %v505 = vld [vmem:[%s392 + $0x2c] sm:$0xf]
        %v506 = vld [vmem:[%s392 + $0x30] sm:$0xff]
        %v507 = vld [vmem:[%s392 + $0x38] sm:$0xf]
        %v508 = vld [vmem:[%s392 + $0x3c] sm:$0xff]
        %v509 = vld [vmem:[%s392 + $0x44] sm:$0xf]
        %v510 = vld [vmem:[%s392 + $0x48] sm:$0xff]
        %v511 = vld [vmem:[%s392 + $0x50] sm:$0xf]
        %v512 = vld [vmem:[%s392 + $0x54] sm:$0xff]
        %v513 = vld [vmem:[%s392 + $0x5c] sm:$0xf]
        %v514 = vld [vmem:[%s392 + $0x60] sm:$0xff]
        %v515 = vld [vmem:[%s392 + $0x68] sm:$0xf]
        %v516 = vld [vmem:[%s392 + $0x6c] sm:$0xff]
        %v517 = vld [vmem:[%s392 + $0x74] sm:$0xf]
        %v518 = vld [vmem:[%s392 + $0x78] sm:$0xff]
        %v519 = vld [vmem:[%s392 + $0x80] sm:$0xf]
        %v520 = vld [vmem:[%s392 + $0x84] sm:$0xff]
        %v521 = vld [vmem:[%s392 + $0x8c] sm:$0xf]
        %v522 = vld [vmem:[%s392 + $0x90] sm:$0xff]
        %v523 = vld [vmem:[%s392 + $0x98] sm:$0xf]
        %v524 = vld [vmem:[%s392 + $0x9c] sm:$0xff]
        %v525 = vld [vmem:[%s392 + $0xa4] sm:$0xf]
        %v526 = vld [vmem:[%s392 + $0xa8] sm:$0xff]
        %v527 = vld [vmem:[%s392 + $0xb0] sm:$0xf]
        %v528 = vld [vmem:[%s392 + $0xb4] sm:$0xff]
        %v529 = vld [vmem:[%s392 + $0xbc] sm:$0xf]
        %v562 = vunpack.c.l.b16 %v498
        %v563 = vunpack.c.h.b16 %v498
        %v564 = vunpack.c.l.b16 %v499
        %v565 = vunpack.c.l.b16 %v500
        %v566 = vunpack.c.h.b16 %v500
        %v567 = vunpack.c.l.b16 %v501
        %v568 = vunpack.c.l.b16 %v502
        %v569 = vunpack.c.h.b16 %v502
        %v570 = vunpack.c.l.b16 %v503
        %v571 = vunpack.c.l.b16 %v504
        %v572 = vunpack.c.h.b16 %v504
        %v573 = vunpack.c.l.b16 %v505
        %v574 = vunpack.c.l.b16 %v506
        %v575 = vunpack.c.h.b16 %v506
        %v576 = vunpack.c.l.b16 %v507
        %v577 = vunpack.c.l.b16 %v508
        %v578 = vunpack.c.h.b16 %v508
        %v579 = vunpack.c.l.b16 %v509
        %v580 = vunpack.c.l.b16 %v510
        %v581 = vunpack.c.h.b16 %v510
        %v582 = vunpack.c.l.b16 %v511
        %v583 = vunpack.c.l.b16 %v512
        %v584 = vunpack.c.h.b16 %v512
        %v585 = vunpack.c.l.b16 %v513
        %v586 = vunpack.c.l.b16 %v514
        %v587 = vunpack.c.h.b16 %v514
        %v588 = vunpack.c.l.b16 %v515
        %v589 = vunpack.c.l.b16 %v516
        %v590 = vunpack.c.h.b16 %v516
        %v591 = vunpack.c.l.b16 %v517
        %v592 = vunpack.c.l.b16 %v518
        %v593 = vunpack.c.h.b16 %v518
        %v594 = vunpack.c.l.b16 %v519
        %v595 = vunpack.c.l.b16 %v520
        %v596 = vunpack.c.h.b16 %v520
        %v597 = vunpack.c.l.b16 %v521
        %v598 = vunpack.c.l.b16 %v522
        %v599 = vunpack.c.h.b16 %v522
        %v600 = vunpack.c.l.b16 %v523
        %v601 = vunpack.c.l.b16 %v524
        %v602 = vunpack.c.h.b16 %v524
        %v603 = vunpack.c.l.b16 %v525
        %v604 = vunpack.c.l.b16 %v526
        %v605 = vunpack.c.h.b16 %v526
        %v606 = vunpack.c.l.b16 %v527
        %v607 = vunpack.c.l.b16 %v528
        %v608 = vunpack.c.h.b16 %v528
        %v609 = vunpack.c.l.b16 %v529
        %v610 = vpack.c.b16 %v565, %v562
        %v611 = vpack.c.b16 %v566, %v563
        %v612 = vpack.c.b16 %v567, %v564
        %v613 = vpack.c.b16 %v571, %v568
        %v614 = vpack.c.b16 %v572, %v569
        %v615 = vpack.c.b16 %v573, %v570
        %v616 = vpack.c.b16 %v577, %v574
        %v617 = vpack.c.b16 %v578, %v575
        %v618 = vpack.c.b16 %v579, %v576
        %v619 = vpack.c.b16 %v583, %v580
        %v620 = vpack.c.b16 %v584, %v581
        %v621 = vpack.c.b16 %v585, %v582
        %v622 = vpack.c.b16 %v589, %v586
        %v623 = vpack.c.b16 %v590, %v587
        %v624 = vpack.c.b16 %v591, %v588
        %v625 = vpack.c.b16 %v595, %v592
        %v626 = vpack.c.b16 %v596, %v593
        %v627 = vpack.c.b16 %v597, %v594
        %v628 = vpack.c.b16 %v601, %v598
        %v629 = vpack.c.b16 %v602, %v599
        %v630 = vpack.c.b16 %v603, %v600
        %v631 = vpack.c.b16 %v607, %v604
        %v632 = vpack.c.b16 %v608, %v605
        %v633 = vpack.c.b16 %v609, %v606
        %658 = vmatprep.subr.bf16.mxu0 %v611
        %659 = vmatpush1.bf16.msra.mxu0 %v610
        %660 = vmatprep.subr.bf16.mxu0 %v614
        %661 = vmatpush1.bf16.msra.mxu0 %v613
        %662 = vmatprep.subr.bf16.mxu0 %v617
        %663 = vmatpush1.bf16.msra.mxu0 %v616
        %664 = vmatprep.subr.bf16.mxu0 %v620
        %665 = vmatpush1.bf16.msra.mxu0 %v619
        %666 = vmatprep.subr.bf16.mxu0 %v623
        %667 = vmatpush1.bf16.msra.mxu0 %v622
        %668 = vmatprep.subr.bf16.mxu0 %v626
        %669 = vmatpush1.bf16.msra.mxu0 %v625
        %670 = vmatprep.subr.bf16.mxu0 %v629
        %671 = vmatpush1.bf16.msra.mxu0 %v628
        %672 = vmatprep.subr.bf16.mxu0 %v632
        %673 = vmatpush1.bf16.msra.mxu0 %v631
        %674 = vmatprep.subr.bf16.mxu0 0
        %675 = vmatpush1.bf16.msra.mxu0 0
        %676 = vmatprep.subr.bf16.mxu0 0
        %677 = vmatpush1.bf16.msra.mxu0 0
        %678 = vmatprep.subr.bf16.mxu0 0
        %679 = vmatpush1.bf16.msra.mxu0 0
        %680 = vmatprep.subr.bf16.mxu0 0
        %681 = vmatpush1.bf16.msra.mxu0 0
        %682 = vmatprep.subr.bf16.mxu0 0
        %683 = vmatpush1.bf16.msra.mxu0 0
        %684 = vmatprep.subr.bf16.mxu0 0
        %685 = vmatpush1.bf16.msra.mxu0 0
        %686 = vmatprep.subr.bf16.mxu0 0
        %687 = vmatpush1.bf16.msra.mxu0 0
        %688 = vmatprep.subr.bf16.mxu0 0
        %689 = vmatpush1.bf16.msra.mxu0 0
        %690 = vmatprep.mubr.bf16.mxu0 0
        %691 = vmatmul.mubr.bf16.gmra.mrb[0].mxu0 %v497
        %v692 = vpop.f32.mrb[0].mxu0
        %v693 = vadd.f32 %v423, %v692
        %v694 = vpop.f32.mrb[0].mxu0
        %v695 = vadd.f32 %v427, %v694
        %v696 = vpop.f32.mrb[0].mxu0
        %v697 = vpop.f32.mrb[0].mxu0
        %698 = vdwg.mxu0
        %699 = vmatprep.subr.bf16.mxu0 0
        %700 = vmatpush1.bf16.msra.mxu0 %v612
        %701 = vmatprep.subr.bf16.mxu0 0
        %702 = vmatpush1.bf16.msra.mxu0 %v615
        %703 = vmatprep.subr.bf16.mxu0 0
        %704 = vmatpush1.bf16.msra.mxu0 %v618
        %705 = vmatprep.subr.bf16.mxu0 0
        %706 = vmatpush1.bf16.msra.mxu0 %v621
        %707 = vmatprep.subr.bf16.mxu0 0
        %708 = vmatpush1.bf16.msra.mxu0 %v624
        %709 = vmatprep.subr.bf16.mxu0 0
        %710 = vmatpush1.bf16.msra.mxu0 %v627
        %711 = vmatprep.subr.bf16.mxu0 0
        %712 = vmatpush1.bf16.msra.mxu0 %v630
        %713 = vmatprep.subr.bf16.mxu0 0
        %714 = vmatpush1.bf16.msra.mxu0 %v633
        %715 = vmatprep.subr.bf16.mxu0 0
        %716 = vmatpush1.bf16.msra.mxu0 0
        %717 = vmatprep.subr.bf16.mxu0 0
        %718 = vmatpush1.bf16.msra.mxu0 0
        %719 = vmatprep.subr.bf16.mxu0 0
        %720 = vmatpush1.bf16.msra.mxu0 0
        %721 = vmatprep.subr.bf16.mxu0 0
        %722 = vmatpush1.bf16.msra.mxu0 0
        %723 = vmatprep.subr.bf16.mxu0 0
        %724 = vmatpush1.bf16.msra.mxu0 0
        %725 = vmatprep.subr.bf16.mxu0 0
        %726 = vmatpush1.bf16.msra.mxu0 0
        %727 = vmatprep.subr.bf16.mxu0 0
        %728 = vmatpush1.bf16.msra.mxu0 0
        %729 = vmatprep.subr.bf16.mxu0 0
        %730 = vmatpush1.bf16.msra.mxu0 0
        %731 = vmatprep.mubr.bf16.mxu0 0
        %732 = vmatmul.mubr.bf16.gmra.mrb[0].mxu0 %v497
        %v733 = vpop.f32.mrb[0].mxu0
        %v734 = vadd.f32 %v431, %v733
        %v735 = vpop.f32.mrb[0].mxu0
        %v736 = vpop.f32.mrb[0].mxu0
        %v737 = vpop.f32.mrb[0].mxu0
        %738 = vdwg.mxu0
        %v739 = vpack.c.bf16 %v486, %v486
        %s740 = scalar_lea.vmem %s392, 192
        %v741 = vld [vmem:[%s740] sm:$0xff]
        %v742 = vld [vmem:[%s740 + $0x8] sm:$0xf]
        %v743 = vld [vmem:[%s740 + $0xc] sm:$0xff]
        %v744 = vld [vmem:[%s740 + $0x14] sm:$0xf]
        %v745 = vld [vmem:[%s740 + $0x18] sm:$0xff]
        %v746 = vld [vmem:[%s740 + $0x20] sm:$0xf]
        %v747 = vld [vmem:[%s740 + $0x24] sm:$0xff]
        %v748 = vld [vmem:[%s740 + $0x2c] sm:$0xf]
        %v749 = vld [vmem:[%s740 + $0x30] sm:$0xff]
        %v750 = vld [vmem:[%s740 + $0x38] sm:$0xf]
        %v751 = vld [vmem:[%s740 + $0x3c] sm:$0xff]
        %v752 = vld [vmem:[%s740 + $0x44] sm:$0xf]
        %v753 = vld [vmem:[%s740 + $0x48] sm:$0xff]
        %v754 = vld [vmem:[%s740 + $0x50] sm:$0xf]
        %v755 = vld [vmem:[%s740 + $0x54] sm:$0xff]
        %v756 = vld [vmem:[%s740 + $0x5c] sm:$0xf]
        %v757 = vld [vmem:[%s740 + $0x60] sm:$0xff]
        %v758 = vld [vmem:[%s740 + $0x68] sm:$0xf]
        %v759 = vld [vmem:[%s740 + $0x6c] sm:$0xff]
        %v760 = vld [vmem:[%s740 + $0x74] sm:$0xf]
        %v761 = vld [vmem:[%s740 + $0x78] sm:$0xff]
        %v762 = vld [vmem:[%s740 + $0x80] sm:$0xf]
        %v763 = vld [vmem:[%s740 + $0x84] sm:$0xff]
        %v764 = vld [vmem:[%s740 + $0x8c] sm:$0xf]
        %v765 = vld [vmem:[%s740 + $0x90] sm:$0xff]
        %v766 = vld [vmem:[%s740 + $0x98] sm:$0xf]
        %v767 = vld [vmem:[%s740 + $0x9c] sm:$0xff]
        %v768 = vld [vmem:[%s740 + $0xa4] sm:$0xf]
        %v769 = vld [vmem:[%s740 + $0xa8] sm:$0xff]
        %v770 = vld [vmem:[%s740 + $0xb0] sm:$0xf]
        %v771 = vld [vmem:[%s740 + $0xb4] sm:$0xff]
        %v772 = vld [vmem:[%s740 + $0xbc] sm:$0xf]
        %v805 = vunpack.c.l.b16 %v741
        %v806 = vunpack.c.h.b16 %v741
        %v807 = vunpack.c.l.b16 %v742
        %v808 = vunpack.c.l.b16 %v743
        %v809 = vunpack.c.h.b16 %v743
        %v810 = vunpack.c.l.b16 %v744
        %v811 = vunpack.c.l.b16 %v745
        %v812 = vunpack.c.h.b16 %v745
        %v813 = vunpack.c.l.b16 %v746
        %v814 = vunpack.c.l.b16 %v747
        %v815 = vunpack.c.h.b16 %v747
        %v816 = vunpack.c.l.b16 %v748
        %v817 = vunpack.c.l.b16 %v749
        %v818 = vunpack.c.h.b16 %v749
        %v819 = vunpack.c.l.b16 %v750
        %v820 = vunpack.c.l.b16 %v751
        %v821 = vunpack.c.h.b16 %v751
        %v822 = vunpack.c.l.b16 %v752
        %v823 = vunpack.c.l.b16 %v753
        %v824 = vunpack.c.h.b16 %v753
        %v825 = vunpack.c.l.b16 %v754
        %v826 = vunpack.c.l.b16 %v755
        %v827 = vunpack.c.h.b16 %v755
        %v828 = vunpack.c.l.b16 %v756
        %v829 = vunpack.c.l.b16 %v757
        %v830 = vunpack.c.h.b16 %v757
        %v831 = vunpack.c.l.b16 %v758
        %v832 = vunpack.c.l.b16 %v759
        %v833 = vunpack.c.h.b16 %v759
        %v834 = vunpack.c.l.b16 %v760
        %v835 = vunpack.c.l.b16 %v761
        %v836 = vunpack.c.h.b16 %v761
        %v837 = vunpack.c.l.b16 %v762
        %v838 = vunpack.c.l.b16 %v763
        %v839 = vunpack.c.h.b16 %v763
        %v840 = vunpack.c.l.b16 %v764
        %v841 = vunpack.c.l.b16 %v765
        %v842 = vunpack.c.h.b16 %v765
        %v843 = vunpack.c.l.b16 %v766
        %v844 = vunpack.c.l.b16 %v767
        %v845 = vunpack.c.h.b16 %v767
        %v846 = vunpack.c.l.b16 %v768
        %v847 = vunpack.c.l.b16 %v769
        %v848 = vunpack.c.h.b16 %v769
        %v849 = vunpack.c.l.b16 %v770
        %v850 = vunpack.c.l.b16 %v771
        %v851 = vunpack.c.h.b16 %v771
        %v852 = vunpack.c.l.b16 %v772
        %v853 = vpack.c.b16 %v808, %v805
        %v854 = vpack.c.b16 %v809, %v806
        %v855 = vpack.c.b16 %v810, %v807
        %v856 = vpack.c.b16 %v814, %v811
        %v857 = vpack.c.b16 %v815, %v812
        %v858 = vpack.c.b16 %v816, %v813
        %v859 = vpack.c.b16 %v820, %v817
        %v860 = vpack.c.b16 %v821, %v818
        %v861 = vpack.c.b16 %v822, %v819
        %v862 = vpack.c.b16 %v826, %v823
        %v863 = vpack.c.b16 %v827, %v824
        %v864 = vpack.c.b16 %v828, %v825
        %v865 = vpack.c.b16 %v832, %v829
        %v866 = vpack.c.b16 %v833, %v830
        %v867 = vpack.c.b16 %v834, %v831
        %v868 = vpack.c.b16 %v838, %v835
        %v869 = vpack.c.b16 %v839, %v836
        %v870 = vpack.c.b16 %v840, %v837
        %v871 = vpack.c.b16 %v844, %v841
        %v872 = vpack.c.b16 %v845, %v842
        %v873 = vpack.c.b16 %v846, %v843
        %v874 = vpack.c.b16 %v850, %v847
        %v875 = vpack.c.b16 %v851, %v848
        %v876 = vpack.c.b16 %v852, %v849
        %901 = vmatprep.subr.bf16.mxu0 %v854
        %902 = vmatpush1.bf16.msra.mxu0 %v853
        %903 = vmatprep.subr.bf16.mxu0 %v857
        %904 = vmatpush1.bf16.msra.mxu0 %v856
        %905 = vmatprep.subr.bf16.mxu0 %v860
        %906 = vmatpush1.bf16.msra.mxu0 %v859
        %907 = vmatprep.subr.bf16.mxu0 %v863
        %908 = vmatpush1.bf16.msra.mxu0 %v862
        %909 = vmatprep.subr.bf16.mxu0 %v866
        %910 = vmatpush1.bf16.msra.mxu0 %v865
        %911 = vmatprep.subr.bf16.mxu0 %v869
        %912 = vmatpush1.bf16.msra.mxu0 %v868
        %913 = vmatprep.subr.bf16.mxu0 %v872
        %914 = vmatpush1.bf16.msra.mxu0 %v871
        %915 = vmatprep.subr.bf16.mxu0 %v875
        %916 = vmatpush1.bf16.msra.mxu0 %v874
        %917 = vmatprep.subr.bf16.mxu0 0
        %918 = vmatpush1.bf16.msra.mxu0 0
        %919 = vmatprep.subr.bf16.mxu0 0
        %920 = vmatpush1.bf16.msra.mxu0 0
        %921 = vmatprep.subr.bf16.mxu0 0
        %922 = vmatpush1.bf16.msra.mxu0 0
        %923 = vmatprep.subr.bf16.mxu0 0
        %924 = vmatpush1.bf16.msra.mxu0 0
        %925 = vmatprep.subr.bf16.mxu0 0
        %926 = vmatpush1.bf16.msra.mxu0 0
        %927 = vmatprep.subr.bf16.mxu0 0
        %928 = vmatpush1.bf16.msra.mxu0 0
        %929 = vmatprep.subr.bf16.mxu0 0
        %930 = vmatpush1.bf16.msra.mxu0 0
        %931 = vmatprep.subr.bf16.mxu0 0
        %932 = vmatpush1.bf16.msra.mxu0 0
        %933 = vmatprep.mubr.bf16.mxu0 0
        %934 = vmatmul.mubr.bf16.gmra.mrb[0].mxu0 %v739
        %v935 = vpop.f32.mrb[0].mxu0
        %v936 = vadd.f32 %v441, %v935
        %v937 = vpop.f32.mrb[0].mxu0
        %v938 = vadd.f32 %v445, %v937
        %v939 = vpop.f32.mrb[0].mxu0
        %v940 = vpop.f32.mrb[0].mxu0
        %941 = vdwg.mxu0
        %942 = vmatprep.subr.bf16.mxu0 0
        %943 = vmatpush1.bf16.msra.mxu0 %v855
        %944 = vmatprep.subr.bf16.mxu0 0
        %945 = vmatpush1.bf16.msra.mxu0 %v858
        %946 = vmatprep.subr.bf16.mxu0 0
        %947 = vmatpush1.bf16.msra.mxu0 %v861
        %948 = vmatprep.subr.bf16.mxu0 0
        %949 = vmatpush1.bf16.msra.mxu0 %v864
        %950 = vmatprep.subr.bf16.mxu0 0
        %951 = vmatpush1.bf16.msra.mxu0 %v867
        %952 = vmatprep.subr.bf16.mxu0 0
        %953 = vmatpush1.bf16.msra.mxu0 %v870
        %954 = vmatprep.subr.bf16.mxu0 0
        %955 = vmatpush1.bf16.msra.mxu0 %v873
        %956 = vmatprep.subr.bf16.mxu0 0
        %957 = vmatpush1.bf16.msra.mxu0 %v876
        %958 = vmatprep.subr.bf16.mxu0 0
        %959 = vmatpush1.bf16.msra.mxu0 0
        %960 = vmatprep.subr.bf16.mxu0 0
        %961 = vmatpush1.bf16.msra.mxu0 0
        %962 = vmatprep.subr.bf16.mxu0 0
        %963 = vmatpush1.bf16.msra.mxu0 0
        %964 = vmatprep.subr.bf16.mxu0 0
        %965 = vmatpush1.bf16.msra.mxu0 0
        %966 = vmatprep.subr.bf16.mxu0 0
        %967 = vmatpush1.bf16.msra.mxu0 0
        %968 = vmatprep.subr.bf16.mxu0 0
        %969 = vmatpush1.bf16.msra.mxu0 0
        %970 = vmatprep.subr.bf16.mxu0 0
        %971 = vmatpush1.bf16.msra.mxu0 0
        %972 = vmatprep.subr.bf16.mxu0 0
        %973 = vmatpush1.bf16.msra.mxu0 0
        %974 = vmatprep.mubr.bf16.mxu0 0
        %975 = vmatmul.mubr.bf16.gmra.mrb[0].mxu0 %v739
        %v976 = vpop.f32.mrb[0].mxu0
        %v977 = vadd.f32 %v449, %v976
        %v978 = vpop.f32.mrb[0].mxu0
        %v979 = vpop.f32.mrb[0].mxu0
        %v980 = vpop.f32.mrb[0].mxu0
        %981 = vdwg.mxu0
        %v982 = vadd.f32 %v489, %v693
        %v983 = vmul.f32 %v982, 0.5
        %v984 = vtanh.pop %v983
        %v985 = vmul.f32 %v984, 0.5
        %v986 = vadd.f32 %v985, 0.5
        %v987 = vadd.f32 %v490, %v695
        %v988 = vmul.f32 %v987, 0.5
        %v989 = vtanh.pop %v988
        %v990 = vmul.f32 %v989, 0.5
        %v991 = vadd.f32 %v990, 0.5
        %v992 = vmul.f32 %v986, %v734
        %v993 = vadd.f32 %v491, %v992
        %v994 = vtanh.pop %v993
        %v995 = vsub.f32 1.0, %v991
        %v996 = vmul.f32 %v995, %v994
        %v997 = vmul.f32 %v991, %v484
        %v998 = vadd.f32 %v996, %v997
        %v999 = vadd.f32 %v494, %v936
        %v1000 = vmul.f32 %v999, 0.5
        %v1001 = vtanh.pop %v1000
        %v1002 = vmul.f32 %v1001, 0.5
        %v1003 = vadd.f32 %v1002, 0.5
        %v1004 = vadd.f32 %v495, %v938
        %v1005 = vmul.f32 %v1004, 0.5
        %v1006 = vtanh.pop %v1005
        %v1007 = vmul.f32 %v1006, 0.5
        %v1008 = vadd.f32 %v1007, 0.5
        %v1009 = vmul.f32 %v1003, %v977
        %v1010 = vadd.f32 %v496, %v1009
        %v1011 = vtanh.pop %v1010
        %v1012 = vsub.f32 1.0, %v1008
        %v1013 = vmul.f32 %v1012, %v1011
        %v1014 = vmul.f32 %v1008, %v486
        %v1015 = vadd.f32 %v1013, %v1014
        %v1016 = vmul.f32 %v482, %v1015
        %v1017 = vadd.f32 %v998, %v1016
        %v1018 = vmul.f32 %v1017, %v458
        %v1019 = vadd.f32 %v1018, %v466
        %vm1020 = vcmp.ge.f32.partialorder %v1019, 0.0
        %v1021 = vmul.f32 %v474, %v1019
        %v1022 = vsel %vm1020, %v1019, %v1021
        %vm1023 = vcmask 517120
        %1024 = vst.msk [vmem:[%s409] sm:$0x3] %vm1023, %v1022
        %v1025 = vld [vmem:[%s330] sm:$0x22]
        %v1026 = vld [vmem:[%s330 + $0x8] sm:$0x2]
        %v1027 = vunpack.c.l.bf16 %v1025
        %v1028 = vunpack.c.h.bf16 %v1025
        %v1029 = vunpack.c.l.bf16 %v1026
        %v1030 = vld [vmem:[%s337] sm:$0x22]
        %v1031 = vld [vmem:[%s337 + $0x8] sm:$0x2]
        %v1032 = vunpack.c.l.bf16 %v1030
        %v1033 = vunpack.c.h.bf16 %v1030
        %v1034 = vunpack.c.l.bf16 %v1031
        %v1035 = vpack.c.bf16 %v998, %v998
        %v1036 = vld [vmem:[%s392] sm:$0xff]
        %v1037 = vld [vmem:[%s392 + $0x8] sm:$0xf]
        %v1038 = vld [vmem:[%s392 + $0xc] sm:$0xff]
        %v1039 = vld [vmem:[%s392 + $0x14] sm:$0xf]
        %v1040 = vld [vmem:[%s392 + $0x18] sm:$0xff]
        %v1041 = vld [vmem:[%s392 + $0x20] sm:$0xf]
        %v1042 = vld [vmem:[%s392 + $0x24] sm:$0xff]
        %v1043 = vld [vmem:[%s392 + $0x2c] sm:$0xf]
        %v1044 = vld [vmem:[%s392 + $0x30] sm:$0xff]
        %v1045 = vld [vmem:[%s392 + $0x38] sm:$0xf]
        %v1046 = vld [vmem:[%s392 + $0x3c] sm:$0xff]
        %v1047 = vld [vmem:[%s392 + $0x44] sm:$0xf]
        %v1048 = vld [vmem:[%s392 + $0x48] sm:$0xff]
        %v1049 = vld [vmem:[%s392 + $0x50] sm:$0xf]
        %v1050 = vld [vmem:[%s392 + $0x54] sm:$0xff]
        %v1051 = vld [vmem:[%s392 + $0x5c] sm:$0xf]
        %v1052 = vld [vmem:[%s392 + $0x60] sm:$0xff]
        %v1053 = vld [vmem:[%s392 + $0x68] sm:$0xf]
        %v1054 = vld [vmem:[%s392 + $0x6c] sm:$0xff]
        %v1055 = vld [vmem:[%s392 + $0x74] sm:$0xf]
        %v1056 = vld [vmem:[%s392 + $0x78] sm:$0xff]
        %v1057 = vld [vmem:[%s392 + $0x80] sm:$0xf]
        %v1058 = vld [vmem:[%s392 + $0x84] sm:$0xff]
        %v1059 = vld [vmem:[%s392 + $0x8c] sm:$0xf]
        %v1060 = vld [vmem:[%s392 + $0x90] sm:$0xff]
        %v1061 = vld [vmem:[%s392 + $0x98] sm:$0xf]
        %v1062 = vld [vmem:[%s392 + $0x9c] sm:$0xff]
        %v1063 = vld [vmem:[%s392 + $0xa4] sm:$0xf]
        %v1064 = vld [vmem:[%s392 + $0xa8] sm:$0xff]
        %v1065 = vld [vmem:[%s392 + $0xb0] sm:$0xf]
        %v1066 = vld [vmem:[%s392 + $0xb4] sm:$0xff]
        %v1067 = vld [vmem:[%s392 + $0xbc] sm:$0xf]
        %v1100 = vunpack.c.l.b16 %v1036
        %v1101 = vunpack.c.h.b16 %v1036
        %v1102 = vunpack.c.l.b16 %v1037
        %v1103 = vunpack.c.l.b16 %v1038
        %v1104 = vunpack.c.h.b16 %v1038
        %v1105 = vunpack.c.l.b16 %v1039
        %v1106 = vunpack.c.l.b16 %v1040
        %v1107 = vunpack.c.h.b16 %v1040
        %v1108 = vunpack.c.l.b16 %v1041
        %v1109 = vunpack.c.l.b16 %v1042
        %v1110 = vunpack.c.h.b16 %v1042
        %v1111 = vunpack.c.l.b16 %v1043
        %v1112 = vunpack.c.l.b16 %v1044
        %v1113 = vunpack.c.h.b16 %v1044
        %v1114 = vunpack.c.l.b16 %v1045
        %v1115 = vunpack.c.l.b16 %v1046
        %v1116 = vunpack.c.h.b16 %v1046
        %v1117 = vunpack.c.l.b16 %v1047
        %v1118 = vunpack.c.l.b16 %v1048
        %v1119 = vunpack.c.h.b16 %v1048
        %v1120 = vunpack.c.l.b16 %v1049
        %v1121 = vunpack.c.l.b16 %v1050
        %v1122 = vunpack.c.h.b16 %v1050
        %v1123 = vunpack.c.l.b16 %v1051
        %v1124 = vunpack.c.l.b16 %v1052
        %v1125 = vunpack.c.h.b16 %v1052
        %v1126 = vunpack.c.l.b16 %v1053
        %v1127 = vunpack.c.l.b16 %v1054
        %v1128 = vunpack.c.h.b16 %v1054
        %v1129 = vunpack.c.l.b16 %v1055
        %v1130 = vunpack.c.l.b16 %v1056
        %v1131 = vunpack.c.h.b16 %v1056
        %v1132 = vunpack.c.l.b16 %v1057
        %v1133 = vunpack.c.l.b16 %v1058
        %v1134 = vunpack.c.h.b16 %v1058
        %v1135 = vunpack.c.l.b16 %v1059
        %v1136 = vunpack.c.l.b16 %v1060
        %v1137 = vunpack.c.h.b16 %v1060
        %v1138 = vunpack.c.l.b16 %v1061
        %v1139 = vunpack.c.l.b16 %v1062
        %v1140 = vunpack.c.h.b16 %v1062
        %v1141 = vunpack.c.l.b16 %v1063
        %v1142 = vunpack.c.l.b16 %v1064
        %v1143 = vunpack.c.h.b16 %v1064
        %v1144 = vunpack.c.l.b16 %v1065
        %v1145 = vunpack.c.l.b16 %v1066
        %v1146 = vunpack.c.h.b16 %v1066
        %v1147 = vunpack.c.l.b16 %v1067
        %v1148 = vpack.c.b16 %v1103, %v1100
        %v1149 = vpack.c.b16 %v1104, %v1101
        %v1150 = vpack.c.b16 %v1105, %v1102
        %v1151 = vpack.c.b16 %v1109, %v1106
        %v1152 = vpack.c.b16 %v1110, %v1107
        %v1153 = vpack.c.b16 %v1111, %v1108
        %v1154 = vpack.c.b16 %v1115, %v1112
        %v1155 = vpack.c.b16 %v1116, %v1113
        %v1156 = vpack.c.b16 %v1117, %v1114
        %v1157 = vpack.c.b16 %v1121, %v1118
        %v1158 = vpack.c.b16 %v1122, %v1119
        %v1159 = vpack.c.b16 %v1123, %v1120
        %v1160 = vpack.c.b16 %v1127, %v1124
        %v1161 = vpack.c.b16 %v1128, %v1125
        %v1162 = vpack.c.b16 %v1129, %v1126
        %v1163 = vpack.c.b16 %v1133, %v1130
        %v1164 = vpack.c.b16 %v1134, %v1131
        %v1165 = vpack.c.b16 %v1135, %v1132
        %v1166 = vpack.c.b16 %v1139, %v1136
        %v1167 = vpack.c.b16 %v1140, %v1137
        %v1168 = vpack.c.b16 %v1141, %v1138
        %v1169 = vpack.c.b16 %v1145, %v1142
        %v1170 = vpack.c.b16 %v1146, %v1143
        %v1171 = vpack.c.b16 %v1147, %v1144
        %1196 = vmatprep.subr.bf16.mxu0 %v1149
        %1197 = vmatpush1.bf16.msra.mxu0 %v1148
        %1198 = vmatprep.subr.bf16.mxu0 %v1152
        %1199 = vmatpush1.bf16.msra.mxu0 %v1151
        %1200 = vmatprep.subr.bf16.mxu0 %v1155
        %1201 = vmatpush1.bf16.msra.mxu0 %v1154
        %1202 = vmatprep.subr.bf16.mxu0 %v1158
        %1203 = vmatpush1.bf16.msra.mxu0 %v1157
        %1204 = vmatprep.subr.bf16.mxu0 %v1161
        %1205 = vmatpush1.bf16.msra.mxu0 %v1160
        %1206 = vmatprep.subr.bf16.mxu0 %v1164
        %1207 = vmatpush1.bf16.msra.mxu0 %v1163
        %1208 = vmatprep.subr.bf16.mxu0 %v1167
        %1209 = vmatpush1.bf16.msra.mxu0 %v1166
        %1210 = vmatprep.subr.bf16.mxu0 %v1170
        %1211 = vmatpush1.bf16.msra.mxu0 %v1169
        %1212 = vmatprep.subr.bf16.mxu0 0
        %1213 = vmatpush1.bf16.msra.mxu0 0
        %1214 = vmatprep.subr.bf16.mxu0 0
        %1215 = vmatpush1.bf16.msra.mxu0 0
        %1216 = vmatprep.subr.bf16.mxu0 0
        %1217 = vmatpush1.bf16.msra.mxu0 0
        %1218 = vmatprep.subr.bf16.mxu0 0
        %1219 = vmatpush1.bf16.msra.mxu0 0
        %1220 = vmatprep.subr.bf16.mxu0 0
        %1221 = vmatpush1.bf16.msra.mxu0 0
        %1222 = vmatprep.subr.bf16.mxu0 0
        %1223 = vmatpush1.bf16.msra.mxu0 0
        %1224 = vmatprep.subr.bf16.mxu0 0
        %1225 = vmatpush1.bf16.msra.mxu0 0
        %1226 = vmatprep.subr.bf16.mxu0 0
        %1227 = vmatpush1.bf16.msra.mxu0 0
        %1228 = vmatprep.mubr.bf16.mxu0 0
        %1229 = vmatmul.mubr.bf16.gmra.mrb[0].mxu0 %v1035
        %v1230 = vpop.f32.mrb[0].mxu0
        %v1231 = vadd.f32 %v423, %v1230
        %v1232 = vpop.f32.mrb[0].mxu0
        %v1233 = vadd.f32 %v427, %v1232
        %v1234 = vpop.f32.mrb[0].mxu0
        %v1235 = vpop.f32.mrb[0].mxu0
        %1236 = vdwg.mxu0
        %1237 = vmatprep.subr.bf16.mxu0 0
        %1238 = vmatpush1.bf16.msra.mxu0 %v1150
        %1239 = vmatprep.subr.bf16.mxu0 0
        %1240 = vmatpush1.bf16.msra.mxu0 %v1153
        %1241 = vmatprep.subr.bf16.mxu0 0
        %1242 = vmatpush1.bf16.msra.mxu0 %v1156
        %1243 = vmatprep.subr.bf16.mxu0 0
        %1244 = vmatpush1.bf16.msra.mxu0 %v1159
        %1245 = vmatprep.subr.bf16.mxu0 0
        %1246 = vmatpush1.bf16.msra.mxu0 %v1162
        %1247 = vmatprep.subr.bf16.mxu0 0
        %1248 = vmatpush1.bf16.msra.mxu0 %v1165
        %1249 = vmatprep.subr.bf16.mxu0 0
        %1250 = vmatpush1.bf16.msra.mxu0 %v1168
        %1251 = vmatprep.subr.bf16.mxu0 0
        %1252 = vmatpush1.bf16.msra.mxu0 %v1171
        %1253 = vmatprep.subr.bf16.mxu0 0
        %1254 = vmatpush1.bf16.msra.mxu0 0
        %1255 = vmatprep.subr.bf16.mxu0 0
        %1256 = vmatpush1.bf16.msra.mxu0 0
        %1257 = vmatprep.subr.bf16.mxu0 0
        %1258 = vmatpush1.bf16.msra.mxu0 0
        %1259 = vmatprep.subr.bf16.mxu0 0
        %1260 = vmatpush1.bf16.msra.mxu0 0
        %1261 = vmatprep.subr.bf16.mxu0 0
        %1262 = vmatpush1.bf16.msra.mxu0 0
        %1263 = vmatprep.subr.bf16.mxu0 0
        %1264 = vmatpush1.bf16.msra.mxu0 0
        %1265 = vmatprep.subr.bf16.mxu0 0
        %1266 = vmatpush1.bf16.msra.mxu0 0
        %1267 = vmatprep.subr.bf16.mxu0 0
        %1268 = vmatpush1.bf16.msra.mxu0 0
        %1269 = vmatprep.mubr.bf16.mxu0 0
        %1270 = vmatmul.mubr.bf16.gmra.mrb[0].mxu0 %v1035
        %v1271 = vpop.f32.mrb[0].mxu0
        %v1272 = vadd.f32 %v431, %v1271
        %v1273 = vpop.f32.mrb[0].mxu0
        %v1274 = vpop.f32.mrb[0].mxu0
        %v1275 = vpop.f32.mrb[0].mxu0
        %1276 = vdwg.mxu0
        %v1277 = vpack.c.bf16 %v1015, %v1015
        %v1278 = vld [vmem:[%s740] sm:$0xff]
        %v1279 = vld [vmem:[%s740 + $0x8] sm:$0xf]
        %v1280 = vld [vmem:[%s740 + $0xc] sm:$0xff]
        %v1281 = vld [vmem:[%s740 + $0x14] sm:$0xf]
        %v1282 = vld [vmem:[%s740 + $0x18] sm:$0xff]
        %v1283 = vld [vmem:[%s740 + $0x20] sm:$0xf]
        %v1284 = vld [vmem:[%s740 + $0x24] sm:$0xff]
        %v1285 = vld [vmem:[%s740 + $0x2c] sm:$0xf]
        %v1286 = vld [vmem:[%s740 + $0x30] sm:$0xff]
        %v1287 = vld [vmem:[%s740 + $0x38] sm:$0xf]
        %v1288 = vld [vmem:[%s740 + $0x3c] sm:$0xff]
        %v1289 = vld [vmem:[%s740 + $0x44] sm:$0xf]
        %v1290 = vld [vmem:[%s740 + $0x48] sm:$0xff]
        %v1291 = vld [vmem:[%s740 + $0x50] sm:$0xf]
        %v1292 = vld [vmem:[%s740 + $0x54] sm:$0xff]
        %v1293 = vld [vmem:[%s740 + $0x5c] sm:$0xf]
        %v1294 = vld [vmem:[%s740 + $0x60] sm:$0xff]
        %v1295 = vld [vmem:[%s740 + $0x68] sm:$0xf]
        %v1296 = vld [vmem:[%s740 + $0x6c] sm:$0xff]
        %v1297 = vld [vmem:[%s740 + $0x74] sm:$0xf]
        %v1298 = vld [vmem:[%s740 + $0x78] sm:$0xff]
        %v1299 = vld [vmem:[%s740 + $0x80] sm:$0xf]
        %v1300 = vld [vmem:[%s740 + $0x84] sm:$0xff]
        %v1301 = vld [vmem:[%s740 + $0x8c] sm:$0xf]
        %v1302 = vld [vmem:[%s740 + $0x90] sm:$0xff]
        %v1303 = vld [vmem:[%s740 + $0x98] sm:$0xf]
        %v1304 = vld [vmem:[%s740 + $0x9c] sm:$0xff]
        %v1305 = vld [vmem:[%s740 + $0xa4] sm:$0xf]
        %v1306 = vld [vmem:[%s740 + $0xa8] sm:$0xff]
        %v1307 = vld [vmem:[%s740 + $0xb0] sm:$0xf]
        %v1308 = vld [vmem:[%s740 + $0xb4] sm:$0xff]
        %v1309 = vld [vmem:[%s740 + $0xbc] sm:$0xf]
        %v1342 = vunpack.c.l.b16 %v1278
        %v1343 = vunpack.c.h.b16 %v1278
        %v1344 = vunpack.c.l.b16 %v1279
        %v1345 = vunpack.c.l.b16 %v1280
        %v1346 = vunpack.c.h.b16 %v1280
        %v1347 = vunpack.c.l.b16 %v1281
        %v1348 = vunpack.c.l.b16 %v1282
        %v1349 = vunpack.c.h.b16 %v1282
        %v1350 = vunpack.c.l.b16 %v1283
        %v1351 = vunpack.c.l.b16 %v1284
        %v1352 = vunpack.c.h.b16 %v1284
        %v1353 = vunpack.c.l.b16 %v1285
        %v1354 = vunpack.c.l.b16 %v1286
        %v1355 = vunpack.c.h.b16 %v1286
        %v1356 = vunpack.c.l.b16 %v1287
        %v1357 = vunpack.c.l.b16 %v1288
        %v1358 = vunpack.c.h.b16 %v1288
        %v1359 = vunpack.c.l.b16 %v1289
        %v1360 = vunpack.c.l.b16 %v1290
        %v1361 = vunpack.c.h.b16 %v1290
        %v1362 = vunpack.c.l.b16 %v1291
        %v1363 = vunpack.c.l.b16 %v1292
        %v1364 = vunpack.c.h.b16 %v1292
        %v1365 = vunpack.c.l.b16 %v1293
        %v1366 = vunpack.c.l.b16 %v1294
        %v1367 = vunpack.c.h.b16 %v1294
        %v1368 = vunpack.c.l.b16 %v1295
        %v1369 = vunpack.c.l.b16 %v1296
        %v1370 = vunpack.c.h.b16 %v1296
        %v1371 = vunpack.c.l.b16 %v1297
        %v1372 = vunpack.c.l.b16 %v1298
        %v1373 = vunpack.c.h.b16 %v1298
        %v1374 = vunpack.c.l.b16 %v1299
        %v1375 = vunpack.c.l.b16 %v1300
        %v1376 = vunpack.c.h.b16 %v1300
        %v1377 = vunpack.c.l.b16 %v1301
        %v1378 = vunpack.c.l.b16 %v1302
        %v1379 = vunpack.c.h.b16 %v1302
        %v1380 = vunpack.c.l.b16 %v1303
        %v1381 = vunpack.c.l.b16 %v1304
        %v1382 = vunpack.c.h.b16 %v1304
        %v1383 = vunpack.c.l.b16 %v1305
        %v1384 = vunpack.c.l.b16 %v1306
        %v1385 = vunpack.c.h.b16 %v1306
        %v1386 = vunpack.c.l.b16 %v1307
        %v1387 = vunpack.c.l.b16 %v1308
        %v1388 = vunpack.c.h.b16 %v1308
        %v1389 = vunpack.c.l.b16 %v1309
        %v1390 = vpack.c.b16 %v1345, %v1342
        %v1391 = vpack.c.b16 %v1346, %v1343
        %v1392 = vpack.c.b16 %v1347, %v1344
        %v1393 = vpack.c.b16 %v1351, %v1348
        %v1394 = vpack.c.b16 %v1352, %v1349
        %v1395 = vpack.c.b16 %v1353, %v1350
        %v1396 = vpack.c.b16 %v1357, %v1354
        %v1397 = vpack.c.b16 %v1358, %v1355
        %v1398 = vpack.c.b16 %v1359, %v1356
        %v1399 = vpack.c.b16 %v1363, %v1360
        %v1400 = vpack.c.b16 %v1364, %v1361
        %v1401 = vpack.c.b16 %v1365, %v1362
        %v1402 = vpack.c.b16 %v1369, %v1366
        %v1403 = vpack.c.b16 %v1370, %v1367
        %v1404 = vpack.c.b16 %v1371, %v1368
        %v1405 = vpack.c.b16 %v1375, %v1372
        %v1406 = vpack.c.b16 %v1376, %v1373
        %v1407 = vpack.c.b16 %v1377, %v1374
        %v1408 = vpack.c.b16 %v1381, %v1378
        %v1409 = vpack.c.b16 %v1382, %v1379
        %v1410 = vpack.c.b16 %v1383, %v1380
        %v1411 = vpack.c.b16 %v1387, %v1384
        %v1412 = vpack.c.b16 %v1388, %v1385
        %v1413 = vpack.c.b16 %v1389, %v1386
        %1438 = vmatprep.subr.bf16.mxu0 %v1391
        %1439 = vmatpush1.bf16.msra.mxu0 %v1390
        %1440 = vmatprep.subr.bf16.mxu0 %v1394
        %1441 = vmatpush1.bf16.msra.mxu0 %v1393
        %1442 = vmatprep.subr.bf16.mxu0 %v1397
        %1443 = vmatpush1.bf16.msra.mxu0 %v1396
        %1444 = vmatprep.subr.bf16.mxu0 %v1400
        %1445 = vmatpush1.bf16.msra.mxu0 %v1399
        %1446 = vmatprep.subr.bf16.mxu0 %v1403
        %1447 = vmatpush1.bf16.msra.mxu0 %v1402
        %1448 = vmatprep.subr.bf16.mxu0 %v1406
        %1449 = vmatpush1.bf16.msra.mxu0 %v1405
        %1450 = vmatprep.subr.bf16.mxu0 %v1409
        %1451 = vmatpush1.bf16.msra.mxu0 %v1408
        %1452 = vmatprep.subr.bf16.mxu0 %v1412
        %1453 = vmatpush1.bf16.msra.mxu0 %v1411
        %1454 = vmatprep.subr.bf16.mxu0 0
        %1455 = vmatpush1.bf16.msra.mxu0 0
        %1456 = vmatprep.subr.bf16.mxu0 0
        %1457 = vmatpush1.bf16.msra.mxu0 0
        %1458 = vmatprep.subr.bf16.mxu0 0
        %1459 = vmatpush1.bf16.msra.mxu0 0
        %1460 = vmatprep.subr.bf16.mxu0 0
        %1461 = vmatpush1.bf16.msra.mxu0 0
        %1462 = vmatprep.subr.bf16.mxu0 0
        %1463 = vmatpush1.bf16.msra.mxu0 0
        %1464 = vmatprep.subr.bf16.mxu0 0
        %1465 = vmatpush1.bf16.msra.mxu0 0
        %1466 = vmatprep.subr.bf16.mxu0 0
        %1467 = vmatpush1.bf16.msra.mxu0 0
        %1468 = vmatprep.subr.bf16.mxu0 0
        %1469 = vmatpush1.bf16.msra.mxu0 0
        %1470 = vmatprep.mubr.bf16.mxu0 0
        %1471 = vmatmul.mubr.bf16.gmra.mrb[0].mxu0 %v1277
        %v1472 = vpop.f32.mrb[0].mxu0
        %v1473 = vadd.f32 %v441, %v1472
        %v1474 = vpop.f32.mrb[0].mxu0
        %v1475 = vadd.f32 %v445, %v1474
        %v1476 = vpop.f32.mrb[0].mxu0
        %v1477 = vpop.f32.mrb[0].mxu0
        %1478 = vdwg.mxu0
        %1479 = vmatprep.subr.bf16.mxu0 0
        %1480 = vmatpush1.bf16.msra.mxu0 %v1392
        %1481 = vmatprep.subr.bf16.mxu0 0
        %1482 = vmatpush1.bf16.msra.mxu0 %v1395
        %1483 = vmatprep.subr.bf16.mxu0 0
        %1484 = vmatpush1.bf16.msra.mxu0 %v1398
        %1485 = vmatprep.subr.bf16.mxu0 0
        %1486 = vmatpush1.bf16.msra.mxu0 %v1401
        %1487 = vmatprep.subr.bf16.mxu0 0
        %1488 = vmatpush1.bf16.msra.mxu0 %v1404
        %1489 = vmatprep.subr.bf16.mxu0 0
        %1490 = vmatpush1.bf16.msra.mxu0 %v1407
        %1491 = vmatprep.subr.bf16.mxu0 0
        %1492 = vmatpush1.bf16.msra.mxu0 %v1410
        %1493 = vmatprep.subr.bf16.mxu0 0
        %1494 = vmatpush1.bf16.msra.mxu0 %v1413
        %1495 = vmatprep.subr.bf16.mxu0 0
        %1496 = vmatpush1.bf16.msra.mxu0 0
        %1497 = vmatprep.subr.bf16.mxu0 0
        %1498 = vmatpush1.bf16.msra.mxu0 0
        %1499 = vmatprep.subr.bf16.mxu0 0
        %1500 = vmatpush1.bf16.msra.mxu0 0
        %1501 = vmatprep.subr.bf16.mxu0 0
        %1502 = vmatpush1.bf16.msra.mxu0 0
        %1503 = vmatprep.subr.bf16.mxu0 0
        %1504 = vmatpush1.bf16.msra.mxu0 0
        %1505 = vmatprep.subr.bf16.mxu0 0
        %1506 = vmatpush1.bf16.msra.mxu0 0
        %1507 = vmatprep.subr.bf16.mxu0 0
        %1508 = vmatpush1.bf16.msra.mxu0 0
        %1509 = vmatprep.subr.bf16.mxu0 0
        %1510 = vmatpush1.bf16.msra.mxu0 0
        %1511 = vmatprep.mubr.bf16.mxu0 0
        %1512 = vmatmul.mubr.bf16.gmra.mrb[0].mxu0 %v1277
        %v1513 = vpop.f32.mrb[0].mxu0
        %v1514 = vadd.f32 %v449, %v1513
        %v1515 = vpop.f32.mrb[0].mxu0
        %v1516 = vpop.f32.mrb[0].mxu0
        %v1517 = vpop.f32.mrb[0].mxu0
        %1518 = vdwg.mxu0
        %v1520 = vrot.slane %v1231, 6
        %v1522 = vadd.f32 %v1027, %v1520
        %v1523 = vmul.f32 %v1522, 0.5
        %v1524 = vtanh.pop %v1523
        %v1525 = vmul.f32 %v1524, 0.5
        %v1526 = vadd.f32 %v1525, 0.5
        %v1528 = vrot.slane %v1233, 6
        %v1530 = vadd.f32 %v1028, %v1528
        %v1531 = vmul.f32 %v1530, 0.5
        %v1532 = vtanh.pop %v1531
        %v1533 = vmul.f32 %v1532, 0.5
        %v1534 = vadd.f32 %v1533, 0.5
        %v1536 = vrot.slane %v1272, 6
        %v1538 = vmul.f32 %v1526, %v1536
        %v1539 = vadd.f32 %v1029, %v1538
        %v1540 = vtanh.pop %v1539
        %v1541 = vsub.f32 1.0, %v1534
        %v1542 = vmul.f32 %v1541, %v1540
        %v1544 = vrot.slane %v998, 6
        %v1546 = vmul.f32 %v1534, %v1544
        %v1547 = vadd.f32 %v1542, %v1546
        %v1549 = vrot.slane %v1473, 6
        %v1551 = vadd.f32 %v1032, %v1549
        %v1552 = vmul.f32 %v1551, 0.5
        %v1553 = vtanh.pop %v1552
        %v1554 = vmul.f32 %v1553, 0.5
        %v1555 = vadd.f32 %v1554, 0.5
        %v1557 = vrot.slane %v1475, 6
        %v1559 = vadd.f32 %v1033, %v1557
        %v1560 = vmul.f32 %v1559, 0.5
        %v1561 = vtanh.pop %v1560
        %v1562 = vmul.f32 %v1561, 0.5
        %v1563 = vadd.f32 %v1562, 0.5
        %v1565 = vrot.slane %v1514, 6
        %v1567 = vmul.f32 %v1555, %v1565
        %v1568 = vadd.f32 %v1034, %v1567
        %v1569 = vtanh.pop %v1568
        %v1570 = vsub.f32 1.0, %v1563
        %v1571 = vmul.f32 %v1570, %v1569
        %v1573 = vrot.slane %v1015, 6
        %v1575 = vmul.f32 %v1563, %v1573
        %v1576 = vadd.f32 %v1571, %v1575
        %v1577 = vmul.f32 %v482, %v1576
        %v1578 = vadd.f32 %v1547, %v1577
        %v1579 = vmul.f32 %v1578, %v458
        %v1580 = vadd.f32 %v1579, %v466
        %vm1581 = vcmp.ge.f32.partialorder %v1580, 0.0
        %v1582 = vmul.f32 %v474, %v1580
        %v1583 = vsel %vm1581, %v1580, %v1582
        %vm1584 = vcmask 519170
        %1585 = vst.msk [vmem:[%s409] sm:$0xc] %vm1584, %v1583
        %v1586 = vld [vmem:[%s330] sm:$0x44]
        %v1587 = vld [vmem:[%s330 + $0x8] sm:$0x4]
        %v1588 = vunpack.c.l.bf16 %v1586
        %v1589 = vunpack.c.h.bf16 %v1586
        %v1590 = vunpack.c.l.bf16 %v1587
        %v1591 = vld [vmem:[%s337] sm:$0x44]
        %v1592 = vld [vmem:[%s337 + $0x8] sm:$0x4]
        %v1593 = vunpack.c.l.bf16 %v1591
        %v1594 = vunpack.c.h.bf16 %v1591
        %v1595 = vunpack.c.l.bf16 %v1592
        %v1596 = vpack.c.bf16 %v1547, %v1547
        %v1597 = vld [vmem:[%s392] sm:$0xff]
        %v1598 = vld [vmem:[%s392 + $0x8] sm:$0xf]
        %v1599 = vld [vmem:[%s392 + $0xc] sm:$0xff]
        %v1600 = vld [vmem:[%s392 + $0x14] sm:$0xf]
        %v1601 = vld [vmem:[%s392 + $0x18] sm:$0xff]
        %v1602 = vld [vmem:[%s392 + $0x20] sm:$0xf]
        %v1603 = vld [vmem:[%s392 + $0x24] sm:$0xff]
        %v1604 = vld [vmem:[%s392 + $0x2c] sm:$0xf]
        %v1605 = vld [vmem:[%s392 + $0x30] sm:$0xff]
        %v1606 = vld [vmem:[%s392 + $0x38] sm:$0xf]
        %v1607 = vld [vmem:[%s392 + $0x3c] sm:$0xff]
        %v1608 = vld [vmem:[%s392 + $0x44] sm:$0xf]
        %v1609 = vld [vmem:[%s392 + $0x48] sm:$0xff]
        %v1610 = vld [vmem:[%s392 + $0x50] sm:$0xf]
        %v1611 = vld [vmem:[%s392 + $0x54] sm:$0xff]
        %v1612 = vld [vmem:[%s392 + $0x5c] sm:$0xf]
        %v1613 = vld [vmem:[%s392 + $0x60] sm:$0xff]
        %v1614 = vld [vmem:[%s392 + $0x68] sm:$0xf]
        %v1615 = vld [vmem:[%s392 + $0x6c] sm:$0xff]
        %v1616 = vld [vmem:[%s392 + $0x74] sm:$0xf]
        %v1617 = vld [vmem:[%s392 + $0x78] sm:$0xff]
        %v1618 = vld [vmem:[%s392 + $0x80] sm:$0xf]
        %v1619 = vld [vmem:[%s392 + $0x84] sm:$0xff]
        %v1620 = vld [vmem:[%s392 + $0x8c] sm:$0xf]
        %v1621 = vld [vmem:[%s392 + $0x90] sm:$0xff]
        %v1622 = vld [vmem:[%s392 + $0x98] sm:$0xf]
        %v1623 = vld [vmem:[%s392 + $0x9c] sm:$0xff]
        %v1624 = vld [vmem:[%s392 + $0xa4] sm:$0xf]
        %v1625 = vld [vmem:[%s392 + $0xa8] sm:$0xff]
        %v1626 = vld [vmem:[%s392 + $0xb0] sm:$0xf]
        %v1627 = vld [vmem:[%s392 + $0xb4] sm:$0xff]
        %v1628 = vld [vmem:[%s392 + $0xbc] sm:$0xf]
        %v1630 = vrot.slane %v1596, 1
        %v1664 = vunpack.c.l.b16 %v1597
        %v1665 = vunpack.c.h.b16 %v1597
        %v1666 = vunpack.c.l.b16 %v1598
        %v1667 = vunpack.c.l.b16 %v1599
        %v1668 = vunpack.c.h.b16 %v1599
        %v1669 = vunpack.c.l.b16 %v1600
        %v1670 = vunpack.c.l.b16 %v1601
        %v1671 = vunpack.c.h.b16 %v1601
        %v1672 = vunpack.c.l.b16 %v1602
        %v1673 = vunpack.c.l.b16 %v1603
        %v1674 = vunpack.c.h.b16 %v1603
        %v1675 = vunpack.c.l.b16 %v1604
        %v1676 = vunpack.c.l.b16 %v1605
        %v1677 = vunpack.c.h.b16 %v1605
        %v1678 = vunpack.c.l.b16 %v1606
        %v1679 = vunpack.c.l.b16 %v1607
        %v1680 = vunpack.c.h.b16 %v1607
        %v1681 = vunpack.c.l.b16 %v1608
        %v1682 = vunpack.c.l.b16 %v1609
        %v1683 = vunpack.c.h.b16 %v1609
        %v1684 = vunpack.c.l.b16 %v1610
        %v1685 = vunpack.c.l.b16 %v1611
        %v1686 = vunpack.c.h.b16 %v1611
        %v1687 = vunpack.c.l.b16 %v1612
        %v1688 = vunpack.c.l.b16 %v1613
        %v1689 = vunpack.c.h.b16 %v1613
        %v1690 = vunpack.c.l.b16 %v1614
        %v1691 = vunpack.c.l.b16 %v1615
        %v1692 = vunpack.c.h.b16 %v1615
        %v1693 = vunpack.c.l.b16 %v1616
        %v1694 = vunpack.c.l.b16 %v1617
        %v1695 = vunpack.c.h.b16 %v1617
        %v1696 = vunpack.c.l.b16 %v1618
        %v1697 = vunpack.c.l.b16 %v1619
        %v1698 = vunpack.c.h.b16 %v1619
        %v1699 = vunpack.c.l.b16 %v1620
        %v1700 = vunpack.c.l.b16 %v1621
        %v1701 = vunpack.c.h.b16 %v1621
        %v1702 = vunpack.c.l.b16 %v1622
        %v1703 = vunpack.c.l.b16 %v1623
        %v1704 = vunpack.c.h.b16 %v1623
        %v1705 = vunpack.c.l.b16 %v1624
        %v1706 = vunpack.c.l.b16 %v1625
        %v1707 = vunpack.c.h.b16 %v1625
        %v1708 = vunpack.c.l.b16 %v1626
        %v1709 = vunpack.c.l.b16 %v1627
        %v1710 = vunpack.c.h.b16 %v1627
        %v1711 = vunpack.c.l.b16 %v1628
        %v1712 = vpack.c.b16 %v1667, %v1664
        %v1713 = vpack.c.b16 %v1668, %v1665
        %v1714 = vpack.c.b16 %v1669, %v1666
        %v1715 = vpack.c.b16 %v1673, %v1670
        %v1716 = vpack.c.b16 %v1674, %v1671
        %v1717 = vpack.c.b16 %v1675, %v1672
        %v1718 = vpack.c.b16 %v1679, %v1676
        %v1719 = vpack.c.b16 %v1680, %v1677
        %v1720 = vpack.c.b16 %v1681, %v1678
        %v1721 = vpack.c.b16 %v1685, %v1682
        %v1722 = vpack.c.b16 %v1686, %v1683
        %v1723 = vpack.c.b16 %v1687, %v1684
        %v1724 = vpack.c.b16 %v1691, %v1688
        %v1725 = vpack.c.b16 %v1692, %v1689
        %v1726 = vpack.c.b16 %v1693, %v1690
        %v1727 = vpack.c.b16 %v1697, %v1694
        %v1728 = vpack.c.b16 %v1698, %v1695
        %v1729 = vpack.c.b16 %v1699, %v1696
        %v1730 = vpack.c.b16 %v1703, %v1700
        %v1731 = vpack.c.b16 %v1704, %v1701
        %v1732 = vpack.c.b16 %v1705, %v1702
        %v1733 = vpack.c.b16 %v1709, %v1706
        %v1734 = vpack.c.b16 %v1710, %v1707
        %v1735 = vpack.c.b16 %v1711, %v1708
        %1760 = vmatprep.subr.bf16.mxu0 %v1713
        %1761 = vmatpush1.bf16.msra.mxu0 %v1712
        %1762 = vmatprep.subr.bf16.mxu0 %v1716
        %1763 = vmatpush1.bf16.msra.mxu0 %v1715
        %1764 = vmatprep.subr.bf16.mxu0 %v1719
        %1765 = vmatpush1.bf16.msra.mxu0 %v1718
        %1766 = vmatprep.subr.bf16.mxu0 %v1722
        %1767 = vmatpush1.bf16.msra.mxu0 %v1721
        %1768 = vmatprep.subr.bf16.mxu0 %v1725
        %1769 = vmatpush1.bf16.msra.mxu0 %v1724
        %1770 = vmatprep.subr.bf16.mxu0 %v1728
        %1771 = vmatpush1.bf16.msra.mxu0 %v1727
        %1772 = vmatprep.subr.bf16.mxu0 %v1731
        %1773 = vmatpush1.bf16.msra.mxu0 %v1730
        %1774 = vmatprep.subr.bf16.mxu0 %v1734
        %1775 = vmatpush1.bf16.msra.mxu0 %v1733
        %1776 = vmatprep.subr.bf16.mxu0 0
        %1777 = vmatpush1.bf16.msra.mxu0 0
        %1778 = vmatprep.subr.bf16.mxu0 0
        %1779 = vmatpush1.bf16.msra.mxu0 0
        %1780 = vmatprep.subr.bf16.mxu0 0
        %1781 = vmatpush1.bf16.msra.mxu0 0
        %1782 = vmatprep.subr.bf16.mxu0 0
        %1783 = vmatpush1.bf16.msra.mxu0 0
        %1784 = vmatprep.subr.bf16.mxu0 0
        %1785 = vmatpush1.bf16.msra.mxu0 0
        %1786 = vmatprep.subr.bf16.mxu0 0
        %1787 = vmatpush1.bf16.msra.mxu0 0
        %1788 = vmatprep.subr.bf16.mxu0 0
        %1789 = vmatpush1.bf16.msra.mxu0 0
        %1790 = vmatprep.subr.bf16.mxu0 0
        %1791 = vmatpush1.bf16.msra.mxu0 0
        %1792 = vmatprep.mubr.bf16.mxu0 0
        %1793 = vmatmul.mubr.bf16.gmra.mrb[0].mxu0 %v1630
        %v1794 = vpop.f32.mrb[0].mxu0
        %v1795 = vadd.f32 %v423, %v1794
        %v1796 = vpop.f32.mrb[0].mxu0
        %v1797 = vadd.f32 %v427, %v1796
        %v1798 = vpop.f32.mrb[0].mxu0
        %v1799 = vpop.f32.mrb[0].mxu0
        %1800 = vdwg.mxu0
        %1801 = vmatprep.subr.bf16.mxu0 0
        %1802 = vmatpush1.bf16.msra.mxu0 %v1714
        %1803 = vmatprep.subr.bf16.mxu0 0
        %1804 = vmatpush1.bf16.msra.mxu0 %v1717
        %1805 = vmatprep.subr.bf16.mxu0 0
        %1806 = vmatpush1.bf16.msra.mxu0 %v1720
        %1807 = vmatprep.subr.bf16.mxu0 0
        %1808 = vmatpush1.bf16.msra.mxu0 %v1723
        %1809 = vmatprep.subr.bf16.mxu0 0
        %1810 = vmatpush1.bf16.msra.mxu0 %v1726
        %1811 = vmatprep.subr.bf16.mxu0 0
        %1812 = vmatpush1.bf16.msra.mxu0 %v1729
        %1813 = vmatprep.subr.bf16.mxu0 0
        %1814 = vmatpush1.bf16.msra.mxu0 %v1732
        %1815 = vmatprep.subr.bf16.mxu0 0
        %1816 = vmatpush1.bf16.msra.mxu0 %v1735
        %1817 = vmatprep.subr.bf16.mxu0 0
        %1818 = vmatpush1.bf16.msra.mxu0 0
        %1819 = vmatprep.subr.bf16.mxu0 0
        %1820 = vmatpush1.bf16.msra.mxu0 0
        %1821 = vmatprep.subr.bf16.mxu0 0
        %1822 = vmatpush1.bf16.msra.mxu0 0
        %1823 = vmatprep.subr.bf16.mxu0 0
        %1824 = vmatpush1.bf16.msra.mxu0 0
        %1825 = vmatprep.subr.bf16.mxu0 0
        %1826 = vmatpush1.bf16.msra.mxu0 0
        %1827 = vmatprep.subr.bf16.mxu0 0
        %1828 = vmatpush1.bf16.msra.mxu0 0
        %1829 = vmatprep.subr.bf16.mxu0 0
        %1830 = vmatpush1.bf16.msra.mxu0 0
        %1831 = vmatprep.subr.bf16.mxu0 0
        %1832 = vmatpush1.bf16.msra.mxu0 0
        %1833 = vmatprep.mubr.bf16.mxu0 0
        %1834 = vmatmul.mubr.bf16.gmra.mrb[0].mxu0 %v1630
        %v1835 = vpop.f32.mrb[0].mxu0
        %v1836 = vadd.f32 %v431, %v1835
        %v1837 = vpop.f32.mrb[0].mxu0
        %v1838 = vpop.f32.mrb[0].mxu0
        %v1839 = vpop.f32.mrb[0].mxu0
        %1840 = vdwg.mxu0
        %v1841 = vpack.c.bf16 %v1576, %v1576
        %v1842 = vld [vmem:[%s740] sm:$0xff]
        %v1843 = vld [vmem:[%s740 + $0x8] sm:$0xf]
        %v1844 = vld [vmem:[%s740 + $0xc] sm:$0xff]
        %v1845 = vld [vmem:[%s740 + $0x14] sm:$0xf]
        %v1846 = vld [vmem:[%s740 + $0x18] sm:$0xff]
        %v1847 = vld [vmem:[%s740 + $0x20] sm:$0xf]
        %v1848 = vld [vmem:[%s740 + $0x24] sm:$0xff]
        %v1849 = vld [vmem:[%s740 + $0x2c] sm:$0xf]
        %v1850 = vld [vmem:[%s740 + $0x30] sm:$0xff]
        %v1851 = vld [vmem:[%s740 + $0x38] sm:$0xf]
        %v1852 = vld [vmem:[%s740 + $0x3c] sm:$0xff]
        %v1853 = vld [vmem:[%s740 + $0x44] sm:$0xf]
        %v1854 = vld [vmem:[%s740 + $0x48] sm:$0xff]
        %v1855 = vld [vmem:[%s740 + $0x50] sm:$0xf]
        %v1856 = vld [vmem:[%s740 + $0x54] sm:$0xff]
        %v1857 = vld [vmem:[%s740 + $0x5c] sm:$0xf]
        %v1858 = vld [vmem:[%s740 + $0x60] sm:$0xff]
        %v1859 = vld [vmem:[%s740 + $0x68] sm:$0xf]
        %v1860 = vld [vmem:[%s740 + $0x6c] sm:$0xff]
        %v1861 = vld [vmem:[%s740 + $0x74] sm:$0xf]
        %v1862 = vld [vmem:[%s740 + $0x78] sm:$0xff]
        %v1863 = vld [vmem:[%s740 + $0x80] sm:$0xf]
        %v1864 = vld [vmem:[%s740 + $0x84] sm:$0xff]
        %v1865 = vld [vmem:[%s740 + $0x8c] sm:$0xf]
        %v1866 = vld [vmem:[%s740 + $0x90] sm:$0xff]
        %v1867 = vld [vmem:[%s740 + $0x98] sm:$0xf]
        %v1868 = vld [vmem:[%s740 + $0x9c] sm:$0xff]
        %v1869 = vld [vmem:[%s740 + $0xa4] sm:$0xf]
        %v1870 = vld [vmem:[%s740 + $0xa8] sm:$0xff]
        %v1871 = vld [vmem:[%s740 + $0xb0] sm:$0xf]
        %v1872 = vld [vmem:[%s740 + $0xb4] sm:$0xff]
        %v1873 = vld [vmem:[%s740 + $0xbc] sm:$0xf]
        %v1875 = vrot.slane %v1841, 1
        %v1909 = vunpack.c.l.b16 %v1842
        %v1910 = vunpack.c.h.b16 %v1842
        %v1911 = vunpack.c.l.b16 %v1843
        %v1912 = vunpack.c.l.b16 %v1844
        %v1913 = vunpack.c.h.b16 %v1844
        %v1914 = vunpack.c.l.b16 %v1845
        %v1915 = vunpack.c.l.b16 %v1846
        %v1916 = vunpack.c.h.b16 %v1846
        %v1917 = vunpack.c.l.b16 %v1847
        %v1918 = vunpack.c.l.b16 %v1848
        %v1919 = vunpack.c.h.b16 %v1848
        %v1920 = vunpack.c.l.b16 %v1849
        %v1921 = vunpack.c.l.b16 %v1850
        %v1922 = vunpack.c.h.b16 %v1850
        %v1923 = vunpack.c.l.b16 %v1851
        %v1924 = vunpack.c.l.b16 %v1852
        %v1925 = vunpack.c.h.b16 %v1852
        %v1926 = vunpack.c.l.b16 %v1853
        %v1927 = vunpack.c.l.b16 %v1854
        %v1928 = vunpack.c.h.b16 %v1854
        %v1929 = vunpack.c.l.b16 %v1855
        %v1930 = vunpack.c.l.b16 %v1856
        %v1931 = vunpack.c.h.b16 %v1856
        %v1932 = vunpack.c.l.b16 %v1857
        %v1933 = vunpack.c.l.b16 %v1858
        %v1934 = vunpack.c.h.b16 %v1858
        %v1935 = vunpack.c.l.b16 %v1859
        %v1936 = vunpack.c.l.b16 %v1860
        %v1937 = vunpack.c.h.b16 %v1860
        %v1938 = vunpack.c.l.b16 %v1861
        %v1939 = vunpack.c.l.b16 %v1862
        %v1940 = vunpack.c.h.b16 %v1862
        %v1941 = vunpack.c.l.b16 %v1863
        %v1942 = vunpack.c.l.b16 %v1864
        %v1943 = vunpack.c.h.b16 %v1864
        %v1944 = vunpack.c.l.b16 %v1865
        %v1945 = vunpack.c.l.b16 %v1866
        %v1946 = vunpack.c.h.b16 %v1866
        %v1947 = vunpack.c.l.b16 %v1867
        %v1948 = vunpack.c.l.b16 %v1868
        %v1949 = vunpack.c.h.b16 %v1868
        %v1950 = vunpack.c.l.b16 %v1869
        %v1951 = vunpack.c.l.b16 %v1870
        %v1952 = vunpack.c.h.b16 %v1870
        %v1953 = vunpack.c.l.b16 %v1871
        %v1954 = vunpack.c.l.b16 %v1872
        %v1955 = vunpack.c.h.b16 %v1872
        %v1956 = vunpack.c.l.b16 %v1873
        %v1957 = vpack.c.b16 %v1912, %v1909
        %v1958 = vpack.c.b16 %v1913, %v1910
        %v1959 = vpack.c.b16 %v1914, %v1911
        %v1960 = vpack.c.b16 %v1918, %v1915
        %v1961 = vpack.c.b16 %v1919, %v1916
        %v1962 = vpack.c.b16 %v1920, %v1917
        %v1963 = vpack.c.b16 %v1924, %v1921
        %v1964 = vpack.c.b16 %v1925, %v1922
        %v1965 = vpack.c.b16 %v1926, %v1923
        %v1966 = vpack.c.b16 %v1930, %v1927
        %v1967 = vpack.c.b16 %v1931, %v1928
        %v1968 = vpack.c.b16 %v1932, %v1929
        %v1969 = vpack.c.b16 %v1936, %v1933
        %v1970 = vpack.c.b16 %v1937, %v1934
        %v1971 = vpack.c.b16 %v1938, %v1935
        %v1972 = vpack.c.b16 %v1942, %v1939
        %v1973 = vpack.c.b16 %v1943, %v1940
        %v1974 = vpack.c.b16 %v1944, %v1941
        %v1975 = vpack.c.b16 %v1948, %v1945
        %v1976 = vpack.c.b16 %v1949, %v1946
        %v1977 = vpack.c.b16 %v1950, %v1947
        %v1978 = vpack.c.b16 %v1954, %v1951
        %v1979 = vpack.c.b16 %v1955, %v1952
        %v1980 = vpack.c.b16 %v1956, %v1953
        %2005 = vmatprep.subr.bf16.mxu0 %v1958
        %2006 = vmatpush1.bf16.msra.mxu0 %v1957
        %2007 = vmatprep.subr.bf16.mxu0 %v1961
        %2008 = vmatpush1.bf16.msra.mxu0 %v1960
        %2009 = vmatprep.subr.bf16.mxu0 %v1964
        %2010 = vmatpush1.bf16.msra.mxu0 %v1963
        %2011 = vmatprep.subr.bf16.mxu0 %v1967
        %2012 = vmatpush1.bf16.msra.mxu0 %v1966
        %2013 = vmatprep.subr.bf16.mxu0 %v1970
        %2014 = vmatpush1.bf16.msra.mxu0 %v1969
        %2015 = vmatprep.subr.bf16.mxu0 %v1973
        %2016 = vmatpush1.bf16.msra.mxu0 %v1972
        %2017 = vmatprep.subr.bf16.mxu0 %v1976
        %2018 = vmatpush1.bf16.msra.mxu0 %v1975
        %2019 = vmatprep.subr.bf16.mxu0 %v1979
        %2020 = vmatpush1.bf16.msra.mxu0 %v1978
        %2021 = vmatprep.subr.bf16.mxu0 0
        %2022 = vmatpush1.bf16.msra.mxu0 0
        %2023 = vmatprep.subr.bf16.mxu0 0
        %2024 = vmatpush1.bf16.msra.mxu0 0
        %2025 = vmatprep.subr.bf16.mxu0 0
        %2026 = vmatpush1.bf16.msra.mxu0 0
        %2027 = vmatprep.subr.bf16.mxu0 0
        %2028 = vmatpush1.bf16.msra.mxu0 0
        %2029 = vmatprep.subr.bf16.mxu0 0
        %2030 = vmatpush1.bf16.msra.mxu0 0
        %2031 = vmatprep.subr.bf16.mxu0 0
        %2032 = vmatpush1.bf16.msra.mxu0 0
        %2033 = vmatprep.subr.bf16.mxu0 0
        %2034 = vmatpush1.bf16.msra.mxu0 0
        %2035 = vmatprep.subr.bf16.mxu0 0
        %2036 = vmatpush1.bf16.msra.mxu0 0
        %2037 = vmatprep.mubr.bf16.mxu0 0
        %2038 = vmatmul.mubr.bf16.gmra.mrb[0].mxu0 %v1875
        %v2039 = vpop.f32.mrb[0].mxu0
        %v2040 = vadd.f32 %v441, %v2039
        %v2041 = vpop.f32.mrb[0].mxu0
        %v2042 = vadd.f32 %v445, %v2041
        %v2043 = vpop.f32.mrb[0].mxu0
        %v2044 = vpop.f32.mrb[0].mxu0
        %2045 = vdwg.mxu0
        %2046 = vmatprep.subr.bf16.mxu0 0
        %2047 = vmatpush1.bf16.msra.mxu0 %v1959
        %2048 = vmatprep.subr.bf16.mxu0 0
        %2049 = vmatpush1.bf16.msra.mxu0 %v1962
        %2050 = vmatprep.subr.bf16.mxu0 0
        %2051 = vmatpush1.bf16.msra.mxu0 %v1965
        %2052 = vmatprep.subr.bf16.mxu0 0
        %2053 = vmatpush1.bf16.msra.mxu0 %v1968
        %2054 = vmatprep.subr.bf16.mxu0 0
        %2055 = vmatpush1.bf16.msra.mxu0 %v1971
        %2056 = vmatprep.subr.bf16.mxu0 0
        %2057 = vmatpush1.bf16.msra.mxu0 %v1974
        %2058 = vmatprep.subr.bf16.mxu0 0
        %2059 = vmatpush1.bf16.msra.mxu0 %v1977
        %2060 = vmatprep.subr.bf16.mxu0 0
        %2061 = vmatpush1.bf16.msra.mxu0 %v1980
        %2062 = vmatprep.subr.bf16.mxu0 0
        %2063 = vmatpush1.bf16.msra.mxu0 0
        %2064 = vmatprep.subr.bf16.mxu0 0
        %2065 = vmatpush1.bf16.msra.mxu0 0
        %2066 = vmatprep.subr.bf16.mxu0 0
        %2067 = vmatpush1.bf16.msra.mxu0 0
        %2068 = vmatprep.subr.bf16.mxu0 0
        %2069 = vmatpush1.bf16.msra.mxu0 0
        %2070 = vmatprep.subr.bf16.mxu0 0
        %2071 = vmatpush1.bf16.msra.mxu0 0
        %2072 = vmatprep.subr.bf16.mxu0 0
        %2073 = vmatpush1.bf16.msra.mxu0 0
        %2074 = vmatprep.subr.bf16.mxu0 0
        %2075 = vmatpush1.bf16.msra.mxu0 0
        %2076 = vmatprep.subr.bf16.mxu0 0
        %2077 = vmatpush1.bf16.msra.mxu0 0
        %2078 = vmatprep.mubr.bf16.mxu0 0
        %2079 = vmatmul.mubr.bf16.gmra.mrb[0].mxu0 %v1875
        %v2080 = vpop.f32.mrb[0].mxu0
        %v2081 = vadd.f32 %v449, %v2080
        %v2082 = vpop.f32.mrb[0].mxu0
        %v2083 = vpop.f32.mrb[0].mxu0
        %v2084 = vpop.f32.mrb[0].mxu0
        %2085 = vdwg.mxu0
        %v2087 = vrot.slane %v1795, 4
        %v2089 = vadd.f32 %v1588, %v2087
        %v2090 = vmul.f32 %v2089, 0.5
        %v2091 = vtanh.pop %v2090
        %v2092 = vmul.f32 %v2091, 0.5
        %v2093 = vadd.f32 %v2092, 0.5
        %v2095 = vrot.slane %v1797, 4
        %v2097 = vadd.f32 %v1589, %v2095
        %v2098 = vmul.f32 %v2097, 0.5
        %v2099 = vtanh.pop %v2098
        %v2100 = vmul.f32 %v2099, 0.5
        %v2101 = vadd.f32 %v2100, 0.5
        %v2103 = vrot.slane %v1836, 4
        %v2105 = vmul.f32 %v2093, %v2103
        %v2106 = vadd.f32 %v1590, %v2105
        %v2107 = vtanh.pop %v2106
        %v2108 = vsub.f32 1.0, %v2101
        %v2109 = vmul.f32 %v2108, %v2107
        %v2111 = vrot.slane %v1547, 6
        %v2113 = vmul.f32 %v2101, %v2111
        %v2114 = vadd.f32 %v2109, %v2113
        %v2116 = vrot.slane %v2040, 4
        %v2118 = vadd.f32 %v1593, %v2116
        %v2119 = vmul.f32 %v2118, 0.5
        %v2120 = vtanh.pop %v2119
        %v2121 = vmul.f32 %v2120, 0.5
        %v2122 = vadd.f32 %v2121, 0.5
        %v2124 = vrot.slane %v2042, 4
        %v2126 = vadd.f32 %v1594, %v2124
        %v2127 = vmul.f32 %v2126, 0.5
        %v2128 = vtanh.pop %v2127
        %v2129 = vmul.f32 %v2128, 0.5
        %v2130 = vadd.f32 %v2129, 0.5
        %v2132 = vrot.slane %v2081, 4
        %v2134 = vmul.f32 %v2122, %v2132
        %v2135 = vadd.f32 %v1595, %v2134
        %v2136 = vtanh.pop %v2135
        %v2137 = vsub.f32 1.0, %v2130
        %v2138 = vmul.f32 %v2137, %v2136
        %v2140 = vrot.slane %v1576, 6
        %v2142 = vmul.f32 %v2130, %v2140
        %v2143 = vadd.f32 %v2138, %v2142
        %v2144 = vmul.f32 %v482, %v2143
        %v2145 = vadd.f32 %v2114, %v2144
        %v2146 = vmul.f32 %v2145, %v458
        %v2147 = vadd.f32 %v2146, %v466
        %vm2148 = vcmp.ge.f32.partialorder %v2147, 0.0
        %v2149 = vmul.f32 %v474, %v2147
        %v2150 = vsel %vm2148, %v2147, %v2149
        %vm2151 = vcmask 521220
        %2152 = vst.msk [vmem:[%s409] sm:$0x30] %vm2151, %v2150
        %v2153 = vld [vmem:[%s330] sm:$0x88]
        %v2154 = vld [vmem:[%s330 + $0x8] sm:$0x8]
        %v2155 = vunpack.c.l.bf16 %v2153
        %v2156 = vunpack.c.h.bf16 %v2153
        %v2157 = vunpack.c.l.bf16 %v2154
        %v2158 = vld [vmem:[%s337] sm:$0x88]
        %v2159 = vld [vmem:[%s337 + $0x8] sm:$0x8]
        %v2160 = vunpack.c.l.bf16 %v2158
        %v2161 = vunpack.c.h.bf16 %v2158
        %v2162 = vunpack.c.l.bf16 %v2159
        %v2163 = vpack.c.bf16 %v2114, %v2114
        %v2164 = vld [vmem:[%s392] sm:$0xff]
        %v2165 = vld [vmem:[%s392 + $0x8] sm:$0xf]
        %v2166 = vld [vmem:[%s392 + $0xc] sm:$0xff]
        %v2167 = vld [vmem:[%s392 + $0x14] sm:$0xf]
        %v2168 = vld [vmem:[%s392 + $0x18] sm:$0xff]
        %v2169 = vld [vmem:[%s392 + $0x20] sm:$0xf]
        %v2170 = vld [vmem:[%s392 + $0x24] sm:$0xff]
        %v2171 = vld [vmem:[%s392 + $0x2c] sm:$0xf]
        %v2172 = vld [vmem:[%s392 + $0x30] sm:$0xff]
        %v2173 = vld [vmem:[%s392 + $0x38] sm:$0xf]
        %v2174 = vld [vmem:[%s392 + $0x3c] sm:$0xff]
        %v2175 = vld [vmem:[%s392 + $0x44] sm:$0xf]
        %v2176 = vld [vmem:[%s392 + $0x48] sm:$0xff]
        %v2177 = vld [vmem:[%s392 + $0x50] sm:$0xf]
        %v2178 = vld [vmem:[%s392 + $0x54] sm:$0xff]
        %v2179 = vld [vmem:[%s392 + $0x5c] sm:$0xf]
        %v2180 = vld [vmem:[%s392 + $0x60] sm:$0xff]
        %v2181 = vld [vmem:[%s392 + $0x68] sm:$0xf]
        %v2182 = vld [vmem:[%s392 + $0x6c] sm:$0xff]
        %v2183 = vld [vmem:[%s392 + $0x74] sm:$0xf]
        %v2184 = vld [vmem:[%s392 + $0x78] sm:$0xff]
        %v2185 = vld [vmem:[%s392 + $0x80] sm:$0xf]
        %v2186 = vld [vmem:[%s392 + $0x84] sm:$0xff]
        %v2187 = vld [vmem:[%s392 + $0x8c] sm:$0xf]
        %v2188 = vld [vmem:[%s392 + $0x90] sm:$0xff]
        %v2189 = vld [vmem:[%s392 + $0x98] sm:$0xf]
        %v2190 = vld [vmem:[%s392 + $0x9c] sm:$0xff]
        %v2191 = vld [vmem:[%s392 + $0xa4] sm:$0xf]
        %v2192 = vld [vmem:[%s392 + $0xa8] sm:$0xff]
        %v2193 = vld [vmem:[%s392 + $0xb0] sm:$0xf]
        %v2194 = vld [vmem:[%s392 + $0xb4] sm:$0xff]
        %v2195 = vld [vmem:[%s392 + $0xbc] sm:$0xf]
        %v2197 = vrot.slane %v2163, 2
        %v2231 = vunpack.c.l.b16 %v2164
        %v2232 = vunpack.c.h.b16 %v2164
        %v2233 = vunpack.c.l.b16 %v2165
        %v2234 = vunpack.c.l.b16 %v2166
        %v2235 = vunpack.c.h.b16 %v2166
        %v2236 = vunpack.c.l.b16 %v2167
        %v2237 = vunpack.c.l.b16 %v2168
        %v2238 = vunpack.c.h.b16 %v2168
        %v2239 = vunpack.c.l.b16 %v2169
        %v2240 = vunpack.c.l.b16 %v2170
        %v2241 = vunpack.c.h.b16 %v2170
        %v2242 = vunpack.c.l.b16 %v2171
        %v2243 = vunpack.c.l.b16 %v2172
        %v2244 = vunpack.c.h.b16 %v2172
        %v2245 = vunpack.c.l.b16 %v2173
        %v2246 = vunpack.c.l.b16 %v2174
        %v2247 = vunpack.c.h.b16 %v2174
        %v2248 = vunpack.c.l.b16 %v2175
        %v2249 = vunpack.c.l.b16 %v2176
        %v2250 = vunpack.c.h.b16 %v2176
        %v2251 = vunpack.c.l.b16 %v2177
        %v2252 = vunpack.c.l.b16 %v2178
        %v2253 = vunpack.c.h.b16 %v2178
        %v2254 = vunpack.c.l.b16 %v2179
        %v2255 = vunpack.c.l.b16 %v2180
        %v2256 = vunpack.c.h.b16 %v2180
        %v2257 = vunpack.c.l.b16 %v2181
        %v2258 = vunpack.c.l.b16 %v2182
        %v2259 = vunpack.c.h.b16 %v2182
        %v2260 = vunpack.c.l.b16 %v2183
        %v2261 = vunpack.c.l.b16 %v2184
        %v2262 = vunpack.c.h.b16 %v2184
        %v2263 = vunpack.c.l.b16 %v2185
        %v2264 = vunpack.c.l.b16 %v2186
        %v2265 = vunpack.c.h.b16 %v2186
        %v2266 = vunpack.c.l.b16 %v2187
        %v2267 = vunpack.c.l.b16 %v2188
        %v2268 = vunpack.c.h.b16 %v2188
        %v2269 = vunpack.c.l.b16 %v2189
        %v2270 = vunpack.c.l.b16 %v2190
        %v2271 = vunpack.c.h.b16 %v2190
        %v2272 = vunpack.c.l.b16 %v2191
        %v2273 = vunpack.c.l.b16 %v2192
        %v2274 = vunpack.c.h.b16 %v2192
        %v2275 = vunpack.c.l.b16 %v2193
        %v2276 = vunpack.c.l.b16 %v2194
        %v2277 = vunpack.c.h.b16 %v2194
        %v2278 = vunpack.c.l.b16 %v2195
        %v2279 = vpack.c.b16 %v2234, %v2231
        %v2280 = vpack.c.b16 %v2235, %v2232
        %v2281 = vpack.c.b16 %v2236, %v2233
        %v2282 = vpack.c.b16 %v2240, %v2237
        %v2283 = vpack.c.b16 %v2241, %v2238
        %v2284 = vpack.c.b16 %v2242, %v2239
        %v2285 = vpack.c.b16 %v2246, %v2243
        %v2286 = vpack.c.b16 %v2247, %v2244
        %v2287 = vpack.c.b16 %v2248, %v2245
        %v2288 = vpack.c.b16 %v2252, %v2249
        %v2289 = vpack.c.b16 %v2253, %v2250
        %v2290 = vpack.c.b16 %v2254, %v2251
        %v2291 = vpack.c.b16 %v2258, %v2255
        %v2292 = vpack.c.b16 %v2259, %v2256
        %v2293 = vpack.c.b16 %v2260, %v2257
        %v2294 = vpack.c.b16 %v2264, %v2261
        %v2295 = vpack.c.b16 %v2265, %v2262
        %v2296 = vpack.c.b16 %v2266, %v2263
        %v2297 = vpack.c.b16 %v2270, %v2267
        %v2298 = vpack.c.b16 %v2271, %v2268
        %v2299 = vpack.c.b16 %v2272, %v2269
        %v2300 = vpack.c.b16 %v2276, %v2273
        %v2301 = vpack.c.b16 %v2277, %v2274
        %v2302 = vpack.c.b16 %v2278, %v2275
        %2327 = vmatprep.subr.bf16.mxu0 %v2280
        %2328 = vmatpush1.bf16.msra.mxu0 %v2279
        %2329 = vmatprep.subr.bf16.mxu0 %v2283
        %2330 = vmatpush1.bf16.msra.mxu0 %v2282
        %2331 = vmatprep.subr.bf16.mxu0 %v2286
        %2332 = vmatpush1.bf16.msra.mxu0 %v2285
        %2333 = vmatprep.subr.bf16.mxu0 %v2289
        %2334 = vmatpush1.bf16.msra.mxu0 %v2288
        %2335 = vmatprep.subr.bf16.mxu0 %v2292
        %2336 = vmatpush1.bf16.msra.mxu0 %v2291
        %2337 = vmatprep.subr.bf16.mxu0 %v2295
        %2338 = vmatpush1.bf16.msra.mxu0 %v2294
        %2339 = vmatprep.subr.bf16.mxu0 %v2298
        %2340 = vmatpush1.bf16.msra.mxu0 %v2297
        %2341 = vmatprep.subr.bf16.mxu0 %v2301
        %2342 = vmatpush1.bf16.msra.mxu0 %v2300
        %2343 = vmatprep.subr.bf16.mxu0 0
        %2344 = vmatpush1.bf16.msra.mxu0 0
        %2345 = vmatprep.subr.bf16.mxu0 0
        %2346 = vmatpush1.bf16.msra.mxu0 0
        %2347 = vmatprep.subr.bf16.mxu0 0
        %2348 = vmatpush1.bf16.msra.mxu0 0
        %2349 = vmatprep.subr.bf16.mxu0 0
        %2350 = vmatpush1.bf16.msra.mxu0 0
        %2351 = vmatprep.subr.bf16.mxu0 0
        %2352 = vmatpush1.bf16.msra.mxu0 0
        %2353 = vmatprep.subr.bf16.mxu0 0
        %2354 = vmatpush1.bf16.msra.mxu0 0
        %2355 = vmatprep.subr.bf16.mxu0 0
        %2356 = vmatpush1.bf16.msra.mxu0 0
        %2357 = vmatprep.subr.bf16.mxu0 0
        %2358 = vmatpush1.bf16.msra.mxu0 0
        %2359 = vmatprep.mubr.bf16.mxu0 0
        %2360 = vmatmul.mubr.bf16.gmra.mrb[0].mxu0 %v2197
        %v2361 = vpop.f32.mrb[0].mxu0
        %v2362 = vadd.f32 %v423, %v2361
        %v2363 = vpop.f32.mrb[0].mxu0
        %v2364 = vadd.f32 %v427, %v2363
        %v2365 = vpop.f32.mrb[0].mxu0
        %v2366 = vpop.f32.mrb[0].mxu0
        %2367 = vdwg.mxu0
        %2368 = vmatprep.subr.bf16.mxu0 0
        %2369 = vmatpush1.bf16.msra.mxu0 %v2281
        %2370 = vmatprep.subr.bf16.mxu0 0
        %2371 = vmatpush1.bf16.msra.mxu0 %v2284
        %2372 = vmatprep.subr.bf16.mxu0 0
        %2373 = vmatpush1.bf16.msra.mxu0 %v2287
        %2374 = vmatprep.subr.bf16.mxu0 0
        %2375 = vmatpush1.bf16.msra.mxu0 %v2290
        %2376 = vmatprep.subr.bf16.mxu0 0
        %2377 = vmatpush1.bf16.msra.mxu0 %v2293
        %2378 = vmatprep.subr.bf16.mxu0 0
        %2379 = vmatpush1.bf16.msra.mxu0 %v2296
        %2380 = vmatprep.subr.bf16.mxu0 0
        %2381 = vmatpush1.bf16.msra.mxu0 %v2299
        %2382 = vmatprep.subr.bf16.mxu0 0
        %2383 = vmatpush1.bf16.msra.mxu0 %v2302
        %2384 = vmatprep.subr.bf16.mxu0 0
        %2385 = vmatpush1.bf16.msra.mxu0 0
        %2386 = vmatprep.subr.bf16.mxu0 0
        %2387 = vmatpush1.bf16.msra.mxu0 0
        %2388 = vmatprep.subr.bf16.mxu0 0
        %2389 = vmatpush1.bf16.msra.mxu0 0
        %2390 = vmatprep.subr.bf16.mxu0 0
        %2391 = vmatpush1.bf16.msra.mxu0 0
        %2392 = vmatprep.subr.bf16.mxu0 0
        %2393 = vmatpush1.bf16.msra.mxu0 0
        %2394 = vmatprep.subr.bf16.mxu0 0
        %2395 = vmatpush1.bf16.msra.mxu0 0
        %2396 = vmatprep.subr.bf16.mxu0 0
        %2397 = vmatpush1.bf16.msra.mxu0 0
        %2398 = vmatprep.subr.bf16.mxu0 0
        %2399 = vmatpush1.bf16.msra.mxu0 0
        %2400 = vmatprep.mubr.bf16.mxu0 0
        %2401 = vmatmul.mubr.bf16.gmra.mrb[0].mxu0 %v2197
        %v2402 = vpop.f32.mrb[0].mxu0
        %v2403 = vadd.f32 %v431, %v2402
        %v2404 = vpop.f32.mrb[0].mxu0
        %v2405 = vpop.f32.mrb[0].mxu0
        %v2406 = vpop.f32.mrb[0].mxu0
        %2407 = vdwg.mxu0
        %v2408 = vpack.c.bf16 %v2143, %v2143
        %v2409 = vld [vmem:[%s740] sm:$0xff]
        %v2410 = vld [vmem:[%s740 + $0x8] sm:$0xf]
        %v2411 = vld [vmem:[%s740 + $0xc] sm:$0xff]
        %v2412 = vld [vmem:[%s740 + $0x14] sm:$0xf]
        %v2413 = vld [vmem:[%s740 + $0x18] sm:$0xff]
        %v2414 = vld [vmem:[%s740 + $0x20] sm:$0xf]
        %v2415 = vld [vmem:[%s740 + $0x24] sm:$0xff]
        %v2416 = vld [vmem:[%s740 + $0x2c] sm:$0xf]
        %v2417 = vld [vmem:[%s740 + $0x30] sm:$0xff]
        %v2418 = vld [vmem:[%s740 + $0x38] sm:$0xf]
        %v2419 = vld [vmem:[%s740 + $0x3c] sm:$0xff]
        %v2420 = vld [vmem:[%s740 + $0x44] sm:$0xf]
        %v2421 = vld [vmem:[%s740 + $0x48] sm:$0xff]
        %v2422 = vld [vmem:[%s740 + $0x50] sm:$0xf]
        %v2423 = vld [vmem:[%s740 + $0x54] sm:$0xff]
        %v2424 = vld [vmem:[%s740 + $0x5c] sm:$0xf]
        %v2425 = vld [vmem:[%s740 + $0x60] sm:$0xff]
        %v2426 = vld [vmem:[%s740 + $0x68] sm:$0xf]
        %v2427 = vld [vmem:[%s740 + $0x6c] sm:$0xff]
        %v2428 = vld [vmem:[%s740 + $0x74] sm:$0xf]
        %v2429 = vld [vmem:[%s740 + $0x78] sm:$0xff]
        %v2430 = vld [vmem:[%s740 + $0x80] sm:$0xf]
        %v2431 = vld [vmem:[%s740 + $0x84] sm:$0xff]
        %v2432 = vld [vmem:[%s740 + $0x8c] sm:$0xf]
        %v2433 = vld [vmem:[%s740 + $0x90] sm:$0xff]
        %v2434 = vld [vmem:[%s740 + $0x98] sm:$0xf]
        %v2435 = vld [vmem:[%s740 + $0x9c] sm:$0xff]
        %v2436 = vld [vmem:[%s740 + $0xa4] sm:$0xf]
        %v2437 = vld [vmem:[%s740 + $0xa8] sm:$0xff]
        %v2438 = vld [vmem:[%s740 + $0xb0] sm:$0xf]
        %v2439 = vld [vmem:[%s740 + $0xb4] sm:$0xff]
        %v2440 = vld [vmem:[%s740 + $0xbc] sm:$0xf]
        %v2442 = vrot.slane %v2408, 2
        %v2476 = vunpack.c.l.b16 %v2409
        %v2477 = vunpack.c.h.b16 %v2409
        %v2478 = vunpack.c.l.b16 %v2410
        %v2479 = vunpack.c.l.b16 %v2411
        %v2480 = vunpack.c.h.b16 %v2411
        %v2481 = vunpack.c.l.b16 %v2412
        %v2482 = vunpack.c.l.b16 %v2413
        %v2483 = vunpack.c.h.b16 %v2413
        %v2484 = vunpack.c.l.b16 %v2414
        %v2485 = vunpack.c.l.b16 %v2415
        %v2486 = vunpack.c.h.b16 %v2415
        %v2487 = vunpack.c.l.b16 %v2416
        %v2488 = vunpack.c.l.b16 %v2417
        %v2489 = vunpack.c.h.b16 %v2417
        %v2490 = vunpack.c.l.b16 %v2418
        %v2491 = vunpack.c.l.b16 %v2419
        %v2492 = vunpack.c.h.b16 %v2419
        %v2493 = vunpack.c.l.b16 %v2420
        %v2494 = vunpack.c.l.b16 %v2421
        %v2495 = vunpack.c.h.b16 %v2421
        %v2496 = vunpack.c.l.b16 %v2422
        %v2497 = vunpack.c.l.b16 %v2423
        %v2498 = vunpack.c.h.b16 %v2423
        %v2499 = vunpack.c.l.b16 %v2424
        %v2500 = vunpack.c.l.b16 %v2425
        %v2501 = vunpack.c.h.b16 %v2425
        %v2502 = vunpack.c.l.b16 %v2426
        %v2503 = vunpack.c.l.b16 %v2427
        %v2504 = vunpack.c.h.b16 %v2427
        %v2505 = vunpack.c.l.b16 %v2428
        %v2506 = vunpack.c.l.b16 %v2429
        %v2507 = vunpack.c.h.b16 %v2429
        %v2508 = vunpack.c.l.b16 %v2430
        %v2509 = vunpack.c.l.b16 %v2431
        %v2510 = vunpack.c.h.b16 %v2431
        %v2511 = vunpack.c.l.b16 %v2432
        %v2512 = vunpack.c.l.b16 %v2433
        %v2513 = vunpack.c.h.b16 %v2433
        %v2514 = vunpack.c.l.b16 %v2434
        %v2515 = vunpack.c.l.b16 %v2435
        %v2516 = vunpack.c.h.b16 %v2435
        %v2517 = vunpack.c.l.b16 %v2436
        %v2518 = vunpack.c.l.b16 %v2437
        %v2519 = vunpack.c.h.b16 %v2437
        %v2520 = vunpack.c.l.b16 %v2438
        %v2521 = vunpack.c.l.b16 %v2439
        %v2522 = vunpack.c.h.b16 %v2439
        %v2523 = vunpack.c.l.b16 %v2440
        %v2524 = vpack.c.b16 %v2479, %v2476
        %v2525 = vpack.c.b16 %v2480, %v2477
        %v2526 = vpack.c.b16 %v2481, %v2478
        %v2527 = vpack.c.b16 %v2485, %v2482
        %v2528 = vpack.c.b16 %v2486, %v2483
        %v2529 = vpack.c.b16 %v2487, %v2484
        %v2530 = vpack.c.b16 %v2491, %v2488
        %v2531 = vpack.c.b16 %v2492, %v2489
        %v2532 = vpack.c.b16 %v2493, %v2490
        %v2533 = vpack.c.b16 %v2497, %v2494
        %v2534 = vpack.c.b16 %v2498, %v2495
        %v2535 = vpack.c.b16 %v2499, %v2496
        %v2536 = vpack.c.b16 %v2503, %v2500
        %v2537 = vpack.c.b16 %v2504, %v2501
        %v2538 = vpack.c.b16 %v2505, %v2502
        %v2539 = vpack.c.b16 %v2509, %v2506
        %v2540 = vpack.c.b16 %v2510, %v2507
        %v2541 = vpack.c.b16 %v2511, %v2508
        %v2542 = vpack.c.b16 %v2515, %v2512
        %v2543 = vpack.c.b16 %v2516, %v2513
        %v2544 = vpack.c.b16 %v2517, %v2514
        %v2545 = vpack.c.b16 %v2521, %v2518
        %v2546 = vpack.c.b16 %v2522, %v2519
        %v2547 = vpack.c.b16 %v2523, %v2520
        %2572 = vmatprep.subr.bf16.mxu0 %v2525
        %2573 = vmatpush1.bf16.msra.mxu0 %v2524
        %2574 = vmatprep.subr.bf16.mxu0 %v2528
        %2575 = vmatpush1.bf16.msra.mxu0 %v2527
        %2576 = vmatprep.subr.bf16.mxu0 %v2531
        %2577 = vmatpush1.bf16.msra.mxu0 %v2530
        %2578 = vmatprep.subr.bf16.mxu0 %v2534
        %2579 = vmatpush1.bf16.msra.mxu0 %v2533
        %2580 = vmatprep.subr.bf16.mxu0 %v2537
        %2581 = vmatpush1.bf16.msra.mxu0 %v2536
        %2582 = vmatprep.subr.bf16.mxu0 %v2540
        %2583 = vmatpush1.bf16.msra.mxu0 %v2539
        %2584 = vmatprep.subr.bf16.mxu0 %v2543
        %2585 = vmatpush1.bf16.msra.mxu0 %v2542
        %2586 = vmatprep.subr.bf16.mxu0 %v2546
        %2587 = vmatpush1.bf16.msra.mxu0 %v2545
        %2588 = vmatprep.subr.bf16.mxu0 0
        %2589 = vmatpush1.bf16.msra.mxu0 0
        %2590 = vmatprep.subr.bf16.mxu0 0
        %2591 = vmatpush1.bf16.msra.mxu0 0
        %2592 = vmatprep.subr.bf16.mxu0 0
        %2593 = vmatpush1.bf16.msra.mxu0 0
        %2594 = vmatprep.subr.bf16.mxu0 0
        %2595 = vmatpush1.bf16.msra.mxu0 0
        %2596 = vmatprep.subr.bf16.mxu0 0
        %2597 = vmatpush1.bf16.msra.mxu0 0
        %2598 = vmatprep.subr.bf16.mxu0 0
        %2599 = vmatpush1.bf16.msra.mxu0 0
        %2600 = vmatprep.subr.bf16.mxu0 0
        %2601 = vmatpush1.bf16.msra.mxu0 0
        %2602 = vmatprep.subr.bf16.mxu0 0
        %2603 = vmatpush1.bf16.msra.mxu0 0
        %2604 = vmatprep.mubr.bf16.mxu0 0
        %2605 = vmatmul.mubr.bf16.gmra.mrb[0].mxu0 %v2442
        %v2606 = vpop.f32.mrb[0].mxu0
        %v2607 = vadd.f32 %v441, %v2606
        %v2608 = vpop.f32.mrb[0].mxu0
        %v2609 = vadd.f32 %v445, %v2608
        %v2610 = vpop.f32.mrb[0].mxu0
        %v2611 = vpop.f32.mrb[0].mxu0
        %2612 = vdwg.mxu0
        %2613 = vmatprep.subr.bf16.mxu0 0
        %2614 = vmatpush1.bf16.msra.mxu0 %v2526
        %2615 = vmatprep.subr.bf16.mxu0 0
        %2616 = vmatpush1.bf16.msra.mxu0 %v2529
        %2617 = vmatprep.subr.bf16.mxu0 0
        %2618 = vmatpush1.bf16.msra.mxu0 %v2532
        %2619 = vmatprep.subr.bf16.mxu0 0
        %2620 = vmatpush1.bf16.msra.mxu0 %v2535
        %2621 = vmatprep.subr.bf16.mxu0 0
        %2622 = vmatpush1.bf16.msra.mxu0 %v2538
        %2623 = vmatprep.subr.bf16.mxu0 0
        %2624 = vmatpush1.bf16.msra.mxu0 %v2541
        %2625 = vmatprep.subr.bf16.mxu0 0
        %2626 = vmatpush1.bf16.msra.mxu0 %v2544
        %2627 = vmatprep.subr.bf16.mxu0 0
        %2628 = vmatpush1.bf16.msra.mxu0 %v2547
        %2629 = vmatprep.subr.bf16.mxu0 0
        %2630 = vmatpush1.bf16.msra.mxu0 0
        %2631 = vmatprep.subr.bf16.mxu0 0
        %2632 = vmatpush1.bf16.msra.mxu0 0
        %2633 = vmatprep.subr.bf16.mxu0 0
        %2634 = vmatpush1.bf16.msra.mxu0 0
        %2635 = vmatprep.subr.bf16.mxu0 0
        %2636 = vmatpush1.bf16.msra.mxu0 0
        %2637 = vmatprep.subr.bf16.mxu0 0
        %2638 = vmatpush1.bf16.msra.mxu0 0
        %2639 = vmatprep.subr.bf16.mxu0 0
        %2640 = vmatpush1.bf16.msra.mxu0 0
        %2641 = vmatprep.subr.bf16.mxu0 0
        %2642 = vmatpush1.bf16.msra.mxu0 0
        %2643 = vmatprep.subr.bf16.mxu0 0
        %2644 = vmatpush1.bf16.msra.mxu0 0
        %2645 = vmatprep.mubr.bf16.mxu0 0
        %2646 = vmatmul.mubr.bf16.gmra.mrb[0].mxu0 %v2442
        %v2647 = vpop.f32.mrb[0].mxu0
        %v2648 = vadd.f32 %v449, %v2647
        %v2649 = vpop.f32.mrb[0].mxu0
        %v2650 = vpop.f32.mrb[0].mxu0
        %v2651 = vpop.f32.mrb[0].mxu0
        %2652 = vdwg.mxu0
        %v2654 = vrot.slane %v2362, 2
        %v2656 = vadd.f32 %v2155, %v2654
        %v2657 = vmul.f32 %v2656, 0.5
        %v2658 = vtanh.pop %v2657
        %v2659 = vmul.f32 %v2658, 0.5
        %v2660 = vadd.f32 %v2659, 0.5
        %v2662 = vrot.slane %v2364, 2
        %v2664 = vadd.f32 %v2156, %v2662
        %v2665 = vmul.f32 %v2664, 0.5
        %v2666 = vtanh.pop %v2665
        %v2667 = vmul.f32 %v2666, 0.5
        %v2668 = vadd.f32 %v2667, 0.5
        %v2670 = vrot.slane %v2403, 2
        %v2672 = vmul.f32 %v2660, %v2670
        %v2673 = vadd.f32 %v2157, %v2672
        %v2674 = vtanh.pop %v2673
        %v2675 = vsub.f32 1.0, %v2668
        %v2676 = vmul.f32 %v2675, %v2674
        %v2678 = vrot.slane %v2114, 6
        %v2680 = vmul.f32 %v2668, %v2678
        %v2681 = vadd.f32 %v2676, %v2680
        %v2683 = vrot.slane %v2607, 2
        %v2685 = vadd.f32 %v2160, %v2683
        %v2686 = vmul.f32 %v2685, 0.5
        %v2687 = vtanh.pop %v2686
        %v2688 = vmul.f32 %v2687, 0.5
        %v2689 = vadd.f32 %v2688, 0.5
        %v2691 = vrot.slane %v2609, 2
        %v2693 = vadd.f32 %v2161, %v2691
        %v2694 = vmul.f32 %v2693, 0.5
        %v2695 = vtanh.pop %v2694
        %v2696 = vmul.f32 %v2695, 0.5
        %v2697 = vadd.f32 %v2696, 0.5
        %v2699 = vrot.slane %v2648, 2
        %v2701 = vmul.f32 %v2689, %v2699
        %v2702 = vadd.f32 %v2162, %v2701
        %v2703 = vtanh.pop %v2702
        %v2704 = vsub.f32 1.0, %v2697
        %v2705 = vmul.f32 %v2704, %v2703
        %v2707 = vrot.slane %v2143, 6
        %v2709 = vmul.f32 %v2697, %v2707
        %v2710 = vadd.f32 %v2705, %v2709
        %v2711 = vmul.f32 %v482, %v2710
        %v2712 = vadd.f32 %v2681, %v2711
        %v2713 = vmul.f32 %v2712, %v458
        %v2714 = vadd.f32 %v2713, %v466
        %vm2715 = vcmp.ge.f32.partialorder %v2714, 0.0
        %v2716 = vmul.f32 %v474, %v2714
        %v2717 = vsel %vm2715, %v2714, %v2716
        %vm2718 = vcmask 523270
        %2719 = vst.msk [vmem:[%s409] sm:$0xc0] %vm2718, %v2717
        %v2720 = vld [vmem:[%s330 + $0xc] sm:$0x11]
        %v2721 = vld [vmem:[%s330 + $0x14] sm:$0x1]
        %v2722 = vunpack.c.l.bf16 %v2720
        %v2723 = vunpack.c.h.bf16 %v2720
        %v2724 = vunpack.c.l.bf16 %v2721
        %v2725 = vld [vmem:[%s337 + $0xc] sm:$0x11]
        %v2726 = vld [vmem:[%s337 + $0x14] sm:$0x1]
        %v2727 = vunpack.c.l.bf16 %v2725
        %v2728 = vunpack.c.h.bf16 %v2725
        %v2729 = vunpack.c.l.bf16 %v2726
        %v2730 = vpack.c.bf16 %v2681, %v2681
        %v2731 = vld [vmem:[%s392] sm:$0xff]
        %v2732 = vld [vmem:[%s392 + $0x8] sm:$0xf]
        %v2733 = vld [vmem:[%s392 + $0xc] sm:$0xff]
        %v2734 = vld [vmem:[%s392 + $0x14] sm:$0xf]
        %v2735 = vld [vmem:[%s392 + $0x18] sm:$0xff]
        %v2736 = vld [vmem:[%s392 + $0x20] sm:$0xf]
        %v2737 = vld [vmem:[%s392 + $0x24] sm:$0xff]
        %v2738 = vld [vmem:[%s392 + $0x2c] sm:$0xf]
        %v2739 = vld [vmem:[%s392 + $0x30] sm:$0xff]
        %v2740 = vld [vmem:[%s392 + $0x38] sm:$0xf]
        %v2741 = vld [vmem:[%s392 + $0x3c] sm:$0xff]
        %v2742 = vld [vmem:[%s392 + $0x44] sm:$0xf]
        %v2743 = vld [vmem:[%s392 + $0x48] sm:$0xff]
        %v2744 = vld [vmem:[%s392 + $0x50] sm:$0xf]
        %v2745 = vld [vmem:[%s392 + $0x54] sm:$0xff]
        %v2746 = vld [vmem:[%s392 + $0x5c] sm:$0xf]
        %v2747 = vld [vmem:[%s392 + $0x60] sm:$0xff]
        %v2748 = vld [vmem:[%s392 + $0x68] sm:$0xf]
        %v2749 = vld [vmem:[%s392 + $0x6c] sm:$0xff]
        %v2750 = vld [vmem:[%s392 + $0x74] sm:$0xf]
        %v2751 = vld [vmem:[%s392 + $0x78] sm:$0xff]
        %v2752 = vld [vmem:[%s392 + $0x80] sm:$0xf]
        %v2753 = vld [vmem:[%s392 + $0x84] sm:$0xff]
        %v2754 = vld [vmem:[%s392 + $0x8c] sm:$0xf]
        %v2755 = vld [vmem:[%s392 + $0x90] sm:$0xff]
        %v2756 = vld [vmem:[%s392 + $0x98] sm:$0xf]
        %v2757 = vld [vmem:[%s392 + $0x9c] sm:$0xff]
        %v2758 = vld [vmem:[%s392 + $0xa4] sm:$0xf]
        %v2759 = vld [vmem:[%s392 + $0xa8] sm:$0xff]
        %v2760 = vld [vmem:[%s392 + $0xb0] sm:$0xf]
        %v2761 = vld [vmem:[%s392 + $0xb4] sm:$0xff]
        %v2762 = vld [vmem:[%s392 + $0xbc] sm:$0xf]
        %v2764 = vrot.slane %v2730, 3
        %v2798 = vunpack.c.l.b16 %v2731
        %v2799 = vunpack.c.h.b16 %v2731
        %v2800 = vunpack.c.l.b16 %v2732
        %v2801 = vunpack.c.l.b16 %v2733
        %v2802 = vunpack.c.h.b16 %v2733
        %v2803 = vunpack.c.l.b16 %v2734
        %v2804 = vunpack.c.l.b16 %v2735
        %v2805 = vunpack.c.h.b16 %v2735
        %v2806 = vunpack.c.l.b16 %v2736
        %v2807 = vunpack.c.l.b16 %v2737
        %v2808 = vunpack.c.h.b16 %v2737
        %v2809 = vunpack.c.l.b16 %v2738
        %v2810 = vunpack.c.l.b16 %v2739
        %v2811 = vunpack.c.h.b16 %v2739
        %v2812 = vunpack.c.l.b16 %v2740
        %v2813 = vunpack.c.l.b16 %v2741
        %v2814 = vunpack.c.h.b16 %v2741
        %v2815 = vunpack.c.l.b16 %v2742
        %v2816 = vunpack.c.l.b16 %v2743
        %v2817 = vunpack.c.h.b16 %v2743
        %v2818 = vunpack.c.l.b16 %v2744
        %v2819 = vunpack.c.l.b16 %v2745
        %v2820 = vunpack.c.h.b16 %v2745
        %v2821 = vunpack.c.l.b16 %v2746
        %v2822 = vunpack.c.l.b16 %v2747
        %v2823 = vunpack.c.h.b16 %v2747
        %v2824 = vunpack.c.l.b16 %v2748
        %v2825 = vunpack.c.l.b16 %v2749
        %v2826 = vunpack.c.h.b16 %v2749
        %v2827 = vunpack.c.l.b16 %v2750
        %v2828 = vunpack.c.l.b16 %v2751
        %v2829 = vunpack.c.h.b16 %v2751
        %v2830 = vunpack.c.l.b16 %v2752
        %v2831 = vunpack.c.l.b16 %v2753
        %v2832 = vunpack.c.h.b16 %v2753
        %v2833 = vunpack.c.l.b16 %v2754
        %v2834 = vunpack.c.l.b16 %v2755
        %v2835 = vunpack.c.h.b16 %v2755
        %v2836 = vunpack.c.l.b16 %v2756
        %v2837 = vunpack.c.l.b16 %v2757
        %v2838 = vunpack.c.h.b16 %v2757
        %v2839 = vunpack.c.l.b16 %v2758
        %v2840 = vunpack.c.l.b16 %v2759
        %v2841 = vunpack.c.h.b16 %v2759
        %v2842 = vunpack.c.l.b16 %v2760
        %v2843 = vunpack.c.l.b16 %v2761
        %v2844 = vunpack.c.h.b16 %v2761
        %v2845 = vunpack.c.l.b16 %v2762
        %v2846 = vpack.c.b16 %v2801, %v2798
        %v2847 = vpack.c.b16 %v2802, %v2799
        %v2848 = vpack.c.b16 %v2803, %v2800
        %v2849 = vpack.c.b16 %v2807, %v2804
        %v2850 = vpack.c.b16 %v2808, %v2805
        %v2851 = vpack.c.b16 %v2809, %v2806
        %v2852 = vpack.c.b16 %v2813, %v2810
        %v2853 = vpack.c.b16 %v2814, %v2811
        %v2854 = vpack.c.b16 %v2815, %v2812
        %v2855 = vpack.c.b16 %v2819, %v2816
        %v2856 = vpack.c.b16 %v2820, %v2817
        %v2857 = vpack.c.b16 %v2821, %v2818
        %v2858 = vpack.c.b16 %v2825, %v2822
        %v2859 = vpack.c.b16 %v2826, %v2823
        %v2860 = vpack.c.b16 %v2827, %v2824
        %v2861 = vpack.c.b16 %v2831, %v2828
        %v2862 = vpack.c.b16 %v2832, %v2829
        %v2863 = vpack.c.b16 %v2833, %v2830
        %v2864 = vpack.c.b16 %v2837, %v2834
        %v2865 = vpack.c.b16 %v2838, %v2835
        %v2866 = vpack.c.b16 %v2839, %v2836
        %v2867 = vpack.c.b16 %v2843, %v2840
        %v2868 = vpack.c.b16 %v2844, %v2841
        %v2869 = vpack.c.b16 %v2845, %v2842
        %2894 = vmatprep.subr.bf16.mxu0 %v2847
        %2895 = vmatpush1.bf16.msra.mxu0 %v2846
        %2896 = vmatprep.subr.bf16.mxu0 %v2850
        %2897 = vmatpush1.bf16.msra.mxu0 %v2849
        %2898 = vmatprep.subr.bf16.mxu0 %v2853
        %2899 = vmatpush1.bf16.msra.mxu0 %v2852
        %2900 = vmatprep.subr.bf16.mxu0 %v2856
        %2901 = vmatpush1.bf16.msra.mxu0 %v2855
        %2902 = vmatprep.subr.bf16.mxu0 %v2859
        %2903 = vmatpush1.bf16.msra.mxu0 %v2858
        %2904 = vmatprep.subr.bf16.mxu0 %v2862
        %2905 = vmatpush1.bf16.msra.mxu0 %v2861
        %2906 = vmatprep.subr.bf16.mxu0 %v2865
        %2907 = vmatpush1.bf16.msra.mxu0 %v2864
        %2908 = vmatprep.subr.bf16.mxu0 %v2868
        %2909 = vmatpush1.bf16.msra.mxu0 %v2867
        %2910 = vmatprep.subr.bf16.mxu0 0
        %2911 = vmatpush1.bf16.msra.mxu0 0
        %2912 = vmatprep.subr.bf16.mxu0 0
        %2913 = vmatpush1.bf16.msra.mxu0 0
        %2914 = vmatprep.subr.bf16.mxu0 0
        %2915 = vmatpush1.bf16.msra.mxu0 0
        %2916 = vmatprep.subr.bf16.mxu0 0
        %2917 = vmatpush1.bf16.msra.mxu0 0
        %2918 = vmatprep.subr.bf16.mxu0 0
        %2919 = vmatpush1.bf16.msra.mxu0 0
        %2920 = vmatprep.subr.bf16.mxu0 0
        %2921 = vmatpush1.bf16.msra.mxu0 0
        %2922 = vmatprep.subr.bf16.mxu0 0
        %2923 = vmatpush1.bf16.msra.mxu0 0
        %2924 = vmatprep.subr.bf16.mxu0 0
        %2925 = vmatpush1.bf16.msra.mxu0 0
        %2926 = vmatprep.mubr.bf16.mxu0 0
        %2927 = vmatmul.mubr.bf16.gmra.mrb[0].mxu0 %v2764
        %v2928 = vpop.f32.mrb[0].mxu0
        %v2929 = vadd.f32 %v423, %v2928
        %v2930 = vpop.f32.mrb[0].mxu0
        %v2931 = vadd.f32 %v427, %v2930
        %v2932 = vpop.f32.mrb[0].mxu0
        %v2933 = vpop.f32.mrb[0].mxu0
        %2934 = vdwg.mxu0
        %2935 = vmatprep.subr.bf16.mxu0 0
        %2936 = vmatpush1.bf16.msra.mxu0 %v2848
        %2937 = vmatprep.subr.bf16.mxu0 0
        %2938 = vmatpush1.bf16.msra.mxu0 %v2851
        %2939 = vmatprep.subr.bf16.mxu0 0
        %2940 = vmatpush1.bf16.msra.mxu0 %v2854
        %2941 = vmatprep.subr.bf16.mxu0 0
        %2942 = vmatpush1.bf16.msra.mxu0 %v2857
        %2943 = vmatprep.subr.bf16.mxu0 0
        %2944 = vmatpush1.bf16.msra.mxu0 %v2860
        %2945 = vmatprep.subr.bf16.mxu0 0
        %2946 = vmatpush1.bf16.msra.mxu0 %v2863
        %2947 = vmatprep.subr.bf16.mxu0 0
        %2948 = vmatpush1.bf16.msra.mxu0 %v2866
        %2949 = vmatprep.subr.bf16.mxu0 0
        %2950 = vmatpush1.bf16.msra.mxu0 %v2869
        %2951 = vmatprep.subr.bf16.mxu0 0
        %2952 = vmatpush1.bf16.msra.mxu0 0
        %2953 = vmatprep.subr.bf16.mxu0 0
        %2954 = vmatpush1.bf16.msra.mxu0 0
        %2955 = vmatprep.subr.bf16.mxu0 0
        %2956 = vmatpush1.bf16.msra.mxu0 0
        %2957 = vmatprep.subr.bf16.mxu0 0
        %2958 = vmatpush1.bf16.msra.mxu0 0
        %2959 = vmatprep.subr.bf16.mxu0 0
        %2960 = vmatpush1.bf16.msra.mxu0 0
        %2961 = vmatprep.subr.bf16.mxu0 0
        %2962 = vmatpush1.bf16.msra.mxu0 0
        %2963 = vmatprep.subr.bf16.mxu0 0
        %2964 = vmatpush1.bf16.msra.mxu0 0
        %2965 = vmatprep.subr.bf16.mxu0 0
        %2966 = vmatpush1.bf16.msra.mxu0 0
        %2967 = vmatprep.mubr.bf16.mxu0 0
        %2968 = vmatmul.mubr.bf16.gmra.mrb[0].mxu0 %v2764
        %v2969 = vpop.f32.mrb[0].mxu0
        %v2970 = vadd.f32 %v431, %v2969
        %v2971 = vpop.f32.mrb[0].mxu0
        %v2972 = vpop.f32.mrb[0].mxu0
        %v2973 = vpop.f32.mrb[0].mxu0
        %2974 = vdwg.mxu0
        %v2975 = vpack.c.bf16 %v2710, %v2710
        %v2976 = vld [vmem:[%s740] sm:$0xff]
        %v2977 = vld [vmem:[%s740 + $0x8] sm:$0xf]
        %v2978 = vld [vmem:[%s740 + $0xc] sm:$0xff]
        %v2979 = vld [vmem:[%s740 + $0x14] sm:$0xf]
        %v2980 = vld [vmem:[%s740 + $0x18] sm:$0xff]
        %v2981 = vld [vmem:[%s740 + $0x20] sm:$0xf]
        %v2982 = vld [vmem:[%s740 + $0x24] sm:$0xff]
        %v2983 = vld [vmem:[%s740 + $0x2c] sm:$0xf]
        %v2984 = vld [vmem:[%s740 + $0x30] sm:$0xff]
        %v2985 = vld [vmem:[%s740 + $0x38] sm:$0xf]
        %v2986 = vld [vmem:[%s740 + $0x3c] sm:$0xff]
        %v2987 = vld [vmem:[%s740 + $0x44] sm:$0xf]
        %v2988 = vld [vmem:[%s740 + $0x48] sm:$0xff]
        %v2989 = vld [vmem:[%s740 + $0x50] sm:$0xf]
        %v2990 = vld [vmem:[%s740 + $0x54] sm:$0xff]
        %v2991 = vld [vmem:[%s740 + $0x5c] sm:$0xf]
        %v2992 = vld [vmem:[%s740 + $0x60] sm:$0xff]
        %v2993 = vld [vmem:[%s740 + $0x68] sm:$0xf]
        %v2994 = vld [vmem:[%s740 + $0x6c] sm:$0xff]
        %v2995 = vld [vmem:[%s740 + $0x74] sm:$0xf]
        %v2996 = vld [vmem:[%s740 + $0x78] sm:$0xff]
        %v2997 = vld [vmem:[%s740 + $0x80] sm:$0xf]
        %v2998 = vld [vmem:[%s740 + $0x84] sm:$0xff]
        %v2999 = vld [vmem:[%s740 + $0x8c] sm:$0xf]
        %v3000 = vld [vmem:[%s740 + $0x90] sm:$0xff]
        %v3001 = vld [vmem:[%s740 + $0x98] sm:$0xf]
        %v3002 = vld [vmem:[%s740 + $0x9c] sm:$0xff]
        %v3003 = vld [vmem:[%s740 + $0xa4] sm:$0xf]
        %v3004 = vld [vmem:[%s740 + $0xa8] sm:$0xff]
        %v3005 = vld [vmem:[%s740 + $0xb0] sm:$0xf]
        %v3006 = vld [vmem:[%s740 + $0xb4] sm:$0xff]
        %v3007 = vld [vmem:[%s740 + $0xbc] sm:$0xf]
        %v3009 = vrot.slane %v2975, 3
        %v3043 = vunpack.c.l.b16 %v2976
        %v3044 = vunpack.c.h.b16 %v2976
        %v3045 = vunpack.c.l.b16 %v2977
        %v3046 = vunpack.c.l.b16 %v2978
        %v3047 = vunpack.c.h.b16 %v2978
        %v3048 = vunpack.c.l.b16 %v2979
        %v3049 = vunpack.c.l.b16 %v2980
        %v3050 = vunpack.c.h.b16 %v2980
        %v3051 = vunpack.c.l.b16 %v2981
        %v3052 = vunpack.c.l.b16 %v2982
        %v3053 = vunpack.c.h.b16 %v2982
        %v3054 = vunpack.c.l.b16 %v2983
        %v3055 = vunpack.c.l.b16 %v2984
        %v3056 = vunpack.c.h.b16 %v2984
        %v3057 = vunpack.c.l.b16 %v2985
        %v3058 = vunpack.c.l.b16 %v2986
        %v3059 = vunpack.c.h.b16 %v2986
        %v3060 = vunpack.c.l.b16 %v2987
        %v3061 = vunpack.c.l.b16 %v2988
        %v3062 = vunpack.c.h.b16 %v2988
        %v3063 = vunpack.c.l.b16 %v2989
        %v3064 = vunpack.c.l.b16 %v2990
        %v3065 = vunpack.c.h.b16 %v2990
        %v3066 = vunpack.c.l.b16 %v2991
        %v3067 = vunpack.c.l.b16 %v2992
        %v3068 = vunpack.c.h.b16 %v2992
        %v3069 = vunpack.c.l.b16 %v2993
        %v3070 = vunpack.c.l.b16 %v2994
        %v3071 = vunpack.c.h.b16 %v2994
        %v3072 = vunpack.c.l.b16 %v2995
        %v3073 = vunpack.c.l.b16 %v2996
        %v3074 = vunpack.c.h.b16 %v2996
        %v3075 = vunpack.c.l.b16 %v2997
        %v3076 = vunpack.c.l.b16 %v2998
        %v3077 = vunpack.c.h.b16 %v2998
        %v3078 = vunpack.c.l.b16 %v2999
        %v3079 = vunpack.c.l.b16 %v3000
        %v3080 = vunpack.c.h.b16 %v3000
        %v3081 = vunpack.c.l.b16 %v3001
        %v3082 = vunpack.c.l.b16 %v3002
        %v3083 = vunpack.c.h.b16 %v3002
        %v3084 = vunpack.c.l.b16 %v3003
        %v3085 = vunpack.c.l.b16 %v3004
        %v3086 = vunpack.c.h.b16 %v3004
        %v3087 = vunpack.c.l.b16 %v3005
        %v3088 = vunpack.c.l.b16 %v3006
        %v3089 = vunpack.c.h.b16 %v3006
        %v3090 = vunpack.c.l.b16 %v3007
        %v3091 = vpack.c.b16 %v3046, %v3043
        %v3092 = vpack.c.b16 %v3047, %v3044
        %v3093 = vpack.c.b16 %v3048, %v3045
        %v3094 = vpack.c.b16 %v3052, %v3049
        %v3095 = vpack.c.b16 %v3053, %v3050
        %v3096 = vpack.c.b16 %v3054, %v3051
        %v3097 = vpack.c.b16 %v3058, %v3055
        %v3098 = vpack.c.b16 %v3059, %v3056
        %v3099 = vpack.c.b16 %v3060, %v3057
        %v3100 = vpack.c.b16 %v3064, %v3061
        %v3101 = vpack.c.b16 %v3065, %v3062
        %v3102 = vpack.c.b16 %v3066, %v3063
        %v3103 = vpack.c.b16 %v3070, %v3067
        %v3104 = vpack.c.b16 %v3071, %v3068
        %v3105 = vpack.c.b16 %v3072, %v3069
        %v3106 = vpack.c.b16 %v3076, %v3073
        %v3107 = vpack.c.b16 %v3077, %v3074
        %v3108 = vpack.c.b16 %v3078, %v3075
        %v3109 = vpack.c.b16 %v3082, %v3079
        %v3110 = vpack.c.b16 %v3083, %v3080
        %v3111 = vpack.c.b16 %v3084, %v3081
        %v3112 = vpack.c.b16 %v3088, %v3085
        %v3113 = vpack.c.b16 %v3089, %v3086
        %v3114 = vpack.c.b16 %v3090, %v3087
        %3139 = vmatprep.subr.bf16.mxu0 %v3092
        %3140 = vmatpush1.bf16.msra.mxu0 %v3091
        %3141 = vmatprep.subr.bf16.mxu0 %v3095
        %3142 = vmatpush1.bf16.msra.mxu0 %v3094
        %3143 = vmatprep.subr.bf16.mxu0 %v3098
        %3144 = vmatpush1.bf16.msra.mxu0 %v3097
        %3145 = vmatprep.subr.bf16.mxu0 %v3101
        %3146 = vmatpush1.bf16.msra.mxu0 %v3100
        %3147 = vmatprep.subr.bf16.mxu0 %v3104
        %3148 = vmatpush1.bf16.msra.mxu0 %v3103
        %3149 = vmatprep.subr.bf16.mxu0 %v3107
        %3150 = vmatpush1.bf16.msra.mxu0 %v3106
        %3151 = vmatprep.subr.bf16.mxu0 %v3110
        %3152 = vmatpush1.bf16.msra.mxu0 %v3109
        %3153 = vmatprep.subr.bf16.mxu0 %v3113
        %3154 = vmatpush1.bf16.msra.mxu0 %v3112
        %3155 = vmatprep.subr.bf16.mxu0 0
        %3156 = vmatpush1.bf16.msra.mxu0 0
        %3157 = vmatprep.subr.bf16.mxu0 0
        %3158 = vmatpush1.bf16.msra.mxu0 0
        %3159 = vmatprep.subr.bf16.mxu0 0
        %3160 = vmatpush1.bf16.msra.mxu0 0
        %3161 = vmatprep.subr.bf16.mxu0 0
        %3162 = vmatpush1.bf16.msra.mxu0 0
        %3163 = vmatprep.subr.bf16.mxu0 0
        %3164 = vmatpush1.bf16.msra.mxu0 0
        %3165 = vmatprep.subr.bf16.mxu0 0
        %3166 = vmatpush1.bf16.msra.mxu0 0
        %3167 = vmatprep.subr.bf16.mxu0 0
        %3168 = vmatpush1.bf16.msra.mxu0 0
        %3169 = vmatprep.subr.bf16.mxu0 0
        %3170 = vmatpush1.bf16.msra.mxu0 0
        %3171 = vmatprep.mubr.bf16.mxu0 0
        %3172 = vmatmul.mubr.bf16.gmra.mrb[0].mxu0 %v3009
        %v3173 = vpop.f32.mrb[0].mxu0
        %v3174 = vadd.f32 %v441, %v3173
        %v3175 = vpop.f32.mrb[0].mxu0
        %v3176 = vadd.f32 %v445, %v3175
        %v3177 = vpop.f32.mrb[0].mxu0
        %v3178 = vpop.f32.mrb[0].mxu0
        %3179 = vdwg.mxu0
        %3180 = vmatprep.subr.bf16.mxu0 0
        %3181 = vmatpush1.bf16.msra.mxu0 %v3093
        %3182 = vmatprep.subr.bf16.mxu0 0
        %3183 = vmatpush1.bf16.msra.mxu0 %v3096
        %3184 = vmatprep.subr.bf16.mxu0 0
        %3185 = vmatpush1.bf16.msra.mxu0 %v3099
        %3186 = vmatprep.subr.bf16.mxu0 0
        %3187 = vmatpush1.bf16.msra.mxu0 %v3102
        %3188 = vmatprep.subr.bf16.mxu0 0
        %3189 = vmatpush1.bf16.msra.mxu0 %v3105
        %3190 = vmatprep.subr.bf16.mxu0 0
        %3191 = vmatpush1.bf16.msra.mxu0 %v3108
        %3192 = vmatprep.subr.bf16.mxu0 0
        %3193 = vmatpush1.bf16.msra.mxu0 %v3111
        %3194 = vmatprep.subr.bf16.mxu0 0
        %3195 = vmatpush1.bf16.msra.mxu0 %v3114
        %3196 = vmatprep.subr.bf16.mxu0 0
        %3197 = vmatpush1.bf16.msra.mxu0 0
        %3198 = vmatprep.subr.bf16.mxu0 0
        %3199 = vmatpush1.bf16.msra.mxu0 0
        %3200 = vmatprep.subr.bf16.mxu0 0
        %3201 = vmatpush1.bf16.msra.mxu0 0
        %3202 = vmatprep.subr.bf16.mxu0 0
        %3203 = vmatpush1.bf16.msra.mxu0 0
        %3204 = vmatprep.subr.bf16.mxu0 0
        %3205 = vmatpush1.bf16.msra.mxu0 0
        %3206 = vmatprep.subr.bf16.mxu0 0
        %3207 = vmatpush1.bf16.msra.mxu0 0
        %3208 = vmatprep.subr.bf16.mxu0 0
        %3209 = vmatpush1.bf16.msra.mxu0 0
        %3210 = vmatprep.subr.bf16.mxu0 0
        %3211 = vmatpush1.bf16.msra.mxu0 0
        %3212 = vmatprep.mubr.bf16.mxu0 0
        %3213 = vmatmul.mubr.bf16.gmra.mrb[0].mxu0 %v3009
        %v3214 = vpop.f32.mrb[0].mxu0
        %v3215 = vadd.f32 %v449, %v3214
        %v3216 = vpop.f32.mrb[0].mxu0
        %v3217 = vpop.f32.mrb[0].mxu0
        %v3218 = vpop.f32.mrb[0].mxu0
        %3219 = vdwg.mxu0
        %v3220 = vadd.f32 %v2722, %v2929
        %v3221 = vmul.f32 %v3220, 0.5
        %v3222 = vtanh.pop %v3221
        %v3223 = vmul.f32 %v3222, 0.5
        %v3224 = vadd.f32 %v3223, 0.5
        %v3225 = vadd.f32 %v2723, %v2931
        %v3226 = vmul.f32 %v3225, 0.5
        %v3227 = vtanh.pop %v3226
        %v3228 = vmul.f32 %v3227, 0.5
        %v3229 = vadd.f32 %v3228, 0.5
        %v3230 = vmul.f32 %v3224, %v2970
        %v3231 = vadd.f32 %v2724, %v3230
        %v3232 = vtanh.pop %v3231
        %v3233 = vsub.f32 1.0, %v3229
        %v3234 = vmul.f32 %v3233, %v3232
        %v3236 = vrot.slane %v2681, 6
        %v3238 = vmul.f32 %v3229, %v3236
        %v3239 = vadd.f32 %v3234, %v3238
        %v3240 = vadd.f32 %v2727, %v3174
        %v3241 = vmul.f32 %v3240, 0.5
        %v3242 = vtanh.pop %v3241
        %v3243 = vmul.f32 %v3242, 0.5
        %v3244 = vadd.f32 %v3243, 0.5
        %v3245 = vadd.f32 %v2728, %v3176
        %v3246 = vmul.f32 %v3245, 0.5
        %v3247 = vtanh.pop %v3246
        %v3248 = vmul.f32 %v3247, 0.5
        %v3249 = vadd.f32 %v3248, 0.5
        %v3250 = vmul.f32 %v3244, %v3215
        %v3251 = vadd.f32 %v2729, %v3250
        %v3252 = vtanh.pop %v3251
        %v3253 = vsub.f32 1.0, %v3249
        %v3254 = vmul.f32 %v3253, %v3252
        %v3256 = vrot.slane %v2710, 6
        %v3258 = vmul.f32 %v3249, %v3256
        %v3259 = vadd.f32 %v3254, %v3258
        %v3260 = vmul.f32 %v482, %v3259
        %v3261 = vadd.f32 %v3239, %v3260
        %v3262 = vmul.f32 %v3261, %v458
        %v3263 = vadd.f32 %v3262, %v466
        %vm3264 = vcmp.ge.f32.partialorder %v3263, 0.0
        %v3265 = vmul.f32 %v474, %v3263
        %v3266 = vsel %vm3264, %v3263, %v3265
        %3267 = vst.msk [vmem:[%s409 + $0x8] sm:$0x3] %vm1023, %v3266
        %v3268 = vld [vmem:[%s330 + $0xc] sm:$0x22]
        %v3269 = vld [vmem:[%s330 + $0x14] sm:$0x2]
        %v3270 = vunpack.c.l.bf16 %v3268
        %v3271 = vunpack.c.h.bf16 %v3268
        %v3272 = vunpack.c.l.bf16 %v3269
        %v3273 = vld [vmem:[%s337 + $0xc] sm:$0x22]
        %v3274 = vld [vmem:[%s337 + $0x14] sm:$0x2]
        %v3275 = vunpack.c.l.bf16 %v3273
        %v3276 = vunpack.c.h.bf16 %v3273
        %v3277 = vunpack.c.l.bf16 %v3274
        %v3278 = vpack.c.bf16 %v3239, %v3239
        %v3279 = vld [vmem:[%s392] sm:$0xff]
        %v3280 = vld [vmem:[%s392 + $0x8] sm:$0xf]
        %v3281 = vld [vmem:[%s392 + $0xc] sm:$0xff]
        %v3282 = vld [vmem:[%s392 + $0x14] sm:$0xf]
        %v3283 = vld [vmem:[%s392 + $0x18] sm:$0xff]
        %v3284 = vld [vmem:[%s392 + $0x20] sm:$0xf]
        %v3285 = vld [vmem:[%s392 + $0x24] sm:$0xff]
        %v3286 = vld [vmem:[%s392 + $0x2c] sm:$0xf]
        %v3287 = vld [vmem:[%s392 + $0x30] sm:$0xff]
        %v3288 = vld [vmem:[%s392 + $0x38] sm:$0xf]
        %v3289 = vld [vmem:[%s392 + $0x3c] sm:$0xff]
        %v3290 = vld [vmem:[%s392 + $0x44] sm:$0xf]
        %v3291 = vld [vmem:[%s392 + $0x48] sm:$0xff]
        %v3292 = vld [vmem:[%s392 + $0x50] sm:$0xf]
        %v3293 = vld [vmem:[%s392 + $0x54] sm:$0xff]
        %v3294 = vld [vmem:[%s392 + $0x5c] sm:$0xf]
        %v3295 = vld [vmem:[%s392 + $0x60] sm:$0xff]
        %v3296 = vld [vmem:[%s392 + $0x68] sm:$0xf]
        %v3297 = vld [vmem:[%s392 + $0x6c] sm:$0xff]
        %v3298 = vld [vmem:[%s392 + $0x74] sm:$0xf]
        %v3299 = vld [vmem:[%s392 + $0x78] sm:$0xff]
        %v3300 = vld [vmem:[%s392 + $0x80] sm:$0xf]
        %v3301 = vld [vmem:[%s392 + $0x84] sm:$0xff]
        %v3302 = vld [vmem:[%s392 + $0x8c] sm:$0xf]
        %v3303 = vld [vmem:[%s392 + $0x90] sm:$0xff]
        %v3304 = vld [vmem:[%s392 + $0x98] sm:$0xf]
        %v3305 = vld [vmem:[%s392 + $0x9c] sm:$0xff]
        %v3306 = vld [vmem:[%s392 + $0xa4] sm:$0xf]
        %v3307 = vld [vmem:[%s392 + $0xa8] sm:$0xff]
        %v3308 = vld [vmem:[%s392 + $0xb0] sm:$0xf]
        %v3309 = vld [vmem:[%s392 + $0xb4] sm:$0xff]
        %v3310 = vld [vmem:[%s392 + $0xbc] sm:$0xf]
        %v3343 = vunpack.c.l.b16 %v3279
        %v3344 = vunpack.c.h.b16 %v3279
        %v3345 = vunpack.c.l.b16 %v3280
        %v3346 = vunpack.c.l.b16 %v3281
        %v3347 = vunpack.c.h.b16 %v3281
        %v3348 = vunpack.c.l.b16 %v3282
        %v3349 = vunpack.c.l.b16 %v3283
        %v3350 = vunpack.c.h.b16 %v3283
        %v3351 = vunpack.c.l.b16 %v3284
        %v3352 = vunpack.c.l.b16 %v3285
        %v3353 = vunpack.c.h.b16 %v3285
        %v3354 = vunpack.c.l.b16 %v3286
        %v3355 = vunpack.c.l.b16 %v3287
        %v3356 = vunpack.c.h.b16 %v3287
        %v3357 = vunpack.c.l.b16 %v3288
        %v3358 = vunpack.c.l.b16 %v3289
        %v3359 = vunpack.c.h.b16 %v3289
        %v3360 = vunpack.c.l.b16 %v3290
        %v3361 = vunpack.c.l.b16 %v3291
        %v3362 = vunpack.c.h.b16 %v3291
        %v3363 = vunpack.c.l.b16 %v3292
        %v3364 = vunpack.c.l.b16 %v3293
        %v3365 = vunpack.c.h.b16 %v3293
        %v3366 = vunpack.c.l.b16 %v3294
        %v3367 = vunpack.c.l.b16 %v3295
        %v3368 = vunpack.c.h.b16 %v3295
        %v3369 = vunpack.c.l.b16 %v3296
        %v3370 = vunpack.c.l.b16 %v3297
        %v3371 = vunpack.c.h.b16 %v3297
        %v3372 = vunpack.c.l.b16 %v3298
        %v3373 = vunpack.c.l.b16 %v3299
        %v3374 = vunpack.c.h.b16 %v3299
        %v3375 = vunpack.c.l.b16 %v3300
        %v3376 = vunpack.c.l.b16 %v3301
        %v3377 = vunpack.c.h.b16 %v3301
        %v3378 = vunpack.c.l.b16 %v3302
        %v3379 = vunpack.c.l.b16 %v3303
        %v3380 = vunpack.c.h.b16 %v3303
        %v3381 = vunpack.c.l.b16 %v3304
        %v3382 = vunpack.c.l.b16 %v3305
        %v3383 = vunpack.c.h.b16 %v3305
        %v3384 = vunpack.c.l.b16 %v3306
        %v3385 = vunpack.c.l.b16 %v3307
        %v3386 = vunpack.c.h.b16 %v3307
        %v3387 = vunpack.c.l.b16 %v3308
        %v3388 = vunpack.c.l.b16 %v3309
        %v3389 = vunpack.c.h.b16 %v3309
        %v3390 = vunpack.c.l.b16 %v3310
        %v3391 = vpack.c.b16 %v3346, %v3343
        %v3392 = vpack.c.b16 %v3347, %v3344
        %v3393 = vpack.c.b16 %v3348, %v3345
        %v3394 = vpack.c.b16 %v3352, %v3349
        %v3395 = vpack.c.b16 %v3353, %v3350
        %v3396 = vpack.c.b16 %v3354, %v3351
        %v3397 = vpack.c.b16 %v3358, %v3355
        %v3398 = vpack.c.b16 %v3359, %v3356
        %v3399 = vpack.c.b16 %v3360, %v3357
        %v3400 = vpack.c.b16 %v3364, %v3361
        %v3401 = vpack.c.b16 %v3365, %v3362
        %v3402 = vpack.c.b16 %v3366, %v3363
        %v3403 = vpack.c.b16 %v3370, %v3367
        %v3404 = vpack.c.b16 %v3371, %v3368
        %v3405 = vpack.c.b16 %v3372, %v3369
        %v3406 = vpack.c.b16 %v3376, %v3373
        %v3407 = vpack.c.b16 %v3377, %v3374
        %v3408 = vpack.c.b16 %v3378, %v3375
        %v3409 = vpack.c.b16 %v3382, %v3379
        %v3410 = vpack.c.b16 %v3383, %v3380
        %v3411 = vpack.c.b16 %v3384, %v3381
        %v3412 = vpack.c.b16 %v3388, %v3385
        %v3413 = vpack.c.b16 %v3389, %v3386
        %v3414 = vpack.c.b16 %v3390, %v3387
        %3439 = vmatprep.subr.bf16.mxu0 %v3392
        %3440 = vmatpush1.bf16.msra.mxu0 %v3391
        %3441 = vmatprep.subr.bf16.mxu0 %v3395
        %3442 = vmatpush1.bf16.msra.mxu0 %v3394
        %3443 = vmatprep.subr.bf16.mxu0 %v3398
        %3444 = vmatpush1.bf16.msra.mxu0 %v3397
        %3445 = vmatprep.subr.bf16.mxu0 %v3401
        %3446 = vmatpush1.bf16.msra.mxu0 %v3400
        %3447 = vmatprep.subr.bf16.mxu0 %v3404
        %3448 = vmatpush1.bf16.msra.mxu0 %v3403
        %3449 = vmatprep.subr.bf16.mxu0 %v3407
        %3450 = vmatpush1.bf16.msra.mxu0 %v3406
        %3451 = vmatprep.subr.bf16.mxu0 %v3410
        %3452 = vmatpush1.bf16.msra.mxu0 %v3409
        %3453 = vmatprep.subr.bf16.mxu0 %v3413
        %3454 = vmatpush1.bf16.msra.mxu0 %v3412
        %3455 = vmatprep.subr.bf16.mxu0 0
        %3456 = vmatpush1.bf16.msra.mxu0 0
        %3457 = vmatprep.subr.bf16.mxu0 0
        %3458 = vmatpush1.bf16.msra.mxu0 0
        %3459 = vmatprep.subr.bf16.mxu0 0
        %3460 = vmatpush1.bf16.msra.mxu0 0
        %3461 = vmatprep.subr.bf16.mxu0 0
        %3462 = vmatpush1.bf16.msra.mxu0 0
        %3463 = vmatprep.subr.bf16.mxu0 0
        %3464 = vmatpush1.bf16.msra.mxu0 0
        %3465 = vmatprep.subr.bf16.mxu0 0
        %3466 = vmatpush1.bf16.msra.mxu0 0
        %3467 = vmatprep.subr.bf16.mxu0 0
        %3468 = vmatpush1.bf16.msra.mxu0 0
        %3469 = vmatprep.subr.bf16.mxu0 0
        %3470 = vmatpush1.bf16.msra.mxu0 0
        %3471 = vmatprep.mubr.bf16.mxu0 0
        %3472 = vmatmul.mubr.bf16.gmra.mrb[0].mxu0 %v3278
        %v3473 = vpop.f32.mrb[0].mxu0
        %v3474 = vadd.f32 %v423, %v3473
        %v3475 = vpop.f32.mrb[0].mxu0
        %v3476 = vadd.f32 %v427, %v3475
        %v3477 = vpop.f32.mrb[0].mxu0
        %v3478 = vpop.f32.mrb[0].mxu0
        %3479 = vdwg.mxu0
        %3480 = vmatprep.subr.bf16.mxu0 0
        %3481 = vmatpush1.bf16.msra.mxu0 %v3393
        %3482 = vmatprep.subr.bf16.mxu0 0
        %3483 = vmatpush1.bf16.msra.mxu0 %v3396
        %3484 = vmatprep.subr.bf16.mxu0 0
        %3485 = vmatpush1.bf16.msra.mxu0 %v3399
        %3486 = vmatprep.subr.bf16.mxu0 0
        %3487 = vmatpush1.bf16.msra.mxu0 %v3402
        %3488 = vmatprep.subr.bf16.mxu0 0
        %3489 = vmatpush1.bf16.msra.mxu0 %v3405
        %3490 = vmatprep.subr.bf16.mxu0 0
        %3491 = vmatpush1.bf16.msra.mxu0 %v3408
        %3492 = vmatprep.subr.bf16.mxu0 0
        %3493 = vmatpush1.bf16.msra.mxu0 %v3411
        %3494 = vmatprep.subr.bf16.mxu0 0
        %3495 = vmatpush1.bf16.msra.mxu0 %v3414
        %3496 = vmatprep.subr.bf16.mxu0 0
        %3497 = vmatpush1.bf16.msra.mxu0 0
        %3498 = vmatprep.subr.bf16.mxu0 0
        %3499 = vmatpush1.bf16.msra.mxu0 0
        %3500 = vmatprep.subr.bf16.mxu0 0
        %3501 = vmatpush1.bf16.msra.mxu0 0
        %3502 = vmatprep.subr.bf16.mxu0 0
        %3503 = vmatpush1.bf16.msra.mxu0 0
        %3504 = vmatprep.subr.bf16.mxu0 0
        %3505 = vmatpush1.bf16.msra.mxu0 0
        %3506 = vmatprep.subr.bf16.mxu0 0
        %3507 = vmatpush1.bf16.msra.mxu0 0
        %3508 = vmatprep.subr.bf16.mxu0 0
        %3509 = vmatpush1.bf16.msra.mxu0 0
        %3510 = vmatprep.subr.bf16.mxu0 0
        %3511 = vmatpush1.bf16.msra.mxu0 0
        %3512 = vmatprep.mubr.bf16.mxu0 0
        %3513 = vmatmul.mubr.bf16.gmra.mrb[0].mxu0 %v3278
        %v3514 = vpop.f32.mrb[0].mxu0
        %v3515 = vadd.f32 %v431, %v3514
        %v3516 = vpop.f32.mrb[0].mxu0
        %v3517 = vpop.f32.mrb[0].mxu0
        %v3518 = vpop.f32.mrb[0].mxu0
        %3519 = vdwg.mxu0
        %v3520 = vpack.c.bf16 %v3259, %v3259
        %v3521 = vld [vmem:[%s740] sm:$0xff]
        %v3522 = vld [vmem:[%s740 + $0x8] sm:$0xf]
        %v3523 = vld [vmem:[%s740 + $0xc] sm:$0xff]
        %v3524 = vld [vmem:[%s740 + $0x14] sm:$0xf]
        %v3525 = vld [vmem:[%s740 + $0x18] sm:$0xff]
        %v3526 = vld [vmem:[%s740 + $0x20] sm:$0xf]
        %v3527 = vld [vmem:[%s740 + $0x24] sm:$0xff]
        %v3528 = vld [vmem:[%s740 + $0x2c] sm:$0xf]
        %v3529 = vld [vmem:[%s740 + $0x30] sm:$0xff]
        %v3530 = vld [vmem:[%s740 + $0x38] sm:$0xf]
        %v3531 = vld [vmem:[%s740 + $0x3c] sm:$0xff]
        %v3532 = vld [vmem:[%s740 + $0x44] sm:$0xf]
        %v3533 = vld [vmem:[%s740 + $0x48] sm:$0xff]
        %v3534 = vld [vmem:[%s740 + $0x50] sm:$0xf]
        %v3535 = vld [vmem:[%s740 + $0x54] sm:$0xff]
        %v3536 = vld [vmem:[%s740 + $0x5c] sm:$0xf]
        %v3537 = vld [vmem:[%s740 + $0x60] sm:$0xff]
        %v3538 = vld [vmem:[%s740 + $0x68] sm:$0xf]
        %v3539 = vld [vmem:[%s740 + $0x6c] sm:$0xff]
        %v3540 = vld [vmem:[%s740 + $0x74] sm:$0xf]
        %v3541 = vld [vmem:[%s740 + $0x78] sm:$0xff]
        %v3542 = vld [vmem:[%s740 + $0x80] sm:$0xf]
        %v3543 = vld [vmem:[%s740 + $0x84] sm:$0xff]
        %v3544 = vld [vmem:[%s740 + $0x8c] sm:$0xf]
        %v3545 = vld [vmem:[%s740 + $0x90] sm:$0xff]
        %v3546 = vld [vmem:[%s740 + $0x98] sm:$0xf]
        %v3547 = vld [vmem:[%s740 + $0x9c] sm:$0xff]
        %v3548 = vld [vmem:[%s740 + $0xa4] sm:$0xf]
        %v3549 = vld [vmem:[%s740 + $0xa8] sm:$0xff]
        %v3550 = vld [vmem:[%s740 + $0xb0] sm:$0xf]
        %v3551 = vld [vmem:[%s740 + $0xb4] sm:$0xff]
        %v3552 = vld [vmem:[%s740 + $0xbc] sm:$0xf]
        %v3585 = vunpack.c.l.b16 %v3521
        %v3586 = vunpack.c.h.b16 %v3521
        %v3587 = vunpack.c.l.b16 %v3522
        %v3588 = vunpack.c.l.b16 %v3523
        %v3589 = vunpack.c.h.b16 %v3523
        %v3590 = vunpack.c.l.b16 %v3524
        %v3591 = vunpack.c.l.b16 %v3525
        %v3592 = vunpack.c.h.b16 %v3525
        %v3593 = vunpack.c.l.b16 %v3526
        %v3594 = vunpack.c.l.b16 %v3527
        %v3595 = vunpack.c.h.b16 %v3527
        %v3596 = vunpack.c.l.b16 %v3528
        %v3597 = vunpack.c.l.b16 %v3529
        %v3598 = vunpack.c.h.b16 %v3529
        %v3599 = vunpack.c.l.b16 %v3530
        %v3600 = vunpack.c.l.b16 %v3531
        %v3601 = vunpack.c.h.b16 %v3531
        %v3602 = vunpack.c.l.b16 %v3532
        %v3603 = vunpack.c.l.b16 %v3533
        %v3604 = vunpack.c.h.b16 %v3533
        %v3605 = vunpack.c.l.b16 %v3534
        %v3606 = vunpack.c.l.b16 %v3535
        %v3607 = vunpack.c.h.b16 %v3535
        %v3608 = vunpack.c.l.b16 %v3536
        %v3609 = vunpack.c.l.b16 %v3537
        %v3610 = vunpack.c.h.b16 %v3537
        %v3611 = vunpack.c.l.b16 %v3538
        %v3612 = vunpack.c.l.b16 %v3539
        %v3613 = vunpack.c.h.b16 %v3539
        %v3614 = vunpack.c.l.b16 %v3540
        %v3615 = vunpack.c.l.b16 %v3541
        %v3616 = vunpack.c.h.b16 %v3541
        %v3617 = vunpack.c.l.b16 %v3542
        %v3618 = vunpack.c.l.b16 %v3543
        %v3619 = vunpack.c.h.b16 %v3543
        %v3620 = vunpack.c.l.b16 %v3544
        %v3621 = vunpack.c.l.b16 %v3545
        %v3622 = vunpack.c.h.b16 %v3545
        %v3623 = vunpack.c.l.b16 %v3546
        %v3624 = vunpack.c.l.b16 %v3547
        %v3625 = vunpack.c.h.b16 %v3547
        %v3626 = vunpack.c.l.b16 %v3548
        %v3627 = vunpack.c.l.b16 %v3549
        %v3628 = vunpack.c.h.b16 %v3549
        %v3629 = vunpack.c.l.b16 %v3550
        %v3630 = vunpack.c.l.b16 %v3551
        %v3631 = vunpack.c.h.b16 %v3551
        %v3632 = vunpack.c.l.b16 %v3552
        %v3633 = vpack.c.b16 %v3588, %v3585
        %v3634 = vpack.c.b16 %v3589, %v3586
        %v3635 = vpack.c.b16 %v3590, %v3587
        %v3636 = vpack.c.b16 %v3594, %v3591
        %v3637 = vpack.c.b16 %v3595, %v3592
        %v3638 = vpack.c.b16 %v3596, %v3593
        %v3639 = vpack.c.b16 %v3600, %v3597
        %v3640 = vpack.c.b16 %v3601, %v3598
        %v3641 = vpack.c.b16 %v3602, %v3599
        %v3642 = vpack.c.b16 %v3606, %v3603
        %v3643 = vpack.c.b16 %v3607, %v3604
        %v3644 = vpack.c.b16 %v3608, %v3605
        %v3645 = vpack.c.b16 %v3612, %v3609
        %v3646 = vpack.c.b16 %v3613, %v3610
        %v3647 = vpack.c.b16 %v3614, %v3611
        %v3648 = vpack.c.b16 %v3618, %v3615
        %v3649 = vpack.c.b16 %v3619, %v3616
        %v3650 = vpack.c.b16 %v3620, %v3617
        %v3651 = vpack.c.b16 %v3624, %v3621
        %v3652 = vpack.c.b16 %v3625, %v3622
        %v3653 = vpack.c.b16 %v3626, %v3623
        %v3654 = vpack.c.b16 %v3630, %v3627
        %v3655 = vpack.c.b16 %v3631, %v3628
        %v3656 = vpack.c.b16 %v3632, %v3629
        %3681 = vmatprep.subr.bf16.mxu0 %v3634
        %3682 = vmatpush1.bf16.msra.mxu0 %v3633
        %3683 = vmatprep.subr.bf16.mxu0 %v3637
        %3684 = vmatpush1.bf16.msra.mxu0 %v3636
        %3685 = vmatprep.subr.bf16.mxu0 %v3640
        %3686 = vmatpush1.bf16.msra.mxu0 %v3639
        %3687 = vmatprep.subr.bf16.mxu0 %v3643
        %3688 = vmatpush1.bf16.msra.mxu0 %v3642
        %3689 = vmatprep.subr.bf16.mxu0 %v3646
        %3690 = vmatpush1.bf16.msra.mxu0 %v3645
        %3691 = vmatprep.subr.bf16.mxu0 %v3649
        %3692 = vmatpush1.bf16.msra.mxu0 %v3648
        %3693 = vmatprep.subr.bf16.mxu0 %v3652
        %3694 = vmatpush1.bf16.msra.mxu0 %v3651
        %3695 = vmatprep.subr.bf16.mxu0 %v3655
        %3696 = vmatpush1.bf16.msra.mxu0 %v3654
        %3697 = vmatprep.subr.bf16.mxu0 0
        %3698 = vmatpush1.bf16.msra.mxu0 0
        %3699 = vmatprep.subr.bf16.mxu0 0
        %3700 = vmatpush1.bf16.msra.mxu0 0
        %3701 = vmatprep.subr.bf16.mxu0 0
        %3702 = vmatpush1.bf16.msra.mxu0 0
        %3703 = vmatprep.subr.bf16.mxu0 0
        %3704 = vmatpush1.bf16.msra.mxu0 0
        %3705 = vmatprep.subr.bf16.mxu0 0
        %3706 = vmatpush1.bf16.msra.mxu0 0
        %3707 = vmatprep.subr.bf16.mxu0 0
        %3708 = vmatpush1.bf16.msra.mxu0 0
        %3709 = vmatprep.subr.bf16.mxu0 0
        %3710 = vmatpush1.bf16.msra.mxu0 0
        %3711 = vmatprep.subr.bf16.mxu0 0
        %3712 = vmatpush1.bf16.msra.mxu0 0
        %3713 = vmatprep.mubr.bf16.mxu0 0
        %3714 = vmatmul.mubr.bf16.gmra.mrb[0].mxu0 %v3520
        %v3715 = vpop.f32.mrb[0].mxu0
        %v3716 = vadd.f32 %v441, %v3715
        %v3717 = vpop.f32.mrb[0].mxu0
        %v3718 = vadd.f32 %v445, %v3717
        %v3719 = vpop.f32.mrb[0].mxu0
        %v3720 = vpop.f32.mrb[0].mxu0
        %3721 = vdwg.mxu0
        %3722 = vmatprep.subr.bf16.mxu0 0
        %3723 = vmatpush1.bf16.msra.mxu0 %v3635
        %3724 = vmatprep.subr.bf16.mxu0 0
        %3725 = vmatpush1.bf16.msra.mxu0 %v3638
        %3726 = vmatprep.subr.bf16.mxu0 0
        %3727 = vmatpush1.bf16.msra.mxu0 %v3641
        %3728 = vmatprep.subr.bf16.mxu0 0
        %3729 = vmatpush1.bf16.msra.mxu0 %v3644
        %3730 = vmatprep.subr.bf16.mxu0 0
        %3731 = vmatpush1.bf16.msra.mxu0 %v3647
        %3732 = vmatprep.subr.bf16.mxu0 0
        %3733 = vmatpush1.bf16.msra.mxu0 %v3650
        %3734 = vmatprep.subr.bf16.mxu0 0
        %3735 = vmatpush1.bf16.msra.mxu0 %v3653
        %3736 = vmatprep.subr.bf16.mxu0 0
        %3737 = vmatpush1.bf16.msra.mxu0 %v3656
        %3738 = vmatprep.subr.bf16.mxu0 0
        %3739 = vmatpush1.bf16.msra.mxu0 0
        %3740 = vmatprep.subr.bf16.mxu0 0
        %3741 = vmatpush1.bf16.msra.mxu0 0
        %3742 = vmatprep.subr.bf16.mxu0 0
        %3743 = vmatpush1.bf16.msra.mxu0 0
        %3744 = vmatprep.subr.bf16.mxu0 0
        %3745 = vmatpush1.bf16.msra.mxu0 0
        %3746 = vmatprep.subr.bf16.mxu0 0
        %3747 = vmatpush1.bf16.msra.mxu0 0
        %3748 = vmatprep.subr.bf16.mxu0 0
        %3749 = vmatpush1.bf16.msra.mxu0 0
        %3750 = vmatprep.subr.bf16.mxu0 0
        %3751 = vmatpush1.bf16.msra.mxu0 0
        %3752 = vmatprep.subr.bf16.mxu0 0
        %3753 = vmatpush1.bf16.msra.mxu0 0
        %3754 = vmatprep.mubr.bf16.mxu0 0
        %3755 = vmatmul.mubr.bf16.gmra.mrb[0].mxu0 %v3520
        %v3756 = vpop.f32.mrb[0].mxu0
        %v3757 = vadd.f32 %v449, %v3756
        %v3758 = vpop.f32.mrb[0].mxu0
        %v3759 = vpop.f32.mrb[0].mxu0
        %v3760 = vpop.f32.mrb[0].mxu0
        %3761 = vdwg.mxu0
        %v3763 = vrot.slane %v3474, 6
        %v3765 = vadd.f32 %v3270, %v3763
        %v3766 = vmul.f32 %v3765, 0.5
        %v3767 = vtanh.pop %v3766
        %v3768 = vmul.f32 %v3767, 0.5
        %v3769 = vadd.f32 %v3768, 0.5
        %v3771 = vrot.slane %v3476, 6
        %v3773 = vadd.f32 %v3271, %v3771
        %v3774 = vmul.f32 %v3773, 0.5
        %v3775 = vtanh.pop %v3774
        %v3776 = vmul.f32 %v3775, 0.5
        %v3777 = vadd.f32 %v3776, 0.5
        %v3779 = vrot.slane %v3515, 6
        %v3781 = vmul.f32 %v3769, %v3779
        %v3782 = vadd.f32 %v3272, %v3781
        %v3783 = vtanh.pop %v3782
        %v3784 = vsub.f32 1.0, %v3777
        %v3785 = vmul.f32 %v3784, %v3783
        %v3787 = vrot.slane %v3239, 6
        %v3789 = vmul.f32 %v3777, %v3787
        %v3790 = vadd.f32 %v3785, %v3789
        %v3792 = vrot.slane %v3716, 6
        %v3794 = vadd.f32 %v3275, %v3792
        %v3795 = vmul.f32 %v3794, 0.5
        %v3796 = vtanh.pop %v3795
        %v3797 = vmul.f32 %v3796, 0.5
        %v3798 = vadd.f32 %v3797, 0.5
        %v3800 = vrot.slane %v3718, 6
        %v3802 = vadd.f32 %v3276, %v3800
        %v3803 = vmul.f32 %v3802, 0.5
        %v3804 = vtanh.pop %v3803
        %v3805 = vmul.f32 %v3804, 0.5
        %v3806 = vadd.f32 %v3805, 0.5
        %v3808 = vrot.slane %v3757, 6
        %v3810 = vmul.f32 %v3798, %v3808
        %v3811 = vadd.f32 %v3277, %v3810
        %v3812 = vtanh.pop %v3811
        %v3813 = vsub.f32 1.0, %v3806
        %v3814 = vmul.f32 %v3813, %v3812
        %v3816 = vrot.slane %v3259, 6
        %v3818 = vmul.f32 %v3806, %v3816
        %v3819 = vadd.f32 %v3814, %v3818
        %v3820 = vmul.f32 %v482, %v3819
        %v3821 = vadd.f32 %v3790, %v3820
        %v3822 = vmul.f32 %v3821, %v458
        %v3823 = vadd.f32 %v3822, %v466
        %vm3824 = vcmp.ge.f32.partialorder %v3823, 0.0
        %v3825 = vmul.f32 %v474, %v3823
        %v3826 = vsel %vm3824, %v3823, %v3825
        %3827 = vst.msk [vmem:[%s409 + $0x8] sm:$0xc] %vm1584, %v3826
        %v3828 = vld [vmem:[%s330 + $0xc] sm:$0x44]
        %v3829 = vld [vmem:[%s330 + $0x14] sm:$0x4]
        %v3830 = vunpack.c.l.bf16 %v3828
        %v3831 = vunpack.c.h.bf16 %v3828
        %v3832 = vunpack.c.l.bf16 %v3829
        %v3833 = vld [vmem:[%s337 + $0xc] sm:$0x44]
        %v3834 = vld [vmem:[%s337 + $0x14] sm:$0x4]
        %v3835 = vunpack.c.l.bf16 %v3833
        %v3836 = vunpack.c.h.bf16 %v3833
        %v3837 = vunpack.c.l.bf16 %v3834
        %v3838 = vpack.c.bf16 %v3790, %v3790
        %v3839 = vld [vmem:[%s392] sm:$0xff]
        %v3840 = vld [vmem:[%s392 + $0x8] sm:$0xf]
        %v3841 = vld [vmem:[%s392 + $0xc] sm:$0xff]
        %v3842 = vld [vmem:[%s392 + $0x14] sm:$0xf]
        %v3843 = vld [vmem:[%s392 + $0x18] sm:$0xff]
        %v3844 = vld [vmem:[%s392 + $0x20] sm:$0xf]
        %v3845 = vld [vmem:[%s392 + $0x24] sm:$0xff]
        %v3846 = vld [vmem:[%s392 + $0x2c] sm:$0xf]
        %v3847 = vld [vmem:[%s392 + $0x30] sm:$0xff]
        %v3848 = vld [vmem:[%s392 + $0x38] sm:$0xf]
        %v3849 = vld [vmem:[%s392 + $0x3c] sm:$0xff]
        %v3850 = vld [vmem:[%s392 + $0x44] sm:$0xf]
        %v3851 = vld [vmem:[%s392 + $0x48] sm:$0xff]
        %v3852 = vld [vmem:[%s392 + $0x50] sm:$0xf]
        %v3853 = vld [vmem:[%s392 + $0x54] sm:$0xff]
        %v3854 = vld [vmem:[%s392 + $0x5c] sm:$0xf]
        %v3855 = vld [vmem:[%s392 + $0x60] sm:$0xff]
        %v3856 = vld [vmem:[%s392 + $0x68] sm:$0xf]
        %v3857 = vld [vmem:[%s392 + $0x6c] sm:$0xff]
        %v3858 = vld [vmem:[%s392 + $0x74] sm:$0xf]
        %v3859 = vld [vmem:[%s392 + $0x78] sm:$0xff]
        %v3860 = vld [vmem:[%s392 + $0x80] sm:$0xf]
        %v3861 = vld [vmem:[%s392 + $0x84] sm:$0xff]
        %v3862 = vld [vmem:[%s392 + $0x8c] sm:$0xf]
        %v3863 = vld [vmem:[%s392 + $0x90] sm:$0xff]
        %v3864 = vld [vmem:[%s392 + $0x98] sm:$0xf]
        %v3865 = vld [vmem:[%s392 + $0x9c] sm:$0xff]
        %v3866 = vld [vmem:[%s392 + $0xa4] sm:$0xf]
        %v3867 = vld [vmem:[%s392 + $0xa8] sm:$0xff]
        %v3868 = vld [vmem:[%s392 + $0xb0] sm:$0xf]
        %v3869 = vld [vmem:[%s392 + $0xb4] sm:$0xff]
        %v3870 = vld [vmem:[%s392 + $0xbc] sm:$0xf]
        %v3872 = vrot.slane %v3838, 1
        %v3906 = vunpack.c.l.b16 %v3839
        %v3907 = vunpack.c.h.b16 %v3839
        %v3908 = vunpack.c.l.b16 %v3840
        %v3909 = vunpack.c.l.b16 %v3841
        %v3910 = vunpack.c.h.b16 %v3841
        %v3911 = vunpack.c.l.b16 %v3842
        %v3912 = vunpack.c.l.b16 %v3843
        %v3913 = vunpack.c.h.b16 %v3843
        %v3914 = vunpack.c.l.b16 %v3844
        %v3915 = vunpack.c.l.b16 %v3845
        %v3916 = vunpack.c.h.b16 %v3845
        %v3917 = vunpack.c.l.b16 %v3846
        %v3918 = vunpack.c.l.b16 %v3847
        %v3919 = vunpack.c.h.b16 %v3847
        %v3920 = vunpack.c.l.b16 %v3848
        %v3921 = vunpack.c.l.b16 %v3849
        %v3922 = vunpack.c.h.b16 %v3849
        %v3923 = vunpack.c.l.b16 %v3850
        %v3924 = vunpack.c.l.b16 %v3851
        %v3925 = vunpack.c.h.b16 %v3851
        %v3926 = vunpack.c.l.b16 %v3852
        %v3927 = vunpack.c.l.b16 %v3853
        %v3928 = vunpack.c.h.b16 %v3853
        %v3929 = vunpack.c.l.b16 %v3854
        %v3930 = vunpack.c.l.b16 %v3855
        %v3931 = vunpack.c.h.b16 %v3855
        %v3932 = vunpack.c.l.b16 %v3856
        %v3933 = vunpack.c.l.b16 %v3857
        %v3934 = vunpack.c.h.b16 %v3857
        %v3935 = vunpack.c.l.b16 %v3858
        %v3936 = vunpack.c.l.b16 %v3859
        %v3937 = vunpack.c.h.b16 %v3859
        %v3938 = vunpack.c.l.b16 %v3860
        %v3939 = vunpack.c.l.b16 %v3861
        %v3940 = vunpack.c.h.b16 %v3861
        %v3941 = vunpack.c.l.b16 %v3862
        %v3942 = vunpack.c.l.b16 %v3863
        %v3943 = vunpack.c.h.b16 %v3863
        %v3944 = vunpack.c.l.b16 %v3864
        %v3945 = vunpack.c.l.b16 %v3865
        %v3946 = vunpack.c.h.b16 %v3865
        %v3947 = vunpack.c.l.b16 %v3866
        %v3948 = vunpack.c.l.b16 %v3867
        %v3949 = vunpack.c.h.b16 %v3867
        %v3950 = vunpack.c.l.b16 %v3868
        %v3951 = vunpack.c.l.b16 %v3869
        %v3952 = vunpack.c.h.b16 %v3869
        %v3953 = vunpack.c.l.b16 %v3870
        %v3954 = vpack.c.b16 %v3909, %v3906
        %v3955 = vpack.c.b16 %v3910, %v3907
        %v3956 = vpack.c.b16 %v3911, %v3908
        %v3957 = vpack.c.b16 %v3915, %v3912
        %v3958 = vpack.c.b16 %v3916, %v3913
        %v3959 = vpack.c.b16 %v3917, %v3914
        %v3960 = vpack.c.b16 %v3921, %v3918
        %v3961 = vpack.c.b16 %v3922, %v3919
        %v3962 = vpack.c.b16 %v3923, %v3920
        %v3963 = vpack.c.b16 %v3927, %v3924
        %v3964 = vpack.c.b16 %v3928, %v3925
        %v3965 = vpack.c.b16 %v3929, %v3926
        %v3966 = vpack.c.b16 %v3933, %v3930
        %v3967 = vpack.c.b16 %v3934, %v3931
        %v3968 = vpack.c.b16 %v3935, %v3932
        %v3969 = vpack.c.b16 %v3939, %v3936
        %v3970 = vpack.c.b16 %v3940, %v3937
        %v3971 = vpack.c.b16 %v3941, %v3938
        %v3972 = vpack.c.b16 %v3945, %v3942
        %v3973 = vpack.c.b16 %v3946, %v3943
        %v3974 = vpack.c.b16 %v3947, %v3944
        %v3975 = vpack.c.b16 %v3951, %v3948
        %v3976 = vpack.c.b16 %v3952, %v3949
        %v3977 = vpack.c.b16 %v3953, %v3950
        %4002 = vmatprep.subr.bf16.mxu0 %v3955
        %4003 = vmatpush1.bf16.msra.mxu0 %v3954
        %4004 = vmatprep.subr.bf16.mxu0 %v3958
        %4005 = vmatpush1.bf16.msra.mxu0 %v3957
        %4006 = vmatprep.subr.bf16.mxu0 %v3961
        %4007 = vmatpush1.bf16.msra.mxu0 %v3960
        %4008 = vmatprep.subr.bf16.mxu0 %v3964
        %4009 = vmatpush1.bf16.msra.mxu0 %v3963
        %4010 = vmatprep.subr.bf16.mxu0 %v3967
        %4011 = vmatpush1.bf16.msra.mxu0 %v3966
        %4012 = vmatprep.subr.bf16.mxu0 %v3970
        %4013 = vmatpush1.bf16.msra.mxu0 %v3969
        %4014 = vmatprep.subr.bf16.mxu0 %v3973
        %4015 = vmatpush1.bf16.msra.mxu0 %v3972
        %4016 = vmatprep.subr.bf16.mxu0 %v3976
        %4017 = vmatpush1.bf16.msra.mxu0 %v3975
        %4018 = vmatprep.subr.bf16.mxu0 0
        %4019 = vmatpush1.bf16.msra.mxu0 0
        %4020 = vmatprep.subr.bf16.mxu0 0
        %4021 = vmatpush1.bf16.msra.mxu0 0
        %4022 = vmatprep.subr.bf16.mxu0 0
        %4023 = vmatpush1.bf16.msra.mxu0 0
        %4024 = vmatprep.subr.bf16.mxu0 0
        %4025 = vmatpush1.bf16.msra.mxu0 0
        %4026 = vmatprep.subr.bf16.mxu0 0
        %4027 = vmatpush1.bf16.msra.mxu0 0
        %4028 = vmatprep.subr.bf16.mxu0 0
        %4029 = vmatpush1.bf16.msra.mxu0 0
        %4030 = vmatprep.subr.bf16.mxu0 0
        %4031 = vmatpush1.bf16.msra.mxu0 0
        %4032 = vmatprep.subr.bf16.mxu0 0
        %4033 = vmatpush1.bf16.msra.mxu0 0
        %4034 = vmatprep.mubr.bf16.mxu0 0
        %4035 = vmatmul.mubr.bf16.gmra.mrb[0].mxu0 %v3872
        %v4036 = vpop.f32.mrb[0].mxu0
        %v4037 = vadd.f32 %v423, %v4036
        %v4038 = vpop.f32.mrb[0].mxu0
        %v4039 = vadd.f32 %v427, %v4038
        %v4040 = vpop.f32.mrb[0].mxu0
        %v4041 = vpop.f32.mrb[0].mxu0
        %4042 = vdwg.mxu0
        %4043 = vmatprep.subr.bf16.mxu0 0
        %4044 = vmatpush1.bf16.msra.mxu0 %v3956
        %4045 = vmatprep.subr.bf16.mxu0 0
        %4046 = vmatpush1.bf16.msra.mxu0 %v3959
        %4047 = vmatprep.subr.bf16.mxu0 0
        %4048 = vmatpush1.bf16.msra.mxu0 %v3962
        %4049 = vmatprep.subr.bf16.mxu0 0
        %4050 = vmatpush1.bf16.msra.mxu0 %v3965
        %4051 = vmatprep.subr.bf16.mxu0 0
        %4052 = vmatpush1.bf16.msra.mxu0 %v3968
        %4053 = vmatprep.subr.bf16.mxu0 0
        %4054 = vmatpush1.bf16.msra.mxu0 %v3971
        %4055 = vmatprep.subr.bf16.mxu0 0
        %4056 = vmatpush1.bf16.msra.mxu0 %v3974
        %4057 = vmatprep.subr.bf16.mxu0 0
        %4058 = vmatpush1.bf16.msra.mxu0 %v3977
        %4059 = vmatprep.subr.bf16.mxu0 0
        %4060 = vmatpush1.bf16.msra.mxu0 0
        %4061 = vmatprep.subr.bf16.mxu0 0
        %4062 = vmatpush1.bf16.msra.mxu0 0
        %4063 = vmatprep.subr.bf16.mxu0 0
        %4064 = vmatpush1.bf16.msra.mxu0 0
        %4065 = vmatprep.subr.bf16.mxu0 0
        %4066 = vmatpush1.bf16.msra.mxu0 0
        %4067 = vmatprep.subr.bf16.mxu0 0
        %4068 = vmatpush1.bf16.msra.mxu0 0
        %4069 = vmatprep.subr.bf16.mxu0 0
        %4070 = vmatpush1.bf16.msra.mxu0 0
        %4071 = vmatprep.subr.bf16.mxu0 0
        %4072 = vmatpush1.bf16.msra.mxu0 0
        %4073 = vmatprep.subr.bf16.mxu0 0
        %4074 = vmatpush1.bf16.msra.mxu0 0
        %4075 = vmatprep.mubr.bf16.mxu0 0
        %4076 = vmatmul.mubr.bf16.gmra.mrb[0].mxu0 %v3872
        %v4077 = vpop.f32.mrb[0].mxu0
        %v4078 = vadd.f32 %v431, %v4077
        %v4079 = vpop.f32.mrb[0].mxu0
        %v4080 = vpop.f32.mrb[0].mxu0
        %v4081 = vpop.f32.mrb[0].mxu0
        %4082 = vdwg.mxu0
        %v4083 = vpack.c.bf16 %v3819, %v3819
        %v4084 = vld [vmem:[%s740] sm:$0xff]
        %v4085 = vld [vmem:[%s740 + $0x8] sm:$0xf]
        %v4086 = vld [vmem:[%s740 + $0xc] sm:$0xff]
        %v4087 = vld [vmem:[%s740 + $0x14] sm:$0xf]
        %v4088 = vld [vmem:[%s740 + $0x18] sm:$0xff]
        %v4089 = vld [vmem:[%s740 + $0x20] sm:$0xf]
        %v4090 = vld [vmem:[%s740 + $0x24] sm:$0xff]
        %v4091 = vld [vmem:[%s740 + $0x2c] sm:$0xf]
        %v4092 = vld [vmem:[%s740 + $0x30] sm:$0xff]
        %v4093 = vld [vmem:[%s740 + $0x38] sm:$0xf]
        %v4094 = vld [vmem:[%s740 + $0x3c] sm:$0xff]
        %v4095 = vld [vmem:[%s740 + $0x44] sm:$0xf]
        %v4096 = vld [vmem:[%s740 + $0x48] sm:$0xff]
        %v4097 = vld [vmem:[%s740 + $0x50] sm:$0xf]
        %v4098 = vld [vmem:[%s740 + $0x54] sm:$0xff]
        %v4099 = vld [vmem:[%s740 + $0x5c] sm:$0xf]
        %v4100 = vld [vmem:[%s740 + $0x60] sm:$0xff]
        %v4101 = vld [vmem:[%s740 + $0x68] sm:$0xf]
        %v4102 = vld [vmem:[%s740 + $0x6c] sm:$0xff]
        %v4103 = vld [vmem:[%s740 + $0x74] sm:$0xf]
        %v4104 = vld [vmem:[%s740 + $0x78] sm:$0xff]
        %v4105 = vld [vmem:[%s740 + $0x80] sm:$0xf]
        %v4106 = vld [vmem:[%s740 + $0x84] sm:$0xff]
        %v4107 = vld [vmem:[%s740 + $0x8c] sm:$0xf]
        %v4108 = vld [vmem:[%s740 + $0x90] sm:$0xff]
        %v4109 = vld [vmem:[%s740 + $0x98] sm:$0xf]
        %v4110 = vld [vmem:[%s740 + $0x9c] sm:$0xff]
        %v4111 = vld [vmem:[%s740 + $0xa4] sm:$0xf]
        %v4112 = vld [vmem:[%s740 + $0xa8] sm:$0xff]
        %v4113 = vld [vmem:[%s740 + $0xb0] sm:$0xf]
        %v4114 = vld [vmem:[%s740 + $0xb4] sm:$0xff]
        %v4115 = vld [vmem:[%s740 + $0xbc] sm:$0xf]
        %v4117 = vrot.slane %v4083, 1
        %v4151 = vunpack.c.l.b16 %v4084
        %v4152 = vunpack.c.h.b16 %v4084
        %v4153 = vunpack.c.l.b16 %v4085
        %v4154 = vunpack.c.l.b16 %v4086
        %v4155 = vunpack.c.h.b16 %v4086
        %v4156 = vunpack.c.l.b16 %v4087
        %v4157 = vunpack.c.l.b16 %v4088
        %v4158 = vunpack.c.h.b16 %v4088
        %v4159 = vunpack.c.l.b16 %v4089
        %v4160 = vunpack.c.l.b16 %v4090
        %v4161 = vunpack.c.h.b16 %v4090
        %v4162 = vunpack.c.l.b16 %v4091
        %v4163 = vunpack.c.l.b16 %v4092
        %v4164 = vunpack.c.h.b16 %v4092
        %v4165 = vunpack.c.l.b16 %v4093
        %v4166 = vunpack.c.l.b16 %v4094
        %v4167 = vunpack.c.h.b16 %v4094
        %v4168 = vunpack.c.l.b16 %v4095
        %v4169 = vunpack.c.l.b16 %v4096
        %v4170 = vunpack.c.h.b16 %v4096
        %v4171 = vunpack.c.l.b16 %v4097
        %v4172 = vunpack.c.l.b16 %v4098
        %v4173 = vunpack.c.h.b16 %v4098
        %v4174 = vunpack.c.l.b16 %v4099
        %v4175 = vunpack.c.l.b16 %v4100
        %v4176 = vunpack.c.h.b16 %v4100
        %v4177 = vunpack.c.l.b16 %v4101
        %v4178 = vunpack.c.l.b16 %v4102
        %v4179 = vunpack.c.h.b16 %v4102
        %v4180 = vunpack.c.l.b16 %v4103
        %v4181 = vunpack.c.l.b16 %v4104
        %v4182 = vunpack.c.h.b16 %v4104
        %v4183 = vunpack.c.l.b16 %v4105
        %v4184 = vunpack.c.l.b16 %v4106
        %v4185 = vunpack.c.h.b16 %v4106
        %v4186 = vunpack.c.l.b16 %v4107
        %v4187 = vunpack.c.l.b16 %v4108
        %v4188 = vunpack.c.h.b16 %v4108
        %v4189 = vunpack.c.l.b16 %v4109
        %v4190 = vunpack.c.l.b16 %v4110
        %v4191 = vunpack.c.h.b16 %v4110
        %v4192 = vunpack.c.l.b16 %v4111
        %v4193 = vunpack.c.l.b16 %v4112
        %v4194 = vunpack.c.h.b16 %v4112
        %v4195 = vunpack.c.l.b16 %v4113
        %v4196 = vunpack.c.l.b16 %v4114
        %v4197 = vunpack.c.h.b16 %v4114
        %v4198 = vunpack.c.l.b16 %v4115
        %v4199 = vpack.c.b16 %v4154, %v4151
        %v4200 = vpack.c.b16 %v4155, %v4152
        %v4201 = vpack.c.b16 %v4156, %v4153
        %v4202 = vpack.c.b16 %v4160, %v4157
        %v4203 = vpack.c.b16 %v4161, %v4158
        %v4204 = vpack.c.b16 %v4162, %v4159
        %v4205 = vpack.c.b16 %v4166, %v4163
        %v4206 = vpack.c.b16 %v4167, %v4164
        %v4207 = vpack.c.b16 %v4168, %v4165
        %v4208 = vpack.c.b16 %v4172, %v4169
        %v4209 = vpack.c.b16 %v4173, %v4170
        %v4210 = vpack.c.b16 %v4174, %v4171
        %v4211 = vpack.c.b16 %v4178, %v4175
        %v4212 = vpack.c.b16 %v4179, %v4176
        %v4213 = vpack.c.b16 %v4180, %v4177
        %v4214 = vpack.c.b16 %v4184, %v4181
        %v4215 = vpack.c.b16 %v4185, %v4182
        %v4216 = vpack.c.b16 %v4186, %v4183
        %v4217 = vpack.c.b16 %v4190, %v4187
        %v4218 = vpack.c.b16 %v4191, %v4188
        %v4219 = vpack.c.b16 %v4192, %v4189
        %v4220 = vpack.c.b16 %v4196, %v4193
        %v4221 = vpack.c.b16 %v4197, %v4194
        %v4222 = vpack.c.b16 %v4198, %v4195
        %4247 = vmatprep.subr.bf16.mxu0 %v4200
        %4248 = vmatpush1.bf16.msra.mxu0 %v4199
        %4249 = vmatprep.subr.bf16.mxu0 %v4203
        %4250 = vmatpush1.bf16.msra.mxu0 %v4202
        %4251 = vmatprep.subr.bf16.mxu0 %v4206
        %4252 = vmatpush1.bf16.msra.mxu0 %v4205
        %4253 = vmatprep.subr.bf16.mxu0 %v4209
        %4254 = vmatpush1.bf16.msra.mxu0 %v4208
        %4255 = vmatprep.subr.bf16.mxu0 %v4212
        %4256 = vmatpush1.bf16.msra.mxu0 %v4211
        %4257 = vmatprep.subr.bf16.mxu0 %v4215
        %4258 = vmatpush1.bf16.msra.mxu0 %v4214
        %4259 = vmatprep.subr.bf16.mxu0 %v4218
        %4260 = vmatpush1.bf16.msra.mxu0 %v4217
        %4261 = vmatprep.subr.bf16.mxu0 %v4221
        %4262 = vmatpush1.bf16.msra.mxu0 %v4220
        %4263 = vmatprep.subr.bf16.mxu0 0
        %4264 = vmatpush1.bf16.msra.mxu0 0
        %4265 = vmatprep.subr.bf16.mxu0 0
        %4266 = vmatpush1.bf16.msra.mxu0 0
        %4267 = vmatprep.subr.bf16.mxu0 0
        %4268 = vmatpush1.bf16.msra.mxu0 0
        %4269 = vmatprep.subr.bf16.mxu0 0
        %4270 = vmatpush1.bf16.msra.mxu0 0
        %4271 = vmatprep.subr.bf16.mxu0 0
        %4272 = vmatpush1.bf16.msra.mxu0 0
        %4273 = vmatprep.subr.bf16.mxu0 0
        %4274 = vmatpush1.bf16.msra.mxu0 0
        %4275 = vmatprep.subr.bf16.mxu0 0
        %4276 = vmatpush1.bf16.msra.mxu0 0
        %4277 = vmatprep.subr.bf16.mxu0 0
        %4278 = vmatpush1.bf16.msra.mxu0 0
        %4279 = vmatprep.mubr.bf16.mxu0 0
        %4280 = vmatmul.mubr.bf16.gmra.mrb[0].mxu0 %v4117
        %v4281 = vpop.f32.mrb[0].mxu0
        %v4282 = vadd.f32 %v441, %v4281
        %v4283 = vpop.f32.mrb[0].mxu0
        %v4284 = vadd.f32 %v445, %v4283
        %v4285 = vpop.f32.mrb[0].mxu0
        %v4286 = vpop.f32.mrb[0].mxu0
        %4287 = vdwg.mxu0
        %4288 = vmatprep.subr.bf16.mxu0 0
        %4289 = vmatpush1.bf16.msra.mxu0 %v4201
        %4290 = vmatprep.subr.bf16.mxu0 0
        %4291 = vmatpush1.bf16.msra.mxu0 %v4204
        %4292 = vmatprep.subr.bf16.mxu0 0
        %4293 = vmatpush1.bf16.msra.mxu0 %v4207
        %4294 = vmatprep.subr.bf16.mxu0 0
        %4295 = vmatpush1.bf16.msra.mxu0 %v4210
        %4296 = vmatprep.subr.bf16.mxu0 0
        %4297 = vmatpush1.bf16.msra.mxu0 %v4213
        %4298 = vmatprep.subr.bf16.mxu0 0
        %4299 = vmatpush1.bf16.msra.mxu0 %v4216
        %4300 = vmatprep.subr.bf16.mxu0 0
        %4301 = vmatpush1.bf16.msra.mxu0 %v4219
        %4302 = vmatprep.subr.bf16.mxu0 0
        %4303 = vmatpush1.bf16.msra.mxu0 %v4222
        %4304 = vmatprep.subr.bf16.mxu0 0
        %4305 = vmatpush1.bf16.msra.mxu0 0
        %4306 = vmatprep.subr.bf16.mxu0 0
        %4307 = vmatpush1.bf16.msra.mxu0 0
        %4308 = vmatprep.subr.bf16.mxu0 0
        %4309 = vmatpush1.bf16.msra.mxu0 0
        %4310 = vmatprep.subr.bf16.mxu0 0
        %4311 = vmatpush1.bf16.msra.mxu0 0
        %4312 = vmatprep.subr.bf16.mxu0 0
        %4313 = vmatpush1.bf16.msra.mxu0 0
        %4314 = vmatprep.subr.bf16.mxu0 0
        %4315 = vmatpush1.bf16.msra.mxu0 0
        %4316 = vmatprep.subr.bf16.mxu0 0
        %4317 = vmatpush1.bf16.msra.mxu0 0
        %4318 = vmatprep.subr.bf16.mxu0 0
        %4319 = vmatpush1.bf16.msra.mxu0 0
        %4320 = vmatprep.mubr.bf16.mxu0 0
        %4321 = vmatmul.mubr.bf16.gmra.mrb[0].mxu0 %v4117
        %v4322 = vpop.f32.mrb[0].mxu0
        %v4323 = vadd.f32 %v449, %v4322
        %v4324 = vpop.f32.mrb[0].mxu0
        %v4325 = vpop.f32.mrb[0].mxu0
        %v4326 = vpop.f32.mrb[0].mxu0
        %4327 = vdwg.mxu0
        %v4329 = vrot.slane %v4037, 4
        %v4331 = vadd.f32 %v3830, %v4329
        %v4332 = vmul.f32 %v4331, 0.5
        %v4333 = vtanh.pop %v4332
        %v4334 = vmul.f32 %v4333, 0.5
        %v4335 = vadd.f32 %v4334, 0.5
        %v4337 = vrot.slane %v4039, 4
        %v4339 = vadd.f32 %v3831, %v4337
        %v4340 = vmul.f32 %v4339, 0.5
        %v4341 = vtanh.pop %v4340
        %v4342 = vmul.f32 %v4341, 0.5
        %v4343 = vadd.f32 %v4342, 0.5
        %v4345 = vrot.slane %v4078, 4
        %v4347 = vmul.f32 %v4335, %v4345
        %v4348 = vadd.f32 %v3832, %v4347
        %v4349 = vtanh.pop %v4348
        %v4350 = vsub.f32 1.0, %v4343
        %v4351 = vmul.f32 %v4350, %v4349
        %v4353 = vrot.slane %v3790, 6
        %v4355 = vmul.f32 %v4343, %v4353
        %v4356 = vadd.f32 %v4351, %v4355
        %v4358 = vrot.slane %v4282, 4
        %v4360 = vadd.f32 %v3835, %v4358
        %v4361 = vmul.f32 %v4360, 0.5
        %v4362 = vtanh.pop %v4361
        %v4363 = vmul.f32 %v4362, 0.5
        %v4364 = vadd.f32 %v4363, 0.5
        %v4366 = vrot.slane %v4284, 4
        %v4368 = vadd.f32 %v3836, %v4366
        %v4369 = vmul.f32 %v4368, 0.5
        %v4370 = vtanh.pop %v4369
        %v4371 = vmul.f32 %v4370, 0.5
        %v4372 = vadd.f32 %v4371, 0.5
        %v4374 = vrot.slane %v4323, 4
        %v4376 = vmul.f32 %v4364, %v4374
        %v4377 = vadd.f32 %v3837, %v4376
        %v4378 = vtanh.pop %v4377
        %v4379 = vsub.f32 1.0, %v4372
        %v4380 = vmul.f32 %v4379, %v4378
        %v4382 = vrot.slane %v3819, 6
        %v4384 = vmul.f32 %v4372, %v4382
        %v4385 = vadd.f32 %v4380, %v4384
        %v4386 = vmul.f32 %v482, %v4385
        %v4387 = vadd.f32 %v4356, %v4386
        %v4388 = vmul.f32 %v4387, %v458
        %v4389 = vadd.f32 %v4388, %v466
        %vm4390 = vcmp.ge.f32.partialorder %v4389, 0.0
        %v4391 = vmul.f32 %v474, %v4389
        %v4392 = vsel %vm4390, %v4389, %v4391
        %4393 = vst.msk [vmem:[%s409 + $0x8] sm:$0x30] %vm2151, %v4392
        %v4394 = vld [vmem:[%s330 + $0xc] sm:$0x88]
        %v4395 = vld [vmem:[%s330 + $0x14] sm:$0x8]
        %v4396 = vunpack.c.l.bf16 %v4394
        %v4397 = vunpack.c.h.bf16 %v4394
        %v4398 = vunpack.c.l.bf16 %v4395
        %v4399 = vld [vmem:[%s337 + $0xc] sm:$0x88]
        %v4400 = vld [vmem:[%s337 + $0x14] sm:$0x8]
        %v4401 = vunpack.c.l.bf16 %v4399
        %v4402 = vunpack.c.h.bf16 %v4399
        %v4403 = vunpack.c.l.bf16 %v4400
        %v4404 = vpack.c.bf16 %v4356, %v4356
        %v4405 = vld [vmem:[%s392] sm:$0xff]
        %v4406 = vld [vmem:[%s392 + $0x8] sm:$0xf]
        %v4407 = vld [vmem:[%s392 + $0xc] sm:$0xff]
        %v4408 = vld [vmem:[%s392 + $0x14] sm:$0xf]
        %v4409 = vld [vmem:[%s392 + $0x18] sm:$0xff]
        %v4410 = vld [vmem:[%s392 + $0x20] sm:$0xf]
        %v4411 = vld [vmem:[%s392 + $0x24] sm:$0xff]
        %v4412 = vld [vmem:[%s392 + $0x2c] sm:$0xf]
        %v4413 = vld [vmem:[%s392 + $0x30] sm:$0xff]
        %v4414 = vld [vmem:[%s392 + $0x38] sm:$0xf]
        %v4415 = vld [vmem:[%s392 + $0x3c] sm:$0xff]
        %v4416 = vld [vmem:[%s392 + $0x44] sm:$0xf]
        %v4417 = vld [vmem:[%s392 + $0x48] sm:$0xff]
        %v4418 = vld [vmem:[%s392 + $0x50] sm:$0xf]
        %v4419 = vld [vmem:[%s392 + $0x54] sm:$0xff]
        %v4420 = vld [vmem:[%s392 + $0x5c] sm:$0xf]
        %v4421 = vld [vmem:[%s392 + $0x60] sm:$0xff]
        %v4422 = vld [vmem:[%s392 + $0x68] sm:$0xf]
        %v4423 = vld [vmem:[%s392 + $0x6c] sm:$0xff]
        %v4424 = vld [vmem:[%s392 + $0x74] sm:$0xf]
        %v4425 = vld [vmem:[%s392 + $0x78] sm:$0xff]
        %v4426 = vld [vmem:[%s392 + $0x80] sm:$0xf]
        %v4427 = vld [vmem:[%s392 + $0x84] sm:$0xff]
        %v4428 = vld [vmem:[%s392 + $0x8c] sm:$0xf]
        %v4429 = vld [vmem:[%s392 + $0x90] sm:$0xff]
        %v4430 = vld [vmem:[%s392 + $0x98] sm:$0xf]
        %v4431 = vld [vmem:[%s392 + $0x9c] sm:$0xff]
        %v4432 = vld [vmem:[%s392 + $0xa4] sm:$0xf]
        %v4433 = vld [vmem:[%s392 + $0xa8] sm:$0xff]
        %v4434 = vld [vmem:[%s392 + $0xb0] sm:$0xf]
        %v4435 = vld [vmem:[%s392 + $0xb4] sm:$0xff]
        %v4436 = vld [vmem:[%s392 + $0xbc] sm:$0xf]
        %v4438 = vrot.slane %v4404, 2
        %v4472 = vunpack.c.l.b16 %v4405
        %v4473 = vunpack.c.h.b16 %v4405
        %v4474 = vunpack.c.l.b16 %v4406
        %v4475 = vunpack.c.l.b16 %v4407
        %v4476 = vunpack.c.h.b16 %v4407
        %v4477 = vunpack.c.l.b16 %v4408
        %v4478 = vunpack.c.l.b16 %v4409
        %v4479 = vunpack.c.h.b16 %v4409
        %v4480 = vunpack.c.l.b16 %v4410
        %v4481 = vunpack.c.l.b16 %v4411
        %v4482 = vunpack.c.h.b16 %v4411
        %v4483 = vunpack.c.l.b16 %v4412
        %v4484 = vunpack.c.l.b16 %v4413
        %v4485 = vunpack.c.h.b16 %v4413
        %v4486 = vunpack.c.l.b16 %v4414
        %v4487 = vunpack.c.l.b16 %v4415
        %v4488 = vunpack.c.h.b16 %v4415
        %v4489 = vunpack.c.l.b16 %v4416
        %v4490 = vunpack.c.l.b16 %v4417
        %v4491 = vunpack.c.h.b16 %v4417
        %v4492 = vunpack.c.l.b16 %v4418
        %v4493 = vunpack.c.l.b16 %v4419
        %v4494 = vunpack.c.h.b16 %v4419
        %v4495 = vunpack.c.l.b16 %v4420
        %v4496 = vunpack.c.l.b16 %v4421
        %v4497 = vunpack.c.h.b16 %v4421
        %v4498 = vunpack.c.l.b16 %v4422
        %v4499 = vunpack.c.l.b16 %v4423
        %v4500 = vunpack.c.h.b16 %v4423
        %v4501 = vunpack.c.l.b16 %v4424
        %v4502 = vunpack.c.l.b16 %v4425
        %v4503 = vunpack.c.h.b16 %v4425
        %v4504 = vunpack.c.l.b16 %v4426
        %v4505 = vunpack.c.l.b16 %v4427
        %v4506 = vunpack.c.h.b16 %v4427
        %v4507 = vunpack.c.l.b16 %v4428
        %v4508 = vunpack.c.l.b16 %v4429
        %v4509 = vunpack.c.h.b16 %v4429
        %v4510 = vunpack.c.l.b16 %v4430
        %v4511 = vunpack.c.l.b16 %v4431
        %v4512 = vunpack.c.h.b16 %v4431
        %v4513 = vunpack.c.l.b16 %v4432
        %v4514 = vunpack.c.l.b16 %v4433
        %v4515 = vunpack.c.h.b16 %v4433
        %v4516 = vunpack.c.l.b16 %v4434
        %v4517 = vunpack.c.l.b16 %v4435
        %v4518 = vunpack.c.h.b16 %v4435
        %v4519 = vunpack.c.l.b16 %v4436
        %v4520 = vpack.c.b16 %v4475, %v4472
        %v4521 = vpack.c.b16 %v4476, %v4473
        %v4522 = vpack.c.b16 %v4477, %v4474
        %v4523 = vpack.c.b16 %v4481, %v4478
        %v4524 = vpack.c.b16 %v4482, %v4479
        %v4525 = vpack.c.b16 %v4483, %v4480
        %v4526 = vpack.c.b16 %v4487, %v4484
        %v4527 = vpack.c.b16 %v4488, %v4485
        %v4528 = vpack.c.b16 %v4489, %v4486
        %v4529 = vpack.c.b16 %v4493, %v4490
        %v4530 = vpack.c.b16 %v4494, %v4491
        %v4531 = vpack.c.b16 %v4495, %v4492
        %v4532 = vpack.c.b16 %v4499, %v4496
        %v4533 = vpack.c.b16 %v4500, %v4497
        %v4534 = vpack.c.b16 %v4501, %v4498
        %v4535 = vpack.c.b16 %v4505, %v4502
        %v4536 = vpack.c.b16 %v4506, %v4503
        %v4537 = vpack.c.b16 %v4507, %v4504
        %v4538 = vpack.c.b16 %v4511, %v4508
        %v4539 = vpack.c.b16 %v4512, %v4509
        %v4540 = vpack.c.b16 %v4513, %v4510
        %v4541 = vpack.c.b16 %v4517, %v4514
        %v4542 = vpack.c.b16 %v4518, %v4515
        %v4543 = vpack.c.b16 %v4519, %v4516
        %4568 = vmatprep.subr.bf16.mxu0 %v4521
        %4569 = vmatpush1.bf16.msra.mxu0 %v4520
        %4570 = vmatprep.subr.bf16.mxu0 %v4524
        %4571 = vmatpush1.bf16.msra.mxu0 %v4523
        %4572 = vmatprep.subr.bf16.mxu0 %v4527
        %4573 = vmatpush1.bf16.msra.mxu0 %v4526
        %4574 = vmatprep.subr.bf16.mxu0 %v4530
        %4575 = vmatpush1.bf16.msra.mxu0 %v4529
        %4576 = vmatprep.subr.bf16.mxu0 %v4533
        %4577 = vmatpush1.bf16.msra.mxu0 %v4532
        %4578 = vmatprep.subr.bf16.mxu0 %v4536
        %4579 = vmatpush1.bf16.msra.mxu0 %v4535
        %4580 = vmatprep.subr.bf16.mxu0 %v4539
        %4581 = vmatpush1.bf16.msra.mxu0 %v4538
        %4582 = vmatprep.subr.bf16.mxu0 %v4542
        %4583 = vmatpush1.bf16.msra.mxu0 %v4541
        %4584 = vmatprep.subr.bf16.mxu0 0
        %4585 = vmatpush1.bf16.msra.mxu0 0
        %4586 = vmatprep.subr.bf16.mxu0 0
        %4587 = vmatpush1.bf16.msra.mxu0 0
        %4588 = vmatprep.subr.bf16.mxu0 0
        %4589 = vmatpush1.bf16.msra.mxu0 0
        %4590 = vmatprep.subr.bf16.mxu0 0
        %4591 = vmatpush1.bf16.msra.mxu0 0
        %4592 = vmatprep.subr.bf16.mxu0 0
        %4593 = vmatpush1.bf16.msra.mxu0 0
        %4594 = vmatprep.subr.bf16.mxu0 0
        %4595 = vmatpush1.bf16.msra.mxu0 0
        %4596 = vmatprep.subr.bf16.mxu0 0
        %4597 = vmatpush1.bf16.msra.mxu0 0
        %4598 = vmatprep.subr.bf16.mxu0 0
        %4599 = vmatpush1.bf16.msra.mxu0 0
        %4600 = vmatprep.mubr.bf16.mxu0 0
        %4601 = vmatmul.mubr.bf16.gmra.mrb[0].mxu0 %v4438
        %v4602 = vpop.f32.mrb[0].mxu0
        %v4603 = vadd.f32 %v423, %v4602
        %v4604 = vpop.f32.mrb[0].mxu0
        %v4605 = vadd.f32 %v427, %v4604
        %v4606 = vpop.f32.mrb[0].mxu0
        %v4607 = vpop.f32.mrb[0].mxu0
        %4608 = vdwg.mxu0
        %4609 = vmatprep.subr.bf16.mxu0 0
        %4610 = vmatpush1.bf16.msra.mxu0 %v4522
        %4611 = vmatprep.subr.bf16.mxu0 0
        %4612 = vmatpush1.bf16.msra.mxu0 %v4525
        %4613 = vmatprep.subr.bf16.mxu0 0
        %4614 = vmatpush1.bf16.msra.mxu0 %v4528
        %4615 = vmatprep.subr.bf16.mxu0 0
        %4616 = vmatpush1.bf16.msra.mxu0 %v4531
        %4617 = vmatprep.subr.bf16.mxu0 0
        %4618 = vmatpush1.bf16.msra.mxu0 %v4534
        %4619 = vmatprep.subr.bf16.mxu0 0
        %4620 = vmatpush1.bf16.msra.mxu0 %v4537
        %4621 = vmatprep.subr.bf16.mxu0 0
        %4622 = vmatpush1.bf16.msra.mxu0 %v4540
        %4623 = vmatprep.subr.bf16.mxu0 0
        %4624 = vmatpush1.bf16.msra.mxu0 %v4543
        %4625 = vmatprep.subr.bf16.mxu0 0
        %4626 = vmatpush1.bf16.msra.mxu0 0
        %4627 = vmatprep.subr.bf16.mxu0 0
        %4628 = vmatpush1.bf16.msra.mxu0 0
        %4629 = vmatprep.subr.bf16.mxu0 0
        %4630 = vmatpush1.bf16.msra.mxu0 0
        %4631 = vmatprep.subr.bf16.mxu0 0
        %4632 = vmatpush1.bf16.msra.mxu0 0
        %4633 = vmatprep.subr.bf16.mxu0 0
        %4634 = vmatpush1.bf16.msra.mxu0 0
        %4635 = vmatprep.subr.bf16.mxu0 0
        %4636 = vmatpush1.bf16.msra.mxu0 0
        %4637 = vmatprep.subr.bf16.mxu0 0
        %4638 = vmatpush1.bf16.msra.mxu0 0
        %4639 = vmatprep.subr.bf16.mxu0 0
        %4640 = vmatpush1.bf16.msra.mxu0 0
        %4641 = vmatprep.mubr.bf16.mxu0 0
        %4642 = vmatmul.mubr.bf16.gmra.mrb[0].mxu0 %v4438
        %v4643 = vpop.f32.mrb[0].mxu0
        %v4644 = vadd.f32 %v431, %v4643
        %v4645 = vpop.f32.mrb[0].mxu0
        %v4646 = vpop.f32.mrb[0].mxu0
        %v4647 = vpop.f32.mrb[0].mxu0
        %4648 = vdwg.mxu0
        %v4649 = vpack.c.bf16 %v4385, %v4385
        %v4650 = vld [vmem:[%s740] sm:$0xff]
        %v4651 = vld [vmem:[%s740 + $0x8] sm:$0xf]
        %v4652 = vld [vmem:[%s740 + $0xc] sm:$0xff]
        %v4653 = vld [vmem:[%s740 + $0x14] sm:$0xf]
        %v4654 = vld [vmem:[%s740 + $0x18] sm:$0xff]
        %v4655 = vld [vmem:[%s740 + $0x20] sm:$0xf]
        %v4656 = vld [vmem:[%s740 + $0x24] sm:$0xff]
        %v4657 = vld [vmem:[%s740 + $0x2c] sm:$0xf]
        %v4658 = vld [vmem:[%s740 + $0x30] sm:$0xff]
        %v4659 = vld [vmem:[%s740 + $0x38] sm:$0xf]
        %v4660 = vld [vmem:[%s740 + $0x3c] sm:$0xff]
        %v4661 = vld [vmem:[%s740 + $0x44] sm:$0xf]
        %v4662 = vld [vmem:[%s740 + $0x48] sm:$0xff]
        %v4663 = vld [vmem:[%s740 + $0x50] sm:$0xf]
        %v4664 = vld [vmem:[%s740 + $0x54] sm:$0xff]
        %v4665 = vld [vmem:[%s740 + $0x5c] sm:$0xf]
        %v4666 = vld [vmem:[%s740 + $0x60] sm:$0xff]
        %v4667 = vld [vmem:[%s740 + $0x68] sm:$0xf]
        %v4668 = vld [vmem:[%s740 + $0x6c] sm:$0xff]
        %v4669 = vld [vmem:[%s740 + $0x74] sm:$0xf]
        %v4670 = vld [vmem:[%s740 + $0x78] sm:$0xff]
        %v4671 = vld [vmem:[%s740 + $0x80] sm:$0xf]
        %v4672 = vld [vmem:[%s740 + $0x84] sm:$0xff]
        %v4673 = vld [vmem:[%s740 + $0x8c] sm:$0xf]
        %v4674 = vld [vmem:[%s740 + $0x90] sm:$0xff]
        %v4675 = vld [vmem:[%s740 + $0x98] sm:$0xf]
        %v4676 = vld [vmem:[%s740 + $0x9c] sm:$0xff]
        %v4677 = vld [vmem:[%s740 + $0xa4] sm:$0xf]
        %v4678 = vld [vmem:[%s740 + $0xa8] sm:$0xff]
        %v4679 = vld [vmem:[%s740 + $0xb0] sm:$0xf]
        %v4680 = vld [vmem:[%s740 + $0xb4] sm:$0xff]
        %v4681 = vld [vmem:[%s740 + $0xbc] sm:$0xf]
        %v4683 = vrot.slane %v4649, 2
        %v4717 = vunpack.c.l.b16 %v4650
        %v4718 = vunpack.c.h.b16 %v4650
        %v4719 = vunpack.c.l.b16 %v4651
        %v4720 = vunpack.c.l.b16 %v4652
        %v4721 = vunpack.c.h.b16 %v4652
        %v4722 = vunpack.c.l.b16 %v4653
        %v4723 = vunpack.c.l.b16 %v4654
        %v4724 = vunpack.c.h.b16 %v4654
        %v4725 = vunpack.c.l.b16 %v4655
        %v4726 = vunpack.c.l.b16 %v4656
        %v4727 = vunpack.c.h.b16 %v4656
        %v4728 = vunpack.c.l.b16 %v4657
        %v4729 = vunpack.c.l.b16 %v4658
        %v4730 = vunpack.c.h.b16 %v4658
        %v4731 = vunpack.c.l.b16 %v4659
        %v4732 = vunpack.c.l.b16 %v4660
        %v4733 = vunpack.c.h.b16 %v4660
        %v4734 = vunpack.c.l.b16 %v4661
        %v4735 = vunpack.c.l.b16 %v4662
        %v4736 = vunpack.c.h.b16 %v4662
        %v4737 = vunpack.c.l.b16 %v4663
        %v4738 = vunpack.c.l.b16 %v4664
        %v4739 = vunpack.c.h.b16 %v4664
        %v4740 = vunpack.c.l.b16 %v4665
        %v4741 = vunpack.c.l.b16 %v4666
        %v4742 = vunpack.c.h.b16 %v4666
        %v4743 = vunpack.c.l.b16 %v4667
        %v4744 = vunpack.c.l.b16 %v4668
        %v4745 = vunpack.c.h.b16 %v4668
        %v4746 = vunpack.c.l.b16 %v4669
        %v4747 = vunpack.c.l.b16 %v4670
        %v4748 = vunpack.c.h.b16 %v4670
        %v4749 = vunpack.c.l.b16 %v4671
        %v4750 = vunpack.c.l.b16 %v4672
        %v4751 = vunpack.c.h.b16 %v4672
        %v4752 = vunpack.c.l.b16 %v4673
        %v4753 = vunpack.c.l.b16 %v4674
        %v4754 = vunpack.c.h.b16 %v4674
        %v4755 = vunpack.c.l.b16 %v4675
        %v4756 = vunpack.c.l.b16 %v4676
        %v4757 = vunpack.c.h.b16 %v4676
        %v4758 = vunpack.c.l.b16 %v4677
        %v4759 = vunpack.c.l.b16 %v4678
        %v4760 = vunpack.c.h.b16 %v4678
        %v4761 = vunpack.c.l.b16 %v4679
        %v4762 = vunpack.c.l.b16 %v4680
        %v4763 = vunpack.c.h.b16 %v4680
        %v4764 = vunpack.c.l.b16 %v4681
        %v4765 = vpack.c.b16 %v4720, %v4717
        %v4766 = vpack.c.b16 %v4721, %v4718
        %v4767 = vpack.c.b16 %v4722, %v4719
        %v4768 = vpack.c.b16 %v4726, %v4723
        %v4769 = vpack.c.b16 %v4727, %v4724
        %v4770 = vpack.c.b16 %v4728, %v4725
        %v4771 = vpack.c.b16 %v4732, %v4729
        %v4772 = vpack.c.b16 %v4733, %v4730
        %v4773 = vpack.c.b16 %v4734, %v4731
        %v4774 = vpack.c.b16 %v4738, %v4735
        %v4775 = vpack.c.b16 %v4739, %v4736
        %v4776 = vpack.c.b16 %v4740, %v4737
        %v4777 = vpack.c.b16 %v4744, %v4741
        %v4778 = vpack.c.b16 %v4745, %v4742
        %v4779 = vpack.c.b16 %v4746, %v4743
        %v4780 = vpack.c.b16 %v4750, %v4747
        %v4781 = vpack.c.b16 %v4751, %v4748
        %v4782 = vpack.c.b16 %v4752, %v4749
        %v4783 = vpack.c.b16 %v4756, %v4753
        %v4784 = vpack.c.b16 %v4757, %v4754
        %v4785 = vpack.c.b16 %v4758, %v4755
        %v4786 = vpack.c.b16 %v4762, %v4759
        %v4787 = vpack.c.b16 %v4763, %v4760
        %v4788 = vpack.c.b16 %v4764, %v4761
        %4813 = vmatprep.subr.bf16.mxu0 %v4766
        %4814 = vmatpush1.bf16.msra.mxu0 %v4765
        %4815 = vmatprep.subr.bf16.mxu0 %v4769
        %4816 = vmatpush1.bf16.msra.mxu0 %v4768
        %4817 = vmatprep.subr.bf16.mxu0 %v4772
        %4818 = vmatpush1.bf16.msra.mxu0 %v4771
        %4819 = vmatprep.subr.bf16.mxu0 %v4775
        %4820 = vmatpush1.bf16.msra.mxu0 %v4774
        %4821 = vmatprep.subr.bf16.mxu0 %v4778
        %4822 = vmatpush1.bf16.msra.mxu0 %v4777
        %4823 = vmatprep.subr.bf16.mxu0 %v4781
        %4824 = vmatpush1.bf16.msra.mxu0 %v4780
        %4825 = vmatprep.subr.bf16.mxu0 %v4784
        %4826 = vmatpush1.bf16.msra.mxu0 %v4783
        %4827 = vmatprep.subr.bf16.mxu0 %v4787
        %4828 = vmatpush1.bf16.msra.mxu0 %v4786
        %4829 = vmatprep.subr.bf16.mxu0 0
        %4830 = vmatpush1.bf16.msra.mxu0 0
        %4831 = vmatprep.subr.bf16.mxu0 0
        %4832 = vmatpush1.bf16.msra.mxu0 0
        %4833 = vmatprep.subr.bf16.mxu0 0
        %4834 = vmatpush1.bf16.msra.mxu0 0
        %4835 = vmatprep.subr.bf16.mxu0 0
        %4836 = vmatpush1.bf16.msra.mxu0 0
        %4837 = vmatprep.subr.bf16.mxu0 0
        %4838 = vmatpush1.bf16.msra.mxu0 0
        %4839 = vmatprep.subr.bf16.mxu0 0
        %4840 = vmatpush1.bf16.msra.mxu0 0
        %4841 = vmatprep.subr.bf16.mxu0 0
        %4842 = vmatpush1.bf16.msra.mxu0 0
        %4843 = vmatprep.subr.bf16.mxu0 0
        %4844 = vmatpush1.bf16.msra.mxu0 0
        %4845 = vmatprep.mubr.bf16.mxu0 0
        %4846 = vmatmul.mubr.bf16.gmra.mrb[0].mxu0 %v4683
        %v4847 = vpop.f32.mrb[0].mxu0
        %v4848 = vadd.f32 %v441, %v4847
        %v4849 = vpop.f32.mrb[0].mxu0
        %v4850 = vadd.f32 %v445, %v4849
        %v4851 = vpop.f32.mrb[0].mxu0
        %v4852 = vpop.f32.mrb[0].mxu0
        %4853 = vdwg.mxu0
        %4854 = vmatprep.subr.bf16.mxu0 0
        %4855 = vmatpush1.bf16.msra.mxu0 %v4767
        %4856 = vmatprep.subr.bf16.mxu0 0
        %4857 = vmatpush1.bf16.msra.mxu0 %v4770
        %4858 = vmatprep.subr.bf16.mxu0 0
        %4859 = vmatpush1.bf16.msra.mxu0 %v4773
        %4860 = vmatprep.subr.bf16.mxu0 0
        %4861 = vmatpush1.bf16.msra.mxu0 %v4776
        %4862 = vmatprep.subr.bf16.mxu0 0
        %4863 = vmatpush1.bf16.msra.mxu0 %v4779
        %4864 = vmatprep.subr.bf16.mxu0 0
        %4865 = vmatpush1.bf16.msra.mxu0 %v4782
        %4866 = vmatprep.subr.bf16.mxu0 0
        %4867 = vmatpush1.bf16.msra.mxu0 %v4785
        %4868 = vmatprep.subr.bf16.mxu0 0
        %4869 = vmatpush1.bf16.msra.mxu0 %v4788
        %4870 = vmatprep.subr.bf16.mxu0 0
        %4871 = vmatpush1.bf16.msra.mxu0 0
        %4872 = vmatprep.subr.bf16.mxu0 0
        %4873 = vmatpush1.bf16.msra.mxu0 0
        %4874 = vmatprep.subr.bf16.mxu0 0
        %4875 = vmatpush1.bf16.msra.mxu0 0
        %4876 = vmatprep.subr.bf16.mxu0 0
        %4877 = vmatpush1.bf16.msra.mxu0 0
        %4878 = vmatprep.subr.bf16.mxu0 0
        %4879 = vmatpush1.bf16.msra.mxu0 0
        %4880 = vmatprep.subr.bf16.mxu0 0
        %4881 = vmatpush1.bf16.msra.mxu0 0
        %4882 = vmatprep.subr.bf16.mxu0 0
        %4883 = vmatpush1.bf16.msra.mxu0 0
        %4884 = vmatprep.subr.bf16.mxu0 0
        %4885 = vmatpush1.bf16.msra.mxu0 0
        %4886 = vmatprep.mubr.bf16.mxu0 0
        %4887 = vmatmul.mubr.bf16.gmra.mrb[0].mxu0 %v4683
        %v4888 = vpop.f32.mrb[0].mxu0
        %v4889 = vadd.f32 %v449, %v4888
        %v4890 = vpop.f32.mrb[0].mxu0
        %v4891 = vpop.f32.mrb[0].mxu0
        %v4892 = vpop.f32.mrb[0].mxu0
        %4893 = vdwg.mxu0
        %v4895 = vrot.slane %v4603, 2
        %v4897 = vadd.f32 %v4396, %v4895
        %v4898 = vmul.f32 %v4897, 0.5
        %v4899 = vtanh.pop %v4898
        %v4900 = vmul.f32 %v4899, 0.5
        %v4901 = vadd.f32 %v4900, 0.5
        %v4903 = vrot.slane %v4605, 2
        %v4905 = vadd.f32 %v4397, %v4903
        %v4906 = vmul.f32 %v4905, 0.5
        %v4907 = vtanh.pop %v4906
        %v4908 = vmul.f32 %v4907, 0.5
        %v4909 = vadd.f32 %v4908, 0.5
        %v4911 = vrot.slane %v4644, 2
        %v4913 = vmul.f32 %v4901, %v4911
        %v4914 = vadd.f32 %v4398, %v4913
        %v4915 = vtanh.pop %v4914
        %v4916 = vsub.f32 1.0, %v4909
        %v4917 = vmul.f32 %v4916, %v4915
        %v4919 = vrot.slane %v4356, 6
        %v4921 = vmul.f32 %v4909, %v4919
        %v4922 = vadd.f32 %v4917, %v4921
        %v4924 = vrot.slane %v4848, 2
        %v4926 = vadd.f32 %v4401, %v4924
        %v4927 = vmul.f32 %v4926, 0.5
        %v4928 = vtanh.pop %v4927
        %v4929 = vmul.f32 %v4928, 0.5
        %v4930 = vadd.f32 %v4929, 0.5
        %v4932 = vrot.slane %v4850, 2
        %v4934 = vadd.f32 %v4402, %v4932
        %v4935 = vmul.f32 %v4934, 0.5
        %v4936 = vtanh.pop %v4935
        %v4937 = vmul.f32 %v4936, 0.5
        %v4938 = vadd.f32 %v4937, 0.5
        %v4940 = vrot.slane %v4889, 2
        %v4942 = vmul.f32 %v4930, %v4940
        %v4943 = vadd.f32 %v4403, %v4942
        %v4944 = vtanh.pop %v4943
        %v4945 = vsub.f32 1.0, %v4938
        %v4946 = vmul.f32 %v4945, %v4944
        %v4948 = vrot.slane %v4385, 6
        %v4950 = vmul.f32 %v4938, %v4948
        %v4951 = vadd.f32 %v4946, %v4950
        %v4952 = vmul.f32 %v482, %v4951
        %v4953 = vadd.f32 %v4922, %v4952
        %v4954 = vmul.f32 %v4953, %v458
        %v4955 = vadd.f32 %v4954, %v466
        %vm4956 = vcmp.ge.f32.partialorder %v4955, 0.0
        %v4957 = vmul.f32 %v474, %v4955
        %v4958 = vsel %vm4956, %v4955, %v4957
        %4959 = vst.msk [vmem:[%s409 + $0x8] sm:$0xc0] %vm2718, %v4958
        %4960 = vst [vmem:[#allocation2 - $0x6] sm:$0xc0] %v4922
        %4961 = vst [vmem:[%s485 - $0x6] sm:$0xc0] %v4951
        %s4962 = smul.u32 2, %s21
        %p4963 = scmp.lt.s32.totalorder %s20, 1
        %s4964 = scalar_select %p4963, %s20, 1
        %p4965 = scmp.lt.s32.totalorder %s4962, 1
        %s4966 = scalar_select %p4965, %s4962, 1
        %s4967 = smul.addr %s4964, 2
        %s4968 = sadd.s32 %s4966, %s4967
        %s4969 = smul.addr %s4968, 8
        %s4970 = scalar_lea.vmem %s5, %s4969
        // Predicated region
        $region97: #{crnn_forward.3} parent=83 // pred_check
          %p4971 = pneg %p184
        $region98: #{crnn_forward.3} parent=83 // pred_check_branch
          %4973 = sbr.rel (%p4971) target = $region100
        $region99: #{crnn_forward.3} parent=83 // pred_region
          %s4974 = smul.u32 2, %s21
        $region100: #{crnn_forward.3} parent=83 // pred_fallthru
          _
      $region84: #{crnn_forward.3} parent=5 // pred_fallthru
        _
      %p4975 = scmp.le.s32.totalorder 2, %s11
      // Predicated region
      $region101: #{crnn_forward.3} parent=5 // pred_check
        %p4976 = pneg %p4975
      $region102: #{crnn_forward.3} parent=5 // pred_check_branch
        %4978 = sbr.rel (%p4976) target = $region104
      $region103: #{crnn_forward.3} parent=5 // pred_region
        %s4979 = ssub.s32 %s11, 2
        // Predicated region
        $region105: #{crnn_forward.3} parent=103 // pred_check
          %p4980 = pneg %p190
        $region106: #{crnn_forward.3} parent=103 // pred_check_branch
          %4982 = sbr.rel (%p4980) target = $region108
        $region107: #{crnn_forward.3} parent=103 // pred_region
          %s4983 = smul.u32 2, %s23
          %p4984 = scmp.lt.s32.totalorder %s22, 1
          %s4985 = scalar_select %p4984, %s22, 1
          %p4986 = scmp.lt.s32.totalorder %s4983, 1
          %s4987 = scalar_select %p4986, %s4983, 1
          %s4988 = smul.addr %s4985, 2
          %s4989 = sadd.s32 %s4987, %s4988
          %s4990 = smul.addr %s4989, 8
          %s4991 = scalar_lea.vmem %s5, %s4990
        $region108: #{crnn_forward.3} parent=103 // pred_fallthru
          _
      $region104: #{crnn_forward.3} parent=5 // pred_fallthru
        _
    $region6: #{crnn_forward.3} parent=1 // loop_footer
      %s15 = sadd.s32 1, %s11
    $region7: #{crnn_forward.3} parent=1 // loop_footer_branch
      %10 = sbr.rel target = $region3
    $region8: #{crnn_forward.3} parent=1 // loop_exit
      _

</llo_original>
